<compile_context>
chip_gen: v7x
topology: tpu7x:2x2x1
jax: 0.10.0
libtpu: 0.0.40
codegen_flags: <defaults>
</compile_context>

<pallas_src>
import numpy as np
import jax
import jax.numpy as jnp
from jax.experimental import pallas as pl
from jax.experimental.pallas import tpu as pltpu


def _conv_block_kernel(x_ref, xt_ref, w1_ref, ws_ref, w2_ref,
                       g1_ref, b1_ref, gs_ref, bs_ref, g2_ref, b2_ref,
                       o_ref, xp_scr, xtp_scr, h1p_scr):
    # x_ref   : (1, H, W, Cin)  one batch element, NHWC
    # xt_ref  : (1, H, W, Cin)  spatially transposed copy of the same element
    # w*_ref  : (9*C, Cout) bf16 im2col weights (tap index kh*3+kw, then input channel)
    # g*/b*   : (1, Cout) f32 LayerNorm affine params
    # o_ref   : (1, H, W, Cout)
    # *_scr   : (H+2, W+2, C) f32 VMEM halo buffers
    H, W, Cin = x_ref.shape[1], x_ref.shape[2], x_ref.shape[3]
    Cout = o_ref.shape[3]

    # Build 1-pixel zero halos in VMEM. Fully re-initialized every step -> no cross-step
    # state, safe under "parallel" (megacore) grid sharding.
    xp_scr[...] = jnp.zeros_like(xp_scr)
    xtp_scr[...] = jnp.zeros_like(xtp_scr)
    h1p_scr[...] = jnp.zeros_like(h1p_scr)
    xp_scr[1:H + 1, 1:W + 1, :] = x_ref[0]
    xtp_scr[1:H + 1, 1:W + 1, :] = xt_ref[0]

    def im2col(xpad):
        # (H+2, W+2, C) -> (H*W, 9*C) bf16; tap order kh*3+kw matches the weight layout.
        C = xpad.shape[-1]
        taps = [xpad[kh:kh + H, kw:kw + W, :] for kh in range(3) for kw in range(3)]
        patches = jnp.concatenate(taps, axis=-1).reshape(H * W, 9 * C)
        return patches.astype(jnp.bfloat16)

    def ln_relu(acc, g_ref, b_ref):
        # LayerNorm over channels (biased variance, eps=1e-5, matches nn.LayerNorm) + ReLU.
        mean = jnp.mean(acc, axis=-1, keepdims=True)
        cen = acc - mean
        var = jnp.mean(cen * cen, axis=-1, keepdims=True)
        y = cen * jax.lax.rsqrt(var + 1e-5)
        return jnp.maximum(y * g_ref[...] + b_ref[...], 0.0)

    # Shortcut branch, computed directly in TRANSPOSED orientation (it consumes the
    # transposed input with tap-transposed weights), so the residual add needs no
    # in-kernel spatial transpose.
    short_t = ln_relu(
        jnp.dot(im2col(xtp_scr[...]), ws_ref[...], preferred_element_type=jnp.float32),
        gs_ref, bs_ref)

    # Main path, stage 1.
    h1 = ln_relu(
        jnp.dot(im2col(xp_scr[...]), w1_ref[...], preferred_element_type=jnp.float32),
        g1_ref, b1_ref)
    h1p_scr[1:H + 1, 1:W + 1, :] = h1.reshape(H, W, Cout)

    # Main path, stage 2, plus residual add with the transposed shortcut.
    h2 = ln_relu(
        jnp.dot(im2col(h1p_scr[...]), w2_ref[...], preferred_element_type=jnp.float32),
        g2_ref, b2_ref)

    o_ref[...] = (h2 + short_t).reshape(1, H, W, Cout)


def conv_block_forward(x_nchw, params):
    """x_nchw: [N, C_in, H, W] float32 (H must equal W, as the PyTorch module requires)."""
    N, Cin, H, W = x_nchw.shape
    assert H == W, "the module's permute/view sequence requires square spatial dims"
    Cout = params["w1"].shape[2]

    x = jnp.transpose(x_nchw, (0, 2, 3, 1))    # NHWC
    xt = jnp.transpose(x_nchw, (0, 3, 2, 1))   # spatially transposed NHWC

    def flat_w(w9):  # (9, C, Cout) -> (9*C, Cout) bf16 for the im2col matmul
        return w9.reshape(9 * w9.shape[1], w9.shape[2]).astype(jnp.bfloat16)

    # Tap-transposed shortcut weights: conv(x_transposed, w_tapswap) == transpose(conv(x, w)).
    w_short_swap = jnp.transpose(
        params["w_short"].reshape(3, 3, Cin, Cout), (1, 0, 2, 3)).reshape(9, Cin, Cout)

    w1 = flat_w(params["w1"])
    ws = flat_w(w_short_swap)
    w2 = flat_w(params["w2"])

    vec = lambda v: v.reshape(1, -1).astype(jnp.float32)
    const2 = lambda r, c: pl.BlockSpec((r, c), lambda n: (0, 0))

    out_nhwc = pl.pallas_call(
        _conv_block_kernel,
        out_shape=jax.ShapeDtypeStruct((N, H, W, Cout), jnp.float32),
        grid=(N,),
        in_specs=[
            pl.BlockSpec((1, H, W, Cin), lambda n: (n, 0, 0, 0)),   # x
            pl.BlockSpec((1, H, W, Cin), lambda n: (n, 0, 0, 0)),   # x transposed
            const2(9 * Cin, Cout),                                  # w1
            const2(9 * Cin, Cout),                                  # w_short (tap-swapped)
            const2(9 * Cout, Cout),                                 # w2
            const2(1, Cout), const2(1, Cout),                       # g1, b1
            const2(1, Cout), const2(1, Cout),                       # g_short, b_short
            const2(1, Cout), const2(1, Cout),                       # g2, b2
        ],
        out_specs=pl.BlockSpec((1, H, W, Cout), lambda n: (n, 0, 0, 0)),
        scratch_shapes=[
            pltpu.VMEM((H + 2, W + 2, Cin), jnp.float32),   # padded x
            pltpu.VMEM((H + 2, W + 2, Cin), jnp.float32),   # padded x^T
            pltpu.VMEM((H + 2, W + 2, Cout), jnp.float32),  # padded h1
        ],
        compiler_params=pltpu.CompilerParams(
            dimension_semantics=("parallel",),
            vmem_limit_bytes=48 * 1024 * 1024,   # safe on v5e/v6e (128 MiB) and v7x (64 MiB)
        ),
    )(x, xt, w1, ws, w2,
      vec(params["g1"]), vec(params["b1"]),
      vec(params["g_short"]), vec(params["b_short"]),
      vec(params["g2"]), vec(params["b2"]))

    return jnp.transpose(out_nhwc, (0, 3, 1, 2))  # -> NCHW


# ---------------- pure-JAX (f32) reference for validation ----------------
def _ref_branch(x_nhwc, w9, gamma, beta):
    Cin, Cout = w9.shape[1], w9.shape[2]
    w_hwio = w9.reshape(3, 3, Cin, Cout)
    y = jax.lax.conv_general_dilated(
        x_nhwc, w_hwio, window_strides=(1, 1), padding=((1, 1), (1, 1)),
        dimension_numbers=("NHWC", "HWIO", "NHWC"))
    mean = jnp.mean(y, axis=-1, keepdims=True)
    var = jnp.mean((y - mean) ** 2, axis=-1, keepdims=True)
    y = (y - mean) / jnp.sqrt(var + 1e-5) * gamma + beta
    return jnp.maximum(y, 0.0)


def conv_block_reference(x_nchw, params):
    x = jnp.transpose(x_nchw, (0, 2, 3, 1))
    short = _ref_branch(x, params["w_short"], params["g_short"], params["b_short"])
    h1 = _ref_branch(x, params["w1"], params["g1"], params["b1"])
    h2 = _ref_branch(h1, params["w2"], params["g2"], params["b2"])
    out_nhwc = h2 + jnp.transpose(short, (0, 2, 1, 3))
    return jnp.transpose(out_nhwc, (0, 3, 1, 2))


if __name__ == "__main__":
    # Small shapes consistent with the module (square spatial; in == out channels).
    N, C_IN, C_OUT, S = 2, 32, 32, 16

    key = jax.random.PRNGKey(0)
    kx, k1, k2, k3, kg1, kb1, kg2, kb2, kg3, kb3 = jax.random.split(key, 10)

    x = jax.random.normal(kx, (N, C_IN, S, S), dtype=jnp.float32)

    def conv_w(k, cin, cout):
        # stored as (9, Cin, Cout), tap index = kh*3 + kw
        return jax.random.normal(k, (9, cin, cout), dtype=jnp.float32) * 0.05

    params = {
        "w1": conv_w(k1, C_IN, C_OUT),
        "w2": conv_w(k2, C_OUT, C_OUT),
        "w_short": conv_w(k3, C_IN, C_OUT),
        "g1": 1.0 + 0.1 * jax.random.normal(kg1, (C_OUT,), dtype=jnp.float32),
        "b1": 0.1 * jax.random.normal(kb1, (C_OUT,), dtype=jnp.float32),
        "g2": 1.0 + 0.1 * jax.random.normal(kg2, (C_OUT,), dtype=jnp.float32),
        "b2": 0.1 * jax.random.normal(kb2, (C_OUT,), dtype=jnp.float32),
        "g_short": 1.0 + 0.1 * jax.random.normal(kg3, (C_OUT,), dtype=jnp.float32),
        "b_short": 0.1 * jax.random.normal(kb3, (C_OUT,), dtype=jnp.float32),
    }

    out = jax.jit(conv_block_forward)(x, params)
    out = jax.block_until_ready(out)

    ref = jax.block_until_ready(conv_block_reference(x, params))
    # Tolerance loosened vs. the pure-f32 version because the conv matmuls now run with
    # bf16 inputs (f32 accumulation), per the performance review.
    np.testing.assert_allclose(np.asarray(out), np.asarray(ref), rtol=5e-2, atol=5e-2)

    assert out.shape == (N, C_OUT, S, S)
    print("KERNEL_OK")
</pallas_src>

<mosaic_0001>
module attributes {stable_mosaic.version = 11 : i64} {
  func.func @_conv_block_kernel(%arg0: i32, %arg1: memref<1x16x16x32xf32, #tpu.memory_space<vmem>>, %arg2: memref<1x16x16x32xf32, #tpu.memory_space<vmem>>, %arg3: memref<288x32xbf16, #tpu.memory_space<vmem>>, %arg4: memref<288x32xbf16, #tpu.memory_space<vmem>>, %arg5: memref<288x32xbf16, #tpu.memory_space<vmem>>, %arg6: memref<1x32xf32, #tpu.memory_space<vmem>>, %arg7: memref<1x32xf32, #tpu.memory_space<vmem>>, %arg8: memref<1x32xf32, #tpu.memory_space<vmem>>, %arg9: memref<1x32xf32, #tpu.memory_space<vmem>>, %arg10: memref<1x32xf32, #tpu.memory_space<vmem>>, %arg11: memref<1x32xf32, #tpu.memory_space<vmem>>, %arg12: memref<1x16x16x32xf32, #tpu.memory_space<vmem>>, %arg13: memref<18x18x32xf32, #tpu.memory_space<vmem>>, %arg14: memref<18x18x32xf32, #tpu.memory_space<vmem>>, %arg15: memref<18x18x32xf32, #tpu.memory_space<vmem>>) attributes {dimension_semantics = [#tpu.dimension_semantics<parallel>], iteration_bounds = array<i64: 2>, scalar_prefetch = 0 : i64, scratch_operands = 3 : i64, tpu.core_type = #tpu.core_type<tc>, window_params = [{transform_indices = @transform_0, window_bounds = array<i64: 1, 16, 16, 32>}, {transform_indices = @transform_1, window_bounds = array<i64: 1, 16, 16, 32>}, {pipeline_mode = #tpu.pipeline_mode<synchronous>, transform_indices = @transform_2, window_bounds = array<i64: 288, 32>}, {pipeline_mode = #tpu.pipeline_mode<synchronous>, transform_indices = @transform_3, window_bounds = array<i64: 288, 32>}, {pipeline_mode = #tpu.pipeline_mode<synchronous>, transform_indices = @transform_4, window_bounds = array<i64: 288, 32>}, {pipeline_mode = #tpu.pipeline_mode<synchronous>, transform_indices = @transform_5, window_bounds = array<i64: 1, 32>}, {pipeline_mode = #tpu.pipeline_mode<synchronous>, transform_indices = @transform_6, window_bounds = array<i64: 1, 32>}, {pipeline_mode = #tpu.pipeline_mode<synchronous>, transform_indices = @transform_7, window_bounds = array<i64: 1, 32>}, {pipeline_mode = #tpu.pipeline_mode<synchronous>, transform_indices = @transform_8, window_bounds = array<i64: 1, 32>}, {pipeline_mode = #tpu.pipeline_mode<synchronous>, transform_indices = @transform_9, window_bounds = array<i64: 1, 32>}, {pipeline_mode = #tpu.pipeline_mode<synchronous>, transform_indices = @transform_10, window_bounds = array<i64: 1, 32>}, {transform_indices = @transform_11, window_bounds = array<i64: 1, 16, 16, 32>}]} {
    %cst = arith.constant 0.000000e+00 : f32
    %0 = vector.broadcast %cst : f32 to vector<18x18x32xf32>
    %c0 = arith.constant 0 : index
    %c0_0 = arith.constant 0 : index
    %c0_1 = arith.constant 0 : index
    %1 = vector.load %arg13[%c0, %c0_0, %c0_1] : memref<18x18x32xf32, #tpu.memory_space<vmem>>, vector<18x18x32xf32>
    tpu.vector_store %arg13[%c0, %c0_0, %c0_1], %0 {strides = array<i32>} : memref<18x18x32xf32, #tpu.memory_space<vmem>>, vector<18x18x32xf32>,
    %cst_2 = arith.constant 0.000000e+00 : f32
    %2 = vector.broadcast %cst_2 : f32 to vector<18x18x32xf32>
    %c0_3 = arith.constant 0 : index
    %c0_4 = arith.constant 0 : index
    %c0_5 = arith.constant 0 : index
    %3 = vector.load %arg14[%c0_3, %c0_4, %c0_5] : memref<18x18x32xf32, #tpu.memory_space<vmem>>, vector<18x18x32xf32>
    tpu.vector_store %arg14[%c0_3, %c0_4, %c0_5], %2 {strides = array<i32>} : memref<18x18x32xf32, #tpu.memory_space<vmem>>, vector<18x18x32xf32>,
    %cst_6 = arith.constant 0.000000e+00 : f32
    %4 = vector.broadcast %cst_6 : f32 to vector<18x18x32xf32>
    %c0_7 = arith.constant 0 : index
    %c0_8 = arith.constant 0 : index
    %c0_9 = arith.constant 0 : index
    %5 = vector.load %arg15[%c0_7, %c0_8, %c0_9] : memref<18x18x32xf32, #tpu.memory_space<vmem>>, vector<18x18x32xf32>
    tpu.vector_store %arg15[%c0_7, %c0_8, %c0_9], %4 {strides = array<i32>} : memref<18x18x32xf32, #tpu.memory_space<vmem>>, vector<18x18x32xf32>,
    %c0_10 = arith.constant 0 : index
    %c0_11 = arith.constant 0 : index
    %c0_12 = arith.constant 0 : index
    %c0_13 = arith.constant 0 : index
    %6 = vector.load %arg1[%c0_10, %c0_11, %c0_12, %c0_13] : memref<1x16x16x32xf32, #tpu.memory_space<vmem>>, vector<1x16x16x32xf32>
    %7 = vector.shape_cast %6 : vector<1x16x16x32xf32> to vector<16x16x32xf32>
    %c1 = arith.constant 1 : index
    %c1_14 = arith.constant 1 : index
    %c0_15 = arith.constant 0 : index
    %8 = vector.load %arg13[%c1, %c1_14, %c0_15] : memref<18x18x32xf32, #tpu.memory_space<vmem>>, vector<16x16x32xf32>
    tpu.vector_store %arg13[%c1, %c1_14, %c0_15], %7 {strides = array<i32>} : memref<18x18x32xf32, #tpu.memory_space<vmem>>, vector<16x16x32xf32>,
    %c0_16 = arith.constant 0 : index
    %c0_17 = arith.constant 0 : index
    %c0_18 = arith.constant 0 : index
    %c0_19 = arith.constant 0 : index
    %9 = vector.load %arg2[%c0_16, %c0_17, %c0_18, %c0_19] : memref<1x16x16x32xf32, #tpu.memory_space<vmem>>, vector<1x16x16x32xf32>
    %10 = vector.shape_cast %9 : vector<1x16x16x32xf32> to vector<16x16x32xf32>
    %c1_20 = arith.constant 1 : index
    %c1_21 = arith.constant 1 : index
    %c0_22 = arith.constant 0 : index
    %11 = vector.load %arg14[%c1_20, %c1_21, %c0_22] : memref<18x18x32xf32, #tpu.memory_space<vmem>>, vector<16x16x32xf32>
    tpu.vector_store %arg14[%c1_20, %c1_21, %c0_22], %10 {strides = array<i32>} : memref<18x18x32xf32, #tpu.memory_space<vmem>>, vector<16x16x32xf32>,
    %c0_23 = arith.constant 0 : index
    %c0_24 = arith.constant 0 : index
    %c0_25 = arith.constant 0 : index
    %12 = vector.load %arg14[%c0_23, %c0_24, %c0_25] : memref<18x18x32xf32, #tpu.memory_space<vmem>>, vector<18x18x32xf32>
    %13 = vector.extract_strided_slice %12 {offsets = [0, 0, 0], sizes = [16, 16, 32], strides = [1, 1, 1]} : vector<18x18x32xf32> to vector<16x16x32xf32>
    %14 = vector.extract_strided_slice %12 {offsets = [0, 1, 0], sizes = [16, 16, 32], strides = [1, 1, 1]} : vector<18x18x32xf32> to vector<16x16x32xf32>
    %15 = vector.extract_strided_slice %12 {offsets = [0, 2, 0], sizes = [16, 16, 32], strides = [1, 1, 1]} : vector<18x18x32xf32> to vector<16x16x32xf32>
    %16 = vector.extract_strided_slice %12 {offsets = [1, 0, 0], sizes = [16, 16, 32], strides = [1, 1, 1]} : vector<18x18x32xf32> to vector<16x16x32xf32>
    %17 = vector.extract_strided_slice %12 {offsets = [1, 1, 0], sizes = [16, 16, 32], strides = [1, 1, 1]} : vector<18x18x32xf32> to vector<16x16x32xf32>
    %18 = vector.extract_strided_slice %12 {offsets = [1, 2, 0], sizes = [16, 16, 32], strides = [1, 1, 1]} : vector<18x18x32xf32> to vector<16x16x32xf32>
    %19 = vector.extract_strided_slice %12 {offsets = [2, 0, 0], sizes = [16, 16, 32], strides = [1, 1, 1]} : vector<18x18x32xf32> to vector<16x16x32xf32>
    %20 = vector.extract_strided_slice %12 {offsets = [2, 1, 0], sizes = [16, 16, 32], strides = [1, 1, 1]} : vector<18x18x32xf32> to vector<16x16x32xf32>
    %21 = vector.extract_strided_slice %12 {offsets = [2, 2, 0], sizes = [16, 16, 32], strides = [1, 1, 1]} : vector<18x18x32xf32> to vector<16x16x32xf32>
    %22 = tpu.concatenate %13, %14, %15, %16, %17, %18, %19, %20, %21 in 2 : vector<16x16x32xf32>, vector<16x16x32xf32>, vector<16x16x32xf32>, vector<16x16x32xf32>, vector<16x16x32xf32>, vector<16x16x32xf32>, vector<16x16x32xf32>, vector<16x16x32xf32>, vector<16x16x32xf32> -> vector<16x16x288xf32>
    %23 = vector.shape_cast %22 : vector<16x16x288xf32> to vector<256x288xf32>
    %24 = arith.truncf %23 : vector<256x288xf32> to vector<256x288xbf16>
    %c0_26 = arith.constant 0 : index
    %c0_27 = arith.constant 0 : index
    %25 = vector.load %arg4[%c0_26, %c0_27] : memref<288x32xbf16, #tpu.memory_space<vmem>>, vector<288x32xbf16>
    %cst_28 = arith.constant dense<0.000000e+00> : vector<256x32xf32>
    %26 = tpu.matmul %24, %25, %cst_28 {dimension_numbers = #tpu.dot_dimension_numbers<[1], [0], [0], [1], [0, 0, 1, 1], [], []>} : vector<256x288xbf16>, vector<288x32xbf16>, vector<256x32xf32> -> vector<256x32xf32>
    %cst_29 = arith.constant dense<0.000000e+00> : vector<256xf32>
    %27 = vector.multi_reduction <add>, %26, %cst_29 [1] : vector<256x32xf32> to vector<256xf32>
    %28 = vector.shape_cast %27 : vector<256xf32> to vector<256x1xf32>
    %cst_30 = arith.constant 3.200000e+01 : f32
    %29 = vector.broadcast %cst_30 : f32 to vector<256x1xf32>
    %30 = arith.divf %28, %29 : vector<256x1xf32>
    %31 = vector.broadcast %30 : vector<256x1xf32> to vector<256x32xf32>
    %32 = arith.subf %26, %31 : vector<256x32xf32>
    %33 = arith.mulf %32, %32 : vector<256x32xf32>
    %cst_31 = arith.constant dense<0.000000e+00> : vector<256xf32>
    %34 = vector.multi_reduction <add>, %33, %cst_31 [1] : vector<256x32xf32> to vector<256xf32>
    %35 = vector.shape_cast %34 : vector<256xf32> to vector<256x1xf32>
    %cst_32 = arith.constant 3.200000e+01 : f32
    %36 = vector.broadcast %cst_32 : f32 to vector<256x1xf32>
    %37 = arith.divf %35, %36 : vector<256x1xf32>
    %cst_33 = arith.constant 9.99999974E-6 : f32
    %38 = vector.broadcast %cst_33 : f32 to vector<256x1xf32>
    %39 = arith.addf %37, %38 : vector<256x1xf32>
    %40 = math.rsqrt %39 : vector<256x1xf32>
    %41 = vector.broadcast %40 : vector<256x1xf32> to vector<256x32xf32>
    %42 = arith.mulf %32, %41 : vector<256x32xf32>
    %c0_34 = arith.constant 0 : index
    %c0_35 = arith.constant 0 : index
    %43 = vector.load %arg8[%c0_34, %c0_35] : memref<1x32xf32, #tpu.memory_space<vmem>>, vector<1x32xf32>
    %44 = vector.broadcast %43 : vector<1x32xf32> to vector<256x32xf32>
    %45 = arith.mulf %42, %44 : vector<256x32xf32>
    %c0_36 = arith.constant 0 : index
    %c0_37 = arith.constant 0 : index
    %46 = vector.load %arg9[%c0_36, %c0_37] : memref<1x32xf32, #tpu.memory_space<vmem>>, vector<1x32xf32>
    %47 = vector.broadcast %46 : vector<1x32xf32> to vector<256x32xf32>
    %48 = arith.addf %45, %47 : vector<256x32xf32>
    %cst_38 = arith.constant 0.000000e+00 : f32
    %49 = vector.broadcast %cst_38 : f32 to vector<256x32xf32>
    %50 = arith.maximumf %48, %49 : vector<256x32xf32>
    %c0_39 = arith.constant 0 : index
    %c0_40 = arith.constant 0 : index
    %c0_41 = arith.constant 0 : index
    %51 = vector.load %arg13[%c0_39, %c0_40, %c0_41] : memref<18x18x32xf32, #tpu.memory_space<vmem>>, vector<18x18x32xf32>
    %52 = vector.extract_strided_slice %51 {offsets = [0, 0, 0], sizes = [16, 16, 32], strides = [1, 1, 1]} : vector<18x18x32xf32> to vector<16x16x32xf32>
    %53 = vector.extract_strided_slice %51 {offsets = [0, 1, 0], sizes = [16, 16, 32], strides = [1, 1, 1]} : vector<18x18x32xf32> to vector<16x16x32xf32>
    %54 = vector.extract_strided_slice %51 {offsets = [0, 2, 0], sizes = [16, 16, 32], strides = [1, 1, 1]} : vector<18x18x32xf32> to vector<16x16x32xf32>
    %55 = vector.extract_strided_slice %51 {offsets = [1, 0, 0], sizes = [16, 16, 32], strides = [1, 1, 1]} : vector<18x18x32xf32> to vector<16x16x32xf32>
    %56 = vector.extract_strided_slice %51 {offsets = [1, 1, 0], sizes = [16, 16, 32], strides = [1, 1, 1]} : vector<18x18x32xf32> to vector<16x16x32xf32>
    %57 = vector.extract_strided_slice %51 {offsets = [1, 2, 0], sizes = [16, 16, 32], strides = [1, 1, 1]} : vector<18x18x32xf32> to vector<16x16x32xf32>
    %58 = vector.extract_strided_slice %51 {offsets = [2, 0, 0], sizes = [16, 16, 32], strides = [1, 1, 1]} : vector<18x18x32xf32> to vector<16x16x32xf32>
    %59 = vector.extract_strided_slice %51 {offsets = [2, 1, 0], sizes = [16, 16, 32], strides = [1, 1, 1]} : vector<18x18x32xf32> to vector<16x16x32xf32>
    %60 = vector.extract_strided_slice %51 {offsets = [2, 2, 0], sizes = [16, 16, 32], strides = [1, 1, 1]} : vector<18x18x32xf32> to vector<16x16x32xf32>
    %61 = tpu.concatenate %52, %53, %54, %55, %56, %57, %58, %59, %60 in 2 : vector<16x16x32xf32>, vector<16x16x32xf32>, vector<16x16x32xf32>, vector<16x16x32xf32>, vector<16x16x32xf32>, vector<16x16x32xf32>, vector<16x16x32xf32>, vector<16x16x32xf32>, vector<16x16x32xf32> -> vector<16x16x288xf32>
    %62 = vector.shape_cast %61 : vector<16x16x288xf32> to vector<256x288xf32>
    %63 = arith.truncf %62 : vector<256x288xf32> to vector<256x288xbf16>
    %c0_42 = arith.constant 0 : index
    %c0_43 = arith.constant 0 : index
    %64 = vector.load %arg3[%c0_42, %c0_43] : memref<288x32xbf16, #tpu.memory_space<vmem>>, vector<288x32xbf16>
    %cst_44 = arith.constant dense<0.000000e+00> : vector<256x32xf32>
    %65 = tpu.matmul %63, %64, %cst_44 {dimension_numbers = #tpu.dot_dimension_numbers<[1], [0], [0], [1], [0, 0, 1, 1], [], []>} : vector<256x288xbf16>, vector<288x32xbf16>, vector<256x32xf32> -> vector<256x32xf32>
    %cst_45 = arith.constant dense<0.000000e+00> : vector<256xf32>
    %66 = vector.multi_reduction <add>, %65, %cst_45 [1] : vector<256x32xf32> to vector<256xf32>
    %67 = vector.shape_cast %66 : vector<256xf32> to vector<256x1xf32>
    %cst_46 = arith.constant 3.200000e+01 : f32
    %68 = vector.broadcast %cst_46 : f32 to vector<256x1xf32>
    %69 = arith.divf %67, %68 : vector<256x1xf32>
    %70 = vector.broadcast %69 : vector<256x1xf32> to vector<256x32xf32>
    %71 = arith.subf %65, %70 : vector<256x32xf32>
    %72 = arith.mulf %71, %71 : vector<256x32xf32>
    %cst_47 = arith.constant dense<0.000000e+00> : vector<256xf32>
    %73 = vector.multi_reduction <add>, %72, %cst_47 [1] : vector<256x32xf32> to vector<256xf32>
    %74 = vector.shape_cast %73 : vector<256xf32> to vector<256x1xf32>
    %cst_48 = arith.constant 3.200000e+01 : f32
    %75 = vector.broadcast %cst_48 : f32 to vector<256x1xf32>
    %76 = arith.divf %74, %75 : vector<256x1xf32>
    %cst_49 = arith.constant 9.99999974E-6 : f32
    %77 = vector.broadcast %cst_49 : f32 to vector<256x1xf32>
    %78 = arith.addf %76, %77 : vector<256x1xf32>
    %79 = math.rsqrt %78 : vector<256x1xf32>
    %80 = vector.broadcast %79 : vector<256x1xf32> to vector<256x32xf32>
    %81 = arith.mulf %71, %80 : vector<256x32xf32>
    %c0_50 = arith.constant 0 : index
    %c0_51 = arith.constant 0 : index
    %82 = vector.load %arg6[%c0_50, %c0_51] : memref<1x32xf32, #tpu.memory_space<vmem>>, vector<1x32xf32>
    %83 = vector.broadcast %82 : vector<1x32xf32> to vector<256x32xf32>
    %84 = arith.mulf %81, %83 : vector<256x32xf32>
    %c0_52 = arith.constant 0 : index
    %c0_53 = arith.constant 0 : index
    %85 = vector.load %arg7[%c0_52, %c0_53] : memref<1x32xf32, #tpu.memory_space<vmem>>, vector<1x32xf32>
    %86 = vector.broadcast %85 : vector<1x32xf32> to vector<256x32xf32>
    %87 = arith.addf %84, %86 : vector<256x32xf32>
    %cst_54 = arith.constant 0.000000e+00 : f32
    %88 = vector.broadcast %cst_54 : f32 to vector<256x32xf32>
    %89 = arith.maximumf %87, %88 : vector<256x32xf32>
    %90 = vector.shape_cast %89 : vector<256x32xf32> to vector<16x16x32xf32>
    %c1_55 = arith.constant 1 : index
    %c1_56 = arith.constant 1 : index
    %c0_57 = arith.constant 0 : index
    %91 = vector.load %arg15[%c1_55, %c1_56, %c0_57] : memref<18x18x32xf32, #tpu.memory_space<vmem>>, vector<16x16x32xf32>
    tpu.vector_store %arg15[%c1_55, %c1_56, %c0_57], %90 {strides = array<i32>} : memref<18x18x32xf32, #tpu.memory_space<vmem>>, vector<16x16x32xf32>,
    %c0_58 = arith.constant 0 : index
    %c0_59 = arith.constant 0 : index
    %c0_60 = arith.constant 0 : index
    %92 = vector.load %arg15[%c0_58, %c0_59, %c0_60] : memref<18x18x32xf32, #tpu.memory_space<vmem>>, vector<18x18x32xf32>
    %93 = vector.extract_strided_slice %92 {offsets = [0, 0, 0], sizes = [16, 16, 32], strides = [1, 1, 1]} : vector<18x18x32xf32> to vector<16x16x32xf32>
    %94 = vector.extract_strided_slice %92 {offsets = [0, 1, 0], sizes = [16, 16, 32], strides = [1, 1, 1]} : vector<18x18x32xf32> to vector<16x16x32xf32>
    %95 = vector.extract_strided_slice %92 {offsets = [0, 2, 0], sizes = [16, 16, 32], strides = [1, 1, 1]} : vector<18x18x32xf32> to vector<16x16x32xf32>
    %96 = vector.extract_strided_slice %92 {offsets = [1, 0, 0], sizes = [16, 16, 32], strides = [1, 1, 1]} : vector<18x18x32xf32> to vector<16x16x32xf32>
    %97 = vector.extract_strided_slice %92 {offsets = [1, 1, 0], sizes = [16, 16, 32], strides = [1, 1, 1]} : vector<18x18x32xf32> to vector<16x16x32xf32>
    %98 = vector.extract_strided_slice %92 {offsets = [1, 2, 0], sizes = [16, 16, 32], strides = [1, 1, 1]} : vector<18x18x32xf32> to vector<16x16x32xf32>
    %99 = vector.extract_strided_slice %92 {offsets = [2, 0, 0], sizes = [16, 16, 32], strides = [1, 1, 1]} : vector<18x18x32xf32> to vector<16x16x32xf32>
    %100 = vector.extract_strided_slice %92 {offsets = [2, 1, 0], sizes = [16, 16, 32], strides = [1, 1, 1]} : vector<18x18x32xf32> to vector<16x16x32xf32>
    %101 = vector.extract_strided_slice %92 {offsets = [2, 2, 0], sizes = [16, 16, 32], strides = [1, 1, 1]} : vector<18x18x32xf32> to vector<16x16x32xf32>
    %102 = tpu.concatenate %93, %94, %95, %96, %97, %98, %99, %100, %101 in 2 : vector<16x16x32xf32>, vector<16x16x32xf32>, vector<16x16x32xf32>, vector<16x16x32xf32>, vector<16x16x32xf32>, vector<16x16x32xf32>, vector<16x16x32xf32>, vector<16x16x32xf32>, vector<16x16x32xf32> -> vector<16x16x288xf32>
    %103 = vector.shape_cast %102 : vector<16x16x288xf32> to vector<256x288xf32>
    %104 = arith.truncf %103 : vector<256x288xf32> to vector<256x288xbf16>
    %c0_61 = arith.constant 0 : index
    %c0_62 = arith.constant 0 : index
    %105 = vector.load %arg5[%c0_61, %c0_62] : memref<288x32xbf16, #tpu.memory_space<vmem>>, vector<288x32xbf16>
    %cst_63 = arith.constant dense<0.000000e+00> : vector<256x32xf32>
    %106 = tpu.matmul %104, %105, %cst_63 {dimension_numbers = #tpu.dot_dimension_numbers<[1], [0], [0], [1], [0, 0, 1, 1], [], []>} : vector<256x288xbf16>, vector<288x32xbf16>, vector<256x32xf32> -> vector<256x32xf32>
    %cst_64 = arith.constant dense<0.000000e+00> : vector<256xf32>
    %107 = vector.multi_reduction <add>, %106, %cst_64 [1] : vector<256x32xf32> to vector<256xf32>
    %108 = vector.shape_cast %107 : vector<256xf32> to vector<256x1xf32>
    %cst_65 = arith.constant 3.200000e+01 : f32
    %109 = vector.broadcast %cst_65 : f32 to vector<256x1xf32>
    %110 = arith.divf %108, %109 : vector<256x1xf32>
    %111 = vector.broadcast %110 : vector<256x1xf32> to vector<256x32xf32>
    %112 = arith.subf %106, %111 : vector<256x32xf32>
    %113 = arith.mulf %112, %112 : vector<256x32xf32>
    %cst_66 = arith.constant dense<0.000000e+00> : vector<256xf32>
    %114 = vector.multi_reduction <add>, %113, %cst_66 [1] : vector<256x32xf32> to vector<256xf32>
    %115 = vector.shape_cast %114 : vector<256xf32> to vector<256x1xf32>
    %cst_67 = arith.constant 3.200000e+01 : f32
    %116 = vector.broadcast %cst_67 : f32 to vector<256x1xf32>
    %117 = arith.divf %115, %116 : vector<256x1xf32>
    %cst_68 = arith.constant 9.99999974E-6 : f32
    %118 = vector.broadcast %cst_68 : f32 to vector<256x1xf32>
    %119 = arith.addf %117, %118 : vector<256x1xf32>
    %120 = math.rsqrt %119 : vector<256x1xf32>
    %121 = vector.broadcast %120 : vector<256x1xf32> to vector<256x32xf32>
    %122 = arith.mulf %112, %121 : vector<256x32xf32>
    %c0_69 = arith.constant 0 : index
    %c0_70 = arith.constant 0 : index
    %123 = vector.load %arg10[%c0_69, %c0_70] : memref<1x32xf32, #tpu.memory_space<vmem>>, vector<1x32xf32>
    %124 = vector.broadcast %123 : vector<1x32xf32> to vector<256x32xf32>
    %125 = arith.mulf %122, %124 : vector<256x32xf32>
    %c0_71 = arith.constant 0 : index
    %c0_72 = arith.constant 0 : index
    %126 = vector.load %arg11[%c0_71, %c0_72] : memref<1x32xf32, #tpu.memory_space<vmem>>, vector<1x32xf32>
    %127 = vector.broadcast %126 : vector<1x32xf32> to vector<256x32xf32>
    %128 = arith.addf %125, %127 : vector<256x32xf32>
    %cst_73 = arith.constant 0.000000e+00 : f32
    %129 = vector.broadcast %cst_73 : f32 to vector<256x32xf32>
    %130 = arith.maximumf %128, %129 : vector<256x32xf32>
    %131 = arith.addf %130, %50 : vector<256x32xf32>
    %132 = vector.shape_cast %131 : vector<256x32xf32> to vector<1x16x16x32xf32>
    %c0_74 = arith.constant 0 : index
    %c0_75 = arith.constant 0 : index
    %c0_76 = arith.constant 0 : index
    %c0_77 = arith.constant 0 : index
    %133 = vector.load %arg12[%c0_74, %c0_75, %c0_76, %c0_77] : memref<1x16x16x32xf32, #tpu.memory_space<vmem>>, vector<1x16x16x32xf32>
    tpu.vector_store %arg12[%c0_74, %c0_75, %c0_76, %c0_77], %132 {strides = array<i32>} : memref<1x16x16x32xf32, #tpu.memory_space<vmem>>, vector<1x16x16x32xf32>,
    return
  }
  func.func @transform_0(%arg0: i32) -> (i32, i32, i32, i32) {
    %c0_i32 = arith.constant 0 : i32
    %c0_i32_0 = arith.constant 0 : i32
    %c0_i32_1 = arith.constant 0 : i32
    %c0_i32_2 = arith.constant 0 : i32
    return %arg0, %c0_i32, %c0_i32_0, %c0_i32_1 : i32, i32, i32, i32
  }
  func.func @transform_1(%arg0: i32) -> (i32, i32, i32, i32) {
    %c0_i32 = arith.constant 0 : i32
    %c0_i32_0 = arith.constant 0 : i32
    %c0_i32_1 = arith.constant 0 : i32
    %c0_i32_2 = arith.constant 0 : i32
    return %arg0, %c0_i32, %c0_i32_0, %c0_i32_1 : i32, i32, i32, i32
  }
  func.func @transform_2(%arg0: i32) -> (i32, i32) {
    %c0_i32 = arith.constant 0 : i32
    %c0_i32_0 = arith.constant 0 : i32
    %c0_i32_1 = arith.constant 0 : i32
    return %c0_i32, %c0_i32_0 : i32, i32
  }
  func.func @transform_3(%arg0: i32) -> (i32, i32) {
    %c0_i32 = arith.constant 0 : i32
    %c0_i32_0 = arith.constant 0 : i32
    %c0_i32_1 = arith.constant 0 : i32
    return %c0_i32, %c0_i32_0 : i32, i32
  }
  func.func @transform_4(%arg0: i32) -> (i32, i32) {
    %c0_i32 = arith.constant 0 : i32
    %c0_i32_0 = arith.constant 0 : i32
    %c0_i32_1 = arith.constant 0 : i32
    return %c0_i32, %c0_i32_0 : i32, i32
  }
  func.func @transform_5(%arg0: i32) -> (i32, i32) {
    %c0_i32 = arith.constant 0 : i32
    %c0_i32_0 = arith.constant 0 : i32
    %c0_i32_1 = arith.constant 0 : i32
    return %c0_i32, %c0_i32_0 : i32, i32
  }
  func.func @transform_6(%arg0: i32) -> (i32, i32) {
    %c0_i32 = arith.constant 0 : i32
    %c0_i32_0 = arith.constant 0 : i32
    %c0_i32_1 = arith.constant 0 : i32
    return %c0_i32, %c0_i32_0 : i32, i32
  }
  func.func @transform_7(%arg0: i32) -> (i32, i32) {
    %c0_i32 = arith.constant 0 : i32
    %c0_i32_0 = arith.constant 0 : i32
    %c0_i32_1 = arith.constant 0 : i32
    return %c0_i32, %c0_i32_0 : i32, i32
  }
  func.func @transform_8(%arg0: i32) -> (i32, i32) {
    %c0_i32 = arith.constant 0 : i32
    %c0_i32_0 = arith.constant 0 : i32
    %c0_i32_1 = arith.constant 0 : i32
    return %c0_i32, %c0_i32_0 : i32, i32
  }
  func.func @transform_9(%arg0: i32) -> (i32, i32) {
    %c0_i32 = arith.constant 0 : i32
    %c0_i32_0 = arith.constant 0 : i32
    %c0_i32_1 = arith.constant 0 : i32
    return %c0_i32, %c0_i32_0 : i32, i32
  }
  func.func @transform_10(%arg0: i32) -> (i32, i32) {
    %c0_i32 = arith.constant 0 : i32
    %c0_i32_0 = arith.constant 0 : i32
    %c0_i32_1 = arith.constant 0 : i32
    return %c0_i32, %c0_i32_0 : i32, i32
  }
  func.func @transform_11(%arg0: i32) -> (i32, i32, i32, i32) {
    %c0_i32 = arith.constant 0 : i32
    %c0_i32_0 = arith.constant 0 : i32
    %c0_i32_1 = arith.constant 0 : i32
    %c0_i32_2 = arith.constant 0 : i32
    return %arg0, %c0_i32, %c0_i32_0, %c0_i32_1 : i32, i32, i32, i32
  }
}

</mosaic_0001>

<llo_original>
// kernel: conv_block_forward.1
$region0: #{conv_block_forward.1}
  #allocation0 [shape = 'u32[]', space=smem, size = 0x4, offset = 0x4, fixed_abs, tag = 'smem constant byte address 0x4 - core index']
  #allocation1 [shape = 'u32[144,128]{1,0:T(1,128)}', space=vmem, size = 0x12000, scoped, tag = 'internal scratch']
  #allocation2 [shape = 'f32[18,18,32]{2,1,0:T(8,128)}', space=vmem, size = 0x36000, scoped, tag = 'scratch operand']
  #allocation3 [shape = 'f32[18,18,32]{2,1,0:T(8,128)}', space=vmem, size = 0x36000, scoped, tag = 'scratch operand']
  #allocation4 [shape = 'f32[18,18,32]{2,1,0:T(8,128)}', space=vmem, size = 0x36000, scoped, tag = 'scratch operand']
  %s0 = inlined_call_operand.vmem [shape: f32[2,16,16,32], index: 0, kind: input, shape index: {}]
  %s1 = inlined_call_operand.vmem [shape: f32[2,16,16,32], index: 1, kind: input, shape index: {}]
  %s2 = inlined_call_operand.vmem [shape: bf16[288,32], index: 2, kind: input, shape index: {}]
  %s3 = inlined_call_operand.vmem [shape: bf16[288,32], index: 3, kind: input, shape index: {}]
  %s4 = inlined_call_operand.vmem [shape: bf16[288,32], index: 4, kind: input, shape index: {}]
  %s5 = inlined_call_operand.vmem [shape: f32[1,32], index: 5, kind: input, shape index: {}]
  %s6 = inlined_call_operand.vmem [shape: f32[1,32], index: 6, kind: input, shape index: {}]
  %s7 = inlined_call_operand.vmem [shape: f32[1,32], index: 7, kind: input, shape index: {}]
  %s8 = inlined_call_operand.vmem [shape: f32[1,32], index: 8, kind: input, shape index: {}]
  %s9 = inlined_call_operand.vmem [shape: f32[1,32], index: 9, kind: input, shape index: {}]
  %s10 = inlined_call_operand.vmem [shape: f32[1,32], index: 10, kind: input, shape index: {}]
  %s11 = inlined_call_operand.hbm [shape: f32[2,16,16,32], index: 11, kind: output, shape index: {}]
  %s12 = sld [smem:[#allocation0]]
  $region77: #{conv_block_forward.1} parent=0
    _
  %s14 = ssub.s32 1, %s12
  %s15 = scalar_select 0, %s14, %s12
  $region1: #{conv_block_forward.1} parent=0
    #allocation5 [shape = 'u8[262144]{0}', space=vmem, size = 0x40000, scoped, tag = 'output window, operand 0']
    #allocation6 [shape = 's32[2]{0}', space=sflag, size = 0x8, scoped, tag = 'scoped memory for conv_block_forward.1']
    %16 = vsyncpa [#allocation6], 0
    %s17 = scalar_lea.sflag [#allocation6], 1
    %18 = vsyncpa %s17, 0
    loop: start=0, step=1, limit=4
    $region2: #{conv_block_forward.1} parent=1 // loop_pre_header
      _
    $region3: #{conv_block_forward.1} parent=1 // loop_header
      %s20 = sphi 0, %s24
      %p21 = scmp.ge.s32.totalorder %s20, 4
      %s30 = sphi 0, %s32
      %s33 = sphi 0, %s30
      %s34 = sphi 0, %s33
      %s50 = sphi 0, %s34
      %s56 = sphi 0, %s58
      %s59 = sphi 0, %s56
      %s60 = sphi 0, %s59
      %s76 = sphi 0, %s60
      %s80 = sphi 0, %s80
      %s82 = sphi 0, %s80
      %s83 = sphi 0, %s82
      %s97 = sphi 0, %s83
      %s101 = sphi 0, %s101
      %s103 = sphi 0, %s101
      %s104 = sphi 0, %s103
      %s118 = sphi 0, %s104
      %s122 = sphi 0, %s122
      %s124 = sphi 0, %s122
      %s125 = sphi 0, %s124
      %s139 = sphi 0, %s125
      %s143 = sphi 0, %s143
      %s145 = sphi 0, %s143
      %s146 = sphi 0, %s145
      %s160 = sphi 0, %s146
      %s164 = sphi 0, %s164
      %s166 = sphi 0, %s164
      %s167 = sphi 0, %s166
      %s181 = sphi 0, %s167
      %s185 = sphi 0, %s185
      %s187 = sphi 0, %s185
      %s188 = sphi 0, %s187
      %s202 = sphi 0, %s188
      %s206 = sphi 0, %s206
      %s208 = sphi 0, %s206
      %s209 = sphi 0, %s208
      %s223 = sphi 0, %s209
      %s227 = sphi 0, %s227
      %s229 = sphi 0, %s227
      %s230 = sphi 0, %s229
      %s244 = sphi 0, %s230
      %s248 = sphi 0, %s248
      %s250 = sphi 0, %s248
      %s251 = sphi 0, %s250
      %s265 = sphi 0, %s251
      %s271 = sphi 0, %s273
      %s274 = sphi 0, %s271
      %s275 = sphi 0, %s274
      %s291 = sphi 0, %s275
    $region4: #{conv_block_forward.1} parent=1 // loop_header_branch
      %23 = sbr.rel (%p21) target = $region8
    $region5: #{conv_block_forward.1} parent=1 // loop_body
      %s25 = ssub.s32 %s20, 1
      %s26 = ssub.s32 %s20, 2
      %s27 = sadd.s32 %s20, 1
      %s28 = ssub.s32 %s20, %s27
      %p29 = scmp.eq.s32.totalorder %s28, 0
      %s31 = sadd.s32 %s30, 1
      %s32 = scalar_select %p29, %s30, %s31
      %p35 = pneg %p29
      %p36 = scmp.eq.s32.totalorder %s20, 1
      %p37 = por %p35, %p36
      %p38 = scmp.ne.s32.totalorder %s30, %s33
      %p39 = scmp.eq.s32.totalorder %s20, 0
      %p40 = por %p38, %p39
      %p41 = scmp.ne.s32.totalorder %s30, %s33
      %p42 = scmp.eq.s32.totalorder %s25, 1
      %p43 = por %p41, %p42
      %p44 = scmp.ne.s32.totalorder %s33, %s34
      %p45 = scmp.eq.s32.totalorder %s25, 0
      %p46 = por %p44, %p45
      %p47 = scmp.ne.s32.totalorder %s33, %s34
      %p48 = scmp.eq.s32.totalorder %s26, 1
      %p49 = por %p47, %p48
      %p51 = scmp.ne.s32.totalorder %s34, %s50
      %p52 = scmp.eq.s32.totalorder %s26, 0
      %p53 = por %p51, %p52
      %s54 = ssub.s32 %s20, %s27
      %p55 = scmp.eq.s32.totalorder %s54, 0
      %s57 = sadd.s32 %s56, 1
      %s58 = scalar_select %p55, %s56, %s57
      %p61 = pneg %p55
      %p62 = scmp.eq.s32.totalorder %s20, 1
      %p63 = por %p61, %p62
      %p64 = scmp.ne.s32.totalorder %s56, %s59
      %p65 = scmp.eq.s32.totalorder %s20, 0
      %p66 = por %p64, %p65
      %p67 = scmp.ne.s32.totalorder %s56, %s59
      %p68 = scmp.eq.s32.totalorder %s25, 1
      %p69 = por %p67, %p68
      %p70 = scmp.ne.s32.totalorder %s59, %s60
      %p71 = scmp.eq.s32.totalorder %s25, 0
      %p72 = por %p70, %p71
      %p73 = scmp.ne.s32.totalorder %s59, %s60
      %p74 = scmp.eq.s32.totalorder %s26, 1
      %p75 = por %p73, %p74
      %p77 = scmp.ne.s32.totalorder %s60, %s76
      %p78 = scmp.eq.s32.totalorder %s26, 0
      %p79 = por %p77, %p78
      %s81 = sadd.s32 %s80, 1
      %p84 = scmp.eq.s32.totalorder %s20, 1
      %p85 = scmp.ne.s32.totalorder %s80, %s82
      %p86 = scmp.eq.s32.totalorder %s20, 0
      %p87 = por %p85, %p86
      %p88 = scmp.ne.s32.totalorder %s80, %s82
      %p89 = scmp.eq.s32.totalorder %s25, 1
      %p90 = por %p88, %p89
      %p91 = scmp.ne.s32.totalorder %s82, %s83
      %p92 = scmp.eq.s32.totalorder %s25, 0
      %p93 = por %p91, %p92
      %p94 = scmp.ne.s32.totalorder %s82, %s83
      %p95 = scmp.eq.s32.totalorder %s26, 1
      %p96 = por %p94, %p95
      %p98 = scmp.ne.s32.totalorder %s83, %s97
      %p99 = scmp.eq.s32.totalorder %s26, 0
      %p100 = por %p98, %p99
      %s102 = sadd.s32 %s101, 1
      %p105 = scmp.eq.s32.totalorder %s20, 1
      %p106 = scmp.ne.s32.totalorder %s101, %s103
      %p107 = scmp.eq.s32.totalorder %s20, 0
      %p108 = por %p106, %p107
      %p109 = scmp.ne.s32.totalorder %s101, %s103
      %p110 = scmp.eq.s32.totalorder %s25, 1
      %p111 = por %p109, %p110
      %p112 = scmp.ne.s32.totalorder %s103, %s104
      %p113 = scmp.eq.s32.totalorder %s25, 0
      %p114 = por %p112, %p113
      %p115 = scmp.ne.s32.totalorder %s103, %s104
      %p116 = scmp.eq.s32.totalorder %s26, 1
      %p117 = por %p115, %p116
      %p119 = scmp.ne.s32.totalorder %s104, %s118
      %p120 = scmp.eq.s32.totalorder %s26, 0
      %p121 = por %p119, %p120
      %s123 = sadd.s32 %s122, 1
      %p126 = scmp.eq.s32.totalorder %s20, 1
      %p127 = scmp.ne.s32.totalorder %s122, %s124
      %p128 = scmp.eq.s32.totalorder %s20, 0
      %p129 = por %p127, %p128
      %p130 = scmp.ne.s32.totalorder %s122, %s124
      %p131 = scmp.eq.s32.totalorder %s25, 1
      %p132 = por %p130, %p131
      %p133 = scmp.ne.s32.totalorder %s124, %s125
      %p134 = scmp.eq.s32.totalorder %s25, 0
      %p135 = por %p133, %p134
      %p136 = scmp.ne.s32.totalorder %s124, %s125
      %p137 = scmp.eq.s32.totalorder %s26, 1
      %p138 = por %p136, %p137
      %p140 = scmp.ne.s32.totalorder %s125, %s139
      %p141 = scmp.eq.s32.totalorder %s26, 0
      %p142 = por %p140, %p141
      %s144 = sadd.s32 %s143, 1
      %p147 = scmp.eq.s32.totalorder %s20, 1
      %p148 = scmp.ne.s32.totalorder %s143, %s145
      %p149 = scmp.eq.s32.totalorder %s20, 0
      %p150 = por %p148, %p149
      %p151 = scmp.ne.s32.totalorder %s143, %s145
      %p152 = scmp.eq.s32.totalorder %s25, 1
      %p153 = por %p151, %p152
      %p154 = scmp.ne.s32.totalorder %s145, %s146
      %p155 = scmp.eq.s32.totalorder %s25, 0
      %p156 = por %p154, %p155
      %p157 = scmp.ne.s32.totalorder %s145, %s146
      %p158 = scmp.eq.s32.totalorder %s26, 1
      %p159 = por %p157, %p158
      %p161 = scmp.ne.s32.totalorder %s146, %s160
      %p162 = scmp.eq.s32.totalorder %s26, 0
      %p163 = por %p161, %p162
      %s165 = sadd.s32 %s164, 1
      %p168 = scmp.eq.s32.totalorder %s20, 1
      %p169 = scmp.ne.s32.totalorder %s164, %s166
      %p170 = scmp.eq.s32.totalorder %s20, 0
      %p171 = por %p169, %p170
      %p172 = scmp.ne.s32.totalorder %s164, %s166
      %p173 = scmp.eq.s32.totalorder %s25, 1
      %p174 = por %p172, %p173
      %p175 = scmp.ne.s32.totalorder %s166, %s167
      %p176 = scmp.eq.s32.totalorder %s25, 0
      %p177 = por %p175, %p176
      %p178 = scmp.ne.s32.totalorder %s166, %s167
      %p179 = scmp.eq.s32.totalorder %s26, 1
      %p180 = por %p178, %p179
      %p182 = scmp.ne.s32.totalorder %s167, %s181
      %p183 = scmp.eq.s32.totalorder %s26, 0
      %p184 = por %p182, %p183
      %s186 = sadd.s32 %s185, 1
      %p189 = scmp.eq.s32.totalorder %s20, 1
      %p190 = scmp.ne.s32.totalorder %s185, %s187
      %p191 = scmp.eq.s32.totalorder %s20, 0
      %p192 = por %p190, %p191
      %p193 = scmp.ne.s32.totalorder %s185, %s187
      %p194 = scmp.eq.s32.totalorder %s25, 1
      %p195 = por %p193, %p194
      %p196 = scmp.ne.s32.totalorder %s187, %s188
      %p197 = scmp.eq.s32.totalorder %s25, 0
      %p198 = por %p196, %p197
      %p199 = scmp.ne.s32.totalorder %s187, %s188
      %p200 = scmp.eq.s32.totalorder %s26, 1
      %p201 = por %p199, %p200
      %p203 = scmp.ne.s32.totalorder %s188, %s202
      %p204 = scmp.eq.s32.totalorder %s26, 0
      %p205 = por %p203, %p204
      %s207 = sadd.s32 %s206, 1
      %p210 = scmp.eq.s32.totalorder %s20, 1
      %p211 = scmp.ne.s32.totalorder %s206, %s208
      %p212 = scmp.eq.s32.totalorder %s20, 0
      %p213 = por %p211, %p212
      %p214 = scmp.ne.s32.totalorder %s206, %s208
      %p215 = scmp.eq.s32.totalorder %s25, 1
      %p216 = por %p214, %p215
      %p217 = scmp.ne.s32.totalorder %s208, %s209
      %p218 = scmp.eq.s32.totalorder %s25, 0
      %p219 = por %p217, %p218
      %p220 = scmp.ne.s32.totalorder %s208, %s209
      %p221 = scmp.eq.s32.totalorder %s26, 1
      %p222 = por %p220, %p221
      %p224 = scmp.ne.s32.totalorder %s209, %s223
      %p225 = scmp.eq.s32.totalorder %s26, 0
      %p226 = por %p224, %p225
      %s228 = sadd.s32 %s227, 1
      %p231 = scmp.eq.s32.totalorder %s20, 1
      %p232 = scmp.ne.s32.totalorder %s227, %s229
      %p233 = scmp.eq.s32.totalorder %s20, 0
      %p234 = por %p232, %p233
      %p235 = scmp.ne.s32.totalorder %s227, %s229
      %p236 = scmp.eq.s32.totalorder %s25, 1
      %p237 = por %p235, %p236
      %p238 = scmp.ne.s32.totalorder %s229, %s230
      %p239 = scmp.eq.s32.totalorder %s25, 0
      %p240 = por %p238, %p239
      %p241 = scmp.ne.s32.totalorder %s229, %s230
      %p242 = scmp.eq.s32.totalorder %s26, 1
      %p243 = por %p241, %p242
      %p245 = scmp.ne.s32.totalorder %s230, %s244
      %p246 = scmp.eq.s32.totalorder %s26, 0
      %p247 = por %p245, %p246
      %s249 = sadd.s32 %s248, 1
      %p252 = scmp.eq.s32.totalorder %s20, 1
      %p253 = scmp.ne.s32.totalorder %s248, %s250
      %p254 = scmp.eq.s32.totalorder %s20, 0
      %p255 = por %p253, %p254
      %p256 = scmp.ne.s32.totalorder %s248, %s250
      %p257 = scmp.eq.s32.totalorder %s25, 1
      %p258 = por %p256, %p257
      %p259 = scmp.ne.s32.totalorder %s250, %s251
      %p260 = scmp.eq.s32.totalorder %s25, 0
      %p261 = por %p259, %p260
      %p262 = scmp.ne.s32.totalorder %s250, %s251
      %p263 = scmp.eq.s32.totalorder %s26, 1
      %p264 = por %p262, %p263
      %p266 = scmp.ne.s32.totalorder %s251, %s265
      %p267 = scmp.eq.s32.totalorder %s26, 0
      %p268 = por %p266, %p267
      %s269 = ssub.s32 %s20, %s27
      %p270 = scmp.eq.s32.totalorder %s269, 0
      %s272 = sadd.s32 %s271, 1
      %s273 = scalar_select %p270, %s271, %s272
      %p276 = pneg %p270
      %p277 = scmp.eq.s32.totalorder %s20, 1
      %p278 = por %p276, %p277
      %p279 = scmp.ne.s32.totalorder %s271, %s274
      %p280 = scmp.eq.s32.totalorder %s20, 0
      %p281 = por %p279, %p280
      %p282 = scmp.ne.s32.totalorder %s271, %s274
      %p283 = scmp.eq.s32.totalorder %s25, 1
      %p284 = por %p282, %p283
      %p285 = scmp.ne.s32.totalorder %s274, %s275
      %p286 = scmp.eq.s32.totalorder %s25, 0
      %p287 = por %p285, %p286
      %p288 = scmp.ne.s32.totalorder %s274, %s275
      %p289 = scmp.eq.s32.totalorder %s26, 1
      %p290 = por %p288, %p289
      %p292 = scmp.ne.s32.totalorder %s275, %s291
      %p293 = scmp.eq.s32.totalorder %s26, 0
      %p294 = por %p292, %p293
      %p295 = scmp.le.s32.totalorder 1, %s20
      %p296 = scmp.lt.s32.totalorder %s20, 3
      %p297 = pnand %p295, %p296
      %p298 = pneg %p297
      // Predicated region
      $region9: #{conv_block_forward.1} parent=5 // pred_check
        _
      $region10: #{conv_block_forward.1} parent=5 // pred_check_branch
        %300 = sbr.rel (%p297) target = $region12
      $region11: #{conv_block_forward.1} parent=5 // pred_region
        %s301 = ssub.s32 %s20, 1
        // Predicated region
        $region13: #{conv_block_forward.1} parent=11 // pred_check
          %p302 = pneg %p93
        $region14: #{conv_block_forward.1} parent=11 // pred_check_branch
          %304 = sbr.rel (%p302) target = $region16
        $region15: #{conv_block_forward.1} parent=11 // pred_region
          _
        $region16: #{conv_block_forward.1} parent=11 // pred_fallthru
          _
        // Predicated region
        $region17: #{conv_block_forward.1} parent=11 // pred_check
          %p305 = pneg %p114
        $region18: #{conv_block_forward.1} parent=11 // pred_check_branch
          %307 = sbr.rel (%p305) target = $region20
        $region19: #{conv_block_forward.1} parent=11 // pred_region
          _
        $region20: #{conv_block_forward.1} parent=11 // pred_fallthru
          _
        // Predicated region
        $region21: #{conv_block_forward.1} parent=11 // pred_check
          %p308 = pneg %p135
        $region22: #{conv_block_forward.1} parent=11 // pred_check_branch
          %310 = sbr.rel (%p308) target = $region24
        $region23: #{conv_block_forward.1} parent=11 // pred_region
          _
        $region24: #{conv_block_forward.1} parent=11 // pred_fallthru
          _
        // Predicated region
        $region25: #{conv_block_forward.1} parent=11 // pred_check
          %p311 = pneg %p156
        $region26: #{conv_block_forward.1} parent=11 // pred_check_branch
          %313 = sbr.rel (%p311) target = $region28
        $region27: #{conv_block_forward.1} parent=11 // pred_region
          _
        $region28: #{conv_block_forward.1} parent=11 // pred_fallthru
          _
        // Predicated region
        $region29: #{conv_block_forward.1} parent=11 // pred_check
          %p314 = pneg %p177
        $region30: #{conv_block_forward.1} parent=11 // pred_check_branch
          %316 = sbr.rel (%p314) target = $region32
        $region31: #{conv_block_forward.1} parent=11 // pred_region
          _
        $region32: #{conv_block_forward.1} parent=11 // pred_fallthru
          _
        // Predicated region
        $region33: #{conv_block_forward.1} parent=11 // pred_check
          %p317 = pneg %p198
        $region34: #{conv_block_forward.1} parent=11 // pred_check_branch
          %319 = sbr.rel (%p317) target = $region36
        $region35: #{conv_block_forward.1} parent=11 // pred_region
          _
        $region36: #{conv_block_forward.1} parent=11 // pred_fallthru
          _
        // Predicated region
        $region37: #{conv_block_forward.1} parent=11 // pred_check
          %p320 = pneg %p219
        $region38: #{conv_block_forward.1} parent=11 // pred_check_branch
          %322 = sbr.rel (%p320) target = $region40
        $region39: #{conv_block_forward.1} parent=11 // pred_region
          _
        $region40: #{conv_block_forward.1} parent=11 // pred_fallthru
          _
        // Predicated region
        $region41: #{conv_block_forward.1} parent=11 // pred_check
          %p323 = pneg %p240
        $region42: #{conv_block_forward.1} parent=11 // pred_check_branch
          %325 = sbr.rel (%p323) target = $region44
        $region43: #{conv_block_forward.1} parent=11 // pred_region
          _
        $region44: #{conv_block_forward.1} parent=11 // pred_fallthru
          _
        // Predicated region
        $region45: #{conv_block_forward.1} parent=11 // pred_check
          %p326 = pneg %p261
        $region46: #{conv_block_forward.1} parent=11 // pred_check_branch
          %328 = sbr.rel (%p326) target = $region48
        $region47: #{conv_block_forward.1} parent=11 // pred_region
          _
        $region48: #{conv_block_forward.1} parent=11 // pred_fallthru
          _
      $region12: #{conv_block_forward.1} parent=5 // pred_fallthru
        _
      %p329 = scmp.lt.s32.totalorder %s20, 2
      // Predicated region
      $region49: #{conv_block_forward.1} parent=5 // pred_check
        %p330 = pneg %p329
      $region50: #{conv_block_forward.1} parent=5 // pred_check_branch
        %332 = sbr.rel (%p330) target = $region52
      $region51: #{conv_block_forward.1} parent=5 // pred_region
        // Predicated region
        $region53: #{conv_block_forward.1} parent=51 // pred_check
          %p333 = pneg %p40
        $region54: #{conv_block_forward.1} parent=51 // pred_check_branch
          %335 = sbr.rel (%p333) target = $region56
        $region55: #{conv_block_forward.1} parent=51 // pred_region
          %p336 = scmp.lt.s32.totalorder %s20, 1
          %s337 = scalar_select %p336, %s20, 1
          %s338 = smul.addr %s337, 32
          %s339 = smul.addr %s338, 8
          %s340 = scalar_lea.vmem %s0, %s339
        $region56: #{conv_block_forward.1} parent=51 // pred_fallthru
          _
        // Predicated region
        $region57: #{conv_block_forward.1} parent=51 // pred_check
          %p341 = pneg %p66
        $region58: #{conv_block_forward.1} parent=51 // pred_check_branch
          %343 = sbr.rel (%p341) target = $region60
        $region59: #{conv_block_forward.1} parent=51 // pred_region
          %p344 = scmp.lt.s32.totalorder %s20, 1
          %s345 = scalar_select %p344, %s20, 1
          %s346 = smul.addr %s345, 32
          %s347 = smul.addr %s346, 8
          %s348 = scalar_lea.vmem %s1, %s347
        $region60: #{conv_block_forward.1} parent=51 // pred_fallthru
          _
      $region52: #{conv_block_forward.1} parent=5 // pred_fallthru
        _
      %p349 = scmp.le.s32.totalorder 1, %s20
      %p350 = scmp.lt.s32.totalorder %s20, 3
      %p351 = pnand %p349, %p350
      %p352 = pneg %p351
      // Predicated region
      $region61: #{conv_block_forward.1} parent=5 // pred_check
        _
      $region62: #{conv_block_forward.1} parent=5 // pred_check_branch
        %354 = sbr.rel (%p351) target = $region64
      $region63: #{conv_block_forward.1} parent=5 // pred_region
        %s355 = ssub.s32 %s20, 1
        %p356 = scmp.lt.s32.totalorder %s25, 1
        %s357 = scalar_select %p356, %s25, 1
        %s358 = smul.addr %s357, 32
        %s359 = smul.addr %s358, 8
        %s360 = scalar_lea.vmem %s0, %s359
        %p361 = pneg %p46
        %p362 = pneg %p43
        %p363 = scmp.lt.s32.totalorder %s25, 1
        %s364 = scalar_select %p363, %s25, 1
        %s365 = smul.addr %s364, 32
        %s366 = smul.addr %s365, 8
        %s367 = scalar_lea.vmem %s1, %s366
        %p368 = pneg %p72
        %p369 = pneg %p69
        %p370 = pneg %p93
        %p371 = pneg %p90
        %p372 = pneg %p114
        %p373 = pneg %p111
        %p374 = pneg %p135
        %p375 = pneg %p132
        %p376 = pneg %p156
        %p377 = pneg %p153
        %p378 = pneg %p177
        %p379 = pneg %p174
        %p380 = pneg %p198
        %p381 = pneg %p195
        %p382 = pneg %p219
        %p383 = pneg %p216
        %p384 = pneg %p240
        %p385 = pneg %p237
        %p386 = pneg %p261
        %p387 = pneg %p258
        %p388 = pneg %p287
        %p389 = pneg %p284
        %s390 = sand.u32 %s274, 1
        %s391 = scalar_lea.sflag [#allocation6], %s390
        %s392 = sand.u32 %s274, 1
        %s393 = smul.addr %s392, 256
        %s394 = scalar_lea.vmem [#allocation5], %s393
        %p395 = scmp.lt.s32.totalorder %s25, 1
        %s396 = scalar_select %p395, %s25, 1
        %s397 = smul.addr %s396, 32
        %s398 = smul.addr %s397, 8
        %s399 = scalar_lea.vmem %s0, %s398
        %p400 = scmp.lt.s32.totalorder %s25, 1
        %s401 = scalar_select %p400, %s25, 1
        %s402 = smul.addr %s401, 32
        %s403 = smul.addr %s402, 8
        %s404 = scalar_lea.vmem %s1, %s403
        %vm406 = vcmask 261120
        %407 = vst.msk [vmem:[#allocation2] sm:$0xff] %vm406, 0.0
        %408 = vst.msk [vmem:[#allocation2 + $0x8] sm:$0xff] %vm406, 0.0
        %vm409 = vcmask 254976
        %410 = vst.msk [vmem:[#allocation2 + $0x10] sm:$0x3] %vm409, 0.0
        %411 = vst.msk [vmem:[#allocation2 + $0x18] sm:$0xff] %vm406, 0.0
        %412 = vst.msk [vmem:[#allocation2 + $0x20] sm:$0xff] %vm406, 0.0
        %413 = vst.msk [vmem:[#allocation2 + $0x28] sm:$0x3] %vm409, 0.0
        %414 = vst.msk [vmem:[#allocation2 + $0x30] sm:$0xff] %vm406, 0.0
        %415 = vst.msk [vmem:[#allocation2 + $0x38] sm:$0xff] %vm406, 0.0
        %416 = vst.msk [vmem:[#allocation2 + $0x40] sm:$0x3] %vm409, 0.0
        %417 = vst.msk [vmem:[#allocation2 + $0x48] sm:$0xff] %vm406, 0.0
        %418 = vst.msk [vmem:[#allocation2 + $0x50] sm:$0xff] %vm406, 0.0
        %419 = vst.msk [vmem:[#allocation2 + $0x58] sm:$0x3] %vm409, 0.0
        %420 = vst.msk [vmem:[#allocation2 + $0x60] sm:$0xff] %vm406, 0.0
        %421 = vst.msk [vmem:[#allocation2 + $0x68] sm:$0xff] %vm406, 0.0
        %422 = vst.msk [vmem:[#allocation2 + $0x70] sm:$0x3] %vm409, 0.0
        %423 = vst.msk [vmem:[#allocation2 + $0x78] sm:$0xff] %vm406, 0.0
        %424 = vst.msk [vmem:[#allocation2 + $0x80] sm:$0xff] %vm406, 0.0
        %425 = vst.msk [vmem:[#allocation2 + $0x88] sm:$0x3] %vm409, 0.0
        %426 = vst.msk [vmem:[#allocation2 + $0x90] sm:$0xff] %vm406, 0.0
        %427 = vst.msk [vmem:[#allocation2 + $0x98] sm:$0xff] %vm406, 0.0
        %428 = vst.msk [vmem:[#allocation2 + $0xa0] sm:$0x3] %vm409, 0.0
        %429 = vst.msk [vmem:[#allocation2 + $0xa8] sm:$0xff] %vm406, 0.0
        %430 = vst.msk [vmem:[#allocation2 + $0xb0] sm:$0xff] %vm406, 0.0
        %431 = vst.msk [vmem:[#allocation2 + $0xb8] sm:$0x3] %vm409, 0.0
        %432 = vst.msk [vmem:[#allocation2 + $0xc0] sm:$0xff] %vm406, 0.0
        %433 = vst.msk [vmem:[#allocation2 + $0xc8] sm:$0xff] %vm406, 0.0
        %434 = vst.msk [vmem:[#allocation2 + $0xd0] sm:$0x3] %vm409, 0.0
        %435 = vst.msk [vmem:[#allocation2 + $0xd8] sm:$0xff] %vm406, 0.0
        %436 = vst.msk [vmem:[#allocation2 + $0xe0] sm:$0xff] %vm406, 0.0
        %437 = vst.msk [vmem:[#allocation2 + $0xe8] sm:$0x3] %vm409, 0.0
        %438 = vst.msk [vmem:[#allocation2 + $0xf0] sm:$0xff] %vm406, 0.0
        %439 = vst.msk [vmem:[#allocation2 + $0xf8] sm:$0xff] %vm406, 0.0
        %440 = vst.msk [vmem:[#allocation2 + $0x100] sm:$0x3] %vm409, 0.0
        %441 = vst.msk [vmem:[#allocation2 + $0x108] sm:$0xff] %vm406, 0.0
        %442 = vst.msk [vmem:[#allocation2 + $0x110] sm:$0xff] %vm406, 0.0
        %443 = vst.msk [vmem:[#allocation2 + $0x118] sm:$0x3] %vm409, 0.0
        %444 = vst.msk [vmem:[#allocation2 + $0x120] sm:$0xff] %vm406, 0.0
        %445 = vst.msk [vmem:[#allocation2 + $0x128] sm:$0xff] %vm406, 0.0
        %446 = vst.msk [vmem:[#allocation2 + $0x130] sm:$0x3] %vm409, 0.0
        %447 = vst.msk [vmem:[#allocation2 + $0x138] sm:$0xff] %vm406, 0.0
        %448 = vst.msk [vmem:[#allocation2 + $0x140] sm:$0xff] %vm406, 0.0
        %449 = vst.msk [vmem:[#allocation2 + $0x148] sm:$0x3] %vm409, 0.0
        %450 = vst.msk [vmem:[#allocation2 + $0x150] sm:$0xff] %vm406, 0.0
        %451 = vst.msk [vmem:[#allocation2 + $0x158] sm:$0xff] %vm406, 0.0
        %452 = vst.msk [vmem:[#allocation2 + $0x160] sm:$0x3] %vm409, 0.0
        %453 = vst.msk [vmem:[#allocation2 + $0x168] sm:$0xff] %vm406, 0.0
        %454 = vst.msk [vmem:[#allocation2 + $0x170] sm:$0xff] %vm406, 0.0
        %455 = vst.msk [vmem:[#allocation2 + $0x178] sm:$0x3] %vm409, 0.0
        %456 = vst.msk [vmem:[#allocation2 + $0x180] sm:$0xff] %vm406, 0.0
        %457 = vst.msk [vmem:[#allocation2 + $0x188] sm:$0xff] %vm406, 0.0
        %458 = vst.msk [vmem:[#allocation2 + $0x190] sm:$0x3] %vm409, 0.0
        %459 = vst.msk [vmem:[#allocation2 + $0x198] sm:$0xff] %vm406, 0.0
        %460 = vst.msk [vmem:[#allocation2 + $0x1a0] sm:$0xff] %vm406, 0.0
        %461 = vst.msk [vmem:[#allocation2 + $0x1a8] sm:$0x3] %vm409, 0.0
        %462 = vst.msk [vmem:[#allocation3] sm:$0xff] %vm406, 0.0
        %463 = vst.msk [vmem:[#allocation3 + $0x8] sm:$0xff] %vm406, 0.0
        %464 = vst.msk [vmem:[#allocation3 + $0x10] sm:$0x3] %vm409, 0.0
        %465 = vst.msk [vmem:[#allocation3 + $0x18] sm:$0xff] %vm406, 0.0
        %466 = vst.msk [vmem:[#allocation3 + $0x20] sm:$0xff] %vm406, 0.0
        %467 = vst.msk [vmem:[#allocation3 + $0x28] sm:$0x3] %vm409, 0.0
        %468 = vst.msk [vmem:[#allocation3 + $0x30] sm:$0xff] %vm406, 0.0
        %469 = vst.msk [vmem:[#allocation3 + $0x38] sm:$0xff] %vm406, 0.0
        %470 = vst.msk [vmem:[#allocation3 + $0x40] sm:$0x3] %vm409, 0.0
        %471 = vst.msk [vmem:[#allocation3 + $0x48] sm:$0xff] %vm406, 0.0
        %472 = vst.msk [vmem:[#allocation3 + $0x50] sm:$0xff] %vm406, 0.0
        %473 = vst.msk [vmem:[#allocation3 + $0x58] sm:$0x3] %vm409, 0.0
        %474 = vst.msk [vmem:[#allocation3 + $0x60] sm:$0xff] %vm406, 0.0
        %475 = vst.msk [vmem:[#allocation3 + $0x68] sm:$0xff] %vm406, 0.0
        %476 = vst.msk [vmem:[#allocation3 + $0x70] sm:$0x3] %vm409, 0.0
        %477 = vst.msk [vmem:[#allocation3 + $0x78] sm:$0xff] %vm406, 0.0
        %478 = vst.msk [vmem:[#allocation3 + $0x80] sm:$0xff] %vm406, 0.0
        %479 = vst.msk [vmem:[#allocation3 + $0x88] sm:$0x3] %vm409, 0.0
        %480 = vst.msk [vmem:[#allocation3 + $0x90] sm:$0xff] %vm406, 0.0
        %481 = vst.msk [vmem:[#allocation3 + $0x98] sm:$0xff] %vm406, 0.0
        %482 = vst.msk [vmem:[#allocation3 + $0xa0] sm:$0x3] %vm409, 0.0
        %483 = vst.msk [vmem:[#allocation3 + $0xa8] sm:$0xff] %vm406, 0.0
        %484 = vst.msk [vmem:[#allocation3 + $0xb0] sm:$0xff] %vm406, 0.0
        %485 = vst.msk [vmem:[#allocation3 + $0xb8] sm:$0x3] %vm409, 0.0
        %486 = vst.msk [vmem:[#allocation3 + $0xc0] sm:$0xff] %vm406, 0.0
        %487 = vst.msk [vmem:[#allocation3 + $0xc8] sm:$0xff] %vm406, 0.0
        %488 = vst.msk [vmem:[#allocation3 + $0xd0] sm:$0x3] %vm409, 0.0
        %489 = vst.msk [vmem:[#allocation3 + $0xd8] sm:$0xff] %vm406, 0.0
        %490 = vst.msk [vmem:[#allocation3 + $0xe0] sm:$0xff] %vm406, 0.0
        %491 = vst.msk [vmem:[#allocation3 + $0xe8] sm:$0x3] %vm409, 0.0
        %492 = vst.msk [vmem:[#allocation3 + $0xf0] sm:$0xff] %vm406, 0.0
        %493 = vst.msk [vmem:[#allocation3 + $0xf8] sm:$0xff] %vm406, 0.0
        %494 = vst.msk [vmem:[#allocation3 + $0x100] sm:$0x3] %vm409, 0.0
        %495 = vst.msk [vmem:[#allocation3 + $0x108] sm:$0xff] %vm406, 0.0
        %496 = vst.msk [vmem:[#allocation3 + $0x110] sm:$0xff] %vm406, 0.0
        %497 = vst.msk [vmem:[#allocation3 + $0x118] sm:$0x3] %vm409, 0.0
        %498 = vst.msk [vmem:[#allocation3 + $0x120] sm:$0xff] %vm406, 0.0
        %499 = vst.msk [vmem:[#allocation3 + $0x128] sm:$0xff] %vm406, 0.0
        %500 = vst.msk [vmem:[#allocation3 + $0x130] sm:$0x3] %vm409, 0.0
        %501 = vst.msk [vmem:[#allocation3 + $0x138] sm:$0xff] %vm406, 0.0
        %502 = vst.msk [vmem:[#allocation3 + $0x140] sm:$0xff] %vm406, 0.0
        %503 = vst.msk [vmem:[#allocation3 + $0x148] sm:$0x3] %vm409, 0.0
        %504 = vst.msk [vmem:[#allocation3 + $0x150] sm:$0xff] %vm406, 0.0
        %505 = vst.msk [vmem:[#allocation3 + $0x158] sm:$0xff] %vm406, 0.0
        %506 = vst.msk [vmem:[#allocation3 + $0x160] sm:$0x3] %vm409, 0.0
        %507 = vst.msk [vmem:[#allocation3 + $0x168] sm:$0xff] %vm406, 0.0
        %508 = vst.msk [vmem:[#allocation3 + $0x170] sm:$0xff] %vm406, 0.0
        %509 = vst.msk [vmem:[#allocation3 + $0x178] sm:$0x3] %vm409, 0.0
        %510 = vst.msk [vmem:[#allocation3 + $0x180] sm:$0xff] %vm406, 0.0
        %511 = vst.msk [vmem:[#allocation3 + $0x188] sm:$0xff] %vm406, 0.0
        %512 = vst.msk [vmem:[#allocation3 + $0x190] sm:$0x3] %vm409, 0.0
        %513 = vst.msk [vmem:[#allocation3 + $0x198] sm:$0xff] %vm406, 0.0
        %514 = vst.msk [vmem:[#allocation3 + $0x1a0] sm:$0xff] %vm406, 0.0
        %515 = vst.msk [vmem:[#allocation3 + $0x1a8] sm:$0x3] %vm409, 0.0
        %516 = vst.msk [vmem:[#allocation4] sm:$0xff] %vm406, 0.0
        %517 = vst.msk [vmem:[#allocation4 + $0x8] sm:$0xff] %vm406, 0.0
        %518 = vst.msk [vmem:[#allocation4 + $0x10] sm:$0x3] %vm409, 0.0
        %519 = vst.msk [vmem:[#allocation4 + $0x18] sm:$0xff] %vm406, 0.0
        %520 = vst.msk [vmem:[#allocation4 + $0x20] sm:$0xff] %vm406, 0.0
        %521 = vst.msk [vmem:[#allocation4 + $0x28] sm:$0x3] %vm409, 0.0
        %522 = vst.msk [vmem:[#allocation4 + $0x30] sm:$0xff] %vm406, 0.0
        %523 = vst.msk [vmem:[#allocation4 + $0x38] sm:$0xff] %vm406, 0.0
        %524 = vst.msk [vmem:[#allocation4 + $0x40] sm:$0x3] %vm409, 0.0
        %525 = vst.msk [vmem:[#allocation4 + $0x48] sm:$0xff] %vm406, 0.0
        %526 = vst.msk [vmem:[#allocation4 + $0x50] sm:$0xff] %vm406, 0.0
        %527 = vst.msk [vmem:[#allocation4 + $0x58] sm:$0x3] %vm409, 0.0
        %528 = vst.msk [vmem:[#allocation4 + $0x60] sm:$0xff] %vm406, 0.0
        %529 = vst.msk [vmem:[#allocation4 + $0x68] sm:$0xff] %vm406, 0.0
        %530 = vst.msk [vmem:[#allocation4 + $0x70] sm:$0x3] %vm409, 0.0
        %531 = vst.msk [vmem:[#allocation4 + $0x78] sm:$0xff] %vm406, 0.0
        %532 = vst.msk [vmem:[#allocation4 + $0x80] sm:$0xff] %vm406, 0.0
        %533 = vst.msk [vmem:[#allocation4 + $0x88] sm:$0x3] %vm409, 0.0
        %534 = vst.msk [vmem:[#allocation4 + $0x90] sm:$0xff] %vm406, 0.0
        %535 = vst.msk [vmem:[#allocation4 + $0x98] sm:$0xff] %vm406, 0.0
        %536 = vst.msk [vmem:[#allocation4 + $0xa0] sm:$0x3] %vm409, 0.0
        %537 = vst.msk [vmem:[#allocation4 + $0xa8] sm:$0xff] %vm406, 0.0
        %538 = vst.msk [vmem:[#allocation4 + $0xb0] sm:$0xff] %vm406, 0.0
        %539 = vst.msk [vmem:[#allocation4 + $0xb8] sm:$0x3] %vm409, 0.0
        %540 = vst.msk [vmem:[#allocation4 + $0xc0] sm:$0xff] %vm406, 0.0
        %541 = vst.msk [vmem:[#allocation4 + $0xc8] sm:$0xff] %vm406, 0.0
        %542 = vst.msk [vmem:[#allocation4 + $0xd0] sm:$0x3] %vm409, 0.0
        %543 = vst.msk [vmem:[#allocation4 + $0xd8] sm:$0xff] %vm406, 0.0
        %544 = vst.msk [vmem:[#allocation4 + $0xe0] sm:$0xff] %vm406, 0.0
        %545 = vst.msk [vmem:[#allocation4 + $0xe8] sm:$0x3] %vm409, 0.0
        %546 = vst.msk [vmem:[#allocation4 + $0xf0] sm:$0xff] %vm406, 0.0
        %547 = vst.msk [vmem:[#allocation4 + $0xf8] sm:$0xff] %vm406, 0.0
        %548 = vst.msk [vmem:[#allocation4 + $0x100] sm:$0x3] %vm409, 0.0
        %549 = vst.msk [vmem:[#allocation4 + $0x108] sm:$0xff] %vm406, 0.0
        %550 = vst.msk [vmem:[#allocation4 + $0x110] sm:$0xff] %vm406, 0.0
        %551 = vst.msk [vmem:[#allocation4 + $0x118] sm:$0x3] %vm409, 0.0
        %552 = vst.msk [vmem:[#allocation4 + $0x120] sm:$0xff] %vm406, 0.0
        %553 = vst.msk [vmem:[#allocation4 + $0x128] sm:$0xff] %vm406, 0.0
        %554 = vst.msk [vmem:[#allocation4 + $0x130] sm:$0x3] %vm409, 0.0
        %555 = vst.msk [vmem:[#allocation4 + $0x138] sm:$0xff] %vm406, 0.0
        %556 = vst.msk [vmem:[#allocation4 + $0x140] sm:$0xff] %vm406, 0.0
        %557 = vst.msk [vmem:[#allocation4 + $0x148] sm:$0x3] %vm409, 0.0
        %558 = vst.msk [vmem:[#allocation4 + $0x150] sm:$0xff] %vm406, 0.0
        %559 = vst.msk [vmem:[#allocation4 + $0x158] sm:$0xff] %vm406, 0.0
        %560 = vst.msk [vmem:[#allocation4 + $0x160] sm:$0x3] %vm409, 0.0
        %561 = vst.msk [vmem:[#allocation4 + $0x168] sm:$0xff] %vm406, 0.0
        %562 = vst.msk [vmem:[#allocation4 + $0x170] sm:$0xff] %vm406, 0.0
        %563 = vst.msk [vmem:[#allocation4 + $0x178] sm:$0x3] %vm409, 0.0
        %564 = vst.msk [vmem:[#allocation4 + $0x180] sm:$0xff] %vm406, 0.0
        %565 = vst.msk [vmem:[#allocation4 + $0x188] sm:$0xff] %vm406, 0.0
        %566 = vst.msk [vmem:[#allocation4 + $0x190] sm:$0x3] %vm409, 0.0
        %567 = vst.msk [vmem:[#allocation4 + $0x198] sm:$0xff] %vm406, 0.0
        %568 = vst.msk [vmem:[#allocation4 + $0x1a0] sm:$0xff] %vm406, 0.0
        %569 = vst.msk [vmem:[#allocation4 + $0x1a8] sm:$0x3] %vm409, 0.0
        %v570 = vld [vmem:[%s399] sm:$0xff]
        %v571 = vld [vmem:[%s399 + $0x8] sm:$0xff]
        %v572 = vld [vmem:[%s399 + $0x10] sm:$0xff]
        %v573 = vld [vmem:[%s399 + $0x18] sm:$0xff]
        %v574 = vld [vmem:[%s399 + $0x20] sm:$0xff]
        %v575 = vld [vmem:[%s399 + $0x28] sm:$0xff]
        %v576 = vld [vmem:[%s399 + $0x30] sm:$0xff]
        %v577 = vld [vmem:[%s399 + $0x38] sm:$0xff]
        %v578 = vld [vmem:[%s399 + $0x40] sm:$0xff]
        %v579 = vld [vmem:[%s399 + $0x48] sm:$0xff]
        %v580 = vld [vmem:[%s399 + $0x50] sm:$0xff]
        %v581 = vld [vmem:[%s399 + $0x58] sm:$0xff]
        %v582 = vld [vmem:[%s399 + $0x60] sm:$0xff]
        %v583 = vld [vmem:[%s399 + $0x68] sm:$0xff]
        %v584 = vld [vmem:[%s399 + $0x70] sm:$0xff]
        %v585 = vld [vmem:[%s399 + $0x78] sm:$0xff]
        %v586 = vld [vmem:[%s399 + $0x80] sm:$0xff]
        %v587 = vld [vmem:[%s399 + $0x88] sm:$0xff]
        %v588 = vld [vmem:[%s399 + $0x90] sm:$0xff]
        %v589 = vld [vmem:[%s399 + $0x98] sm:$0xff]
        %v590 = vld [vmem:[%s399 + $0xa0] sm:$0xff]
        %v591 = vld [vmem:[%s399 + $0xa8] sm:$0xff]
        %v592 = vld [vmem:[%s399 + $0xb0] sm:$0xff]
        %v593 = vld [vmem:[%s399 + $0xb8] sm:$0xff]
        %v594 = vld [vmem:[%s399 + $0xc0] sm:$0xff]
        %v595 = vld [vmem:[%s399 + $0xc8] sm:$0xff]
        %v596 = vld [vmem:[%s399 + $0xd0] sm:$0xff]
        %v597 = vld [vmem:[%s399 + $0xd8] sm:$0xff]
        %v598 = vld [vmem:[%s399 + $0xe0] sm:$0xff]
        %v599 = vld [vmem:[%s399 + $0xe8] sm:$0xff]
        %v600 = vld [vmem:[%s399 + $0xf0] sm:$0xff]
        %v601 = vld [vmem:[%s399 + $0xf8] sm:$0xff]
        %s602 = scalar_lea.vmem [#allocation2], 24
        %603 = vst.msk [vmem:[%s602 + $0x1] sm:$0xff] %vm406, %v570
        %604 = vst.msk [vmem:[%s602 + $0x9] sm:$0xff] %vm406, %v571
        %605 = vst.msk [vmem:[%s602 + $0x19] sm:$0xff] %vm406, %v572
        %606 = vst.msk [vmem:[%s602 + $0x21] sm:$0xff] %vm406, %v573
        %607 = vst.msk [vmem:[%s602 + $0x31] sm:$0xff] %vm406, %v574
        %608 = vst.msk [vmem:[%s602 + $0x39] sm:$0xff] %vm406, %v575
        %609 = vst.msk [vmem:[%s602 + $0x49] sm:$0xff] %vm406, %v576
        %610 = vst.msk [vmem:[%s602 + $0x51] sm:$0xff] %vm406, %v577
        %611 = vst.msk [vmem:[%s602 + $0x61] sm:$0xff] %vm406, %v578
        %612 = vst.msk [vmem:[%s602 + $0x69] sm:$0xff] %vm406, %v579
        %613 = vst.msk [vmem:[%s602 + $0x79] sm:$0xff] %vm406, %v580
        %614 = vst.msk [vmem:[%s602 + $0x81] sm:$0xff] %vm406, %v581
        %615 = vst.msk [vmem:[%s602 + $0x91] sm:$0xff] %vm406, %v582
        %616 = vst.msk [vmem:[%s602 + $0x99] sm:$0xff] %vm406, %v583
        %617 = vst.msk [vmem:[%s602 + $0xa9] sm:$0xff] %vm406, %v584
        %618 = vst.msk [vmem:[%s602 + $0xb1] sm:$0xff] %vm406, %v585
        %619 = vst.msk [vmem:[%s602 + $0xc1] sm:$0xff] %vm406, %v586
        %620 = vst.msk [vmem:[%s602 + $0xc9] sm:$0xff] %vm406, %v587
        %621 = vst.msk [vmem:[%s602 + $0xd9] sm:$0xff] %vm406, %v588
        %622 = vst.msk [vmem:[%s602 + $0xe1] sm:$0xff] %vm406, %v589
        %623 = vst.msk [vmem:[%s602 + $0xf1] sm:$0xff] %vm406, %v590
        %624 = vst.msk [vmem:[%s602 + $0xf9] sm:$0xff] %vm406, %v591
        %625 = vst.msk [vmem:[%s602 + $0x109] sm:$0xff] %vm406, %v592
        %626 = vst.msk [vmem:[%s602 + $0x111] sm:$0xff] %vm406, %v593
        %627 = vst.msk [vmem:[%s602 + $0x121] sm:$0xff] %vm406, %v594
        %628 = vst.msk [vmem:[%s602 + $0x129] sm:$0xff] %vm406, %v595
        %629 = vst.msk [vmem:[%s602 + $0x139] sm:$0xff] %vm406, %v596
        %630 = vst.msk [vmem:[%s602 + $0x141] sm:$0xff] %vm406, %v597
        %631 = vst.msk [vmem:[%s602 + $0x151] sm:$0xff] %vm406, %v598
        %632 = vst.msk [vmem:[%s602 + $0x159] sm:$0xff] %vm406, %v599
        %633 = vst.msk [vmem:[%s602 + $0x169] sm:$0xff] %vm406, %v600
        %634 = vst.msk [vmem:[%s602 + $0x171] sm:$0xff] %vm406, %v601
        %v635 = vld [vmem:[%s404] sm:$0xff]
        %v636 = vld [vmem:[%s404 + $0x8] sm:$0xff]
        %v637 = vld [vmem:[%s404 + $0x10] sm:$0xff]
        %v638 = vld [vmem:[%s404 + $0x18] sm:$0xff]
        %v639 = vld [vmem:[%s404 + $0x20] sm:$0xff]
        %v640 = vld [vmem:[%s404 + $0x28] sm:$0xff]
        %v641 = vld [vmem:[%s404 + $0x30] sm:$0xff]
        %v642 = vld [vmem:[%s404 + $0x38] sm:$0xff]
        %v643 = vld [vmem:[%s404 + $0x40] sm:$0xff]
        %v644 = vld [vmem:[%s404 + $0x48] sm:$0xff]
        %v645 = vld [vmem:[%s404 + $0x50] sm:$0xff]
        %v646 = vld [vmem:[%s404 + $0x58] sm:$0xff]
        %v647 = vld [vmem:[%s404 + $0x60] sm:$0xff]
        %v648 = vld [vmem:[%s404 + $0x68] sm:$0xff]
        %v649 = vld [vmem:[%s404 + $0x70] sm:$0xff]
        %v650 = vld [vmem:[%s404 + $0x78] sm:$0xff]
        %v651 = vld [vmem:[%s404 + $0x80] sm:$0xff]
        %v652 = vld [vmem:[%s404 + $0x88] sm:$0xff]
        %v653 = vld [vmem:[%s404 + $0x90] sm:$0xff]
        %v654 = vld [vmem:[%s404 + $0x98] sm:$0xff]
        %v655 = vld [vmem:[%s404 + $0xa0] sm:$0xff]
        %v656 = vld [vmem:[%s404 + $0xa8] sm:$0xff]
        %v657 = vld [vmem:[%s404 + $0xb0] sm:$0xff]
        %v658 = vld [vmem:[%s404 + $0xb8] sm:$0xff]
        %v659 = vld [vmem:[%s404 + $0xc0] sm:$0xff]
        %v660 = vld [vmem:[%s404 + $0xc8] sm:$0xff]
        %v661 = vld [vmem:[%s404 + $0xd0] sm:$0xff]
        %v662 = vld [vmem:[%s404 + $0xd8] sm:$0xff]
        %v663 = vld [vmem:[%s404 + $0xe0] sm:$0xff]
        %v664 = vld [vmem:[%s404 + $0xe8] sm:$0xff]
        %v665 = vld [vmem:[%s404 + $0xf0] sm:$0xff]
        %v666 = vld [vmem:[%s404 + $0xf8] sm:$0xff]
        %s667 = scalar_lea.vmem [#allocation3], 24
        %668 = vst.msk [vmem:[%s667 + $0x1] sm:$0xff] %vm406, %v635
        %669 = vst.msk [vmem:[%s667 + $0x9] sm:$0xff] %vm406, %v636
        %670 = vst.msk [vmem:[%s667 + $0x19] sm:$0xff] %vm406, %v637
        %671 = vst.msk [vmem:[%s667 + $0x21] sm:$0xff] %vm406, %v638
        %672 = vst.msk [vmem:[%s667 + $0x31] sm:$0xff] %vm406, %v639
        %673 = vst.msk [vmem:[%s667 + $0x39] sm:$0xff] %vm406, %v640
        %674 = vst.msk [vmem:[%s667 + $0x49] sm:$0xff] %vm406, %v641
        %675 = vst.msk [vmem:[%s667 + $0x51] sm:$0xff] %vm406, %v642
        %676 = vst.msk [vmem:[%s667 + $0x61] sm:$0xff] %vm406, %v643
        %677 = vst.msk [vmem:[%s667 + $0x69] sm:$0xff] %vm406, %v644
        %678 = vst.msk [vmem:[%s667 + $0x79] sm:$0xff] %vm406, %v645
        %679 = vst.msk [vmem:[%s667 + $0x81] sm:$0xff] %vm406, %v646
        %680 = vst.msk [vmem:[%s667 + $0x91] sm:$0xff] %vm406, %v647
        %681 = vst.msk [vmem:[%s667 + $0x99] sm:$0xff] %vm406, %v648
        %682 = vst.msk [vmem:[%s667 + $0xa9] sm:$0xff] %vm406, %v649
        %683 = vst.msk [vmem:[%s667 + $0xb1] sm:$0xff] %vm406, %v650
        %684 = vst.msk [vmem:[%s667 + $0xc1] sm:$0xff] %vm406, %v651
        %685 = vst.msk [vmem:[%s667 + $0xc9] sm:$0xff] %vm406, %v652
        %686 = vst.msk [vmem:[%s667 + $0xd9] sm:$0xff] %vm406, %v653
        %687 = vst.msk [vmem:[%s667 + $0xe1] sm:$0xff] %vm406, %v654
        %688 = vst.msk [vmem:[%s667 + $0xf1] sm:$0xff] %vm406, %v655
        %689 = vst.msk [vmem:[%s667 + $0xf9] sm:$0xff] %vm406, %v656
        %690 = vst.msk [vmem:[%s667 + $0x109] sm:$0xff] %vm406, %v657
        %691 = vst.msk [vmem:[%s667 + $0x111] sm:$0xff] %vm406, %v658
        %692 = vst.msk [vmem:[%s667 + $0x121] sm:$0xff] %vm406, %v659
        %693 = vst.msk [vmem:[%s667 + $0x129] sm:$0xff] %vm406, %v660
        %694 = vst.msk [vmem:[%s667 + $0x139] sm:$0xff] %vm406, %v661
        %695 = vst.msk [vmem:[%s667 + $0x141] sm:$0xff] %vm406, %v662
        %696 = vst.msk [vmem:[%s667 + $0x151] sm:$0xff] %vm406, %v663
        %697 = vst.msk [vmem:[%s667 + $0x159] sm:$0xff] %vm406, %v664
        %698 = vst.msk [vmem:[%s667 + $0x169] sm:$0xff] %vm406, %v665
        %699 = vst.msk [vmem:[%s667 + $0x171] sm:$0xff] %vm406, %v666
        %v700 = vld [vmem:[#allocation3] sm:$0xff]
        %v701 = vld [vmem:[#allocation3 + $0x8] sm:$0xff]
        %v702 = vld [vmem:[#allocation3 + $0x10] sm:$0x3]
        %v703 = vld [vmem:[#allocation3 + $0x18] sm:$0xff]
        %v704 = vld [vmem:[#allocation3 + $0x20] sm:$0xff]
        %v705 = vld [vmem:[#allocation3 + $0x28] sm:$0x3]
        %v706 = vld [vmem:[#allocation3 + $0x30] sm:$0xff]
        %v707 = vld [vmem:[#allocation3 + $0x38] sm:$0xff]
        %v708 = vld [vmem:[#allocation3 + $0x40] sm:$0x3]
        %v709 = vld [vmem:[#allocation3 + $0x48] sm:$0xff]
        %v710 = vld [vmem:[#allocation3 + $0x50] sm:$0xff]
        %v711 = vld [vmem:[#allocation3 + $0x58] sm:$0x3]
        %v712 = vld [vmem:[#allocation3 + $0x60] sm:$0xff]
        %v713 = vld [vmem:[#allocation3 + $0x68] sm:$0xff]
        %v714 = vld [vmem:[#allocation3 + $0x70] sm:$0x3]
        %v715 = vld [vmem:[#allocation3 + $0x78] sm:$0xff]
        %v716 = vld [vmem:[#allocation3 + $0x80] sm:$0xff]
        %v717 = vld [vmem:[#allocation3 + $0x88] sm:$0x3]
        %v718 = vld [vmem:[#allocation3 + $0x90] sm:$0xff]
        %v719 = vld [vmem:[#allocation3 + $0x98] sm:$0xff]
        %v720 = vld [vmem:[#allocation3 + $0xa0] sm:$0x3]
        %v721 = vld [vmem:[#allocation3 + $0xa8] sm:$0xff]
        %v722 = vld [vmem:[#allocation3 + $0xb0] sm:$0xff]
        %v723 = vld [vmem:[#allocation3 + $0xb8] sm:$0x3]
        %v724 = vld [vmem:[#allocation3 + $0xc0] sm:$0xff]
        %v725 = vld [vmem:[#allocation3 + $0xc8] sm:$0xff]
        %v726 = vld [vmem:[#allocation3 + $0xd0] sm:$0x3]
        %v727 = vld [vmem:[#allocation3 + $0xd8] sm:$0xff]
        %v728 = vld [vmem:[#allocation3 + $0xe0] sm:$0xff]
        %v729 = vld [vmem:[#allocation3 + $0xe8] sm:$0x3]
        %v730 = vld [vmem:[#allocation3 + $0xf0] sm:$0xff]
        %v731 = vld [vmem:[#allocation3 + $0xf8] sm:$0xff]
        %v732 = vld [vmem:[#allocation3 + $0x100] sm:$0x3]
        %v733 = vld [vmem:[#allocation3 + $0x108] sm:$0xff]
        %v734 = vld [vmem:[#allocation3 + $0x110] sm:$0xff]
        %v735 = vld [vmem:[#allocation3 + $0x118] sm:$0x3]
        %v736 = vld [vmem:[#allocation3 + $0x120] sm:$0xff]
        %v737 = vld [vmem:[#allocation3 + $0x128] sm:$0xff]
        %v738 = vld [vmem:[#allocation3 + $0x130] sm:$0x3]
        %v739 = vld [vmem:[#allocation3 + $0x138] sm:$0xff]
        %v740 = vld [vmem:[#allocation3 + $0x140] sm:$0xff]
        %v741 = vld [vmem:[#allocation3 + $0x148] sm:$0x3]
        %v742 = vld [vmem:[#allocation3 + $0x150] sm:$0xff]
        %v743 = vld [vmem:[#allocation3 + $0x158] sm:$0xff]
        %v744 = vld [vmem:[#allocation3 + $0x160] sm:$0x3]
        %v745 = vld [vmem:[#allocation3 + $0x168] sm:$0xff]
        %v746 = vld [vmem:[#allocation3 + $0x170] sm:$0xff]
        %v747 = vld [vmem:[#allocation3 + $0x178] sm:$0x3]
        %v748 = vld [vmem:[#allocation3 + $0x180] sm:$0xff]
        %v749 = vld [vmem:[#allocation3 + $0x188] sm:$0xff]
        %v750 = vld [vmem:[#allocation3 + $0x190] sm:$0x3]
        %v751 = vld [vmem:[#allocation3 + $0x198] sm:$0xff]
        %v752 = vld [vmem:[#allocation3 + $0x1a0] sm:$0xff]
        %v753 = vld [vmem:[#allocation3 + $0x1a8] sm:$0x3]
        %vm802 = vcmask 1046528
        %v803 = vrot.slane %v700, 1
        %v804 = vrot.slane %v701, 1
        %v805 = vsel %vm802, %v803, %v804
        %v806 = vrot.slane %v702, 1
        %v807 = vsel %vm802, %v804, %v806
        %v808 = vrot.slane %v703, 1
        %v809 = vrot.slane %v704, 1
        %v810 = vsel %vm802, %v808, %v809
        %v811 = vrot.slane %v705, 1
        %v812 = vsel %vm802, %v809, %v811
        %v813 = vrot.slane %v706, 1
        %v814 = vrot.slane %v707, 1
        %v815 = vsel %vm802, %v813, %v814
        %v816 = vrot.slane %v708, 1
        %v817 = vsel %vm802, %v814, %v816
        %v818 = vrot.slane %v709, 1
        %v819 = vrot.slane %v710, 1
        %v820 = vsel %vm802, %v818, %v819
        %v821 = vrot.slane %v711, 1
        %v822 = vsel %vm802, %v819, %v821
        %v823 = vrot.slane %v712, 1
        %v824 = vrot.slane %v713, 1
        %v825 = vsel %vm802, %v823, %v824
        %v826 = vrot.slane %v714, 1
        %v827 = vsel %vm802, %v824, %v826
        %v828 = vrot.slane %v715, 1
        %v829 = vrot.slane %v716, 1
        %v830 = vsel %vm802, %v828, %v829
        %v831 = vrot.slane %v717, 1
        %v832 = vsel %vm802, %v829, %v831
        %v833 = vrot.slane %v718, 1
        %v834 = vrot.slane %v719, 1
        %v835 = vsel %vm802, %v833, %v834
        %v836 = vrot.slane %v720, 1
        %v837 = vsel %vm802, %v834, %v836
        %v838 = vrot.slane %v721, 1
        %v839 = vrot.slane %v722, 1
        %v840 = vsel %vm802, %v838, %v839
        %v841 = vrot.slane %v723, 1
        %v842 = vsel %vm802, %v839, %v841
        %v843 = vrot.slane %v724, 1
        %v844 = vrot.slane %v725, 1
        %v845 = vsel %vm802, %v843, %v844
        %v846 = vrot.slane %v726, 1
        %v847 = vsel %vm802, %v844, %v846
        %v848 = vrot.slane %v727, 1
        %v849 = vrot.slane %v728, 1
        %v850 = vsel %vm802, %v848, %v849
        %v851 = vrot.slane %v729, 1
        %v852 = vsel %vm802, %v849, %v851
        %v853 = vrot.slane %v730, 1
        %v854 = vrot.slane %v731, 1
        %v855 = vsel %vm802, %v853, %v854
        %v856 = vrot.slane %v732, 1
        %v857 = vsel %vm802, %v854, %v856
        %v858 = vrot.slane %v733, 1
        %v859 = vrot.slane %v734, 1
        %v860 = vsel %vm802, %v858, %v859
        %v861 = vrot.slane %v735, 1
        %v862 = vsel %vm802, %v859, %v861
        %v863 = vrot.slane %v736, 1
        %v864 = vrot.slane %v737, 1
        %v865 = vsel %vm802, %v863, %v864
        %v866 = vrot.slane %v738, 1
        %v867 = vsel %vm802, %v864, %v866
        %v868 = vrot.slane %v739, 1
        %v869 = vrot.slane %v740, 1
        %v870 = vsel %vm802, %v868, %v869
        %v871 = vrot.slane %v741, 1
        %v872 = vsel %vm802, %v869, %v871
        %v873 = vrot.slane %v742, 1
        %v874 = vrot.slane %v743, 1
        %v875 = vsel %vm802, %v873, %v874
        %v876 = vrot.slane %v744, 1
        %v877 = vsel %vm802, %v874, %v876
        %v878 = vrot.slane %v745, 1
        %v879 = vrot.slane %v746, 1
        %v880 = vsel %vm802, %v878, %v879
        %v881 = vrot.slane %v747, 1
        %v882 = vsel %vm802, %v879, %v881
        %883 = vrot.lane.b32.xlu0 %v805, 32
        %v884 = vpop.permute.xlu0 %883
        %885 = vrot.lane.b32.xlu0 %v807, 32
        %v886 = vpop.permute.xlu0 %885
        %887 = vrot.lane.b32.xlu0 %v810, 32
        %v888 = vpop.permute.xlu0 %887
        %889 = vrot.lane.b32.xlu0 %v812, 32
        %v890 = vpop.permute.xlu0 %889
        %891 = vrot.lane.b32.xlu0 %v815, 32
        %v892 = vpop.permute.xlu0 %891
        %893 = vrot.lane.b32.xlu0 %v817, 32
        %v894 = vpop.permute.xlu0 %893
        %895 = vrot.lane.b32.xlu0 %v820, 32
        %v896 = vpop.permute.xlu0 %895
        %897 = vrot.lane.b32.xlu0 %v822, 32
        %v898 = vpop.permute.xlu0 %897
        %899 = vrot.lane.b32.xlu0 %v825, 32
        %v900 = vpop.permute.xlu0 %899
        %901 = vrot.lane.b32.xlu0 %v827, 32
        %v902 = vpop.permute.xlu0 %901
        %903 = vrot.lane.b32.xlu0 %v830, 32
        %v904 = vpop.permute.xlu0 %903
        %905 = vrot.lane.b32.xlu0 %v832, 32
        %v906 = vpop.permute.xlu0 %905
        %907 = vrot.lane.b32.xlu0 %v835, 32
        %v908 = vpop.permute.xlu0 %907
        %909 = vrot.lane.b32.xlu0 %v837, 32
        %v910 = vpop.permute.xlu0 %909
        %911 = vrot.lane.b32.xlu0 %v840, 32
        %v912 = vpop.permute.xlu0 %911
        %913 = vrot.lane.b32.xlu0 %v842, 32
        %v914 = vpop.permute.xlu0 %913
        %915 = vrot.lane.b32.xlu0 %v845, 32
        %v916 = vpop.permute.xlu0 %915
        %917 = vrot.lane.b32.xlu0 %v847, 32
        %v918 = vpop.permute.xlu0 %917
        %919 = vrot.lane.b32.xlu0 %v850, 32
        %v920 = vpop.permute.xlu0 %919
        %921 = vrot.lane.b32.xlu0 %v852, 32
        %v922 = vpop.permute.xlu0 %921
        %923 = vrot.lane.b32.xlu0 %v855, 32
        %v924 = vpop.permute.xlu0 %923
        %925 = vrot.lane.b32.xlu0 %v857, 32
        %v926 = vpop.permute.xlu0 %925
        %927 = vrot.lane.b32.xlu0 %v860, 32
        %v928 = vpop.permute.xlu0 %927
        %929 = vrot.lane.b32.xlu0 %v862, 32
        %v930 = vpop.permute.xlu0 %929
        %931 = vrot.lane.b32.xlu0 %v865, 32
        %v932 = vpop.permute.xlu0 %931
        %933 = vrot.lane.b32.xlu0 %v867, 32
        %v934 = vpop.permute.xlu0 %933
        %935 = vrot.lane.b32.xlu0 %v870, 32
        %v936 = vpop.permute.xlu0 %935
        %937 = vrot.lane.b32.xlu0 %v872, 32
        %v938 = vpop.permute.xlu0 %937
        %939 = vrot.lane.b32.xlu0 %v875, 32
        %v940 = vpop.permute.xlu0 %939
        %941 = vrot.lane.b32.xlu0 %v877, 32
        %v942 = vpop.permute.xlu0 %941
        %943 = vrot.lane.b32.xlu0 %v880, 32
        %v944 = vpop.permute.xlu0 %943
        %945 = vrot.lane.b32.xlu0 %v882, 32
        %v946 = vpop.permute.xlu0 %945
        %vm979 = vcmask 1045504
        %v980 = vrot.slane %v700, 2
        %v981 = vrot.slane %v701, 2
        %v982 = vsel %vm979, %v980, %v981
        %v983 = vrot.slane %v702, 2
        %v984 = vsel %vm979, %v981, %v983
        %v985 = vrot.slane %v703, 2
        %v986 = vrot.slane %v704, 2
        %v987 = vsel %vm979, %v985, %v986
        %v988 = vrot.slane %v705, 2
        %v989 = vsel %vm979, %v986, %v988
        %v990 = vrot.slane %v706, 2
        %v991 = vrot.slane %v707, 2
        %v992 = vsel %vm979, %v990, %v991
        %v993 = vrot.slane %v708, 2
        %v994 = vsel %vm979, %v991, %v993
        %v995 = vrot.slane %v709, 2
        %v996 = vrot.slane %v710, 2
        %v997 = vsel %vm979, %v995, %v996
        %v998 = vrot.slane %v711, 2
        %v999 = vsel %vm979, %v996, %v998
        %v1000 = vrot.slane %v712, 2
        %v1001 = vrot.slane %v713, 2
        %v1002 = vsel %vm979, %v1000, %v1001
        %v1003 = vrot.slane %v714, 2
        %v1004 = vsel %vm979, %v1001, %v1003
        %v1005 = vrot.slane %v715, 2
        %v1006 = vrot.slane %v716, 2
        %v1007 = vsel %vm979, %v1005, %v1006
        %v1008 = vrot.slane %v717, 2
        %v1009 = vsel %vm979, %v1006, %v1008
        %v1010 = vrot.slane %v718, 2
        %v1011 = vrot.slane %v719, 2
        %v1012 = vsel %vm979, %v1010, %v1011
        %v1013 = vrot.slane %v720, 2
        %v1014 = vsel %vm979, %v1011, %v1013
        %v1015 = vrot.slane %v721, 2
        %v1016 = vrot.slane %v722, 2
        %v1017 = vsel %vm979, %v1015, %v1016
        %v1018 = vrot.slane %v723, 2
        %v1019 = vsel %vm979, %v1016, %v1018
        %v1020 = vrot.slane %v724, 2
        %v1021 = vrot.slane %v725, 2
        %v1022 = vsel %vm979, %v1020, %v1021
        %v1023 = vrot.slane %v726, 2
        %v1024 = vsel %vm979, %v1021, %v1023
        %v1025 = vrot.slane %v727, 2
        %v1026 = vrot.slane %v728, 2
        %v1027 = vsel %vm979, %v1025, %v1026
        %v1028 = vrot.slane %v729, 2
        %v1029 = vsel %vm979, %v1026, %v1028
        %v1030 = vrot.slane %v730, 2
        %v1031 = vrot.slane %v731, 2
        %v1032 = vsel %vm979, %v1030, %v1031
        %v1033 = vrot.slane %v732, 2
        %v1034 = vsel %vm979, %v1031, %v1033
        %v1035 = vrot.slane %v733, 2
        %v1036 = vrot.slane %v734, 2
        %v1037 = vsel %vm979, %v1035, %v1036
        %v1038 = vrot.slane %v735, 2
        %v1039 = vsel %vm979, %v1036, %v1038
        %v1040 = vrot.slane %v736, 2
        %v1041 = vrot.slane %v737, 2
        %v1042 = vsel %vm979, %v1040, %v1041
        %v1043 = vrot.slane %v738, 2
        %v1044 = vsel %vm979, %v1041, %v1043
        %v1045 = vrot.slane %v739, 2
        %v1046 = vrot.slane %v740, 2
        %v1047 = vsel %vm979, %v1045, %v1046
        %v1048 = vrot.slane %v741, 2
        %v1049 = vsel %vm979, %v1046, %v1048
        %v1050 = vrot.slane %v742, 2
        %v1051 = vrot.slane %v743, 2
        %v1052 = vsel %vm979, %v1050, %v1051
        %v1053 = vrot.slane %v744, 2
        %v1054 = vsel %vm979, %v1051, %v1053
        %v1055 = vrot.slane %v745, 2
        %v1056 = vrot.slane %v746, 2
        %v1057 = vsel %vm979, %v1055, %v1056
        %v1058 = vrot.slane %v747, 2
        %v1059 = vsel %vm979, %v1056, %v1058
        %1060 = vrot.lane.b32.xlu0 %v982, 64
        %v1061 = vpop.permute.xlu0 %1060
        %1062 = vrot.lane.b32.xlu0 %v984, 64
        %v1063 = vpop.permute.xlu0 %1062
        %1064 = vrot.lane.b32.xlu0 %v987, 64
        %v1065 = vpop.permute.xlu0 %1064
        %1066 = vrot.lane.b32.xlu0 %v989, 64
        %v1067 = vpop.permute.xlu0 %1066
        %1068 = vrot.lane.b32.xlu0 %v992, 64
        %v1069 = vpop.permute.xlu0 %1068
        %1070 = vrot.lane.b32.xlu0 %v994, 64
        %v1071 = vpop.permute.xlu0 %1070
        %1072 = vrot.lane.b32.xlu0 %v997, 64
        %v1073 = vpop.permute.xlu0 %1072
        %1074 = vrot.lane.b32.xlu0 %v999, 64
        %v1075 = vpop.permute.xlu0 %1074
        %1076 = vrot.lane.b32.xlu0 %v1002, 64
        %v1077 = vpop.permute.xlu0 %1076
        %1078 = vrot.lane.b32.xlu0 %v1004, 64
        %v1079 = vpop.permute.xlu0 %1078
        %1080 = vrot.lane.b32.xlu0 %v1007, 64
        %v1081 = vpop.permute.xlu0 %1080
        %1082 = vrot.lane.b32.xlu0 %v1009, 64
        %v1083 = vpop.permute.xlu0 %1082
        %1084 = vrot.lane.b32.xlu0 %v1012, 64
        %v1085 = vpop.permute.xlu0 %1084
        %1086 = vrot.lane.b32.xlu0 %v1014, 64
        %v1087 = vpop.permute.xlu0 %1086
        %1088 = vrot.lane.b32.xlu0 %v1017, 64
        %v1089 = vpop.permute.xlu0 %1088
        %1090 = vrot.lane.b32.xlu0 %v1019, 64
        %v1091 = vpop.permute.xlu0 %1090
        %1092 = vrot.lane.b32.xlu0 %v1022, 64
        %v1093 = vpop.permute.xlu0 %1092
        %1094 = vrot.lane.b32.xlu0 %v1024, 64
        %v1095 = vpop.permute.xlu0 %1094
        %1096 = vrot.lane.b32.xlu0 %v1027, 64
        %v1097 = vpop.permute.xlu0 %1096
        %1098 = vrot.lane.b32.xlu0 %v1029, 64
        %v1099 = vpop.permute.xlu0 %1098
        %1100 = vrot.lane.b32.xlu0 %v1032, 64
        %v1101 = vpop.permute.xlu0 %1100
        %1102 = vrot.lane.b32.xlu0 %v1034, 64
        %v1103 = vpop.permute.xlu0 %1102
        %1104 = vrot.lane.b32.xlu0 %v1037, 64
        %v1105 = vpop.permute.xlu0 %1104
        %1106 = vrot.lane.b32.xlu0 %v1039, 64
        %v1107 = vpop.permute.xlu0 %1106
        %1108 = vrot.lane.b32.xlu0 %v1042, 64
        %v1109 = vpop.permute.xlu0 %1108
        %1110 = vrot.lane.b32.xlu0 %v1044, 64
        %v1111 = vpop.permute.xlu0 %1110
        %1112 = vrot.lane.b32.xlu0 %v1047, 64
        %v1113 = vpop.permute.xlu0 %1112
        %1114 = vrot.lane.b32.xlu0 %v1049, 64
        %v1115 = vpop.permute.xlu0 %1114
        %1116 = vrot.lane.b32.xlu0 %v1052, 64
        %v1117 = vpop.permute.xlu0 %1116
        %1118 = vrot.lane.b32.xlu0 %v1054, 64
        %v1119 = vpop.permute.xlu0 %1118
        %1120 = vrot.lane.b32.xlu0 %v1057, 64
        %v1121 = vpop.permute.xlu0 %1120
        %1122 = vrot.lane.b32.xlu0 %v1059, 64
        %v1123 = vpop.permute.xlu0 %1122
        %1158 = vrot.lane.b32.xlu0 %v703, 96
        %v1159 = vpop.permute.xlu0 %1158
        %1160 = vrot.lane.b32.xlu0 %v704, 96
        %v1161 = vpop.permute.xlu0 %1160
        %1162 = vrot.lane.b32.xlu0 %v706, 96
        %v1163 = vpop.permute.xlu0 %1162
        %1164 = vrot.lane.b32.xlu0 %v707, 96
        %v1165 = vpop.permute.xlu0 %1164
        %1166 = vrot.lane.b32.xlu0 %v709, 96
        %v1167 = vpop.permute.xlu0 %1166
        %1168 = vrot.lane.b32.xlu0 %v710, 96
        %v1169 = vpop.permute.xlu0 %1168
        %1170 = vrot.lane.b32.xlu0 %v712, 96
        %v1171 = vpop.permute.xlu0 %1170
        %1172 = vrot.lane.b32.xlu0 %v713, 96
        %v1173 = vpop.permute.xlu0 %1172
        %1174 = vrot.lane.b32.xlu0 %v715, 96
        %v1175 = vpop.permute.xlu0 %1174
        %1176 = vrot.lane.b32.xlu0 %v716, 96
        %v1177 = vpop.permute.xlu0 %1176
        %1178 = vrot.lane.b32.xlu0 %v718, 96
        %v1179 = vpop.permute.xlu0 %1178
        %1180 = vrot.lane.b32.xlu0 %v719, 96
        %v1181 = vpop.permute.xlu0 %1180
        %1182 = vrot.lane.b32.xlu0 %v721, 96
        %v1183 = vpop.permute.xlu0 %1182
        %1184 = vrot.lane.b32.xlu0 %v722, 96
        %v1185 = vpop.permute.xlu0 %1184
        %1186 = vrot.lane.b32.xlu0 %v724, 96
        %v1187 = vpop.permute.xlu0 %1186
        %1188 = vrot.lane.b32.xlu0 %v725, 96
        %v1189 = vpop.permute.xlu0 %1188
        %1190 = vrot.lane.b32.xlu0 %v727, 96
        %v1191 = vpop.permute.xlu0 %1190
        %1192 = vrot.lane.b32.xlu0 %v728, 96
        %v1193 = vpop.permute.xlu0 %1192
        %1194 = vrot.lane.b32.xlu0 %v730, 96
        %v1195 = vpop.permute.xlu0 %1194
        %1196 = vrot.lane.b32.xlu0 %v731, 96
        %v1197 = vpop.permute.xlu0 %1196
        %1198 = vrot.lane.b32.xlu0 %v733, 96
        %v1199 = vpop.permute.xlu0 %1198
        %1200 = vrot.lane.b32.xlu0 %v734, 96
        %v1201 = vpop.permute.xlu0 %1200
        %1202 = vrot.lane.b32.xlu0 %v736, 96
        %v1203 = vpop.permute.xlu0 %1202
        %1204 = vrot.lane.b32.xlu0 %v737, 96
        %v1205 = vpop.permute.xlu0 %1204
        %1206 = vrot.lane.b32.xlu0 %v739, 96
        %v1207 = vpop.permute.xlu0 %1206
        %1208 = vrot.lane.b32.xlu0 %v740, 96
        %v1209 = vpop.permute.xlu0 %1208
        %1210 = vrot.lane.b32.xlu0 %v742, 96
        %v1211 = vpop.permute.xlu0 %1210
        %1212 = vrot.lane.b32.xlu0 %v743, 96
        %v1213 = vpop.permute.xlu0 %1212
        %1214 = vrot.lane.b32.xlu0 %v745, 96
        %v1215 = vpop.permute.xlu0 %1214
        %1216 = vrot.lane.b32.xlu0 %v746, 96
        %v1217 = vpop.permute.xlu0 %1216
        %1218 = vrot.lane.b32.xlu0 %v748, 96
        %v1219 = vpop.permute.xlu0 %1218
        %1220 = vrot.lane.b32.xlu0 %v749, 96
        %v1221 = vpop.permute.xlu0 %1220
        %v1255 = vrot.slane %v748, 1
        %v1256 = vrot.slane %v749, 1
        %v1257 = vsel %vm802, %v1255, %v1256
        %v1258 = vrot.slane %v750, 1
        %v1259 = vsel %vm802, %v1256, %v1258
        %v1292 = vrot.slane %v748, 2
        %v1293 = vrot.slane %v749, 2
        %v1294 = vsel %vm979, %v1292, %v1293
        %v1295 = vrot.slane %v750, 2
        %v1296 = vsel %vm979, %v1293, %v1295
        %1297 = vrot.lane.b32.xlu0 %v987, 32
        %v1298 = vpop.permute.xlu0 %1297
        %1299 = vrot.lane.b32.xlu0 %v989, 32
        %v1300 = vpop.permute.xlu0 %1299
        %1301 = vrot.lane.b32.xlu0 %v992, 32
        %v1302 = vpop.permute.xlu0 %1301
        %1303 = vrot.lane.b32.xlu0 %v994, 32
        %v1304 = vpop.permute.xlu0 %1303
        %1305 = vrot.lane.b32.xlu0 %v997, 32
        %v1306 = vpop.permute.xlu0 %1305
        %1307 = vrot.lane.b32.xlu0 %v999, 32
        %v1308 = vpop.permute.xlu0 %1307
        %1309 = vrot.lane.b32.xlu0 %v1002, 32
        %v1310 = vpop.permute.xlu0 %1309
        %1311 = vrot.lane.b32.xlu0 %v1004, 32
        %v1312 = vpop.permute.xlu0 %1311
        %1313 = vrot.lane.b32.xlu0 %v1007, 32
        %v1314 = vpop.permute.xlu0 %1313
        %1315 = vrot.lane.b32.xlu0 %v1009, 32
        %v1316 = vpop.permute.xlu0 %1315
        %1317 = vrot.lane.b32.xlu0 %v1012, 32
        %v1318 = vpop.permute.xlu0 %1317
        %1319 = vrot.lane.b32.xlu0 %v1014, 32
        %v1320 = vpop.permute.xlu0 %1319
        %1321 = vrot.lane.b32.xlu0 %v1017, 32
        %v1322 = vpop.permute.xlu0 %1321
        %1323 = vrot.lane.b32.xlu0 %v1019, 32
        %v1324 = vpop.permute.xlu0 %1323
        %1325 = vrot.lane.b32.xlu0 %v1022, 32
        %v1326 = vpop.permute.xlu0 %1325
        %1327 = vrot.lane.b32.xlu0 %v1024, 32
        %v1328 = vpop.permute.xlu0 %1327
        %1329 = vrot.lane.b32.xlu0 %v1027, 32
        %v1330 = vpop.permute.xlu0 %1329
        %1331 = vrot.lane.b32.xlu0 %v1029, 32
        %v1332 = vpop.permute.xlu0 %1331
        %1333 = vrot.lane.b32.xlu0 %v1032, 32
        %v1334 = vpop.permute.xlu0 %1333
        %1335 = vrot.lane.b32.xlu0 %v1034, 32
        %v1336 = vpop.permute.xlu0 %1335
        %1337 = vrot.lane.b32.xlu0 %v1037, 32
        %v1338 = vpop.permute.xlu0 %1337
        %1339 = vrot.lane.b32.xlu0 %v1039, 32
        %v1340 = vpop.permute.xlu0 %1339
        %1341 = vrot.lane.b32.xlu0 %v1042, 32
        %v1342 = vpop.permute.xlu0 %1341
        %1343 = vrot.lane.b32.xlu0 %v1044, 32
        %v1344 = vpop.permute.xlu0 %1343
        %1345 = vrot.lane.b32.xlu0 %v1047, 32
        %v1346 = vpop.permute.xlu0 %1345
        %1347 = vrot.lane.b32.xlu0 %v1049, 32
        %v1348 = vpop.permute.xlu0 %1347
        %1349 = vrot.lane.b32.xlu0 %v1052, 32
        %v1350 = vpop.permute.xlu0 %1349
        %1351 = vrot.lane.b32.xlu0 %v1054, 32
        %v1352 = vpop.permute.xlu0 %1351
        %1353 = vrot.lane.b32.xlu0 %v1057, 32
        %v1354 = vpop.permute.xlu0 %1353
        %1355 = vrot.lane.b32.xlu0 %v1059, 32
        %v1356 = vpop.permute.xlu0 %1355
        %1357 = vrot.lane.b32.xlu0 %v1294, 32
        %v1358 = vpop.permute.xlu0 %1357
        %1359 = vrot.lane.b32.xlu0 %v1296, 32
        %v1360 = vpop.permute.xlu0 %1359
        %1395 = vrot.lane.b32.xlu0 %v706, 64
        %v1396 = vpop.permute.xlu0 %1395
        %1397 = vrot.lane.b32.xlu0 %v707, 64
        %v1398 = vpop.permute.xlu0 %1397
        %1399 = vrot.lane.b32.xlu0 %v709, 64
        %v1400 = vpop.permute.xlu0 %1399
        %1401 = vrot.lane.b32.xlu0 %v710, 64
        %v1402 = vpop.permute.xlu0 %1401
        %1403 = vrot.lane.b32.xlu0 %v712, 64
        %v1404 = vpop.permute.xlu0 %1403
        %1405 = vrot.lane.b32.xlu0 %v713, 64
        %v1406 = vpop.permute.xlu0 %1405
        %1407 = vrot.lane.b32.xlu0 %v715, 64
        %v1408 = vpop.permute.xlu0 %1407
        %1409 = vrot.lane.b32.xlu0 %v716, 64
        %v1410 = vpop.permute.xlu0 %1409
        %1411 = vrot.lane.b32.xlu0 %v718, 64
        %v1412 = vpop.permute.xlu0 %1411
        %1413 = vrot.lane.b32.xlu0 %v719, 64
        %v1414 = vpop.permute.xlu0 %1413
        %1415 = vrot.lane.b32.xlu0 %v721, 64
        %v1416 = vpop.permute.xlu0 %1415
        %1417 = vrot.lane.b32.xlu0 %v722, 64
        %v1418 = vpop.permute.xlu0 %1417
        %1419 = vrot.lane.b32.xlu0 %v724, 64
        %v1420 = vpop.permute.xlu0 %1419
        %1421 = vrot.lane.b32.xlu0 %v725, 64
        %v1422 = vpop.permute.xlu0 %1421
        %1423 = vrot.lane.b32.xlu0 %v727, 64
        %v1424 = vpop.permute.xlu0 %1423
        %1425 = vrot.lane.b32.xlu0 %v728, 64
        %v1426 = vpop.permute.xlu0 %1425
        %1427 = vrot.lane.b32.xlu0 %v730, 64
        %v1428 = vpop.permute.xlu0 %1427
        %1429 = vrot.lane.b32.xlu0 %v731, 64
        %v1430 = vpop.permute.xlu0 %1429
        %1431 = vrot.lane.b32.xlu0 %v733, 64
        %v1432 = vpop.permute.xlu0 %1431
        %1433 = vrot.lane.b32.xlu0 %v734, 64
        %v1434 = vpop.permute.xlu0 %1433
        %1435 = vrot.lane.b32.xlu0 %v736, 64
        %v1436 = vpop.permute.xlu0 %1435
        %1437 = vrot.lane.b32.xlu0 %v737, 64
        %v1438 = vpop.permute.xlu0 %1437
        %1439 = vrot.lane.b32.xlu0 %v739, 64
        %v1440 = vpop.permute.xlu0 %1439
        %1441 = vrot.lane.b32.xlu0 %v740, 64
        %v1442 = vpop.permute.xlu0 %1441
        %1443 = vrot.lane.b32.xlu0 %v742, 64
        %v1444 = vpop.permute.xlu0 %1443
        %1445 = vrot.lane.b32.xlu0 %v743, 64
        %v1446 = vpop.permute.xlu0 %1445
        %1447 = vrot.lane.b32.xlu0 %v745, 64
        %v1448 = vpop.permute.xlu0 %1447
        %1449 = vrot.lane.b32.xlu0 %v746, 64
        %v1450 = vpop.permute.xlu0 %1449
        %1451 = vrot.lane.b32.xlu0 %v748, 64
        %v1452 = vpop.permute.xlu0 %1451
        %1453 = vrot.lane.b32.xlu0 %v749, 64
        %v1454 = vpop.permute.xlu0 %1453
        %1455 = vrot.lane.b32.xlu0 %v751, 64
        %v1456 = vpop.permute.xlu0 %1455
        %1457 = vrot.lane.b32.xlu0 %v752, 64
        %v1458 = vpop.permute.xlu0 %1457
        %v1492 = vrot.slane %v751, 1
        %v1493 = vrot.slane %v752, 1
        %v1494 = vsel %vm802, %v1492, %v1493
        %v1495 = vrot.slane %v753, 1
        %v1496 = vsel %vm802, %v1493, %v1495
        %1497 = vrot.lane.b32.xlu0 %v815, 96
        %v1498 = vpop.permute.xlu0 %1497
        %1499 = vrot.lane.b32.xlu0 %v817, 96
        %v1500 = vpop.permute.xlu0 %1499
        %1501 = vrot.lane.b32.xlu0 %v820, 96
        %v1502 = vpop.permute.xlu0 %1501
        %1503 = vrot.lane.b32.xlu0 %v822, 96
        %v1504 = vpop.permute.xlu0 %1503
        %1505 = vrot.lane.b32.xlu0 %v825, 96
        %v1506 = vpop.permute.xlu0 %1505
        %1507 = vrot.lane.b32.xlu0 %v827, 96
        %v1508 = vpop.permute.xlu0 %1507
        %1509 = vrot.lane.b32.xlu0 %v830, 96
        %v1510 = vpop.permute.xlu0 %1509
        %1511 = vrot.lane.b32.xlu0 %v832, 96
        %v1512 = vpop.permute.xlu0 %1511
        %1513 = vrot.lane.b32.xlu0 %v835, 96
        %v1514 = vpop.permute.xlu0 %1513
        %1515 = vrot.lane.b32.xlu0 %v837, 96
        %v1516 = vpop.permute.xlu0 %1515
        %1517 = vrot.lane.b32.xlu0 %v840, 96
        %v1518 = vpop.permute.xlu0 %1517
        %1519 = vrot.lane.b32.xlu0 %v842, 96
        %v1520 = vpop.permute.xlu0 %1519
        %1521 = vrot.lane.b32.xlu0 %v845, 96
        %v1522 = vpop.permute.xlu0 %1521
        %1523 = vrot.lane.b32.xlu0 %v847, 96
        %v1524 = vpop.permute.xlu0 %1523
        %1525 = vrot.lane.b32.xlu0 %v850, 96
        %v1526 = vpop.permute.xlu0 %1525
        %1527 = vrot.lane.b32.xlu0 %v852, 96
        %v1528 = vpop.permute.xlu0 %1527
        %1529 = vrot.lane.b32.xlu0 %v855, 96
        %v1530 = vpop.permute.xlu0 %1529
        %1531 = vrot.lane.b32.xlu0 %v857, 96
        %v1532 = vpop.permute.xlu0 %1531
        %1533 = vrot.lane.b32.xlu0 %v860, 96
        %v1534 = vpop.permute.xlu0 %1533
        %1535 = vrot.lane.b32.xlu0 %v862, 96
        %v1536 = vpop.permute.xlu0 %1535
        %1537 = vrot.lane.b32.xlu0 %v865, 96
        %v1538 = vpop.permute.xlu0 %1537
        %1539 = vrot.lane.b32.xlu0 %v867, 96
        %v1540 = vpop.permute.xlu0 %1539
        %1541 = vrot.lane.b32.xlu0 %v870, 96
        %v1542 = vpop.permute.xlu0 %1541
        %1543 = vrot.lane.b32.xlu0 %v872, 96
        %v1544 = vpop.permute.xlu0 %1543
        %1545 = vrot.lane.b32.xlu0 %v875, 96
        %v1546 = vpop.permute.xlu0 %1545
        %1547 = vrot.lane.b32.xlu0 %v877, 96
        %v1548 = vpop.permute.xlu0 %1547
        %1549 = vrot.lane.b32.xlu0 %v880, 96
        %v1550 = vpop.permute.xlu0 %1549
        %1551 = vrot.lane.b32.xlu0 %v882, 96
        %v1552 = vpop.permute.xlu0 %1551
        %1553 = vrot.lane.b32.xlu0 %v1257, 96
        %v1554 = vpop.permute.xlu0 %1553
        %1555 = vrot.lane.b32.xlu0 %v1259, 96
        %v1556 = vpop.permute.xlu0 %1555
        %1557 = vrot.lane.b32.xlu0 %v1494, 96
        %v1558 = vpop.permute.xlu0 %1557
        %1559 = vrot.lane.b32.xlu0 %v1496, 96
        %v1560 = vpop.permute.xlu0 %1559
        %v1593 = vrot.slane %v751, 2
        %v1594 = vrot.slane %v752, 2
        %v1595 = vsel %vm979, %v1593, %v1594
        %v1596 = vrot.slane %v753, 2
        %v1597 = vsel %vm979, %v1594, %v1596
        %v1630 = vsel %vm406, %v700, %v884
        %v1631 = vsel %vm406, %v701, %v886
        %v1632 = vsel %vm406, %v703, %v888
        %v1633 = vsel %vm406, %v704, %v890
        %v1634 = vsel %vm406, %v706, %v892
        %v1635 = vsel %vm406, %v707, %v894
        %v1636 = vsel %vm406, %v709, %v896
        %v1637 = vsel %vm406, %v710, %v898
        %v1638 = vsel %vm406, %v712, %v900
        %v1639 = vsel %vm406, %v713, %v902
        %v1640 = vsel %vm406, %v715, %v904
        %v1641 = vsel %vm406, %v716, %v906
        %v1642 = vsel %vm406, %v718, %v908
        %v1643 = vsel %vm406, %v719, %v910
        %v1644 = vsel %vm406, %v721, %v912
        %v1645 = vsel %vm406, %v722, %v914
        %v1646 = vsel %vm406, %v724, %v916
        %v1647 = vsel %vm406, %v725, %v918
        %v1648 = vsel %vm406, %v727, %v920
        %v1649 = vsel %vm406, %v728, %v922
        %v1650 = vsel %vm406, %v730, %v924
        %v1651 = vsel %vm406, %v731, %v926
        %v1652 = vsel %vm406, %v733, %v928
        %v1653 = vsel %vm406, %v734, %v930
        %v1654 = vsel %vm406, %v736, %v932
        %v1655 = vsel %vm406, %v737, %v934
        %v1656 = vsel %vm406, %v739, %v936
        %v1657 = vsel %vm406, %v740, %v938
        %v1658 = vsel %vm406, %v742, %v940
        %v1659 = vsel %vm406, %v743, %v942
        %v1660 = vsel %vm406, %v745, %v944
        %v1661 = vsel %vm406, %v746, %v946
        %vm1662 = vcmask 523264
        %v1663 = vsel %vm1662, %v1630, %v1061
        %v1664 = vsel %vm1662, %v1631, %v1063
        %v1665 = vsel %vm1662, %v1632, %v1065
        %v1666 = vsel %vm1662, %v1633, %v1067
        %v1667 = vsel %vm1662, %v1634, %v1069
        %v1668 = vsel %vm1662, %v1635, %v1071
        %v1669 = vsel %vm1662, %v1636, %v1073
        %v1670 = vsel %vm1662, %v1637, %v1075
        %v1671 = vsel %vm1662, %v1638, %v1077
        %v1672 = vsel %vm1662, %v1639, %v1079
        %v1673 = vsel %vm1662, %v1640, %v1081
        %v1674 = vsel %vm1662, %v1641, %v1083
        %v1675 = vsel %vm1662, %v1642, %v1085
        %v1676 = vsel %vm1662, %v1643, %v1087
        %v1677 = vsel %vm1662, %v1644, %v1089
        %v1678 = vsel %vm1662, %v1645, %v1091
        %v1679 = vsel %vm1662, %v1646, %v1093
        %v1680 = vsel %vm1662, %v1647, %v1095
        %v1681 = vsel %vm1662, %v1648, %v1097
        %v1682 = vsel %vm1662, %v1649, %v1099
        %v1683 = vsel %vm1662, %v1650, %v1101
        %v1684 = vsel %vm1662, %v1651, %v1103
        %v1685 = vsel %vm1662, %v1652, %v1105
        %v1686 = vsel %vm1662, %v1653, %v1107
        %v1687 = vsel %vm1662, %v1654, %v1109
        %v1688 = vsel %vm1662, %v1655, %v1111
        %v1689 = vsel %vm1662, %v1656, %v1113
        %v1690 = vsel %vm1662, %v1657, %v1115
        %v1691 = vsel %vm1662, %v1658, %v1117
        %v1692 = vsel %vm1662, %v1659, %v1119
        %v1693 = vsel %vm1662, %v1660, %v1121
        %v1694 = vsel %vm1662, %v1661, %v1123
        %vm1695 = vcmask 785408
        %v1696 = vsel %vm1695, %v1663, %v1159
        %v1697 = vsel %vm1695, %v1664, %v1161
        %v1698 = vsel %vm1695, %v1665, %v1163
        %v1699 = vsel %vm1695, %v1666, %v1165
        %v1700 = vsel %vm1695, %v1667, %v1167
        %v1701 = vsel %vm1695, %v1668, %v1169
        %v1702 = vsel %vm1695, %v1669, %v1171
        %v1703 = vsel %vm1695, %v1670, %v1173
        %v1704 = vsel %vm1695, %v1671, %v1175
        %v1705 = vsel %vm1695, %v1672, %v1177
        %v1706 = vsel %vm1695, %v1673, %v1179
        %v1707 = vsel %vm1695, %v1674, %v1181
        %v1708 = vsel %vm1695, %v1675, %v1183
        %v1709 = vsel %vm1695, %v1676, %v1185
        %v1710 = vsel %vm1695, %v1677, %v1187
        %v1711 = vsel %vm1695, %v1678, %v1189
        %v1712 = vsel %vm1695, %v1679, %v1191
        %v1713 = vsel %vm1695, %v1680, %v1193
        %v1714 = vsel %vm1695, %v1681, %v1195
        %v1715 = vsel %vm1695, %v1682, %v1197
        %v1716 = vsel %vm1695, %v1683, %v1199
        %v1717 = vsel %vm1695, %v1684, %v1201
        %v1718 = vsel %vm1695, %v1685, %v1203
        %v1719 = vsel %vm1695, %v1686, %v1205
        %v1720 = vsel %vm1695, %v1687, %v1207
        %v1721 = vsel %vm1695, %v1688, %v1209
        %v1722 = vsel %vm1695, %v1689, %v1211
        %v1723 = vsel %vm1695, %v1690, %v1213
        %v1724 = vsel %vm1695, %v1691, %v1215
        %v1725 = vsel %vm1695, %v1692, %v1217
        %v1726 = vsel %vm1695, %v1693, %v1219
        %v1727 = vsel %vm1695, %v1694, %v1221
        %v1728 = vsel %vm406, %v810, %v1298
        %v1729 = vsel %vm406, %v812, %v1300
        %v1730 = vsel %vm406, %v815, %v1302
        %v1731 = vsel %vm406, %v817, %v1304
        %v1732 = vsel %vm406, %v820, %v1306
        %v1733 = vsel %vm406, %v822, %v1308
        %v1734 = vsel %vm406, %v825, %v1310
        %v1735 = vsel %vm406, %v827, %v1312
        %v1736 = vsel %vm406, %v830, %v1314
        %v1737 = vsel %vm406, %v832, %v1316
        %v1738 = vsel %vm406, %v835, %v1318
        %v1739 = vsel %vm406, %v837, %v1320
        %v1740 = vsel %vm406, %v840, %v1322
        %v1741 = vsel %vm406, %v842, %v1324
        %v1742 = vsel %vm406, %v845, %v1326
        %v1743 = vsel %vm406, %v847, %v1328
        %v1744 = vsel %vm406, %v850, %v1330
        %v1745 = vsel %vm406, %v852, %v1332
        %v1746 = vsel %vm406, %v855, %v1334
        %v1747 = vsel %vm406, %v857, %v1336
        %v1748 = vsel %vm406, %v860, %v1338
        %v1749 = vsel %vm406, %v862, %v1340
        %v1750 = vsel %vm406, %v865, %v1342
        %v1751 = vsel %vm406, %v867, %v1344
        %v1752 = vsel %vm406, %v870, %v1346
        %v1753 = vsel %vm406, %v872, %v1348
        %v1754 = vsel %vm406, %v875, %v1350
        %v1755 = vsel %vm406, %v877, %v1352
        %v1756 = vsel %vm406, %v880, %v1354
        %v1757 = vsel %vm406, %v882, %v1356
        %v1758 = vsel %vm406, %v1257, %v1358
        %v1759 = vsel %vm406, %v1259, %v1360
        %v1760 = vsel %vm1662, %v1728, %v1396
        %v1761 = vsel %vm1662, %v1729, %v1398
        %v1762 = vsel %vm1662, %v1730, %v1400
        %v1763 = vsel %vm1662, %v1731, %v1402
        %v1764 = vsel %vm1662, %v1732, %v1404
        %v1765 = vsel %vm1662, %v1733, %v1406
        %v1766 = vsel %vm1662, %v1734, %v1408
        %v1767 = vsel %vm1662, %v1735, %v1410
        %v1768 = vsel %vm1662, %v1736, %v1412
        %v1769 = vsel %vm1662, %v1737, %v1414
        %v1770 = vsel %vm1662, %v1738, %v1416
        %v1771 = vsel %vm1662, %v1739, %v1418
        %v1772 = vsel %vm1662, %v1740, %v1420
        %v1773 = vsel %vm1662, %v1741, %v1422
        %v1774 = vsel %vm1662, %v1742, %v1424
        %v1775 = vsel %vm1662, %v1743, %v1426
        %v1776 = vsel %vm1662, %v1744, %v1428
        %v1777 = vsel %vm1662, %v1745, %v1430
        %v1778 = vsel %vm1662, %v1746, %v1432
        %v1779 = vsel %vm1662, %v1747, %v1434
        %v1780 = vsel %vm1662, %v1748, %v1436
        %v1781 = vsel %vm1662, %v1749, %v1438
        %v1782 = vsel %vm1662, %v1750, %v1440
        %v1783 = vsel %vm1662, %v1751, %v1442
        %v1784 = vsel %vm1662, %v1752, %v1444
        %v1785 = vsel %vm1662, %v1753, %v1446
        %v1786 = vsel %vm1662, %v1754, %v1448
        %v1787 = vsel %vm1662, %v1755, %v1450
        %v1788 = vsel %vm1662, %v1756, %v1452
        %v1789 = vsel %vm1662, %v1757, %v1454
        %v1790 = vsel %vm1662, %v1758, %v1456
        %v1791 = vsel %vm1662, %v1759, %v1458
        %v1792 = vsel %vm1695, %v1760, %v1498
        %v1793 = vsel %vm1695, %v1761, %v1500
        %v1794 = vsel %vm1695, %v1762, %v1502
        %v1795 = vsel %vm1695, %v1763, %v1504
        %v1796 = vsel %vm1695, %v1764, %v1506
        %v1797 = vsel %vm1695, %v1765, %v1508
        %v1798 = vsel %vm1695, %v1766, %v1510
        %v1799 = vsel %vm1695, %v1767, %v1512
        %v1800 = vsel %vm1695, %v1768, %v1514
        %v1801 = vsel %vm1695, %v1769, %v1516
        %v1802 = vsel %vm1695, %v1770, %v1518
        %v1803 = vsel %vm1695, %v1771, %v1520
        %v1804 = vsel %vm1695, %v1772, %v1522
        %v1805 = vsel %vm1695, %v1773, %v1524
        %v1806 = vsel %vm1695, %v1774, %v1526
        %v1807 = vsel %vm1695, %v1775, %v1528
        %v1808 = vsel %vm1695, %v1776, %v1530
        %v1809 = vsel %vm1695, %v1777, %v1532
        %v1810 = vsel %vm1695, %v1778, %v1534
        %v1811 = vsel %vm1695, %v1779, %v1536
        %v1812 = vsel %vm1695, %v1780, %v1538
        %v1813 = vsel %vm1695, %v1781, %v1540
        %v1814 = vsel %vm1695, %v1782, %v1542
        %v1815 = vsel %vm1695, %v1783, %v1544
        %v1816 = vsel %vm1695, %v1784, %v1546
        %v1817 = vsel %vm1695, %v1785, %v1548
        %v1818 = vsel %vm1695, %v1786, %v1550
        %v1819 = vsel %vm1695, %v1787, %v1552
        %v1820 = vsel %vm1695, %v1788, %v1554
        %v1821 = vsel %vm1695, %v1789, %v1556
        %v1822 = vsel %vm1695, %v1790, %v1558
        %v1823 = vsel %vm1695, %v1791, %v1560
        %v1824 = vpack.c.bf16 %v1697, %v1696
        %v1825 = vpack.c.bf16 %v1793, %v1792
        %v1826 = vpack.c.bf16 %v994, %v992
        %v1827 = vpack.c.bf16 %v1699, %v1698
        %v1828 = vpack.c.bf16 %v1795, %v1794
        %v1829 = vpack.c.bf16 %v999, %v997
        %v1830 = vpack.c.bf16 %v1701, %v1700
        %v1831 = vpack.c.bf16 %v1797, %v1796
        %v1832 = vpack.c.bf16 %v1004, %v1002
        %v1833 = vpack.c.bf16 %v1703, %v1702
        %v1834 = vpack.c.bf16 %v1799, %v1798
        %v1835 = vpack.c.bf16 %v1009, %v1007
        %v1836 = vpack.c.bf16 %v1705, %v1704
        %v1837 = vpack.c.bf16 %v1801, %v1800
        %v1838 = vpack.c.bf16 %v1014, %v1012
        %v1839 = vpack.c.bf16 %v1707, %v1706
        %v1840 = vpack.c.bf16 %v1803, %v1802
        %v1841 = vpack.c.bf16 %v1019, %v1017
        %v1842 = vpack.c.bf16 %v1709, %v1708
        %v1843 = vpack.c.bf16 %v1805, %v1804
        %v1844 = vpack.c.bf16 %v1024, %v1022
        %v1845 = vpack.c.bf16 %v1711, %v1710
        %v1846 = vpack.c.bf16 %v1807, %v1806
        %v1847 = vpack.c.bf16 %v1029, %v1027
        %v1848 = vpack.c.bf16 %v1713, %v1712
        %v1849 = vpack.c.bf16 %v1809, %v1808
        %v1850 = vpack.c.bf16 %v1034, %v1032
        %v1851 = vpack.c.bf16 %v1715, %v1714
        %v1852 = vpack.c.bf16 %v1811, %v1810
        %v1853 = vpack.c.bf16 %v1039, %v1037
        %v1854 = vpack.c.bf16 %v1717, %v1716
        %v1855 = vpack.c.bf16 %v1813, %v1812
        %v1856 = vpack.c.bf16 %v1044, %v1042
        %v1857 = vpack.c.bf16 %v1719, %v1718
        %v1858 = vpack.c.bf16 %v1815, %v1814
        %v1859 = vpack.c.bf16 %v1049, %v1047
        %v1860 = vpack.c.bf16 %v1721, %v1720
        %v1861 = vpack.c.bf16 %v1817, %v1816
        %v1862 = vpack.c.bf16 %v1054, %v1052
        %v1863 = vpack.c.bf16 %v1723, %v1722
        %v1864 = vpack.c.bf16 %v1819, %v1818
        %v1865 = vpack.c.bf16 %v1059, %v1057
        %v1866 = vpack.c.bf16 %v1725, %v1724
        %v1867 = vpack.c.bf16 %v1821, %v1820
        %v1868 = vpack.c.bf16 %v1296, %v1294
        %v1869 = vpack.c.bf16 %v1727, %v1726
        %v1870 = vpack.c.bf16 %v1823, %v1822
        %v1871 = vpack.c.bf16 %v1597, %v1595
        %v1872 = vld [vmem:[%s3] sm:$0xf]
        %v1873 = vld [vmem:[%s3 + $0x4] sm:$0xf]
        %v1874 = vld [vmem:[%s3 + $0x8] sm:$0xf]
        %v1875 = vld [vmem:[%s3 + $0xc] sm:$0xf]
        %v1876 = vld [vmem:[%s3 + $0x10] sm:$0xf]
        %v1877 = vld [vmem:[%s3 + $0x14] sm:$0xf]
        %v1878 = vld [vmem:[%s3 + $0x18] sm:$0xf]
        %v1879 = vld [vmem:[%s3 + $0x1c] sm:$0xf]
        %v1880 = vld [vmem:[%s3 + $0x20] sm:$0xf]
        %v1881 = vld [vmem:[%s3 + $0x24] sm:$0xf]
        %v1882 = vld [vmem:[%s3 + $0x28] sm:$0xf]
        %v1883 = vld [vmem:[%s3 + $0x2c] sm:$0xf]
        %v1884 = vld [vmem:[%s3 + $0x30] sm:$0xf]
        %v1885 = vld [vmem:[%s3 + $0x34] sm:$0xf]
        %v1886 = vld [vmem:[%s3 + $0x38] sm:$0xf]
        %v1887 = vld [vmem:[%s3 + $0x3c] sm:$0xf]
        %v1888 = vld [vmem:[%s3 + $0x40] sm:$0xf]
        %v1889 = vld [vmem:[%s3 + $0x44] sm:$0xf]
        %v1890 = vld [vmem:[%s3 + $0x48] sm:$0xf]
        %v1891 = vld [vmem:[%s3 + $0x4c] sm:$0xf]
        %v1892 = vld [vmem:[%s3 + $0x50] sm:$0xf]
        %v1893 = vld [vmem:[%s3 + $0x54] sm:$0xf]
        %v1894 = vld [vmem:[%s3 + $0x58] sm:$0xf]
        %v1895 = vld [vmem:[%s3 + $0x5c] sm:$0xf]
        %v1896 = vld [vmem:[%s3 + $0x60] sm:$0xf]
        %v1897 = vld [vmem:[%s3 + $0x64] sm:$0xf]
        %v1898 = vld [vmem:[%s3 + $0x68] sm:$0xf]
        %v1899 = vld [vmem:[%s3 + $0x6c] sm:$0xf]
        %v1900 = vld [vmem:[%s3 + $0x70] sm:$0xf]
        %v1901 = vld [vmem:[%s3 + $0x74] sm:$0xf]
        %v1902 = vld [vmem:[%s3 + $0x78] sm:$0xf]
        %v1903 = vld [vmem:[%s3 + $0x7c] sm:$0xf]
        %v1904 = vld [vmem:[%s3 + $0x80] sm:$0xf]
        %v1905 = vld [vmem:[%s3 + $0x84] sm:$0xf]
        %v1906 = vld [vmem:[%s3 + $0x88] sm:$0xf]
        %v1907 = vld [vmem:[%s3 + $0x8c] sm:$0xf]
        %v1944 = vunpack.c.l.b16 %v1872
        %v1945 = vunpack.c.l.b16 %v1873
        %v1946 = vunpack.c.l.b16 %v1874
        %v1947 = vunpack.c.l.b16 %v1875
        %v1948 = vunpack.c.l.b16 %v1876
        %v1949 = vunpack.c.l.b16 %v1877
        %v1950 = vunpack.c.l.b16 %v1878
        %v1951 = vunpack.c.l.b16 %v1879
        %v1952 = vunpack.c.l.b16 %v1880
        %v1953 = vunpack.c.l.b16 %v1881
        %v1954 = vunpack.c.l.b16 %v1882
        %v1955 = vunpack.c.l.b16 %v1883
        %v1956 = vunpack.c.l.b16 %v1884
        %v1957 = vunpack.c.l.b16 %v1885
        %v1958 = vunpack.c.l.b16 %v1886
        %v1959 = vunpack.c.l.b16 %v1887
        %v1960 = vunpack.c.l.b16 %v1888
        %v1961 = vunpack.c.l.b16 %v1889
        %v1962 = vunpack.c.l.b16 %v1890
        %v1963 = vunpack.c.l.b16 %v1891
        %v1964 = vunpack.c.l.b16 %v1892
        %v1965 = vunpack.c.l.b16 %v1893
        %v1966 = vunpack.c.l.b16 %v1894
        %v1967 = vunpack.c.l.b16 %v1895
        %v1968 = vunpack.c.l.b16 %v1896
        %v1969 = vunpack.c.l.b16 %v1897
        %v1970 = vunpack.c.l.b16 %v1898
        %v1971 = vunpack.c.l.b16 %v1899
        %v1972 = vunpack.c.l.b16 %v1900
        %v1973 = vunpack.c.l.b16 %v1901
        %v1974 = vunpack.c.l.b16 %v1902
        %v1975 = vunpack.c.l.b16 %v1903
        %v1976 = vunpack.c.l.b16 %v1904
        %v1977 = vunpack.c.l.b16 %v1905
        %v1978 = vunpack.c.l.b16 %v1906
        %v1979 = vunpack.c.l.b16 %v1907
        %v1980 = vpack.c.b16 %v1945, %v1944
        %v1981 = vpack.c.b16 %v1947, %v1946
        %v1982 = vpack.c.b16 %v1949, %v1948
        %v1983 = vpack.c.b16 %v1951, %v1950
        %v1984 = vpack.c.b16 %v1953, %v1952
        %v1985 = vpack.c.b16 %v1955, %v1954
        %v1986 = vpack.c.b16 %v1957, %v1956
        %v1987 = vpack.c.b16 %v1959, %v1958
        %v1988 = vpack.c.b16 %v1961, %v1960
        %v1989 = vpack.c.b16 %v1963, %v1962
        %v1990 = vpack.c.b16 %v1965, %v1964
        %v1991 = vpack.c.b16 %v1967, %v1966
        %v1992 = vpack.c.b16 %v1969, %v1968
        %v1993 = vpack.c.b16 %v1971, %v1970
        %v1994 = vpack.c.b16 %v1973, %v1972
        %v1995 = vpack.c.b16 %v1975, %v1974
        %v1996 = vpack.c.b16 %v1977, %v1976
        %v1997 = vpack.c.b16 %v1979, %v1978
        %v2017 = vsel %vm406, %v1826, 0
        %v2020 = vsel %vm406, %v1829, 0
        %v2023 = vsel %vm406, %v1832, 0
        %v2026 = vsel %vm406, %v1835, 0
        %v2029 = vsel %vm406, %v1838, 0
        %v2032 = vsel %vm406, %v1841, 0
        %v2035 = vsel %vm406, %v1844, 0
        %v2038 = vsel %vm406, %v1847, 0
        %v2041 = vsel %vm406, %v1850, 0
        %v2044 = vsel %vm406, %v1853, 0
        %v2047 = vsel %vm406, %v1856, 0
        %v2050 = vsel %vm406, %v1859, 0
        %v2053 = vsel %vm406, %v1862, 0
        %v2056 = vsel %vm406, %v1865, 0
        %v2059 = vsel %vm406, %v1868, 0
        %v2062 = vsel %vm406, %v1871, 0
        %2064 = vmatprep.subr.bf16.mxu0 0
        %2065 = vmatpush1.bf16.msra.mxu0 %v1980
        %2066 = vmatprep.subr.bf16.mxu0 0
        %2067 = vmatpush1.bf16.msra.mxu0 %v1981
        %2068 = vmatprep.subr.bf16.mxu0 0
        %2069 = vmatpush1.bf16.msra.mxu0 %v1982
        %2070 = vmatprep.subr.bf16.mxu0 0
        %2071 = vmatpush1.bf16.msra.mxu0 %v1983
        %2072 = vmatprep.subr.bf16.mxu0 0
        %2073 = vmatpush1.bf16.msra.mxu0 %v1984
        %2074 = vmatprep.subr.bf16.mxu0 0
        %2075 = vmatpush1.bf16.msra.mxu0 %v1985
        %2076 = vmatprep.subr.bf16.mxu0 0
        %2077 = vmatpush1.bf16.msra.mxu0 %v1986
        %2078 = vmatprep.subr.bf16.mxu0 0
        %2079 = vmatpush1.bf16.msra.mxu0 %v1987
        %2080 = vmatprep.subr.bf16.mxu0 0
        %2081 = vmatpush1.bf16.msra.mxu0 %v1988
        %2082 = vmatprep.subr.bf16.mxu0 0
        %2083 = vmatpush1.bf16.msra.mxu0 %v1989
        %2084 = vmatprep.subr.bf16.mxu0 0
        %2085 = vmatpush1.bf16.msra.mxu0 %v1990
        %2086 = vmatprep.subr.bf16.mxu0 0
        %2087 = vmatpush1.bf16.msra.mxu0 %v1991
        %2088 = vmatprep.subr.bf16.mxu0 0
        %2089 = vmatpush1.bf16.msra.mxu0 %v1992
        %2090 = vmatprep.subr.bf16.mxu0 0
        %2091 = vmatpush1.bf16.msra.mxu0 %v1993
        %2092 = vmatprep.subr.bf16.mxu0 0
        %2093 = vmatpush1.bf16.msra.mxu0 %v1994
        %2094 = vmatprep.subr.bf16.mxu0 0
        %2095 = vmatpush1.bf16.msra.mxu0 %v1995
        %2096 = vmatprep.mubr.bf16.mxu0 %v1825
        %2097 = vmatmul.mubr.bf16.gmra.mrb[0].mxu0 %v1824
        %v2098 = vpop.f32.mrb[0].mxu0
        %v2099 = vadd.f32 0.0, %v2098
        %v2100 = vpop.f32.mrb[0].mxu0
        %v2101 = vpop.f32.mrb[0].mxu0
        %v2102 = vadd.f32 0.0, %v2101
        %v2103 = vpop.f32.mrb[0].mxu0
        %2104 = vmatprep.mubr.bf16.mxu0 %v1828
        %2105 = vmatmul.mubr.bf16.gmra.mrb[0].mxu0 %v1827
        %v2106 = vpop.f32.mrb[0].mxu0
        %v2107 = vadd.f32 0.0, %v2106
        %v2108 = vpop.f32.mrb[0].mxu0
        %v2109 = vpop.f32.mrb[0].mxu0
        %v2110 = vadd.f32 0.0, %v2109
        %v2111 = vpop.f32.mrb[0].mxu0
        %2112 = vmatprep.mubr.bf16.mxu0 %v1831
        %2113 = vmatmul.mubr.bf16.gmra.mrb[0].mxu0 %v1830
        %v2114 = vpop.f32.mrb[0].mxu0
        %v2115 = vadd.f32 0.0, %v2114
        %v2116 = vpop.f32.mrb[0].mxu0
        %v2117 = vpop.f32.mrb[0].mxu0
        %v2118 = vadd.f32 0.0, %v2117
        %v2119 = vpop.f32.mrb[0].mxu0
        %2120 = vmatprep.mubr.bf16.mxu0 %v1834
        %2121 = vmatmul.mubr.bf16.gmra.mrb[0].mxu0 %v1833
        %v2122 = vpop.f32.mrb[0].mxu0
        %v2123 = vadd.f32 0.0, %v2122
        %v2124 = vpop.f32.mrb[0].mxu0
        %v2125 = vpop.f32.mrb[0].mxu0
        %v2126 = vadd.f32 0.0, %v2125
        %v2127 = vpop.f32.mrb[0].mxu0
        %2128 = vmatprep.mubr.bf16.mxu0 %v1837
        %2129 = vmatmul.mubr.bf16.gmra.mrb[0].mxu0 %v1836
        %v2130 = vpop.f32.mrb[0].mxu0
        %v2131 = vadd.f32 0.0, %v2130
        %v2132 = vpop.f32.mrb[0].mxu0
        %v2133 = vpop.f32.mrb[0].mxu0
        %v2134 = vadd.f32 0.0, %v2133
        %v2135 = vpop.f32.mrb[0].mxu0
        %2136 = vmatprep.mubr.bf16.mxu0 %v1840
        %2137 = vmatmul.mubr.bf16.gmra.mrb[0].mxu0 %v1839
        %v2138 = vpop.f32.mrb[0].mxu0
        %v2139 = vadd.f32 0.0, %v2138
        %v2140 = vpop.f32.mrb[0].mxu0
        %v2141 = vpop.f32.mrb[0].mxu0
        %v2142 = vadd.f32 0.0, %v2141
        %v2143 = vpop.f32.mrb[0].mxu0
        %2144 = vmatprep.mubr.bf16.mxu0 %v1843
        %2145 = vmatmul.mubr.bf16.gmra.mrb[0].mxu0 %v1842
        %v2146 = vpop.f32.mrb[0].mxu0
        %v2147 = vadd.f32 0.0, %v2146
        %v2148 = vpop.f32.mrb[0].mxu0
        %v2149 = vpop.f32.mrb[0].mxu0
        %v2150 = vadd.f32 0.0, %v2149
        %v2151 = vpop.f32.mrb[0].mxu0
        %2152 = vmatprep.mubr.bf16.mxu0 %v1846
        %2153 = vmatmul.mubr.bf16.gmra.mrb[0].mxu0 %v1845
        %v2154 = vpop.f32.mrb[0].mxu0
        %v2155 = vadd.f32 0.0, %v2154
        %v2156 = vpop.f32.mrb[0].mxu0
        %v2157 = vpop.f32.mrb[0].mxu0
        %v2158 = vadd.f32 0.0, %v2157
        %v2159 = vpop.f32.mrb[0].mxu0
        %2160 = vmatprep.mubr.bf16.mxu0 %v1849
        %2161 = vmatmul.mubr.bf16.gmra.mrb[0].mxu0 %v1848
        %v2162 = vpop.f32.mrb[0].mxu0
        %v2163 = vadd.f32 0.0, %v2162
        %v2164 = vpop.f32.mrb[0].mxu0
        %v2165 = vpop.f32.mrb[0].mxu0
        %v2166 = vadd.f32 0.0, %v2165
        %v2167 = vpop.f32.mrb[0].mxu0
        %2168 = vmatprep.mubr.bf16.mxu0 %v1852
        %2169 = vmatmul.mubr.bf16.gmra.mrb[0].mxu0 %v1851
        %v2170 = vpop.f32.mrb[0].mxu0
        %v2171 = vadd.f32 0.0, %v2170
        %v2172 = vpop.f32.mrb[0].mxu0
        %v2173 = vpop.f32.mrb[0].mxu0
        %v2174 = vadd.f32 0.0, %v2173
        %v2175 = vpop.f32.mrb[0].mxu0
        %2176 = vmatprep.mubr.bf16.mxu0 %v1855
        %2177 = vmatmul.mubr.bf16.gmra.mrb[0].mxu0 %v1854
        %v2178 = vpop.f32.mrb[0].mxu0
        %v2179 = vadd.f32 0.0, %v2178
        %v2180 = vpop.f32.mrb[0].mxu0
        %v2181 = vpop.f32.mrb[0].mxu0
        %v2182 = vadd.f32 0.0, %v2181
        %v2183 = vpop.f32.mrb[0].mxu0
        %2184 = vmatprep.mubr.bf16.mxu0 %v1858
        %2185 = vmatmul.mubr.bf16.gmra.mrb[0].mxu0 %v1857
        %v2186 = vpop.f32.mrb[0].mxu0
        %v2187 = vadd.f32 0.0, %v2186
        %v2188 = vpop.f32.mrb[0].mxu0
        %v2189 = vpop.f32.mrb[0].mxu0
        %v2190 = vadd.f32 0.0, %v2189
        %v2191 = vpop.f32.mrb[0].mxu0
        %2192 = vmatprep.mubr.bf16.mxu0 %v1861
        %2193 = vmatmul.mubr.bf16.gmra.mrb[0].mxu0 %v1860
        %v2194 = vpop.f32.mrb[0].mxu0
        %v2195 = vadd.f32 0.0, %v2194
        %v2196 = vpop.f32.mrb[0].mxu0
        %v2197 = vpop.f32.mrb[0].mxu0
        %v2198 = vadd.f32 0.0, %v2197
        %v2199 = vpop.f32.mrb[0].mxu0
        %2200 = vmatprep.mubr.bf16.mxu0 %v1864
        %2201 = vmatmul.mubr.bf16.gmra.mrb[0].mxu0 %v1863
        %v2202 = vpop.f32.mrb[0].mxu0
        %v2203 = vadd.f32 0.0, %v2202
        %v2204 = vpop.f32.mrb[0].mxu0
        %v2205 = vpop.f32.mrb[0].mxu0
        %v2206 = vadd.f32 0.0, %v2205
        %v2207 = vpop.f32.mrb[0].mxu0
        %2208 = vmatprep.mubr.bf16.mxu0 %v1867
        %2209 = vmatmul.mubr.bf16.gmra.mrb[0].mxu0 %v1866
        %v2210 = vpop.f32.mrb[0].mxu0
        %v2211 = vadd.f32 0.0, %v2210
        %v2212 = vpop.f32.mrb[0].mxu0
        %v2213 = vpop.f32.mrb[0].mxu0
        %v2214 = vadd.f32 0.0, %v2213
        %v2215 = vpop.f32.mrb[0].mxu0
        %2216 = vmatprep.mubr.bf16.mxu0 %v1870
        %2217 = vmatmul.mubr.bf16.gmra.mrb[0].mxu0 %v1869
        %v2218 = vpop.f32.mrb[0].mxu0
        %v2219 = vadd.f32 0.0, %v2218
        %v2220 = vpop.f32.mrb[0].mxu0
        %v2221 = vpop.f32.mrb[0].mxu0
        %v2222 = vadd.f32 0.0, %v2221
        %v2223 = vpop.f32.mrb[0].mxu0
        %2224 = vdwg.mxu0
        %2225 = vmatprep.subr.bf16.mxu0 0
        %2226 = vmatpush1.bf16.msra.mxu0 %v1996
        %2227 = vmatprep.subr.bf16.mxu0 0
        %2228 = vmatpush1.bf16.msra.mxu0 %v1997
        %2229 = vmatprep.subr.bf16.mxu0 0
        %2230 = vmatpush1.bf16.msra.mxu0 0
        %2231 = vmatprep.subr.bf16.mxu0 0
        %2232 = vmatpush1.bf16.msra.mxu0 0
        %2233 = vmatprep.subr.bf16.mxu0 0
        %2234 = vmatpush1.bf16.msra.mxu0 0
        %2235 = vmatprep.subr.bf16.mxu0 0
        %2236 = vmatpush1.bf16.msra.mxu0 0
        %2237 = vmatprep.subr.bf16.mxu0 0
        %2238 = vmatpush1.bf16.msra.mxu0 0
        %2239 = vmatprep.subr.bf16.mxu0 0
        %2240 = vmatpush1.bf16.msra.mxu0 0
        %2241 = vmatprep.subr.bf16.mxu0 0
        %2242 = vmatpush1.bf16.msra.mxu0 0
        %2243 = vmatprep.subr.bf16.mxu0 0
        %2244 = vmatpush1.bf16.msra.mxu0 0
        %2245 = vmatprep.subr.bf16.mxu0 0
        %2246 = vmatpush1.bf16.msra.mxu0 0
        %2247 = vmatprep.subr.bf16.mxu0 0
        %2248 = vmatpush1.bf16.msra.mxu0 0
        %2249 = vmatprep.subr.bf16.mxu0 0
        %2250 = vmatpush1.bf16.msra.mxu0 0
        %2251 = vmatprep.subr.bf16.mxu0 0
        %2252 = vmatpush1.bf16.msra.mxu0 0
        %2253 = vmatprep.subr.bf16.mxu0 0
        %2254 = vmatpush1.bf16.msra.mxu0 0
        %2255 = vmatprep.subr.bf16.mxu0 0
        %2256 = vmatpush1.bf16.msra.mxu0 0
        %2257 = vmatprep.mubr.bf16.mxu0 0
        %2258 = vmatmul.mubr.bf16.gmra.mrb[0].mxu0 %v2017
        %v2259 = vpop.f32.mrb[0].mxu0
        %v2260 = vadd.f32 %v2099, %v2259
        %v2261 = vpop.f32.mrb[0].mxu0
        %v2262 = vpop.f32.mrb[0].mxu0
        %v2263 = vadd.f32 %v2102, %v2262
        %v2264 = vpop.f32.mrb[0].mxu0
        %2265 = vmatprep.mubr.bf16.mxu0 0
        %2266 = vmatmul.mubr.bf16.gmra.mrb[0].mxu0 %v2020
        %v2267 = vpop.f32.mrb[0].mxu0
        %v2268 = vadd.f32 %v2107, %v2267
        %v2269 = vpop.f32.mrb[0].mxu0
        %v2270 = vpop.f32.mrb[0].mxu0
        %v2271 = vadd.f32 %v2110, %v2270
        %v2272 = vpop.f32.mrb[0].mxu0
        %2273 = vmatprep.mubr.bf16.mxu0 0
        %2274 = vmatmul.mubr.bf16.gmra.mrb[0].mxu0 %v2023
        %v2275 = vpop.f32.mrb[0].mxu0
        %v2276 = vadd.f32 %v2115, %v2275
        %v2277 = vpop.f32.mrb[0].mxu0
        %v2278 = vpop.f32.mrb[0].mxu0
        %v2279 = vadd.f32 %v2118, %v2278
        %v2280 = vpop.f32.mrb[0].mxu0
        %2281 = vmatprep.mubr.bf16.mxu0 0
        %2282 = vmatmul.mubr.bf16.gmra.mrb[0].mxu0 %v2026
        %v2283 = vpop.f32.mrb[0].mxu0
        %v2284 = vadd.f32 %v2123, %v2283
        %v2285 = vpop.f32.mrb[0].mxu0
        %v2286 = vpop.f32.mrb[0].mxu0
        %v2287 = vadd.f32 %v2126, %v2286
        %v2288 = vpop.f32.mrb[0].mxu0
        %2289 = vmatprep.mubr.bf16.mxu0 0
        %2290 = vmatmul.mubr.bf16.gmra.mrb[0].mxu0 %v2029
        %v2291 = vpop.f32.mrb[0].mxu0
        %v2292 = vadd.f32 %v2131, %v2291
        %v2293 = vpop.f32.mrb[0].mxu0
        %v2294 = vpop.f32.mrb[0].mxu0
        %v2295 = vadd.f32 %v2134, %v2294
        %v2296 = vpop.f32.mrb[0].mxu0
        %2297 = vmatprep.mubr.bf16.mxu0 0
        %2298 = vmatmul.mubr.bf16.gmra.mrb[0].mxu0 %v2032
        %v2299 = vpop.f32.mrb[0].mxu0
        %v2300 = vadd.f32 %v2139, %v2299
        %v2301 = vpop.f32.mrb[0].mxu0
        %v2302 = vpop.f32.mrb[0].mxu0
        %v2303 = vadd.f32 %v2142, %v2302
        %v2304 = vpop.f32.mrb[0].mxu0
        %2305 = vmatprep.mubr.bf16.mxu0 0
        %2306 = vmatmul.mubr.bf16.gmra.mrb[0].mxu0 %v2035
        %v2307 = vpop.f32.mrb[0].mxu0
        %v2308 = vadd.f32 %v2147, %v2307
        %v2309 = vpop.f32.mrb[0].mxu0
        %v2310 = vpop.f32.mrb[0].mxu0
        %v2311 = vadd.f32 %v2150, %v2310
        %v2312 = vpop.f32.mrb[0].mxu0
        %2313 = vmatprep.mubr.bf16.mxu0 0
        %2314 = vmatmul.mubr.bf16.gmra.mrb[0].mxu0 %v2038
        %v2315 = vpop.f32.mrb[0].mxu0
        %v2316 = vadd.f32 %v2155, %v2315
        %v2317 = vpop.f32.mrb[0].mxu0
        %v2318 = vpop.f32.mrb[0].mxu0
        %v2319 = vadd.f32 %v2158, %v2318
        %v2320 = vpop.f32.mrb[0].mxu0
        %2321 = vmatprep.mubr.bf16.mxu0 0
        %2322 = vmatmul.mubr.bf16.gmra.mrb[0].mxu0 %v2041
        %v2323 = vpop.f32.mrb[0].mxu0
        %v2324 = vadd.f32 %v2163, %v2323
        %v2325 = vpop.f32.mrb[0].mxu0
        %v2326 = vpop.f32.mrb[0].mxu0
        %v2327 = vadd.f32 %v2166, %v2326
        %v2328 = vpop.f32.mrb[0].mxu0
        %2329 = vmatprep.mubr.bf16.mxu0 0
        %2330 = vmatmul.mubr.bf16.gmra.mrb[0].mxu0 %v2044
        %v2331 = vpop.f32.mrb[0].mxu0
        %v2332 = vadd.f32 %v2171, %v2331
        %v2333 = vpop.f32.mrb[0].mxu0
        %v2334 = vpop.f32.mrb[0].mxu0
        %v2335 = vadd.f32 %v2174, %v2334
        %v2336 = vpop.f32.mrb[0].mxu0
        %2337 = vmatprep.mubr.bf16.mxu0 0
        %2338 = vmatmul.mubr.bf16.gmra.mrb[0].mxu0 %v2047
        %v2339 = vpop.f32.mrb[0].mxu0
        %v2340 = vadd.f32 %v2179, %v2339
        %v2341 = vpop.f32.mrb[0].mxu0
        %v2342 = vpop.f32.mrb[0].mxu0
        %v2343 = vadd.f32 %v2182, %v2342
        %v2344 = vpop.f32.mrb[0].mxu0
        %2345 = vmatprep.mubr.bf16.mxu0 0
        %2346 = vmatmul.mubr.bf16.gmra.mrb[0].mxu0 %v2050
        %v2347 = vpop.f32.mrb[0].mxu0
        %v2348 = vadd.f32 %v2187, %v2347
        %v2349 = vpop.f32.mrb[0].mxu0
        %v2350 = vpop.f32.mrb[0].mxu0
        %v2351 = vadd.f32 %v2190, %v2350
        %v2352 = vpop.f32.mrb[0].mxu0
        %2353 = vmatprep.mubr.bf16.mxu0 0
        %2354 = vmatmul.mubr.bf16.gmra.mrb[0].mxu0 %v2053
        %v2355 = vpop.f32.mrb[0].mxu0
        %v2356 = vadd.f32 %v2195, %v2355
        %v2357 = vpop.f32.mrb[0].mxu0
        %v2358 = vpop.f32.mrb[0].mxu0
        %v2359 = vadd.f32 %v2198, %v2358
        %v2360 = vpop.f32.mrb[0].mxu0
        %2361 = vmatprep.mubr.bf16.mxu0 0
        %2362 = vmatmul.mubr.bf16.gmra.mrb[0].mxu0 %v2056
        %v2363 = vpop.f32.mrb[0].mxu0
        %v2364 = vadd.f32 %v2203, %v2363
        %v2365 = vpop.f32.mrb[0].mxu0
        %v2366 = vpop.f32.mrb[0].mxu0
        %v2367 = vadd.f32 %v2206, %v2366
        %v2368 = vpop.f32.mrb[0].mxu0
        %2369 = vmatprep.mubr.bf16.mxu0 0
        %2370 = vmatmul.mubr.bf16.gmra.mrb[0].mxu0 %v2059
        %v2371 = vpop.f32.mrb[0].mxu0
        %v2372 = vadd.f32 %v2211, %v2371
        %v2373 = vpop.f32.mrb[0].mxu0
        %v2374 = vpop.f32.mrb[0].mxu0
        %v2375 = vadd.f32 %v2214, %v2374
        %v2376 = vpop.f32.mrb[0].mxu0
        %2377 = vmatprep.mubr.bf16.mxu0 0
        %2378 = vmatmul.mubr.bf16.gmra.mrb[0].mxu0 %v2062
        %v2379 = vpop.f32.mrb[0].mxu0
        %v2380 = vadd.f32 %v2219, %v2379
        %v2381 = vpop.f32.mrb[0].mxu0
        %v2382 = vpop.f32.mrb[0].mxu0
        %v2383 = vadd.f32 %v2222, %v2382
        %v2384 = vpop.f32.mrb[0].mxu0
        %2385 = vdwg.mxu0
        %v2386 = vsel %vm406, %v2260, 0.0
        %2387 = vadd.xlane.f32.xlu0 %v2386
        %v2388 = vpop.xlane.xlu0 %2387
        %v2389 = vsel %vm406, %v2263, 0.0
        %2390 = vadd.xlane.f32.xlu0 %v2389
        %v2391 = vpop.xlane.xlu0 %2390
        %v2392 = vsel %vm406, %v2268, 0.0
        %2393 = vadd.xlane.f32.xlu0 %v2392
        %v2394 = vpop.xlane.xlu0 %2393
        %v2395 = vsel %vm406, %v2271, 0.0
        %2396 = vadd.xlane.f32.xlu0 %v2395
        %v2397 = vpop.xlane.xlu0 %2396
        %v2398 = vsel %vm406, %v2276, 0.0
        %2399 = vadd.xlane.f32.xlu0 %v2398
        %v2400 = vpop.xlane.xlu0 %2399
        %v2401 = vsel %vm406, %v2279, 0.0
        %2402 = vadd.xlane.f32.xlu0 %v2401
        %v2403 = vpop.xlane.xlu0 %2402
        %v2404 = vsel %vm406, %v2284, 0.0
        %2405 = vadd.xlane.f32.xlu0 %v2404
        %v2406 = vpop.xlane.xlu0 %2405
        %v2407 = vsel %vm406, %v2287, 0.0
        %2408 = vadd.xlane.f32.xlu0 %v2407
        %v2409 = vpop.xlane.xlu0 %2408
        %v2410 = vsel %vm406, %v2292, 0.0
        %2411 = vadd.xlane.f32.xlu0 %v2410
        %v2412 = vpop.xlane.xlu0 %2411
        %v2413 = vsel %vm406, %v2295, 0.0
        %2414 = vadd.xlane.f32.xlu0 %v2413
        %v2415 = vpop.xlane.xlu0 %2414
        %v2416 = vsel %vm406, %v2300, 0.0
        %2417 = vadd.xlane.f32.xlu0 %v2416
        %v2418 = vpop.xlane.xlu0 %2417
        %v2419 = vsel %vm406, %v2303, 0.0
        %2420 = vadd.xlane.f32.xlu0 %v2419
        %v2421 = vpop.xlane.xlu0 %2420
        %v2422 = vsel %vm406, %v2308, 0.0
        %2423 = vadd.xlane.f32.xlu0 %v2422
        %v2424 = vpop.xlane.xlu0 %2423
        %v2425 = vsel %vm406, %v2311, 0.0
        %2426 = vadd.xlane.f32.xlu0 %v2425
        %v2427 = vpop.xlane.xlu0 %2426
        %v2428 = vsel %vm406, %v2316, 0.0
        %2429 = vadd.xlane.f32.xlu0 %v2428
        %v2430 = vpop.xlane.xlu0 %2429
        %v2431 = vsel %vm406, %v2319, 0.0
        %2432 = vadd.xlane.f32.xlu0 %v2431
        %v2433 = vpop.xlane.xlu0 %2432
        %v2434 = vsel %vm406, %v2324, 0.0
        %2435 = vadd.xlane.f32.xlu0 %v2434
        %v2436 = vpop.xlane.xlu0 %2435
        %v2437 = vsel %vm406, %v2327, 0.0
        %2438 = vadd.xlane.f32.xlu0 %v2437
        %v2439 = vpop.xlane.xlu0 %2438
        %v2440 = vsel %vm406, %v2332, 0.0
        %2441 = vadd.xlane.f32.xlu0 %v2440
        %v2442 = vpop.xlane.xlu0 %2441
        %v2443 = vsel %vm406, %v2335, 0.0
        %2444 = vadd.xlane.f32.xlu0 %v2443
        %v2445 = vpop.xlane.xlu0 %2444
        %v2446 = vsel %vm406, %v2340, 0.0
        %2447 = vadd.xlane.f32.xlu0 %v2446
        %v2448 = vpop.xlane.xlu0 %2447
        %v2449 = vsel %vm406, %v2343, 0.0
        %2450 = vadd.xlane.f32.xlu0 %v2449
        %v2451 = vpop.xlane.xlu0 %2450
        %v2452 = vsel %vm406, %v2348, 0.0
        %2453 = vadd.xlane.f32.xlu0 %v2452
        %v2454 = vpop.xlane.xlu0 %2453
        %v2455 = vsel %vm406, %v2351, 0.0
        %2456 = vadd.xlane.f32.xlu0 %v2455
        %v2457 = vpop.xlane.xlu0 %2456
        %v2458 = vsel %vm406, %v2356, 0.0
        %2459 = vadd.xlane.f32.xlu0 %v2458
        %v2460 = vpop.xlane.xlu0 %2459
        %v2461 = vsel %vm406, %v2359, 0.0
        %2462 = vadd.xlane.f32.xlu0 %v2461
        %v2463 = vpop.xlane.xlu0 %2462
        %v2464 = vsel %vm406, %v2364, 0.0
        %2465 = vadd.xlane.f32.xlu0 %v2464
        %v2466 = vpop.xlane.xlu0 %2465
        %v2467 = vsel %vm406, %v2367, 0.0
        %2468 = vadd.xlane.f32.xlu0 %v2467
        %v2469 = vpop.xlane.xlu0 %2468
        %v2470 = vsel %vm406, %v2372, 0.0
        %2471 = vadd.xlane.f32.xlu0 %v2470
        %v2472 = vpop.xlane.xlu0 %2471
        %v2473 = vsel %vm406, %v2375, 0.0
        %2474 = vadd.xlane.f32.xlu0 %v2473
        %v2475 = vpop.xlane.xlu0 %2474
        %v2476 = vsel %vm406, %v2380, 0.0
        %2477 = vadd.xlane.f32.xlu0 %v2476
        %v2478 = vpop.xlane.xlu0 %2477
        %v2479 = vsel %vm406, %v2383, 0.0
        %2480 = vadd.xlane.f32.xlu0 %v2479
        %v2481 = vpop.xlane.xlu0 %2480
        %v2482 = vrcp.pop 32.0
        %v2483 = vmul.f32 %v2388, %v2482
        %v2484 = vmul.f32 %v2391, %v2482
        %v2485 = vmul.f32 %v2394, %v2482
        %v2486 = vmul.f32 %v2397, %v2482
        %v2487 = vmul.f32 %v2400, %v2482
        %v2488 = vmul.f32 %v2403, %v2482
        %v2489 = vmul.f32 %v2406, %v2482
        %v2490 = vmul.f32 %v2409, %v2482
        %v2491 = vmul.f32 %v2412, %v2482
        %v2492 = vmul.f32 %v2415, %v2482
        %v2493 = vmul.f32 %v2418, %v2482
        %v2494 = vmul.f32 %v2421, %v2482
        %v2495 = vmul.f32 %v2424, %v2482
        %v2496 = vmul.f32 %v2427, %v2482
        %v2497 = vmul.f32 %v2430, %v2482
        %v2498 = vmul.f32 %v2433, %v2482
        %v2499 = vmul.f32 %v2436, %v2482
        %v2500 = vmul.f32 %v2439, %v2482
        %v2501 = vmul.f32 %v2442, %v2482
        %v2502 = vmul.f32 %v2445, %v2482
        %v2503 = vmul.f32 %v2448, %v2482
        %v2504 = vmul.f32 %v2451, %v2482
        %v2505 = vmul.f32 %v2454, %v2482
        %v2506 = vmul.f32 %v2457, %v2482
        %v2507 = vmul.f32 %v2460, %v2482
        %v2508 = vmul.f32 %v2463, %v2482
        %v2509 = vmul.f32 %v2466, %v2482
        %v2510 = vmul.f32 %v2469, %v2482
        %v2511 = vmul.f32 %v2472, %v2482
        %v2512 = vmul.f32 %v2475, %v2482
        %v2513 = vmul.f32 %v2478, %v2482
        %v2514 = vmul.f32 %v2481, %v2482
        %v2515 = vsub.f32 %v2260, %v2483
        %v2516 = vsub.f32 %v2263, %v2484
        %v2517 = vsub.f32 %v2268, %v2485
        %v2518 = vsub.f32 %v2271, %v2486
        %v2519 = vsub.f32 %v2276, %v2487
        %v2520 = vsub.f32 %v2279, %v2488
        %v2521 = vsub.f32 %v2284, %v2489
        %v2522 = vsub.f32 %v2287, %v2490
        %v2523 = vsub.f32 %v2292, %v2491
        %v2524 = vsub.f32 %v2295, %v2492
        %v2525 = vsub.f32 %v2300, %v2493
        %v2526 = vsub.f32 %v2303, %v2494
        %v2527 = vsub.f32 %v2308, %v2495
        %v2528 = vsub.f32 %v2311, %v2496
        %v2529 = vsub.f32 %v2316, %v2497
        %v2530 = vsub.f32 %v2319, %v2498
        %v2531 = vsub.f32 %v2324, %v2499
        %v2532 = vsub.f32 %v2327, %v2500
        %v2533 = vsub.f32 %v2332, %v2501
        %v2534 = vsub.f32 %v2335, %v2502
        %v2535 = vsub.f32 %v2340, %v2503
        %v2536 = vsub.f32 %v2343, %v2504
        %v2537 = vsub.f32 %v2348, %v2505
        %v2538 = vsub.f32 %v2351, %v2506
        %v2539 = vsub.f32 %v2356, %v2507
        %v2540 = vsub.f32 %v2359, %v2508
        %v2541 = vsub.f32 %v2364, %v2509
        %v2542 = vsub.f32 %v2367, %v2510
        %v2543 = vsub.f32 %v2372, %v2511
        %v2544 = vsub.f32 %v2375, %v2512
        %v2545 = vsub.f32 %v2380, %v2513
        %v2546 = vsub.f32 %v2383, %v2514
        %v2547 = vmul.f32 %v2515, %v2515
        %v2548 = vmul.f32 %v2516, %v2516
        %v2549 = vmul.f32 %v2517, %v2517
        %v2550 = vmul.f32 %v2518, %v2518
        %v2551 = vmul.f32 %v2519, %v2519
        %v2552 = vmul.f32 %v2520, %v2520
        %v2553 = vmul.f32 %v2521, %v2521
        %v2554 = vmul.f32 %v2522, %v2522
        %v2555 = vmul.f32 %v2523, %v2523
        %v2556 = vmul.f32 %v2524, %v2524
        %v2557 = vmul.f32 %v2525, %v2525
        %v2558 = vmul.f32 %v2526, %v2526
        %v2559 = vmul.f32 %v2527, %v2527
        %v2560 = vmul.f32 %v2528, %v2528
        %v2561 = vmul.f32 %v2529, %v2529
        %v2562 = vmul.f32 %v2530, %v2530
        %v2563 = vmul.f32 %v2531, %v2531
        %v2564 = vmul.f32 %v2532, %v2532
        %v2565 = vmul.f32 %v2533, %v2533
        %v2566 = vmul.f32 %v2534, %v2534
        %v2567 = vmul.f32 %v2535, %v2535
        %v2568 = vmul.f32 %v2536, %v2536
        %v2569 = vmul.f32 %v2537, %v2537
        %v2570 = vmul.f32 %v2538, %v2538
        %v2571 = vmul.f32 %v2539, %v2539
        %v2572 = vmul.f32 %v2540, %v2540
        %v2573 = vmul.f32 %v2541, %v2541
        %v2574 = vmul.f32 %v2542, %v2542
        %v2575 = vmul.f32 %v2543, %v2543
        %v2576 = vmul.f32 %v2544, %v2544
        %v2577 = vmul.f32 %v2545, %v2545
        %v2578 = vmul.f32 %v2546, %v2546
        %v2579 = vsel %vm406, %v2547, 0.0
        %2580 = vadd.xlane.f32.xlu0 %v2579
        %v2581 = vpop.xlane.xlu0 %2580
        %v2582 = vsel %vm406, %v2548, 0.0
        %2583 = vadd.xlane.f32.xlu0 %v2582
        %v2584 = vpop.xlane.xlu0 %2583
        %v2585 = vsel %vm406, %v2549, 0.0
        %2586 = vadd.xlane.f32.xlu0 %v2585
        %v2587 = vpop.xlane.xlu0 %2586
        %v2588 = vsel %vm406, %v2550, 0.0
        %2589 = vadd.xlane.f32.xlu0 %v2588
        %v2590 = vpop.xlane.xlu0 %2589
        %v2591 = vsel %vm406, %v2551, 0.0
        %2592 = vadd.xlane.f32.xlu0 %v2591
        %v2593 = vpop.xlane.xlu0 %2592
        %v2594 = vsel %vm406, %v2552, 0.0
        %2595 = vadd.xlane.f32.xlu0 %v2594
        %v2596 = vpop.xlane.xlu0 %2595
        %v2597 = vsel %vm406, %v2553, 0.0
        %2598 = vadd.xlane.f32.xlu0 %v2597
        %v2599 = vpop.xlane.xlu0 %2598
        %v2600 = vsel %vm406, %v2554, 0.0
        %2601 = vadd.xlane.f32.xlu0 %v2600
        %v2602 = vpop.xlane.xlu0 %2601
        %v2603 = vsel %vm406, %v2555, 0.0
        %2604 = vadd.xlane.f32.xlu0 %v2603
        %v2605 = vpop.xlane.xlu0 %2604
        %v2606 = vsel %vm406, %v2556, 0.0
        %2607 = vadd.xlane.f32.xlu0 %v2606
        %v2608 = vpop.xlane.xlu0 %2607
        %v2609 = vsel %vm406, %v2557, 0.0
        %2610 = vadd.xlane.f32.xlu0 %v2609
        %v2611 = vpop.xlane.xlu0 %2610
        %v2612 = vsel %vm406, %v2558, 0.0
        %2613 = vadd.xlane.f32.xlu0 %v2612
        %v2614 = vpop.xlane.xlu0 %2613
        %v2615 = vsel %vm406, %v2559, 0.0
        %2616 = vadd.xlane.f32.xlu0 %v2615
        %v2617 = vpop.xlane.xlu0 %2616
        %v2618 = vsel %vm406, %v2560, 0.0
        %2619 = vadd.xlane.f32.xlu0 %v2618
        %v2620 = vpop.xlane.xlu0 %2619
        %v2621 = vsel %vm406, %v2561, 0.0
        %2622 = vadd.xlane.f32.xlu0 %v2621
        %v2623 = vpop.xlane.xlu0 %2622
        %v2624 = vsel %vm406, %v2562, 0.0
        %2625 = vadd.xlane.f32.xlu0 %v2624
        %v2626 = vpop.xlane.xlu0 %2625
        %v2627 = vsel %vm406, %v2563, 0.0
        %2628 = vadd.xlane.f32.xlu0 %v2627
        %v2629 = vpop.xlane.xlu0 %2628
        %v2630 = vsel %vm406, %v2564, 0.0
        %2631 = vadd.xlane.f32.xlu0 %v2630
        %v2632 = vpop.xlane.xlu0 %2631
        %v2633 = vsel %vm406, %v2565, 0.0
        %2634 = vadd.xlane.f32.xlu0 %v2633
        %v2635 = vpop.xlane.xlu0 %2634
        %v2636 = vsel %vm406, %v2566, 0.0
        %2637 = vadd.xlane.f32.xlu0 %v2636
        %v2638 = vpop.xlane.xlu0 %2637
        %v2639 = vsel %vm406, %v2567, 0.0
        %2640 = vadd.xlane.f32.xlu0 %v2639
        %v2641 = vpop.xlane.xlu0 %2640
        %v2642 = vsel %vm406, %v2568, 0.0
        %2643 = vadd.xlane.f32.xlu0 %v2642
        %v2644 = vpop.xlane.xlu0 %2643
        %v2645 = vsel %vm406, %v2569, 0.0
        %2646 = vadd.xlane.f32.xlu0 %v2645
        %v2647 = vpop.xlane.xlu0 %2646
        %v2648 = vsel %vm406, %v2570, 0.0
        %2649 = vadd.xlane.f32.xlu0 %v2648
        %v2650 = vpop.xlane.xlu0 %2649
        %v2651 = vsel %vm406, %v2571, 0.0
        %2652 = vadd.xlane.f32.xlu0 %v2651
        %v2653 = vpop.xlane.xlu0 %2652
        %v2654 = vsel %vm406, %v2572, 0.0
        %2655 = vadd.xlane.f32.xlu0 %v2654
        %v2656 = vpop.xlane.xlu0 %2655
        %v2657 = vsel %vm406, %v2573, 0.0
        %2658 = vadd.xlane.f32.xlu0 %v2657
        %v2659 = vpop.xlane.xlu0 %2658
        %v2660 = vsel %vm406, %v2574, 0.0
        %2661 = vadd.xlane.f32.xlu0 %v2660
        %v2662 = vpop.xlane.xlu0 %2661
        %v2663 = vsel %vm406, %v2575, 0.0
        %2664 = vadd.xlane.f32.xlu0 %v2663
        %v2665 = vpop.xlane.xlu0 %2664
        %v2666 = vsel %vm406, %v2576, 0.0
        %2667 = vadd.xlane.f32.xlu0 %v2666
        %v2668 = vpop.xlane.xlu0 %2667
        %v2669 = vsel %vm406, %v2577, 0.0
        %2670 = vadd.xlane.f32.xlu0 %v2669
        %v2671 = vpop.xlane.xlu0 %2670
        %v2672 = vsel %vm406, %v2578, 0.0
        %2673 = vadd.xlane.f32.xlu0 %v2672
        %v2674 = vpop.xlane.xlu0 %2673
        %v2675 = vmul.f32 %v2581, %v2482
        %v2676 = vmul.f32 %v2584, %v2482
        %v2677 = vmul.f32 %v2587, %v2482
        %v2678 = vmul.f32 %v2590, %v2482
        %v2679 = vmul.f32 %v2593, %v2482
        %v2680 = vmul.f32 %v2596, %v2482
        %v2681 = vmul.f32 %v2599, %v2482
        %v2682 = vmul.f32 %v2602, %v2482
        %v2683 = vmul.f32 %v2605, %v2482
        %v2684 = vmul.f32 %v2608, %v2482
        %v2685 = vmul.f32 %v2611, %v2482
        %v2686 = vmul.f32 %v2614, %v2482
        %v2687 = vmul.f32 %v2617, %v2482
        %v2688 = vmul.f32 %v2620, %v2482
        %v2689 = vmul.f32 %v2623, %v2482
        %v2690 = vmul.f32 %v2626, %v2482
        %v2691 = vmul.f32 %v2629, %v2482
        %v2692 = vmul.f32 %v2632, %v2482
        %v2693 = vmul.f32 %v2635, %v2482
        %v2694 = vmul.f32 %v2638, %v2482
        %v2695 = vmul.f32 %v2641, %v2482
        %v2696 = vmul.f32 %v2644, %v2482
        %v2697 = vmul.f32 %v2647, %v2482
        %v2698 = vmul.f32 %v2650, %v2482
        %v2699 = vmul.f32 %v2653, %v2482
        %v2700 = vmul.f32 %v2656, %v2482
        %v2701 = vmul.f32 %v2659, %v2482
        %v2702 = vmul.f32 %v2662, %v2482
        %v2703 = vmul.f32 %v2665, %v2482
        %v2704 = vmul.f32 %v2668, %v2482
        %v2705 = vmul.f32 %v2671, %v2482
        %v2706 = vmul.f32 %v2674, %v2482
        %v2707 = vadd.f32 %v2675, 1e-05
        %v2708 = vadd.f32 %v2676, 1e-05
        %v2709 = vadd.f32 %v2677, 1e-05
        %v2710 = vadd.f32 %v2678, 1e-05
        %v2711 = vadd.f32 %v2679, 1e-05
        %v2712 = vadd.f32 %v2680, 1e-05
        %v2713 = vadd.f32 %v2681, 1e-05
        %v2714 = vadd.f32 %v2682, 1e-05
        %v2715 = vadd.f32 %v2683, 1e-05
        %v2716 = vadd.f32 %v2684, 1e-05
        %v2717 = vadd.f32 %v2685, 1e-05
        %v2718 = vadd.f32 %v2686, 1e-05
        %v2719 = vadd.f32 %v2687, 1e-05
        %v2720 = vadd.f32 %v2688, 1e-05
        %v2721 = vadd.f32 %v2689, 1e-05
        %v2722 = vadd.f32 %v2690, 1e-05
        %v2723 = vadd.f32 %v2691, 1e-05
        %v2724 = vadd.f32 %v2692, 1e-05
        %v2725 = vadd.f32 %v2693, 1e-05
        %v2726 = vadd.f32 %v2694, 1e-05
        %v2727 = vadd.f32 %v2695, 1e-05
        %v2728 = vadd.f32 %v2696, 1e-05
        %v2729 = vadd.f32 %v2697, 1e-05
        %v2730 = vadd.f32 %v2698, 1e-05
        %v2731 = vadd.f32 %v2699, 1e-05
        %v2732 = vadd.f32 %v2700, 1e-05
        %v2733 = vadd.f32 %v2701, 1e-05
        %v2734 = vadd.f32 %v2702, 1e-05
        %v2735 = vadd.f32 %v2703, 1e-05
        %v2736 = vadd.f32 %v2704, 1e-05
        %v2737 = vadd.f32 %v2705, 1e-05
        %v2738 = vadd.f32 %v2706, 1e-05
        %v2739 = vrsqrt.pop %v2707
        %v2740 = vrsqrt.pop %v2708
        %v2741 = vrsqrt.pop %v2709
        %v2742 = vrsqrt.pop %v2710
        %v2743 = vrsqrt.pop %v2711
        %v2744 = vrsqrt.pop %v2712
        %v2745 = vrsqrt.pop %v2713
        %v2746 = vrsqrt.pop %v2714
        %v2747 = vrsqrt.pop %v2715
        %v2748 = vrsqrt.pop %v2716
        %v2749 = vrsqrt.pop %v2717
        %v2750 = vrsqrt.pop %v2718
        %v2751 = vrsqrt.pop %v2719
        %v2752 = vrsqrt.pop %v2720
        %v2753 = vrsqrt.pop %v2721
        %v2754 = vrsqrt.pop %v2722
        %v2755 = vrsqrt.pop %v2723
        %v2756 = vrsqrt.pop %v2724
        %v2757 = vrsqrt.pop %v2725
        %v2758 = vrsqrt.pop %v2726
        %v2759 = vrsqrt.pop %v2727
        %v2760 = vrsqrt.pop %v2728
        %v2761 = vrsqrt.pop %v2729
        %v2762 = vrsqrt.pop %v2730
        %v2763 = vrsqrt.pop %v2731
        %v2764 = vrsqrt.pop %v2732
        %v2765 = vrsqrt.pop %v2733
        %v2766 = vrsqrt.pop %v2734
        %v2767 = vrsqrt.pop %v2735
        %v2768 = vrsqrt.pop %v2736
        %v2769 = vrsqrt.pop %v2737
        %v2770 = vrsqrt.pop %v2738
        %v2771 = vmul.f32 %v2515, %v2739
        %v2772 = vmul.f32 %v2516, %v2740
        %v2773 = vmul.f32 %v2517, %v2741
        %v2774 = vmul.f32 %v2518, %v2742
        %v2775 = vmul.f32 %v2519, %v2743
        %v2776 = vmul.f32 %v2520, %v2744
        %v2777 = vmul.f32 %v2521, %v2745
        %v2778 = vmul.f32 %v2522, %v2746
        %v2779 = vmul.f32 %v2523, %v2747
        %v2780 = vmul.f32 %v2524, %v2748
        %v2781 = vmul.f32 %v2525, %v2749
        %v2782 = vmul.f32 %v2526, %v2750
        %v2783 = vmul.f32 %v2527, %v2751
        %v2784 = vmul.f32 %v2528, %v2752
        %v2785 = vmul.f32 %v2529, %v2753
        %v2786 = vmul.f32 %v2530, %v2754
        %v2787 = vmul.f32 %v2531, %v2755
        %v2788 = vmul.f32 %v2532, %v2756
        %v2789 = vmul.f32 %v2533, %v2757
        %v2790 = vmul.f32 %v2534, %v2758
        %v2791 = vmul.f32 %v2535, %v2759
        %v2792 = vmul.f32 %v2536, %v2760
        %v2793 = vmul.f32 %v2537, %v2761
        %v2794 = vmul.f32 %v2538, %v2762
        %v2795 = vmul.f32 %v2539, %v2763
        %v2796 = vmul.f32 %v2540, %v2764
        %v2797 = vmul.f32 %v2541, %v2765
        %v2798 = vmul.f32 %v2542, %v2766
        %v2799 = vmul.f32 %v2543, %v2767
        %v2800 = vmul.f32 %v2544, %v2768
        %v2801 = vmul.f32 %v2545, %v2769
        %v2802 = vmul.f32 %v2546, %v2770
        %v2803 = vld [vmem:[%s7] sm:$0x1]
        %v2805 = vlaneseq
        %v2806 = vshrl.u32 %v2805, 7
        %v2807 = vsub.s32 0, %v2806
        %v2808 = vrot.slane %v2803, %v2807
        %v2810 = vmul.f32 %v2771, %v2808
        %v2811 = vmul.f32 %v2772, %v2808
        %v2812 = vmul.f32 %v2773, %v2808
        %v2813 = vmul.f32 %v2774, %v2808
        %v2814 = vmul.f32 %v2775, %v2808
        %v2815 = vmul.f32 %v2776, %v2808
        %v2816 = vmul.f32 %v2777, %v2808
        %v2817 = vmul.f32 %v2778, %v2808
        %v2818 = vmul.f32 %v2779, %v2808
        %v2819 = vmul.f32 %v2780, %v2808
        %v2820 = vmul.f32 %v2781, %v2808
        %v2821 = vmul.f32 %v2782, %v2808
        %v2822 = vmul.f32 %v2783, %v2808
        %v2823 = vmul.f32 %v2784, %v2808
        %v2824 = vmul.f32 %v2785, %v2808
        %v2825 = vmul.f32 %v2786, %v2808
        %v2826 = vmul.f32 %v2787, %v2808
        %v2827 = vmul.f32 %v2788, %v2808
        %v2828 = vmul.f32 %v2789, %v2808
        %v2829 = vmul.f32 %v2790, %v2808
        %v2830 = vmul.f32 %v2791, %v2808
        %v2831 = vmul.f32 %v2792, %v2808
        %v2832 = vmul.f32 %v2793, %v2808
        %v2833 = vmul.f32 %v2794, %v2808
        %v2834 = vmul.f32 %v2795, %v2808
        %v2835 = vmul.f32 %v2796, %v2808
        %v2836 = vmul.f32 %v2797, %v2808
        %v2837 = vmul.f32 %v2798, %v2808
        %v2838 = vmul.f32 %v2799, %v2808
        %v2839 = vmul.f32 %v2800, %v2808
        %v2840 = vmul.f32 %v2801, %v2808
        %v2841 = vmul.f32 %v2802, %v2808
        %v2842 = vld [vmem:[%s8] sm:$0x1]
        %v2844 = vlaneseq
        %v2845 = vshrl.u32 %v2844, 7
        %v2846 = vsub.s32 0, %v2845
        %v2847 = vrot.slane %v2842, %v2846
        %v2849 = vadd.f32 %v2810, %v2847
        %v2850 = vadd.f32 %v2811, %v2847
        %v2851 = vadd.f32 %v2812, %v2847
        %v2852 = vadd.f32 %v2813, %v2847
        %v2853 = vadd.f32 %v2814, %v2847
        %v2854 = vadd.f32 %v2815, %v2847
        %v2855 = vadd.f32 %v2816, %v2847
        %v2856 = vadd.f32 %v2817, %v2847
        %v2857 = vadd.f32 %v2818, %v2847
        %v2858 = vadd.f32 %v2819, %v2847
        %v2859 = vadd.f32 %v2820, %v2847
        %v2860 = vadd.f32 %v2821, %v2847
        %v2861 = vadd.f32 %v2822, %v2847
        %v2862 = vadd.f32 %v2823, %v2847
        %v2863 = vadd.f32 %v2824, %v2847
        %v2864 = vadd.f32 %v2825, %v2847
        %v2865 = vadd.f32 %v2826, %v2847
        %v2866 = vadd.f32 %v2827, %v2847
        %v2867 = vadd.f32 %v2828, %v2847
        %v2868 = vadd.f32 %v2829, %v2847
        %v2869 = vadd.f32 %v2830, %v2847
        %v2870 = vadd.f32 %v2831, %v2847
        %v2871 = vadd.f32 %v2832, %v2847
        %v2872 = vadd.f32 %v2833, %v2847
        %v2873 = vadd.f32 %v2834, %v2847
        %v2874 = vadd.f32 %v2835, %v2847
        %v2875 = vadd.f32 %v2836, %v2847
        %v2876 = vadd.f32 %v2837, %v2847
        %v2877 = vadd.f32 %v2838, %v2847
        %v2878 = vadd.f32 %v2839, %v2847
        %v2879 = vadd.f32 %v2840, %v2847
        %v2880 = vadd.f32 %v2841, %v2847
        %v2881 = vmax.f32 %v2849, 0.0
        %v2882 = vmax.f32 %v2850, 0.0
        %v2883 = vmax.f32 %v2851, 0.0
        %v2884 = vmax.f32 %v2852, 0.0
        %v2885 = vmax.f32 %v2853, 0.0
        %v2886 = vmax.f32 %v2854, 0.0
        %v2887 = vmax.f32 %v2855, 0.0
        %v2888 = vmax.f32 %v2856, 0.0
        %v2889 = vmax.f32 %v2857, 0.0
        %v2890 = vmax.f32 %v2858, 0.0
        %v2891 = vmax.f32 %v2859, 0.0
        %v2892 = vmax.f32 %v2860, 0.0
        %v2893 = vmax.f32 %v2861, 0.0
        %v2894 = vmax.f32 %v2862, 0.0
        %v2895 = vmax.f32 %v2863, 0.0
        %v2896 = vmax.f32 %v2864, 0.0
        %v2897 = vmax.f32 %v2865, 0.0
        %v2898 = vmax.f32 %v2866, 0.0
        %v2899 = vmax.f32 %v2867, 0.0
        %v2900 = vmax.f32 %v2868, 0.0
        %v2901 = vmax.f32 %v2869, 0.0
        %v2902 = vmax.f32 %v2870, 0.0
        %v2903 = vmax.f32 %v2871, 0.0
        %v2904 = vmax.f32 %v2872, 0.0
        %v2905 = vmax.f32 %v2873, 0.0
        %v2906 = vmax.f32 %v2874, 0.0
        %v2907 = vmax.f32 %v2875, 0.0
        %v2908 = vmax.f32 %v2876, 0.0
        %v2909 = vmax.f32 %v2877, 0.0
        %v2910 = vmax.f32 %v2878, 0.0
        %v2911 = vmax.f32 %v2879, 0.0
        %v2912 = vmax.f32 %v2880, 0.0
        %v2913 = vld [vmem:[#allocation2] sm:$0xff]
        %v2914 = vld [vmem:[#allocation2 + $0x8] sm:$0xff]
        %v2915 = vld [vmem:[#allocation2 + $0x10] sm:$0x3]
        %v2916 = vld [vmem:[#allocation2 + $0x18] sm:$0xff]
        %v2917 = vld [vmem:[#allocation2 + $0x20] sm:$0xff]
        %v2918 = vld [vmem:[#allocation2 + $0x28] sm:$0x3]
        %v2919 = vld [vmem:[#allocation2 + $0x30] sm:$0xff]
        %v2920 = vld [vmem:[#allocation2 + $0x38] sm:$0xff]
        %v2921 = vld [vmem:[#allocation2 + $0x40] sm:$0x3]
        %v2922 = vld [vmem:[#allocation2 + $0x48] sm:$0xff]
        %v2923 = vld [vmem:[#allocation2 + $0x50] sm:$0xff]
        %v2924 = vld [vmem:[#allocation2 + $0x58] sm:$0x3]
        %v2925 = vld [vmem:[#allocation2 + $0x60] sm:$0xff]
        %v2926 = vld [vmem:[#allocation2 + $0x68] sm:$0xff]
        %v2927 = vld [vmem:[#allocation2 + $0x70] sm:$0x3]
        %v2928 = vld [vmem:[#allocation2 + $0x78] sm:$0xff]
        %v2929 = vld [vmem:[#allocation2 + $0x80] sm:$0xff]
        %v2930 = vld [vmem:[#allocation2 + $0x88] sm:$0x3]
        %v2931 = vld [vmem:[#allocation2 + $0x90] sm:$0xff]
        %v2932 = vld [vmem:[#allocation2 + $0x98] sm:$0xff]
        %v2933 = vld [vmem:[#allocation2 + $0xa0] sm:$0x3]
        %v2934 = vld [vmem:[#allocation2 + $0xa8] sm:$0xff]
        %v2935 = vld [vmem:[#allocation2 + $0xb0] sm:$0xff]
        %v2936 = vld [vmem:[#allocation2 + $0xb8] sm:$0x3]
        %v2937 = vld [vmem:[#allocation2 + $0xc0] sm:$0xff]
        %v2938 = vld [vmem:[#allocation2 + $0xc8] sm:$0xff]
        %v2939 = vld [vmem:[#allocation2 + $0xd0] sm:$0x3]
        %v2940 = vld [vmem:[#allocation2 + $0xd8] sm:$0xff]
        %v2941 = vld [vmem:[#allocation2 + $0xe0] sm:$0xff]
        %v2942 = vld [vmem:[#allocation2 + $0xe8] sm:$0x3]
        %v2943 = vld [vmem:[#allocation2 + $0xf0] sm:$0xff]
        %v2944 = vld [vmem:[#allocation2 + $0xf8] sm:$0xff]
        %v2945 = vld [vmem:[#allocation2 + $0x100] sm:$0x3]
        %v2946 = vld [vmem:[#allocation2 + $0x108] sm:$0xff]
        %v2947 = vld [vmem:[#allocation2 + $0x110] sm:$0xff]
        %v2948 = vld [vmem:[#allocation2 + $0x118] sm:$0x3]
        %v2949 = vld [vmem:[#allocation2 + $0x120] sm:$0xff]
        %v2950 = vld [vmem:[#allocation2 + $0x128] sm:$0xff]
        %v2951 = vld [vmem:[#allocation2 + $0x130] sm:$0x3]
        %v2952 = vld [vmem:[#allocation2 + $0x138] sm:$0xff]
        %v2953 = vld [vmem:[#allocation2 + $0x140] sm:$0xff]
        %v2954 = vld [vmem:[#allocation2 + $0x148] sm:$0x3]
        %v2955 = vld [vmem:[#allocation2 + $0x150] sm:$0xff]
        %v2956 = vld [vmem:[#allocation2 + $0x158] sm:$0xff]
        %v2957 = vld [vmem:[#allocation2 + $0x160] sm:$0x3]
        %v2958 = vld [vmem:[#allocation2 + $0x168] sm:$0xff]
        %v2959 = vld [vmem:[#allocation2 + $0x170] sm:$0xff]
        %v2960 = vld [vmem:[#allocation2 + $0x178] sm:$0x3]
        %v2961 = vld [vmem:[#allocation2 + $0x180] sm:$0xff]
        %v2962 = vld [vmem:[#allocation2 + $0x188] sm:$0xff]
        %v2963 = vld [vmem:[#allocation2 + $0x190] sm:$0x3]
        %v2964 = vld [vmem:[#allocation2 + $0x198] sm:$0xff]
        %v2965 = vld [vmem:[#allocation2 + $0x1a0] sm:$0xff]
        %v2966 = vld [vmem:[#allocation2 + $0x1a8] sm:$0x3]
        %v3015 = vrot.slane %v2913, 1
        %v3016 = vrot.slane %v2914, 1
        %v3017 = vsel %vm802, %v3015, %v3016
        %v3018 = vrot.slane %v2915, 1
        %v3019 = vsel %vm802, %v3016, %v3018
        %v3020 = vrot.slane %v2916, 1
        %v3021 = vrot.slane %v2917, 1
        %v3022 = vsel %vm802, %v3020, %v3021
        %v3023 = vrot.slane %v2918, 1
        %v3024 = vsel %vm802, %v3021, %v3023
        %v3025 = vrot.slane %v2919, 1
        %v3026 = vrot.slane %v2920, 1
        %v3027 = vsel %vm802, %v3025, %v3026
        %v3028 = vrot.slane %v2921, 1
        %v3029 = vsel %vm802, %v3026, %v3028
        %v3030 = vrot.slane %v2922, 1
        %v3031 = vrot.slane %v2923, 1
        %v3032 = vsel %vm802, %v3030, %v3031
        %v3033 = vrot.slane %v2924, 1
        %v3034 = vsel %vm802, %v3031, %v3033
        %v3035 = vrot.slane %v2925, 1
        %v3036 = vrot.slane %v2926, 1
        %v3037 = vsel %vm802, %v3035, %v3036
        %v3038 = vrot.slane %v2927, 1
        %v3039 = vsel %vm802, %v3036, %v3038
        %v3040 = vrot.slane %v2928, 1
        %v3041 = vrot.slane %v2929, 1
        %v3042 = vsel %vm802, %v3040, %v3041
        %v3043 = vrot.slane %v2930, 1
        %v3044 = vsel %vm802, %v3041, %v3043
        %v3045 = vrot.slane %v2931, 1
        %v3046 = vrot.slane %v2932, 1
        %v3047 = vsel %vm802, %v3045, %v3046
        %v3048 = vrot.slane %v2933, 1
        %v3049 = vsel %vm802, %v3046, %v3048
        %v3050 = vrot.slane %v2934, 1
        %v3051 = vrot.slane %v2935, 1
        %v3052 = vsel %vm802, %v3050, %v3051
        %v3053 = vrot.slane %v2936, 1
        %v3054 = vsel %vm802, %v3051, %v3053
        %v3055 = vrot.slane %v2937, 1
        %v3056 = vrot.slane %v2938, 1
        %v3057 = vsel %vm802, %v3055, %v3056
        %v3058 = vrot.slane %v2939, 1
        %v3059 = vsel %vm802, %v3056, %v3058
        %v3060 = vrot.slane %v2940, 1
        %v3061 = vrot.slane %v2941, 1
        %v3062 = vsel %vm802, %v3060, %v3061
        %v3063 = vrot.slane %v2942, 1
        %v3064 = vsel %vm802, %v3061, %v3063
        %v3065 = vrot.slane %v2943, 1
        %v3066 = vrot.slane %v2944, 1
        %v3067 = vsel %vm802, %v3065, %v3066
        %v3068 = vrot.slane %v2945, 1
        %v3069 = vsel %vm802, %v3066, %v3068
        %v3070 = vrot.slane %v2946, 1
        %v3071 = vrot.slane %v2947, 1
        %v3072 = vsel %vm802, %v3070, %v3071
        %v3073 = vrot.slane %v2948, 1
        %v3074 = vsel %vm802, %v3071, %v3073
        %v3075 = vrot.slane %v2949, 1
        %v3076 = vrot.slane %v2950, 1
        %v3077 = vsel %vm802, %v3075, %v3076
        %v3078 = vrot.slane %v2951, 1
        %v3079 = vsel %vm802, %v3076, %v3078
        %v3080 = vrot.slane %v2952, 1
        %v3081 = vrot.slane %v2953, 1
        %v3082 = vsel %vm802, %v3080, %v3081
        %v3083 = vrot.slane %v2954, 1
        %v3084 = vsel %vm802, %v3081, %v3083
        %v3085 = vrot.slane %v2955, 1
        %v3086 = vrot.slane %v2956, 1
        %v3087 = vsel %vm802, %v3085, %v3086
        %v3088 = vrot.slane %v2957, 1
        %v3089 = vsel %vm802, %v3086, %v3088
        %v3090 = vrot.slane %v2958, 1
        %v3091 = vrot.slane %v2959, 1
        %v3092 = vsel %vm802, %v3090, %v3091
        %v3093 = vrot.slane %v2960, 1
        %v3094 = vsel %vm802, %v3091, %v3093
        %3095 = vrot.lane.b32.xlu0 %v3017, 32
        %v3096 = vpop.permute.xlu0 %3095
        %3097 = vrot.lane.b32.xlu0 %v3019, 32
        %v3098 = vpop.permute.xlu0 %3097
        %3099 = vrot.lane.b32.xlu0 %v3022, 32
        %v3100 = vpop.permute.xlu0 %3099
        %3101 = vrot.lane.b32.xlu0 %v3024, 32
        %v3102 = vpop.permute.xlu0 %3101
        %3103 = vrot.lane.b32.xlu0 %v3027, 32
        %v3104 = vpop.permute.xlu0 %3103
        %3105 = vrot.lane.b32.xlu0 %v3029, 32
        %v3106 = vpop.permute.xlu0 %3105
        %3107 = vrot.lane.b32.xlu0 %v3032, 32
        %v3108 = vpop.permute.xlu0 %3107
        %3109 = vrot.lane.b32.xlu0 %v3034, 32
        %v3110 = vpop.permute.xlu0 %3109
        %3111 = vrot.lane.b32.xlu0 %v3037, 32
        %v3112 = vpop.permute.xlu0 %3111
        %3113 = vrot.lane.b32.xlu0 %v3039, 32
        %v3114 = vpop.permute.xlu0 %3113
        %3115 = vrot.lane.b32.xlu0 %v3042, 32
        %v3116 = vpop.permute.xlu0 %3115
        %3117 = vrot.lane.b32.xlu0 %v3044, 32
        %v3118 = vpop.permute.xlu0 %3117
        %3119 = vrot.lane.b32.xlu0 %v3047, 32
        %v3120 = vpop.permute.xlu0 %3119
        %3121 = vrot.lane.b32.xlu0 %v3049, 32
        %v3122 = vpop.permute.xlu0 %3121
        %3123 = vrot.lane.b32.xlu0 %v3052, 32
        %v3124 = vpop.permute.xlu0 %3123
        %3125 = vrot.lane.b32.xlu0 %v3054, 32
        %v3126 = vpop.permute.xlu0 %3125
        %3127 = vrot.lane.b32.xlu0 %v3057, 32
        %v3128 = vpop.permute.xlu0 %3127
        %3129 = vrot.lane.b32.xlu0 %v3059, 32
        %v3130 = vpop.permute.xlu0 %3129
        %3131 = vrot.lane.b32.xlu0 %v3062, 32
        %v3132 = vpop.permute.xlu0 %3131
        %3133 = vrot.lane.b32.xlu0 %v3064, 32
        %v3134 = vpop.permute.xlu0 %3133
        %3135 = vrot.lane.b32.xlu0 %v3067, 32
        %v3136 = vpop.permute.xlu0 %3135
        %3137 = vrot.lane.b32.xlu0 %v3069, 32
        %v3138 = vpop.permute.xlu0 %3137
        %3139 = vrot.lane.b32.xlu0 %v3072, 32
        %v3140 = vpop.permute.xlu0 %3139
        %3141 = vrot.lane.b32.xlu0 %v3074, 32
        %v3142 = vpop.permute.xlu0 %3141
        %3143 = vrot.lane.b32.xlu0 %v3077, 32
        %v3144 = vpop.permute.xlu0 %3143
        %3145 = vrot.lane.b32.xlu0 %v3079, 32
        %v3146 = vpop.permute.xlu0 %3145
        %3147 = vrot.lane.b32.xlu0 %v3082, 32
        %v3148 = vpop.permute.xlu0 %3147
        %3149 = vrot.lane.b32.xlu0 %v3084, 32
        %v3150 = vpop.permute.xlu0 %3149
        %3151 = vrot.lane.b32.xlu0 %v3087, 32
        %v3152 = vpop.permute.xlu0 %3151
        %3153 = vrot.lane.b32.xlu0 %v3089, 32
        %v3154 = vpop.permute.xlu0 %3153
        %3155 = vrot.lane.b32.xlu0 %v3092, 32
        %v3156 = vpop.permute.xlu0 %3155
        %3157 = vrot.lane.b32.xlu0 %v3094, 32
        %v3158 = vpop.permute.xlu0 %3157
        %v3191 = vrot.slane %v2913, 2
        %v3192 = vrot.slane %v2914, 2
        %v3193 = vsel %vm979, %v3191, %v3192
        %v3194 = vrot.slane %v2915, 2
        %v3195 = vsel %vm979, %v3192, %v3194
        %v3196 = vrot.slane %v2916, 2
        %v3197 = vrot.slane %v2917, 2
        %v3198 = vsel %vm979, %v3196, %v3197
        %v3199 = vrot.slane %v2918, 2
        %v3200 = vsel %vm979, %v3197, %v3199
        %v3201 = vrot.slane %v2919, 2
        %v3202 = vrot.slane %v2920, 2
        %v3203 = vsel %vm979, %v3201, %v3202
        %v3204 = vrot.slane %v2921, 2
        %v3205 = vsel %vm979, %v3202, %v3204
        %v3206 = vrot.slane %v2922, 2
        %v3207 = vrot.slane %v2923, 2
        %v3208 = vsel %vm979, %v3206, %v3207
        %v3209 = vrot.slane %v2924, 2
        %v3210 = vsel %vm979, %v3207, %v3209
        %v3211 = vrot.slane %v2925, 2
        %v3212 = vrot.slane %v2926, 2
        %v3213 = vsel %vm979, %v3211, %v3212
        %v3214 = vrot.slane %v2927, 2
        %v3215 = vsel %vm979, %v3212, %v3214
        %v3216 = vrot.slane %v2928, 2
        %v3217 = vrot.slane %v2929, 2
        %v3218 = vsel %vm979, %v3216, %v3217
        %v3219 = vrot.slane %v2930, 2
        %v3220 = vsel %vm979, %v3217, %v3219
        %v3221 = vrot.slane %v2931, 2
        %v3222 = vrot.slane %v2932, 2
        %v3223 = vsel %vm979, %v3221, %v3222
        %v3224 = vrot.slane %v2933, 2
        %v3225 = vsel %vm979, %v3222, %v3224
        %v3226 = vrot.slane %v2934, 2
        %v3227 = vrot.slane %v2935, 2
        %v3228 = vsel %vm979, %v3226, %v3227
        %v3229 = vrot.slane %v2936, 2
        %v3230 = vsel %vm979, %v3227, %v3229
        %v3231 = vrot.slane %v2937, 2
        %v3232 = vrot.slane %v2938, 2
        %v3233 = vsel %vm979, %v3231, %v3232
        %v3234 = vrot.slane %v2939, 2
        %v3235 = vsel %vm979, %v3232, %v3234
        %v3236 = vrot.slane %v2940, 2
        %v3237 = vrot.slane %v2941, 2
        %v3238 = vsel %vm979, %v3236, %v3237
        %v3239 = vrot.slane %v2942, 2
        %v3240 = vsel %vm979, %v3237, %v3239
        %v3241 = vrot.slane %v2943, 2
        %v3242 = vrot.slane %v2944, 2
        %v3243 = vsel %vm979, %v3241, %v3242
        %v3244 = vrot.slane %v2945, 2
        %v3245 = vsel %vm979, %v3242, %v3244
        %v3246 = vrot.slane %v2946, 2
        %v3247 = vrot.slane %v2947, 2
        %v3248 = vsel %vm979, %v3246, %v3247
        %v3249 = vrot.slane %v2948, 2
        %v3250 = vsel %vm979, %v3247, %v3249
        %v3251 = vrot.slane %v2949, 2
        %v3252 = vrot.slane %v2950, 2
        %v3253 = vsel %vm979, %v3251, %v3252
        %v3254 = vrot.slane %v2951, 2
        %v3255 = vsel %vm979, %v3252, %v3254
        %v3256 = vrot.slane %v2952, 2
        %v3257 = vrot.slane %v2953, 2
        %v3258 = vsel %vm979, %v3256, %v3257
        %v3259 = vrot.slane %v2954, 2
        %v3260 = vsel %vm979, %v3257, %v3259
        %v3261 = vrot.slane %v2955, 2
        %v3262 = vrot.slane %v2956, 2
        %v3263 = vsel %vm979, %v3261, %v3262
        %v3264 = vrot.slane %v2957, 2
        %v3265 = vsel %vm979, %v3262, %v3264
        %v3266 = vrot.slane %v2958, 2
        %v3267 = vrot.slane %v2959, 2
        %v3268 = vsel %vm979, %v3266, %v3267
        %v3269 = vrot.slane %v2960, 2
        %v3270 = vsel %vm979, %v3267, %v3269
        %3271 = vrot.lane.b32.xlu0 %v3193, 64
        %v3272 = vpop.permute.xlu0 %3271
        %3273 = vrot.lane.b32.xlu0 %v3195, 64
        %v3274 = vpop.permute.xlu0 %3273
        %3275 = vrot.lane.b32.xlu0 %v3198, 64
        %v3276 = vpop.permute.xlu0 %3275
        %3277 = vrot.lane.b32.xlu0 %v3200, 64
        %v3278 = vpop.permute.xlu0 %3277
        %3279 = vrot.lane.b32.xlu0 %v3203, 64
        %v3280 = vpop.permute.xlu0 %3279
        %3281 = vrot.lane.b32.xlu0 %v3205, 64
        %v3282 = vpop.permute.xlu0 %3281
        %3283 = vrot.lane.b32.xlu0 %v3208, 64
        %v3284 = vpop.permute.xlu0 %3283
        %3285 = vrot.lane.b32.xlu0 %v3210, 64
        %v3286 = vpop.permute.xlu0 %3285
        %3287 = vrot.lane.b32.xlu0 %v3213, 64
        %v3288 = vpop.permute.xlu0 %3287
        %3289 = vrot.lane.b32.xlu0 %v3215, 64
        %v3290 = vpop.permute.xlu0 %3289
        %3291 = vrot.lane.b32.xlu0 %v3218, 64
        %v3292 = vpop.permute.xlu0 %3291
        %3293 = vrot.lane.b32.xlu0 %v3220, 64
        %v3294 = vpop.permute.xlu0 %3293
        %3295 = vrot.lane.b32.xlu0 %v3223, 64
        %v3296 = vpop.permute.xlu0 %3295
        %3297 = vrot.lane.b32.xlu0 %v3225, 64
        %v3298 = vpop.permute.xlu0 %3297
        %3299 = vrot.lane.b32.xlu0 %v3228, 64
        %v3300 = vpop.permute.xlu0 %3299
        %3301 = vrot.lane.b32.xlu0 %v3230, 64
        %v3302 = vpop.permute.xlu0 %3301
        %3303 = vrot.lane.b32.xlu0 %v3233, 64
        %v3304 = vpop.permute.xlu0 %3303
        %3305 = vrot.lane.b32.xlu0 %v3235, 64
        %v3306 = vpop.permute.xlu0 %3305
        %3307 = vrot.lane.b32.xlu0 %v3238, 64
        %v3308 = vpop.permute.xlu0 %3307
        %3309 = vrot.lane.b32.xlu0 %v3240, 64
        %v3310 = vpop.permute.xlu0 %3309
        %3311 = vrot.lane.b32.xlu0 %v3243, 64
        %v3312 = vpop.permute.xlu0 %3311
        %3313 = vrot.lane.b32.xlu0 %v3245, 64
        %v3314 = vpop.permute.xlu0 %3313
        %3315 = vrot.lane.b32.xlu0 %v3248, 64
        %v3316 = vpop.permute.xlu0 %3315
        %3317 = vrot.lane.b32.xlu0 %v3250, 64
        %v3318 = vpop.permute.xlu0 %3317
        %3319 = vrot.lane.b32.xlu0 %v3253, 64
        %v3320 = vpop.permute.xlu0 %3319
        %3321 = vrot.lane.b32.xlu0 %v3255, 64
        %v3322 = vpop.permute.xlu0 %3321
        %3323 = vrot.lane.b32.xlu0 %v3258, 64
        %v3324 = vpop.permute.xlu0 %3323
        %3325 = vrot.lane.b32.xlu0 %v3260, 64
        %v3326 = vpop.permute.xlu0 %3325
        %3327 = vrot.lane.b32.xlu0 %v3263, 64
        %v3328 = vpop.permute.xlu0 %3327
        %3329 = vrot.lane.b32.xlu0 %v3265, 64
        %v3330 = vpop.permute.xlu0 %3329
        %3331 = vrot.lane.b32.xlu0 %v3268, 64
        %v3332 = vpop.permute.xlu0 %3331
        %3333 = vrot.lane.b32.xlu0 %v3270, 64
        %v3334 = vpop.permute.xlu0 %3333
        %3369 = vrot.lane.b32.xlu0 %v2916, 96
        %v3370 = vpop.permute.xlu0 %3369
        %3371 = vrot.lane.b32.xlu0 %v2917, 96
        %v3372 = vpop.permute.xlu0 %3371
        %3373 = vrot.lane.b32.xlu0 %v2919, 96
        %v3374 = vpop.permute.xlu0 %3373
        %3375 = vrot.lane.b32.xlu0 %v2920, 96
        %v3376 = vpop.permute.xlu0 %3375
        %3377 = vrot.lane.b32.xlu0 %v2922, 96
        %v3378 = vpop.permute.xlu0 %3377
        %3379 = vrot.lane.b32.xlu0 %v2923, 96
        %v3380 = vpop.permute.xlu0 %3379
        %3381 = vrot.lane.b32.xlu0 %v2925, 96
        %v3382 = vpop.permute.xlu0 %3381
        %3383 = vrot.lane.b32.xlu0 %v2926, 96
        %v3384 = vpop.permute.xlu0 %3383
        %3385 = vrot.lane.b32.xlu0 %v2928, 96
        %v3386 = vpop.permute.xlu0 %3385
        %3387 = vrot.lane.b32.xlu0 %v2929, 96
        %v3388 = vpop.permute.xlu0 %3387
        %3389 = vrot.lane.b32.xlu0 %v2931, 96
        %v3390 = vpop.permute.xlu0 %3389
        %3391 = vrot.lane.b32.xlu0 %v2932, 96
        %v3392 = vpop.permute.xlu0 %3391
        %3393 = vrot.lane.b32.xlu0 %v2934, 96
        %v3394 = vpop.permute.xlu0 %3393
        %3395 = vrot.lane.b32.xlu0 %v2935, 96
        %v3396 = vpop.permute.xlu0 %3395
        %3397 = vrot.lane.b32.xlu0 %v2937, 96
        %v3398 = vpop.permute.xlu0 %3397
        %3399 = vrot.lane.b32.xlu0 %v2938, 96
        %v3400 = vpop.permute.xlu0 %3399
        %3401 = vrot.lane.b32.xlu0 %v2940, 96
        %v3402 = vpop.permute.xlu0 %3401
        %3403 = vrot.lane.b32.xlu0 %v2941, 96
        %v3404 = vpop.permute.xlu0 %3403
        %3405 = vrot.lane.b32.xlu0 %v2943, 96
        %v3406 = vpop.permute.xlu0 %3405
        %3407 = vrot.lane.b32.xlu0 %v2944, 96
        %v3408 = vpop.permute.xlu0 %3407
        %3409 = vrot.lane.b32.xlu0 %v2946, 96
        %v3410 = vpop.permute.xlu0 %3409
        %3411 = vrot.lane.b32.xlu0 %v2947, 96
        %v3412 = vpop.permute.xlu0 %3411
        %3413 = vrot.lane.b32.xlu0 %v2949, 96
        %v3414 = vpop.permute.xlu0 %3413
        %3415 = vrot.lane.b32.xlu0 %v2950, 96
        %v3416 = vpop.permute.xlu0 %3415
        %3417 = vrot.lane.b32.xlu0 %v2952, 96
        %v3418 = vpop.permute.xlu0 %3417
        %3419 = vrot.lane.b32.xlu0 %v2953, 96
        %v3420 = vpop.permute.xlu0 %3419
        %3421 = vrot.lane.b32.xlu0 %v2955, 96
        %v3422 = vpop.permute.xlu0 %3421
        %3423 = vrot.lane.b32.xlu0 %v2956, 96
        %v3424 = vpop.permute.xlu0 %3423
        %3425 = vrot.lane.b32.xlu0 %v2958, 96
        %v3426 = vpop.permute.xlu0 %3425
        %3427 = vrot.lane.b32.xlu0 %v2959, 96
        %v3428 = vpop.permute.xlu0 %3427
        %3429 = vrot.lane.b32.xlu0 %v2961, 96
        %v3430 = vpop.permute.xlu0 %3429
        %3431 = vrot.lane.b32.xlu0 %v2962, 96
        %v3432 = vpop.permute.xlu0 %3431
        %v3466 = vrot.slane %v2961, 1
        %v3467 = vrot.slane %v2962, 1
        %v3468 = vsel %vm802, %v3466, %v3467
        %v3469 = vrot.slane %v2963, 1
        %v3470 = vsel %vm802, %v3467, %v3469
        %v3503 = vrot.slane %v2961, 2
        %v3504 = vrot.slane %v2962, 2
        %v3505 = vsel %vm979, %v3503, %v3504
        %v3506 = vrot.slane %v2963, 2
        %v3507 = vsel %vm979, %v3504, %v3506
        %3508 = vrot.lane.b32.xlu0 %v3198, 32
        %v3509 = vpop.permute.xlu0 %3508
        %3510 = vrot.lane.b32.xlu0 %v3200, 32
        %v3511 = vpop.permute.xlu0 %3510
        %3512 = vrot.lane.b32.xlu0 %v3203, 32
        %v3513 = vpop.permute.xlu0 %3512
        %3514 = vrot.lane.b32.xlu0 %v3205, 32
        %v3515 = vpop.permute.xlu0 %3514
        %3516 = vrot.lane.b32.xlu0 %v3208, 32
        %v3517 = vpop.permute.xlu0 %3516
        %3518 = vrot.lane.b32.xlu0 %v3210, 32
        %v3519 = vpop.permute.xlu0 %3518
        %3520 = vrot.lane.b32.xlu0 %v3213, 32
        %v3521 = vpop.permute.xlu0 %3520
        %3522 = vrot.lane.b32.xlu0 %v3215, 32
        %v3523 = vpop.permute.xlu0 %3522
        %3524 = vrot.lane.b32.xlu0 %v3218, 32
        %v3525 = vpop.permute.xlu0 %3524
        %3526 = vrot.lane.b32.xlu0 %v3220, 32
        %v3527 = vpop.permute.xlu0 %3526
        %3528 = vrot.lane.b32.xlu0 %v3223, 32
        %v3529 = vpop.permute.xlu0 %3528
        %3530 = vrot.lane.b32.xlu0 %v3225, 32
        %v3531 = vpop.permute.xlu0 %3530
        %3532 = vrot.lane.b32.xlu0 %v3228, 32
        %v3533 = vpop.permute.xlu0 %3532
        %3534 = vrot.lane.b32.xlu0 %v3230, 32
        %v3535 = vpop.permute.xlu0 %3534
        %3536 = vrot.lane.b32.xlu0 %v3233, 32
        %v3537 = vpop.permute.xlu0 %3536
        %3538 = vrot.lane.b32.xlu0 %v3235, 32
        %v3539 = vpop.permute.xlu0 %3538
        %3540 = vrot.lane.b32.xlu0 %v3238, 32
        %v3541 = vpop.permute.xlu0 %3540
        %3542 = vrot.lane.b32.xlu0 %v3240, 32
        %v3543 = vpop.permute.xlu0 %3542
        %3544 = vrot.lane.b32.xlu0 %v3243, 32
        %v3545 = vpop.permute.xlu0 %3544
        %3546 = vrot.lane.b32.xlu0 %v3245, 32
        %v3547 = vpop.permute.xlu0 %3546
        %3548 = vrot.lane.b32.xlu0 %v3248, 32
        %v3549 = vpop.permute.xlu0 %3548
        %3550 = vrot.lane.b32.xlu0 %v3250, 32
        %v3551 = vpop.permute.xlu0 %3550
        %3552 = vrot.lane.b32.xlu0 %v3253, 32
        %v3553 = vpop.permute.xlu0 %3552
        %3554 = vrot.lane.b32.xlu0 %v3255, 32
        %v3555 = vpop.permute.xlu0 %3554
        %3556 = vrot.lane.b32.xlu0 %v3258, 32
        %v3557 = vpop.permute.xlu0 %3556
        %3558 = vrot.lane.b32.xlu0 %v3260, 32
        %v3559 = vpop.permute.xlu0 %3558
        %3560 = vrot.lane.b32.xlu0 %v3263, 32
        %v3561 = vpop.permute.xlu0 %3560
        %3562 = vrot.lane.b32.xlu0 %v3265, 32
        %v3563 = vpop.permute.xlu0 %3562
        %3564 = vrot.lane.b32.xlu0 %v3268, 32
        %v3565 = vpop.permute.xlu0 %3564
        %3566 = vrot.lane.b32.xlu0 %v3270, 32
        %v3567 = vpop.permute.xlu0 %3566
        %3568 = vrot.lane.b32.xlu0 %v3505, 32
        %v3569 = vpop.permute.xlu0 %3568
        %3570 = vrot.lane.b32.xlu0 %v3507, 32
        %v3571 = vpop.permute.xlu0 %3570
        %3606 = vrot.lane.b32.xlu0 %v2919, 64
        %v3607 = vpop.permute.xlu0 %3606
        %3608 = vrot.lane.b32.xlu0 %v2920, 64
        %v3609 = vpop.permute.xlu0 %3608
        %3610 = vrot.lane.b32.xlu0 %v2922, 64
        %v3611 = vpop.permute.xlu0 %3610
        %3612 = vrot.lane.b32.xlu0 %v2923, 64
        %v3613 = vpop.permute.xlu0 %3612
        %3614 = vrot.lane.b32.xlu0 %v2925, 64
        %v3615 = vpop.permute.xlu0 %3614
        %3616 = vrot.lane.b32.xlu0 %v2926, 64
        %v3617 = vpop.permute.xlu0 %3616
        %3618 = vrot.lane.b32.xlu0 %v2928, 64
        %v3619 = vpop.permute.xlu0 %3618
        %3620 = vrot.lane.b32.xlu0 %v2929, 64
        %v3621 = vpop.permute.xlu0 %3620
        %3622 = vrot.lane.b32.xlu0 %v2931, 64
        %v3623 = vpop.permute.xlu0 %3622
        %3624 = vrot.lane.b32.xlu0 %v2932, 64
        %v3625 = vpop.permute.xlu0 %3624
        %3626 = vrot.lane.b32.xlu0 %v2934, 64
        %v3627 = vpop.permute.xlu0 %3626
        %3628 = vrot.lane.b32.xlu0 %v2935, 64
        %v3629 = vpop.permute.xlu0 %3628
        %3630 = vrot.lane.b32.xlu0 %v2937, 64
        %v3631 = vpop.permute.xlu0 %3630
        %3632 = vrot.lane.b32.xlu0 %v2938, 64
        %v3633 = vpop.permute.xlu0 %3632
        %3634 = vrot.lane.b32.xlu0 %v2940, 64
        %v3635 = vpop.permute.xlu0 %3634
        %3636 = vrot.lane.b32.xlu0 %v2941, 64
        %v3637 = vpop.permute.xlu0 %3636
        %3638 = vrot.lane.b32.xlu0 %v2943, 64
        %v3639 = vpop.permute.xlu0 %3638
        %3640 = vrot.lane.b32.xlu0 %v2944, 64
        %v3641 = vpop.permute.xlu0 %3640
        %3642 = vrot.lane.b32.xlu0 %v2946, 64
        %v3643 = vpop.permute.xlu0 %3642
        %3644 = vrot.lane.b32.xlu0 %v2947, 64
        %v3645 = vpop.permute.xlu0 %3644
        %3646 = vrot.lane.b32.xlu0 %v2949, 64
        %v3647 = vpop.permute.xlu0 %3646
        %3648 = vrot.lane.b32.xlu0 %v2950, 64
        %v3649 = vpop.permute.xlu0 %3648
        %3650 = vrot.lane.b32.xlu0 %v2952, 64
        %v3651 = vpop.permute.xlu0 %3650
        %3652 = vrot.lane.b32.xlu0 %v2953, 64
        %v3653 = vpop.permute.xlu0 %3652
        %3654 = vrot.lane.b32.xlu0 %v2955, 64
        %v3655 = vpop.permute.xlu0 %3654
        %3656 = vrot.lane.b32.xlu0 %v2956, 64
        %v3657 = vpop.permute.xlu0 %3656
        %3658 = vrot.lane.b32.xlu0 %v2958, 64
        %v3659 = vpop.permute.xlu0 %3658
        %3660 = vrot.lane.b32.xlu0 %v2959, 64
        %v3661 = vpop.permute.xlu0 %3660
        %3662 = vrot.lane.b32.xlu0 %v2961, 64
        %v3663 = vpop.permute.xlu0 %3662
        %3664 = vrot.lane.b32.xlu0 %v2962, 64
        %v3665 = vpop.permute.xlu0 %3664
        %3666 = vrot.lane.b32.xlu0 %v2964, 64
        %v3667 = vpop.permute.xlu0 %3666
        %3668 = vrot.lane.b32.xlu0 %v2965, 64
        %v3669 = vpop.permute.xlu0 %3668
        %v3703 = vrot.slane %v2964, 1
        %v3704 = vrot.slane %v2965, 1
        %v3705 = vsel %vm802, %v3703, %v3704
        %v3706 = vrot.slane %v2966, 1
        %v3707 = vsel %vm802, %v3704, %v3706
        %3708 = vrot.lane.b32.xlu0 %v3027, 96
        %v3709 = vpop.permute.xlu0 %3708
        %3710 = vrot.lane.b32.xlu0 %v3029, 96
        %v3711 = vpop.permute.xlu0 %3710
        %3712 = vrot.lane.b32.xlu0 %v3032, 96
        %v3713 = vpop.permute.xlu0 %3712
        %3714 = vrot.lane.b32.xlu0 %v3034, 96
        %v3715 = vpop.permute.xlu0 %3714
        %3716 = vrot.lane.b32.xlu0 %v3037, 96
        %v3717 = vpop.permute.xlu0 %3716
        %3718 = vrot.lane.b32.xlu0 %v3039, 96
        %v3719 = vpop.permute.xlu0 %3718
        %3720 = vrot.lane.b32.xlu0 %v3042, 96
        %v3721 = vpop.permute.xlu0 %3720
        %3722 = vrot.lane.b32.xlu0 %v3044, 96
        %v3723 = vpop.permute.xlu0 %3722
        %3724 = vrot.lane.b32.xlu0 %v3047, 96
        %v3725 = vpop.permute.xlu0 %3724
        %3726 = vrot.lane.b32.xlu0 %v3049, 96
        %v3727 = vpop.permute.xlu0 %3726
        %3728 = vrot.lane.b32.xlu0 %v3052, 96
        %v3729 = vpop.permute.xlu0 %3728
        %3730 = vrot.lane.b32.xlu0 %v3054, 96
        %v3731 = vpop.permute.xlu0 %3730
        %3732 = vrot.lane.b32.xlu0 %v3057, 96
        %v3733 = vpop.permute.xlu0 %3732
        %3734 = vrot.lane.b32.xlu0 %v3059, 96
        %v3735 = vpop.permute.xlu0 %3734
        %3736 = vrot.lane.b32.xlu0 %v3062, 96
        %v3737 = vpop.permute.xlu0 %3736
        %3738 = vrot.lane.b32.xlu0 %v3064, 96
        %v3739 = vpop.permute.xlu0 %3738
        %3740 = vrot.lane.b32.xlu0 %v3067, 96
        %v3741 = vpop.permute.xlu0 %3740
        %3742 = vrot.lane.b32.xlu0 %v3069, 96
        %v3743 = vpop.permute.xlu0 %3742
        %3744 = vrot.lane.b32.xlu0 %v3072, 96
        %v3745 = vpop.permute.xlu0 %3744
        %3746 = vrot.lane.b32.xlu0 %v3074, 96
        %v3747 = vpop.permute.xlu0 %3746
        %3748 = vrot.lane.b32.xlu0 %v3077, 96
        %v3749 = vpop.permute.xlu0 %3748
        %3750 = vrot.lane.b32.xlu0 %v3079, 96
        %v3751 = vpop.permute.xlu0 %3750
        %3752 = vrot.lane.b32.xlu0 %v3082, 96
        %v3753 = vpop.permute.xlu0 %3752
        %3754 = vrot.lane.b32.xlu0 %v3084, 96
        %v3755 = vpop.permute.xlu0 %3754
        %3756 = vrot.lane.b32.xlu0 %v3087, 96
        %v3757 = vpop.permute.xlu0 %3756
        %3758 = vrot.lane.b32.xlu0 %v3089, 96
        %v3759 = vpop.permute.xlu0 %3758
        %3760 = vrot.lane.b32.xlu0 %v3092, 96
        %v3761 = vpop.permute.xlu0 %3760
        %3762 = vrot.lane.b32.xlu0 %v3094, 96
        %v3763 = vpop.permute.xlu0 %3762
        %3764 = vrot.lane.b32.xlu0 %v3468, 96
        %v3765 = vpop.permute.xlu0 %3764
        %3766 = vrot.lane.b32.xlu0 %v3470, 96
        %v3767 = vpop.permute.xlu0 %3766
        %3768 = vrot.lane.b32.xlu0 %v3705, 96
        %v3769 = vpop.permute.xlu0 %3768
        %3770 = vrot.lane.b32.xlu0 %v3707, 96
        %v3771 = vpop.permute.xlu0 %3770
        %v3804 = vrot.slane %v2964, 2
        %v3805 = vrot.slane %v2965, 2
        %v3806 = vsel %vm979, %v3804, %v3805
        %v3807 = vrot.slane %v2966, 2
        %v3808 = vsel %vm979, %v3805, %v3807
        %v3841 = vsel %vm406, %v2913, %v3096
        %v3842 = vsel %vm406, %v2914, %v3098
        %v3843 = vsel %vm406, %v2916, %v3100
        %v3844 = vsel %vm406, %v2917, %v3102
        %v3845 = vsel %vm406, %v2919, %v3104
        %v3846 = vsel %vm406, %v2920, %v3106
        %v3847 = vsel %vm406, %v2922, %v3108
        %v3848 = vsel %vm406, %v2923, %v3110
        %v3849 = vsel %vm406, %v2925, %v3112
        %v3850 = vsel %vm406, %v2926, %v3114
        %v3851 = vsel %vm406, %v2928, %v3116
        %v3852 = vsel %vm406, %v2929, %v3118
        %v3853 = vsel %vm406, %v2931, %v3120
        %v3854 = vsel %vm406, %v2932, %v3122
        %v3855 = vsel %vm406, %v2934, %v3124
        %v3856 = vsel %vm406, %v2935, %v3126
        %v3857 = vsel %vm406, %v2937, %v3128
        %v3858 = vsel %vm406, %v2938, %v3130
        %v3859 = vsel %vm406, %v2940, %v3132
        %v3860 = vsel %vm406, %v2941, %v3134
        %v3861 = vsel %vm406, %v2943, %v3136
        %v3862 = vsel %vm406, %v2944, %v3138
        %v3863 = vsel %vm406, %v2946, %v3140
        %v3864 = vsel %vm406, %v2947, %v3142
        %v3865 = vsel %vm406, %v2949, %v3144
        %v3866 = vsel %vm406, %v2950, %v3146
        %v3867 = vsel %vm406, %v2952, %v3148
        %v3868 = vsel %vm406, %v2953, %v3150
        %v3869 = vsel %vm406, %v2955, %v3152
        %v3870 = vsel %vm406, %v2956, %v3154
        %v3871 = vsel %vm406, %v2958, %v3156
        %v3872 = vsel %vm406, %v2959, %v3158
        %v3873 = vsel %vm1662, %v3841, %v3272
        %v3874 = vsel %vm1662, %v3842, %v3274
        %v3875 = vsel %vm1662, %v3843, %v3276
        %v3876 = vsel %vm1662, %v3844, %v3278
        %v3877 = vsel %vm1662, %v3845, %v3280
        %v3878 = vsel %vm1662, %v3846, %v3282
        %v3879 = vsel %vm1662, %v3847, %v3284
        %v3880 = vsel %vm1662, %v3848, %v3286
        %v3881 = vsel %vm1662, %v3849, %v3288
        %v3882 = vsel %vm1662, %v3850, %v3290
        %v3883 = vsel %vm1662, %v3851, %v3292
        %v3884 = vsel %vm1662, %v3852, %v3294
        %v3885 = vsel %vm1662, %v3853, %v3296
        %v3886 = vsel %vm1662, %v3854, %v3298
        %v3887 = vsel %vm1662, %v3855, %v3300
        %v3888 = vsel %vm1662, %v3856, %v3302
        %v3889 = vsel %vm1662, %v3857, %v3304
        %v3890 = vsel %vm1662, %v3858, %v3306
        %v3891 = vsel %vm1662, %v3859, %v3308
        %v3892 = vsel %vm1662, %v3860, %v3310
        %v3893 = vsel %vm1662, %v3861, %v3312
        %v3894 = vsel %vm1662, %v3862, %v3314
        %v3895 = vsel %vm1662, %v3863, %v3316
        %v3896 = vsel %vm1662, %v3864, %v3318
        %v3897 = vsel %vm1662, %v3865, %v3320
        %v3898 = vsel %vm1662, %v3866, %v3322
        %v3899 = vsel %vm1662, %v3867, %v3324
        %v3900 = vsel %vm1662, %v3868, %v3326
        %v3901 = vsel %vm1662, %v3869, %v3328
        %v3902 = vsel %vm1662, %v3870, %v3330
        %v3903 = vsel %vm1662, %v3871, %v3332
        %v3904 = vsel %vm1662, %v3872, %v3334
        %v3905 = vsel %vm1695, %v3873, %v3370
        %v3906 = vsel %vm1695, %v3874, %v3372
        %v3907 = vsel %vm1695, %v3875, %v3374
        %v3908 = vsel %vm1695, %v3876, %v3376
        %v3909 = vsel %vm1695, %v3877, %v3378
        %v3910 = vsel %vm1695, %v3878, %v3380
        %v3911 = vsel %vm1695, %v3879, %v3382
        %v3912 = vsel %vm1695, %v3880, %v3384
        %v3913 = vsel %vm1695, %v3881, %v3386
        %v3914 = vsel %vm1695, %v3882, %v3388
        %v3915 = vsel %vm1695, %v3883, %v3390
        %v3916 = vsel %vm1695, %v3884, %v3392
        %v3917 = vsel %vm1695, %v3885, %v3394
        %v3918 = vsel %vm1695, %v3886, %v3396
        %v3919 = vsel %vm1695, %v3887, %v3398
        %v3920 = vsel %vm1695, %v3888, %v3400
        %v3921 = vsel %vm1695, %v3889, %v3402
        %v3922 = vsel %vm1695, %v3890, %v3404
        %v3923 = vsel %vm1695, %v3891, %v3406
        %v3924 = vsel %vm1695, %v3892, %v3408
        %v3925 = vsel %vm1695, %v3893, %v3410
        %v3926 = vsel %vm1695, %v3894, %v3412
        %v3927 = vsel %vm1695, %v3895, %v3414
        %v3928 = vsel %vm1695, %v3896, %v3416
        %v3929 = vsel %vm1695, %v3897, %v3418
        %v3930 = vsel %vm1695, %v3898, %v3420
        %v3931 = vsel %vm1695, %v3899, %v3422
        %v3932 = vsel %vm1695, %v3900, %v3424
        %v3933 = vsel %vm1695, %v3901, %v3426
        %v3934 = vsel %vm1695, %v3902, %v3428
        %v3935 = vsel %vm1695, %v3903, %v3430
        %v3936 = vsel %vm1695, %v3904, %v3432
        %v3937 = vsel %vm406, %v3022, %v3509
        %v3938 = vsel %vm406, %v3024, %v3511
        %v3939 = vsel %vm406, %v3027, %v3513
        %v3940 = vsel %vm406, %v3029, %v3515
        %v3941 = vsel %vm406, %v3032, %v3517
        %v3942 = vsel %vm406, %v3034, %v3519
        %v3943 = vsel %vm406, %v3037, %v3521
        %v3944 = vsel %vm406, %v3039, %v3523
        %v3945 = vsel %vm406, %v3042, %v3525
        %v3946 = vsel %vm406, %v3044, %v3527
        %v3947 = vsel %vm406, %v3047, %v3529
        %v3948 = vsel %vm406, %v3049, %v3531
        %v3949 = vsel %vm406, %v3052, %v3533
        %v3950 = vsel %vm406, %v3054, %v3535
        %v3951 = vsel %vm406, %v3057, %v3537
        %v3952 = vsel %vm406, %v3059, %v3539
        %v3953 = vsel %vm406, %v3062, %v3541
        %v3954 = vsel %vm406, %v3064, %v3543
        %v3955 = vsel %vm406, %v3067, %v3545
        %v3956 = vsel %vm406, %v3069, %v3547
        %v3957 = vsel %vm406, %v3072, %v3549
        %v3958 = vsel %vm406, %v3074, %v3551
        %v3959 = vsel %vm406, %v3077, %v3553
        %v3960 = vsel %vm406, %v3079, %v3555
        %v3961 = vsel %vm406, %v3082, %v3557
        %v3962 = vsel %vm406, %v3084, %v3559
        %v3963 = vsel %vm406, %v3087, %v3561
        %v3964 = vsel %vm406, %v3089, %v3563
        %v3965 = vsel %vm406, %v3092, %v3565
        %v3966 = vsel %vm406, %v3094, %v3567
        %v3967 = vsel %vm406, %v3468, %v3569
        %v3968 = vsel %vm406, %v3470, %v3571
        %v3969 = vsel %vm1662, %v3937, %v3607
        %v3970 = vsel %vm1662, %v3938, %v3609
        %v3971 = vsel %vm1662, %v3939, %v3611
        %v3972 = vsel %vm1662, %v3940, %v3613
        %v3973 = vsel %vm1662, %v3941, %v3615
        %v3974 = vsel %vm1662, %v3942, %v3617
        %v3975 = vsel %vm1662, %v3943, %v3619
        %v3976 = vsel %vm1662, %v3944, %v3621
        %v3977 = vsel %vm1662, %v3945, %v3623
        %v3978 = vsel %vm1662, %v3946, %v3625
        %v3979 = vsel %vm1662, %v3947, %v3627
        %v3980 = vsel %vm1662, %v3948, %v3629
        %v3981 = vsel %vm1662, %v3949, %v3631
        %v3982 = vsel %vm1662, %v3950, %v3633
        %v3983 = vsel %vm1662, %v3951, %v3635
        %v3984 = vsel %vm1662, %v3952, %v3637
        %v3985 = vsel %vm1662, %v3953, %v3639
        %v3986 = vsel %vm1662, %v3954, %v3641
        %v3987 = vsel %vm1662, %v3955, %v3643
        %v3988 = vsel %vm1662, %v3956, %v3645
        %v3989 = vsel %vm1662, %v3957, %v3647
        %v3990 = vsel %vm1662, %v3958, %v3649
        %v3991 = vsel %vm1662, %v3959, %v3651
        %v3992 = vsel %vm1662, %v3960, %v3653
        %v3993 = vsel %vm1662, %v3961, %v3655
        %v3994 = vsel %vm1662, %v3962, %v3657
        %v3995 = vsel %vm1662, %v3963, %v3659
        %v3996 = vsel %vm1662, %v3964, %v3661
        %v3997 = vsel %vm1662, %v3965, %v3663
        %v3998 = vsel %vm1662, %v3966, %v3665
        %v3999 = vsel %vm1662, %v3967, %v3667
        %v4000 = vsel %vm1662, %v3968, %v3669
        %v4001 = vsel %vm1695, %v3969, %v3709
        %v4002 = vsel %vm1695, %v3970, %v3711
        %v4003 = vsel %vm1695, %v3971, %v3713
        %v4004 = vsel %vm1695, %v3972, %v3715
        %v4005 = vsel %vm1695, %v3973, %v3717
        %v4006 = vsel %vm1695, %v3974, %v3719
        %v4007 = vsel %vm1695, %v3975, %v3721
        %v4008 = vsel %vm1695, %v3976, %v3723
        %v4009 = vsel %vm1695, %v3977, %v3725
        %v4010 = vsel %vm1695, %v3978, %v3727
        %v4011 = vsel %vm1695, %v3979, %v3729
        %v4012 = vsel %vm1695, %v3980, %v3731
        %v4013 = vsel %vm1695, %v3981, %v3733
        %v4014 = vsel %vm1695, %v3982, %v3735
        %v4015 = vsel %vm1695, %v3983, %v3737
        %v4016 = vsel %vm1695, %v3984, %v3739
        %v4017 = vsel %vm1695, %v3985, %v3741
        %v4018 = vsel %vm1695, %v3986, %v3743
        %v4019 = vsel %vm1695, %v3987, %v3745
        %v4020 = vsel %vm1695, %v3988, %v3747
        %v4021 = vsel %vm1695, %v3989, %v3749
        %v4022 = vsel %vm1695, %v3990, %v3751
        %v4023 = vsel %vm1695, %v3991, %v3753
        %v4024 = vsel %vm1695, %v3992, %v3755
        %v4025 = vsel %vm1695, %v3993, %v3757
        %v4026 = vsel %vm1695, %v3994, %v3759
        %v4027 = vsel %vm1695, %v3995, %v3761
        %v4028 = vsel %vm1695, %v3996, %v3763
        %v4029 = vsel %vm1695, %v3997, %v3765
        %v4030 = vsel %vm1695, %v3998, %v3767
        %v4031 = vsel %vm1695, %v3999, %v3769
        %v4032 = vsel %vm1695, %v4000, %v3771
        %v4033 = vpack.c.bf16 %v3906, %v3905
        %v4034 = vpack.c.bf16 %v4002, %v4001
        %v4035 = vpack.c.bf16 %v3205, %v3203
        %v4036 = vpack.c.bf16 %v3908, %v3907
        %v4037 = vpack.c.bf16 %v4004, %v4003
        %v4038 = vpack.c.bf16 %v3210, %v3208
        %v4039 = vpack.c.bf16 %v3910, %v3909
        %v4040 = vpack.c.bf16 %v4006, %v4005
        %v4041 = vpack.c.bf16 %v3215, %v3213
        %v4042 = vpack.c.bf16 %v3912, %v3911
        %v4043 = vpack.c.bf16 %v4008, %v4007
        %v4044 = vpack.c.bf16 %v3220, %v3218
        %v4045 = vpack.c.bf16 %v3914, %v3913
        %v4046 = vpack.c.bf16 %v4010, %v4009
        %v4047 = vpack.c.bf16 %v3225, %v3223
        %v4048 = vpack.c.bf16 %v3916, %v3915
        %v4049 = vpack.c.bf16 %v4012, %v4011
        %v4050 = vpack.c.bf16 %v3230, %v3228
        %v4051 = vpack.c.bf16 %v3918, %v3917
        %v4052 = vpack.c.bf16 %v4014, %v4013
        %v4053 = vpack.c.bf16 %v3235, %v3233
        %v4054 = vpack.c.bf16 %v3920, %v3919
        %v4055 = vpack.c.bf16 %v4016, %v4015
        %v4056 = vpack.c.bf16 %v3240, %v3238
        %v4057 = vpack.c.bf16 %v3922, %v3921
        %v4058 = vpack.c.bf16 %v4018, %v4017
        %v4059 = vpack.c.bf16 %v3245, %v3243
        %v4060 = vpack.c.bf16 %v3924, %v3923
        %v4061 = vpack.c.bf16 %v4020, %v4019
        %v4062 = vpack.c.bf16 %v3250, %v3248
        %v4063 = vpack.c.bf16 %v3926, %v3925
        %v4064 = vpack.c.bf16 %v4022, %v4021
        %v4065 = vpack.c.bf16 %v3255, %v3253
        %v4066 = vpack.c.bf16 %v3928, %v3927
        %v4067 = vpack.c.bf16 %v4024, %v4023
        %v4068 = vpack.c.bf16 %v3260, %v3258
        %v4069 = vpack.c.bf16 %v3930, %v3929
        %v4070 = vpack.c.bf16 %v4026, %v4025
        %v4071 = vpack.c.bf16 %v3265, %v3263
        %v4072 = vpack.c.bf16 %v3932, %v3931
        %v4073 = vpack.c.bf16 %v4028, %v4027
        %v4074 = vpack.c.bf16 %v3270, %v3268
        %v4075 = vpack.c.bf16 %v3934, %v3933
        %v4076 = vpack.c.bf16 %v4030, %v4029
        %v4077 = vpack.c.bf16 %v3507, %v3505
        %v4078 = vpack.c.bf16 %v3936, %v3935
        %v4079 = vpack.c.bf16 %v4032, %v4031
        %v4080 = vpack.c.bf16 %v3808, %v3806
        %v4081 = vld [vmem:[%s2] sm:$0xf]
        %v4082 = vld [vmem:[%s2 + $0x4] sm:$0xf]
        %v4083 = vld [vmem:[%s2 + $0x8] sm:$0xf]
        %v4084 = vld [vmem:[%s2 + $0xc] sm:$0xf]
        %v4085 = vld [vmem:[%s2 + $0x10] sm:$0xf]
        %v4086 = vld [vmem:[%s2 + $0x14] sm:$0xf]
        %v4087 = vld [vmem:[%s2 + $0x18] sm:$0xf]
        %v4088 = vld [vmem:[%s2 + $0x1c] sm:$0xf]
        %v4089 = vld [vmem:[%s2 + $0x20] sm:$0xf]
        %v4090 = vld [vmem:[%s2 + $0x24] sm:$0xf]
        %v4091 = vld [vmem:[%s2 + $0x28] sm:$0xf]
        %v4092 = vld [vmem:[%s2 + $0x2c] sm:$0xf]
        %v4093 = vld [vmem:[%s2 + $0x30] sm:$0xf]
        %v4094 = vld [vmem:[%s2 + $0x34] sm:$0xf]
        %v4095 = vld [vmem:[%s2 + $0x38] sm:$0xf]
        %v4096 = vld [vmem:[%s2 + $0x3c] sm:$0xf]
        %v4097 = vld [vmem:[%s2 + $0x40] sm:$0xf]
        %v4098 = vld [vmem:[%s2 + $0x44] sm:$0xf]
        %v4099 = vld [vmem:[%s2 + $0x48] sm:$0xf]
        %v4100 = vld [vmem:[%s2 + $0x4c] sm:$0xf]
        %v4101 = vld [vmem:[%s2 + $0x50] sm:$0xf]
        %v4102 = vld [vmem:[%s2 + $0x54] sm:$0xf]
        %v4103 = vld [vmem:[%s2 + $0x58] sm:$0xf]
        %v4104 = vld [vmem:[%s2 + $0x5c] sm:$0xf]
        %v4105 = vld [vmem:[%s2 + $0x60] sm:$0xf]
        %v4106 = vld [vmem:[%s2 + $0x64] sm:$0xf]
        %v4107 = vld [vmem:[%s2 + $0x68] sm:$0xf]
        %v4108 = vld [vmem:[%s2 + $0x6c] sm:$0xf]
        %v4109 = vld [vmem:[%s2 + $0x70] sm:$0xf]
        %v4110 = vld [vmem:[%s2 + $0x74] sm:$0xf]
        %v4111 = vld [vmem:[%s2 + $0x78] sm:$0xf]
        %v4112 = vld [vmem:[%s2 + $0x7c] sm:$0xf]
        %v4113 = vld [vmem:[%s2 + $0x80] sm:$0xf]
        %v4114 = vld [vmem:[%s2 + $0x84] sm:$0xf]
        %v4115 = vld [vmem:[%s2 + $0x88] sm:$0xf]
        %v4116 = vld [vmem:[%s2 + $0x8c] sm:$0xf]
        %v4153 = vunpack.c.l.b16 %v4081
        %v4154 = vunpack.c.l.b16 %v4082
        %v4155 = vunpack.c.l.b16 %v4083
        %v4156 = vunpack.c.l.b16 %v4084
        %v4157 = vunpack.c.l.b16 %v4085
        %v4158 = vunpack.c.l.b16 %v4086
        %v4159 = vunpack.c.l.b16 %v4087
        %v4160 = vunpack.c.l.b16 %v4088
        %v4161 = vunpack.c.l.b16 %v4089
        %v4162 = vunpack.c.l.b16 %v4090
        %v4163 = vunpack.c.l.b16 %v4091
        %v4164 = vunpack.c.l.b16 %v4092
        %v4165 = vunpack.c.l.b16 %v4093
        %v4166 = vunpack.c.l.b16 %v4094
        %v4167 = vunpack.c.l.b16 %v4095
        %v4168 = vunpack.c.l.b16 %v4096
        %v4169 = vunpack.c.l.b16 %v4097
        %v4170 = vunpack.c.l.b16 %v4098
        %v4171 = vunpack.c.l.b16 %v4099
        %v4172 = vunpack.c.l.b16 %v4100
        %v4173 = vunpack.c.l.b16 %v4101
        %v4174 = vunpack.c.l.b16 %v4102
        %v4175 = vunpack.c.l.b16 %v4103
        %v4176 = vunpack.c.l.b16 %v4104
        %v4177 = vunpack.c.l.b16 %v4105
        %v4178 = vunpack.c.l.b16 %v4106
        %v4179 = vunpack.c.l.b16 %v4107
        %v4180 = vunpack.c.l.b16 %v4108
        %v4181 = vunpack.c.l.b16 %v4109
        %v4182 = vunpack.c.l.b16 %v4110
        %v4183 = vunpack.c.l.b16 %v4111
        %v4184 = vunpack.c.l.b16 %v4112
        %v4185 = vunpack.c.l.b16 %v4113
        %v4186 = vunpack.c.l.b16 %v4114
        %v4187 = vunpack.c.l.b16 %v4115
        %v4188 = vunpack.c.l.b16 %v4116
        %v4189 = vpack.c.b16 %v4154, %v4153
        %v4190 = vpack.c.b16 %v4156, %v4155
        %v4191 = vpack.c.b16 %v4158, %v4157
        %v4192 = vpack.c.b16 %v4160, %v4159
        %v4193 = vpack.c.b16 %v4162, %v4161
        %v4194 = vpack.c.b16 %v4164, %v4163
        %v4195 = vpack.c.b16 %v4166, %v4165
        %v4196 = vpack.c.b16 %v4168, %v4167
        %v4197 = vpack.c.b16 %v4170, %v4169
        %v4198 = vpack.c.b16 %v4172, %v4171
        %v4199 = vpack.c.b16 %v4174, %v4173
        %v4200 = vpack.c.b16 %v4176, %v4175
        %v4201 = vpack.c.b16 %v4178, %v4177
        %v4202 = vpack.c.b16 %v4180, %v4179
        %v4203 = vpack.c.b16 %v4182, %v4181
        %v4204 = vpack.c.b16 %v4184, %v4183
        %v4205 = vpack.c.b16 %v4186, %v4185
        %v4206 = vpack.c.b16 %v4188, %v4187
        %v4226 = vsel %vm406, %v4035, 0
        %v4229 = vsel %vm406, %v4038, 0
        %v4232 = vsel %vm406, %v4041, 0
        %v4235 = vsel %vm406, %v4044, 0
        %v4238 = vsel %vm406, %v4047, 0
        %v4241 = vsel %vm406, %v4050, 0
        %v4244 = vsel %vm406, %v4053, 0
        %v4247 = vsel %vm406, %v4056, 0
        %v4250 = vsel %vm406, %v4059, 0
        %v4253 = vsel %vm406, %v4062, 0
        %v4256 = vsel %vm406, %v4065, 0
        %v4259 = vsel %vm406, %v4068, 0
        %v4262 = vsel %vm406, %v4071, 0
        %v4265 = vsel %vm406, %v4074, 0
        %v4268 = vsel %vm406, %v4077, 0
        %v4271 = vsel %vm406, %v4080, 0
        %4273 = vmatprep.subr.bf16.mxu0 0
        %4274 = vmatpush1.bf16.msra.mxu0 %v4189
        %4275 = vmatprep.subr.bf16.mxu0 0
        %4276 = vmatpush1.bf16.msra.mxu0 %v4190
        %4277 = vmatprep.subr.bf16.mxu0 0
        %4278 = vmatpush1.bf16.msra.mxu0 %v4191
        %4279 = vmatprep.subr.bf16.mxu0 0
        %4280 = vmatpush1.bf16.msra.mxu0 %v4192
        %4281 = vmatprep.subr.bf16.mxu0 0
        %4282 = vmatpush1.bf16.msra.mxu0 %v4193
        %4283 = vmatprep.subr.bf16.mxu0 0
        %4284 = vmatpush1.bf16.msra.mxu0 %v4194
        %4285 = vmatprep.subr.bf16.mxu0 0
        %4286 = vmatpush1.bf16.msra.mxu0 %v4195
        %4287 = vmatprep.subr.bf16.mxu0 0
        %4288 = vmatpush1.bf16.msra.mxu0 %v4196
        %4289 = vmatprep.subr.bf16.mxu0 0
        %4290 = vmatpush1.bf16.msra.mxu0 %v4197
        %4291 = vmatprep.subr.bf16.mxu0 0
        %4292 = vmatpush1.bf16.msra.mxu0 %v4198
        %4293 = vmatprep.subr.bf16.mxu0 0
        %4294 = vmatpush1.bf16.msra.mxu0 %v4199
        %4295 = vmatprep.subr.bf16.mxu0 0
        %4296 = vmatpush1.bf16.msra.mxu0 %v4200
        %4297 = vmatprep.subr.bf16.mxu0 0
        %4298 = vmatpush1.bf16.msra.mxu0 %v4201
        %4299 = vmatprep.subr.bf16.mxu0 0
        %4300 = vmatpush1.bf16.msra.mxu0 %v4202
        %4301 = vmatprep.subr.bf16.mxu0 0
        %4302 = vmatpush1.bf16.msra.mxu0 %v4203
        %4303 = vmatprep.subr.bf16.mxu0 0
        %4304 = vmatpush1.bf16.msra.mxu0 %v4204
        %4305 = vmatprep.mubr.bf16.mxu0 %v4034
        %4306 = vmatmul.mubr.bf16.gmra.mrb[0].mxu0 %v4033
        %v4307 = vpop.f32.mrb[0].mxu0
        %v4308 = vadd.f32 0.0, %v4307
        %v4309 = vpop.f32.mrb[0].mxu0
        %v4310 = vpop.f32.mrb[0].mxu0
        %v4311 = vadd.f32 0.0, %v4310
        %v4312 = vpop.f32.mrb[0].mxu0
        %4313 = vmatprep.mubr.bf16.mxu0 %v4037
        %4314 = vmatmul.mubr.bf16.gmra.mrb[0].mxu0 %v4036
        %v4315 = vpop.f32.mrb[0].mxu0
        %v4316 = vadd.f32 0.0, %v4315
        %v4317 = vpop.f32.mrb[0].mxu0
        %v4318 = vpop.f32.mrb[0].mxu0
        %v4319 = vadd.f32 0.0, %v4318
        %v4320 = vpop.f32.mrb[0].mxu0
        %4321 = vmatprep.mubr.bf16.mxu0 %v4040
        %4322 = vmatmul.mubr.bf16.gmra.mrb[0].mxu0 %v4039
        %v4323 = vpop.f32.mrb[0].mxu0
        %v4324 = vadd.f32 0.0, %v4323
        %v4325 = vpop.f32.mrb[0].mxu0
        %v4326 = vpop.f32.mrb[0].mxu0
        %v4327 = vadd.f32 0.0, %v4326
        %v4328 = vpop.f32.mrb[0].mxu0
        %4329 = vmatprep.mubr.bf16.mxu0 %v4043
        %4330 = vmatmul.mubr.bf16.gmra.mrb[0].mxu0 %v4042
        %v4331 = vpop.f32.mrb[0].mxu0
        %v4332 = vadd.f32 0.0, %v4331
        %v4333 = vpop.f32.mrb[0].mxu0
        %v4334 = vpop.f32.mrb[0].mxu0
        %v4335 = vadd.f32 0.0, %v4334
        %v4336 = vpop.f32.mrb[0].mxu0
        %4337 = vmatprep.mubr.bf16.mxu0 %v4046
        %4338 = vmatmul.mubr.bf16.gmra.mrb[0].mxu0 %v4045
        %v4339 = vpop.f32.mrb[0].mxu0
        %v4340 = vadd.f32 0.0, %v4339
        %v4341 = vpop.f32.mrb[0].mxu0
        %v4342 = vpop.f32.mrb[0].mxu0
        %v4343 = vadd.f32 0.0, %v4342
        %v4344 = vpop.f32.mrb[0].mxu0
        %4345 = vmatprep.mubr.bf16.mxu0 %v4049
        %4346 = vmatmul.mubr.bf16.gmra.mrb[0].mxu0 %v4048
        %v4347 = vpop.f32.mrb[0].mxu0
        %v4348 = vadd.f32 0.0, %v4347
        %v4349 = vpop.f32.mrb[0].mxu0
        %v4350 = vpop.f32.mrb[0].mxu0
        %v4351 = vadd.f32 0.0, %v4350
        %v4352 = vpop.f32.mrb[0].mxu0
        %4353 = vmatprep.mubr.bf16.mxu0 %v4052
        %4354 = vmatmul.mubr.bf16.gmra.mrb[0].mxu0 %v4051
        %v4355 = vpop.f32.mrb[0].mxu0
        %v4356 = vadd.f32 0.0, %v4355
        %v4357 = vpop.f32.mrb[0].mxu0
        %v4358 = vpop.f32.mrb[0].mxu0
        %v4359 = vadd.f32 0.0, %v4358
        %v4360 = vpop.f32.mrb[0].mxu0
        %4361 = vmatprep.mubr.bf16.mxu0 %v4055
        %4362 = vmatmul.mubr.bf16.gmra.mrb[0].mxu0 %v4054
        %v4363 = vpop.f32.mrb[0].mxu0
        %v4364 = vadd.f32 0.0, %v4363
        %v4365 = vpop.f32.mrb[0].mxu0
        %v4366 = vpop.f32.mrb[0].mxu0
        %v4367 = vadd.f32 0.0, %v4366
        %v4368 = vpop.f32.mrb[0].mxu0
        %4369 = vmatprep.mubr.bf16.mxu0 %v4058
        %4370 = vmatmul.mubr.bf16.gmra.mrb[0].mxu0 %v4057
        %v4371 = vpop.f32.mrb[0].mxu0
        %v4372 = vadd.f32 0.0, %v4371
        %v4373 = vpop.f32.mrb[0].mxu0
        %v4374 = vpop.f32.mrb[0].mxu0
        %v4375 = vadd.f32 0.0, %v4374
        %v4376 = vpop.f32.mrb[0].mxu0
        %4377 = vmatprep.mubr.bf16.mxu0 %v4061
        %4378 = vmatmul.mubr.bf16.gmra.mrb[0].mxu0 %v4060
        %v4379 = vpop.f32.mrb[0].mxu0
        %v4380 = vadd.f32 0.0, %v4379
        %v4381 = vpop.f32.mrb[0].mxu0
        %v4382 = vpop.f32.mrb[0].mxu0
        %v4383 = vadd.f32 0.0, %v4382
        %v4384 = vpop.f32.mrb[0].mxu0
        %4385 = vmatprep.mubr.bf16.mxu0 %v4064
        %4386 = vmatmul.mubr.bf16.gmra.mrb[0].mxu0 %v4063
        %v4387 = vpop.f32.mrb[0].mxu0
        %v4388 = vadd.f32 0.0, %v4387
        %v4389 = vpop.f32.mrb[0].mxu0
        %v4390 = vpop.f32.mrb[0].mxu0
        %v4391 = vadd.f32 0.0, %v4390
        %v4392 = vpop.f32.mrb[0].mxu0
        %4393 = vmatprep.mubr.bf16.mxu0 %v4067
        %4394 = vmatmul.mubr.bf16.gmra.mrb[0].mxu0 %v4066
        %v4395 = vpop.f32.mrb[0].mxu0
        %v4396 = vadd.f32 0.0, %v4395
        %v4397 = vpop.f32.mrb[0].mxu0
        %v4398 = vpop.f32.mrb[0].mxu0
        %v4399 = vadd.f32 0.0, %v4398
        %v4400 = vpop.f32.mrb[0].mxu0
        %4401 = vmatprep.mubr.bf16.mxu0 %v4070
        %4402 = vmatmul.mubr.bf16.gmra.mrb[0].mxu0 %v4069
        %v4403 = vpop.f32.mrb[0].mxu0
        %v4404 = vadd.f32 0.0, %v4403
        %v4405 = vpop.f32.mrb[0].mxu0
        %v4406 = vpop.f32.mrb[0].mxu0
        %v4407 = vadd.f32 0.0, %v4406
        %v4408 = vpop.f32.mrb[0].mxu0
        %4409 = vmatprep.mubr.bf16.mxu0 %v4073
        %4410 = vmatmul.mubr.bf16.gmra.mrb[0].mxu0 %v4072
        %v4411 = vpop.f32.mrb[0].mxu0
        %v4412 = vadd.f32 0.0, %v4411
        %v4413 = vpop.f32.mrb[0].mxu0
        %v4414 = vpop.f32.mrb[0].mxu0
        %v4415 = vadd.f32 0.0, %v4414
        %v4416 = vpop.f32.mrb[0].mxu0
        %4417 = vmatprep.mubr.bf16.mxu0 %v4076
        %4418 = vmatmul.mubr.bf16.gmra.mrb[0].mxu0 %v4075
        %v4419 = vpop.f32.mrb[0].mxu0
        %v4420 = vadd.f32 0.0, %v4419
        %v4421 = vpop.f32.mrb[0].mxu0
        %v4422 = vpop.f32.mrb[0].mxu0
        %v4423 = vadd.f32 0.0, %v4422
        %v4424 = vpop.f32.mrb[0].mxu0
        %4425 = vmatprep.mubr.bf16.mxu0 %v4079
        %4426 = vmatmul.mubr.bf16.gmra.mrb[0].mxu0 %v4078
        %v4427 = vpop.f32.mrb[0].mxu0
        %v4428 = vadd.f32 0.0, %v4427
        %v4429 = vpop.f32.mrb[0].mxu0
        %v4430 = vpop.f32.mrb[0].mxu0
        %v4431 = vadd.f32 0.0, %v4430
        %v4432 = vpop.f32.mrb[0].mxu0
        %4433 = vdwg.mxu0
        %4434 = vmatprep.subr.bf16.mxu0 0
        %4435 = vmatpush1.bf16.msra.mxu0 %v4205
        %4436 = vmatprep.subr.bf16.mxu0 0
        %4437 = vmatpush1.bf16.msra.mxu0 %v4206
        %4438 = vmatprep.subr.bf16.mxu0 0
        %4439 = vmatpush1.bf16.msra.mxu0 0
        %4440 = vmatprep.subr.bf16.mxu0 0
        %4441 = vmatpush1.bf16.msra.mxu0 0
        %4442 = vmatprep.subr.bf16.mxu0 0
        %4443 = vmatpush1.bf16.msra.mxu0 0
        %4444 = vmatprep.subr.bf16.mxu0 0
        %4445 = vmatpush1.bf16.msra.mxu0 0
        %4446 = vmatprep.subr.bf16.mxu0 0
        %4447 = vmatpush1.bf16.msra.mxu0 0
        %4448 = vmatprep.subr.bf16.mxu0 0
        %4449 = vmatpush1.bf16.msra.mxu0 0
        %4450 = vmatprep.subr.bf16.mxu0 0
        %4451 = vmatpush1.bf16.msra.mxu0 0
        %4452 = vmatprep.subr.bf16.mxu0 0
        %4453 = vmatpush1.bf16.msra.mxu0 0
        %4454 = vmatprep.subr.bf16.mxu0 0
        %4455 = vmatpush1.bf16.msra.mxu0 0
        %4456 = vmatprep.subr.bf16.mxu0 0
        %4457 = vmatpush1.bf16.msra.mxu0 0
        %4458 = vmatprep.subr.bf16.mxu0 0
        %4459 = vmatpush1.bf16.msra.mxu0 0
        %4460 = vmatprep.subr.bf16.mxu0 0
        %4461 = vmatpush1.bf16.msra.mxu0 0
        %4462 = vmatprep.subr.bf16.mxu0 0
        %4463 = vmatpush1.bf16.msra.mxu0 0
        %4464 = vmatprep.subr.bf16.mxu0 0
        %4465 = vmatpush1.bf16.msra.mxu0 0
        %4466 = vmatprep.mubr.bf16.mxu0 0
        %4467 = vmatmul.mubr.bf16.gmra.mrb[0].mxu0 %v4226
        %v4468 = vpop.f32.mrb[0].mxu0
        %v4469 = vadd.f32 %v4308, %v4468
        %v4470 = vpop.f32.mrb[0].mxu0
        %v4471 = vpop.f32.mrb[0].mxu0
        %v4472 = vadd.f32 %v4311, %v4471
        %v4473 = vpop.f32.mrb[0].mxu0
        %4474 = vmatprep.mubr.bf16.mxu0 0
        %4475 = vmatmul.mubr.bf16.gmra.mrb[0].mxu0 %v4229
        %v4476 = vpop.f32.mrb[0].mxu0
        %v4477 = vadd.f32 %v4316, %v4476
        %v4478 = vpop.f32.mrb[0].mxu0
        %v4479 = vpop.f32.mrb[0].mxu0
        %v4480 = vadd.f32 %v4319, %v4479
        %v4481 = vpop.f32.mrb[0].mxu0
        %4482 = vmatprep.mubr.bf16.mxu0 0
        %4483 = vmatmul.mubr.bf16.gmra.mrb[0].mxu0 %v4232
        %v4484 = vpop.f32.mrb[0].mxu0
        %v4485 = vadd.f32 %v4324, %v4484
        %v4486 = vpop.f32.mrb[0].mxu0
        %v4487 = vpop.f32.mrb[0].mxu0
        %v4488 = vadd.f32 %v4327, %v4487
        %v4489 = vpop.f32.mrb[0].mxu0
        %4490 = vmatprep.mubr.bf16.mxu0 0
        %4491 = vmatmul.mubr.bf16.gmra.mrb[0].mxu0 %v4235
        %v4492 = vpop.f32.mrb[0].mxu0
        %v4493 = vadd.f32 %v4332, %v4492
        %v4494 = vpop.f32.mrb[0].mxu0
        %v4495 = vpop.f32.mrb[0].mxu0
        %v4496 = vadd.f32 %v4335, %v4495
        %v4497 = vpop.f32.mrb[0].mxu0
        %4498 = vmatprep.mubr.bf16.mxu0 0
        %4499 = vmatmul.mubr.bf16.gmra.mrb[0].mxu0 %v4238
        %v4500 = vpop.f32.mrb[0].mxu0
        %v4501 = vadd.f32 %v4340, %v4500
        %v4502 = vpop.f32.mrb[0].mxu0
        %v4503 = vpop.f32.mrb[0].mxu0
        %v4504 = vadd.f32 %v4343, %v4503
        %v4505 = vpop.f32.mrb[0].mxu0
        %4506 = vmatprep.mubr.bf16.mxu0 0
        %4507 = vmatmul.mubr.bf16.gmra.mrb[0].mxu0 %v4241
        %v4508 = vpop.f32.mrb[0].mxu0
        %v4509 = vadd.f32 %v4348, %v4508
        %v4510 = vpop.f32.mrb[0].mxu0
        %v4511 = vpop.f32.mrb[0].mxu0
        %v4512 = vadd.f32 %v4351, %v4511
        %v4513 = vpop.f32.mrb[0].mxu0
        %4514 = vmatprep.mubr.bf16.mxu0 0
        %4515 = vmatmul.mubr.bf16.gmra.mrb[0].mxu0 %v4244
        %v4516 = vpop.f32.mrb[0].mxu0
        %v4517 = vadd.f32 %v4356, %v4516
        %v4518 = vpop.f32.mrb[0].mxu0
        %v4519 = vpop.f32.mrb[0].mxu0
        %v4520 = vadd.f32 %v4359, %v4519
        %v4521 = vpop.f32.mrb[0].mxu0
        %4522 = vmatprep.mubr.bf16.mxu0 0
        %4523 = vmatmul.mubr.bf16.gmra.mrb[0].mxu0 %v4247
        %v4524 = vpop.f32.mrb[0].mxu0
        %v4525 = vadd.f32 %v4364, %v4524
        %v4526 = vpop.f32.mrb[0].mxu0
        %v4527 = vpop.f32.mrb[0].mxu0
        %v4528 = vadd.f32 %v4367, %v4527
        %v4529 = vpop.f32.mrb[0].mxu0
        %4530 = vmatprep.mubr.bf16.mxu0 0
        %4531 = vmatmul.mubr.bf16.gmra.mrb[0].mxu0 %v4250
        %v4532 = vpop.f32.mrb[0].mxu0
        %v4533 = vadd.f32 %v4372, %v4532
        %v4534 = vpop.f32.mrb[0].mxu0
        %v4535 = vpop.f32.mrb[0].mxu0
        %v4536 = vadd.f32 %v4375, %v4535
        %v4537 = vpop.f32.mrb[0].mxu0
        %4538 = vmatprep.mubr.bf16.mxu0 0
        %4539 = vmatmul.mubr.bf16.gmra.mrb[0].mxu0 %v4253
        %v4540 = vpop.f32.mrb[0].mxu0
        %v4541 = vadd.f32 %v4380, %v4540
        %v4542 = vpop.f32.mrb[0].mxu0
        %v4543 = vpop.f32.mrb[0].mxu0
        %v4544 = vadd.f32 %v4383, %v4543
        %v4545 = vpop.f32.mrb[0].mxu0
        %4546 = vmatprep.mubr.bf16.mxu0 0
        %4547 = vmatmul.mubr.bf16.gmra.mrb[0].mxu0 %v4256
        %v4548 = vpop.f32.mrb[0].mxu0
        %v4549 = vadd.f32 %v4388, %v4548
        %v4550 = vpop.f32.mrb[0].mxu0
        %v4551 = vpop.f32.mrb[0].mxu0
        %v4552 = vadd.f32 %v4391, %v4551
        %v4553 = vpop.f32.mrb[0].mxu0
        %4554 = vmatprep.mubr.bf16.mxu0 0
        %4555 = vmatmul.mubr.bf16.gmra.mrb[0].mxu0 %v4259
        %v4556 = vpop.f32.mrb[0].mxu0
        %v4557 = vadd.f32 %v4396, %v4556
        %v4558 = vpop.f32.mrb[0].mxu0
        %v4559 = vpop.f32.mrb[0].mxu0
        %v4560 = vadd.f32 %v4399, %v4559
        %v4561 = vpop.f32.mrb[0].mxu0
        %4562 = vmatprep.mubr.bf16.mxu0 0
        %4563 = vmatmul.mubr.bf16.gmra.mrb[0].mxu0 %v4262
        %v4564 = vpop.f32.mrb[0].mxu0
        %v4565 = vadd.f32 %v4404, %v4564
        %v4566 = vpop.f32.mrb[0].mxu0
        %v4567 = vpop.f32.mrb[0].mxu0
        %v4568 = vadd.f32 %v4407, %v4567
        %v4569 = vpop.f32.mrb[0].mxu0
        %4570 = vmatprep.mubr.bf16.mxu0 0
        %4571 = vmatmul.mubr.bf16.gmra.mrb[0].mxu0 %v4265
        %v4572 = vpop.f32.mrb[0].mxu0
        %v4573 = vadd.f32 %v4412, %v4572
        %v4574 = vpop.f32.mrb[0].mxu0
        %v4575 = vpop.f32.mrb[0].mxu0
        %v4576 = vadd.f32 %v4415, %v4575
        %v4577 = vpop.f32.mrb[0].mxu0
        %4578 = vmatprep.mubr.bf16.mxu0 0
        %4579 = vmatmul.mubr.bf16.gmra.mrb[0].mxu0 %v4268
        %v4580 = vpop.f32.mrb[0].mxu0
        %v4581 = vadd.f32 %v4420, %v4580
        %v4582 = vpop.f32.mrb[0].mxu0
        %v4583 = vpop.f32.mrb[0].mxu0
        %v4584 = vadd.f32 %v4423, %v4583
        %v4585 = vpop.f32.mrb[0].mxu0
        %4586 = vmatprep.mubr.bf16.mxu0 0
        %4587 = vmatmul.mubr.bf16.gmra.mrb[0].mxu0 %v4271
        %v4588 = vpop.f32.mrb[0].mxu0
        %v4589 = vadd.f32 %v4428, %v4588
        %v4590 = vpop.f32.mrb[0].mxu0
        %v4591 = vpop.f32.mrb[0].mxu0
        %v4592 = vadd.f32 %v4431, %v4591
        %v4593 = vpop.f32.mrb[0].mxu0
        %4594 = vdwg.mxu0
        %v4595 = vsel %vm406, %v4469, 0.0
        %4596 = vadd.xlane.f32.xlu0 %v4595
        %v4597 = vpop.xlane.xlu0 %4596
        %v4598 = vsel %vm406, %v4472, 0.0
        %4599 = vadd.xlane.f32.xlu0 %v4598
        %v4600 = vpop.xlane.xlu0 %4599
        %v4601 = vsel %vm406, %v4477, 0.0
        %4602 = vadd.xlane.f32.xlu0 %v4601
        %v4603 = vpop.xlane.xlu0 %4602
        %v4604 = vsel %vm406, %v4480, 0.0
        %4605 = vadd.xlane.f32.xlu0 %v4604
        %v4606 = vpop.xlane.xlu0 %4605
        %v4607 = vsel %vm406, %v4485, 0.0
        %4608 = vadd.xlane.f32.xlu0 %v4607
        %v4609 = vpop.xlane.xlu0 %4608
        %v4610 = vsel %vm406, %v4488, 0.0
        %4611 = vadd.xlane.f32.xlu0 %v4610
        %v4612 = vpop.xlane.xlu0 %4611
        %v4613 = vsel %vm406, %v4493, 0.0
        %4614 = vadd.xlane.f32.xlu0 %v4613
        %v4615 = vpop.xlane.xlu0 %4614
        %v4616 = vsel %vm406, %v4496, 0.0
        %4617 = vadd.xlane.f32.xlu0 %v4616
        %v4618 = vpop.xlane.xlu0 %4617
        %v4619 = vsel %vm406, %v4501, 0.0
        %4620 = vadd.xlane.f32.xlu0 %v4619
        %v4621 = vpop.xlane.xlu0 %4620
        %v4622 = vsel %vm406, %v4504, 0.0
        %4623 = vadd.xlane.f32.xlu0 %v4622
        %v4624 = vpop.xlane.xlu0 %4623
        %v4625 = vsel %vm406, %v4509, 0.0
        %4626 = vadd.xlane.f32.xlu0 %v4625
        %v4627 = vpop.xlane.xlu0 %4626
        %v4628 = vsel %vm406, %v4512, 0.0
        %4629 = vadd.xlane.f32.xlu0 %v4628
        %v4630 = vpop.xlane.xlu0 %4629
        %v4631 = vsel %vm406, %v4517, 0.0
        %4632 = vadd.xlane.f32.xlu0 %v4631
        %v4633 = vpop.xlane.xlu0 %4632
        %v4634 = vsel %vm406, %v4520, 0.0
        %4635 = vadd.xlane.f32.xlu0 %v4634
        %v4636 = vpop.xlane.xlu0 %4635
        %v4637 = vsel %vm406, %v4525, 0.0
        %4638 = vadd.xlane.f32.xlu0 %v4637
        %v4639 = vpop.xlane.xlu0 %4638
        %v4640 = vsel %vm406, %v4528, 0.0
        %4641 = vadd.xlane.f32.xlu0 %v4640
        %v4642 = vpop.xlane.xlu0 %4641
        %v4643 = vsel %vm406, %v4533, 0.0
        %4644 = vadd.xlane.f32.xlu0 %v4643
        %v4645 = vpop.xlane.xlu0 %4644
        %v4646 = vsel %vm406, %v4536, 0.0
        %4647 = vadd.xlane.f32.xlu0 %v4646
        %v4648 = vpop.xlane.xlu0 %4647
        %v4649 = vsel %vm406, %v4541, 0.0
        %4650 = vadd.xlane.f32.xlu0 %v4649
        %v4651 = vpop.xlane.xlu0 %4650
        %v4652 = vsel %vm406, %v4544, 0.0
        %4653 = vadd.xlane.f32.xlu0 %v4652
        %v4654 = vpop.xlane.xlu0 %4653
        %v4655 = vsel %vm406, %v4549, 0.0
        %4656 = vadd.xlane.f32.xlu0 %v4655
        %v4657 = vpop.xlane.xlu0 %4656
        %v4658 = vsel %vm406, %v4552, 0.0
        %4659 = vadd.xlane.f32.xlu0 %v4658
        %v4660 = vpop.xlane.xlu0 %4659
        %v4661 = vsel %vm406, %v4557, 0.0
        %4662 = vadd.xlane.f32.xlu0 %v4661
        %v4663 = vpop.xlane.xlu0 %4662
        %v4664 = vsel %vm406, %v4560, 0.0
        %4665 = vadd.xlane.f32.xlu0 %v4664
        %v4666 = vpop.xlane.xlu0 %4665
        %v4667 = vsel %vm406, %v4565, 0.0
        %4668 = vadd.xlane.f32.xlu0 %v4667
        %v4669 = vpop.xlane.xlu0 %4668
        %v4670 = vsel %vm406, %v4568, 0.0
        %4671 = vadd.xlane.f32.xlu0 %v4670
        %v4672 = vpop.xlane.xlu0 %4671
        %v4673 = vsel %vm406, %v4573, 0.0
        %4674 = vadd.xlane.f32.xlu0 %v4673
        %v4675 = vpop.xlane.xlu0 %4674
        %v4676 = vsel %vm406, %v4576, 0.0
        %4677 = vadd.xlane.f32.xlu0 %v4676
        %v4678 = vpop.xlane.xlu0 %4677
        %v4679 = vsel %vm406, %v4581, 0.0
        %4680 = vadd.xlane.f32.xlu0 %v4679
        %v4681 = vpop.xlane.xlu0 %4680
        %v4682 = vsel %vm406, %v4584, 0.0
        %4683 = vadd.xlane.f32.xlu0 %v4682
        %v4684 = vpop.xlane.xlu0 %4683
        %v4685 = vsel %vm406, %v4589, 0.0
        %4686 = vadd.xlane.f32.xlu0 %v4685
        %v4687 = vpop.xlane.xlu0 %4686
        %v4688 = vsel %vm406, %v4592, 0.0
        %4689 = vadd.xlane.f32.xlu0 %v4688
        %v4690 = vpop.xlane.xlu0 %4689
        %v4691 = vmul.f32 %v4597, %v2482
        %v4692 = vmul.f32 %v4600, %v2482
        %v4693 = vmul.f32 %v4603, %v2482
        %v4694 = vmul.f32 %v4606, %v2482
        %v4695 = vmul.f32 %v4609, %v2482
        %v4696 = vmul.f32 %v4612, %v2482
        %v4697 = vmul.f32 %v4615, %v2482
        %v4698 = vmul.f32 %v4618, %v2482
        %v4699 = vmul.f32 %v4621, %v2482
        %v4700 = vmul.f32 %v4624, %v2482
        %v4701 = vmul.f32 %v4627, %v2482
        %v4702 = vmul.f32 %v4630, %v2482
        %v4703 = vmul.f32 %v4633, %v2482
        %v4704 = vmul.f32 %v4636, %v2482
        %v4705 = vmul.f32 %v4639, %v2482
        %v4706 = vmul.f32 %v4642, %v2482
        %v4707 = vmul.f32 %v4645, %v2482
        %v4708 = vmul.f32 %v4648, %v2482
        %v4709 = vmul.f32 %v4651, %v2482
        %v4710 = vmul.f32 %v4654, %v2482
        %v4711 = vmul.f32 %v4657, %v2482
        %v4712 = vmul.f32 %v4660, %v2482
        %v4713 = vmul.f32 %v4663, %v2482
        %v4714 = vmul.f32 %v4666, %v2482
        %v4715 = vmul.f32 %v4669, %v2482
        %v4716 = vmul.f32 %v4672, %v2482
        %v4717 = vmul.f32 %v4675, %v2482
        %v4718 = vmul.f32 %v4678, %v2482
        %v4719 = vmul.f32 %v4681, %v2482
        %v4720 = vmul.f32 %v4684, %v2482
        %v4721 = vmul.f32 %v4687, %v2482
        %v4722 = vmul.f32 %v4690, %v2482
        %v4723 = vsub.f32 %v4469, %v4691
        %v4724 = vsub.f32 %v4472, %v4692
        %v4725 = vsub.f32 %v4477, %v4693
        %v4726 = vsub.f32 %v4480, %v4694
        %v4727 = vsub.f32 %v4485, %v4695
        %v4728 = vsub.f32 %v4488, %v4696
        %v4729 = vsub.f32 %v4493, %v4697
        %v4730 = vsub.f32 %v4496, %v4698
        %v4731 = vsub.f32 %v4501, %v4699
        %v4732 = vsub.f32 %v4504, %v4700
        %v4733 = vsub.f32 %v4509, %v4701
        %v4734 = vsub.f32 %v4512, %v4702
        %v4735 = vsub.f32 %v4517, %v4703
        %v4736 = vsub.f32 %v4520, %v4704
        %v4737 = vsub.f32 %v4525, %v4705
        %v4738 = vsub.f32 %v4528, %v4706
        %v4739 = vsub.f32 %v4533, %v4707
        %v4740 = vsub.f32 %v4536, %v4708
        %v4741 = vsub.f32 %v4541, %v4709
        %v4742 = vsub.f32 %v4544, %v4710
        %v4743 = vsub.f32 %v4549, %v4711
        %v4744 = vsub.f32 %v4552, %v4712
        %v4745 = vsub.f32 %v4557, %v4713
        %v4746 = vsub.f32 %v4560, %v4714
        %v4747 = vsub.f32 %v4565, %v4715
        %v4748 = vsub.f32 %v4568, %v4716
        %v4749 = vsub.f32 %v4573, %v4717
        %v4750 = vsub.f32 %v4576, %v4718
        %v4751 = vsub.f32 %v4581, %v4719
        %v4752 = vsub.f32 %v4584, %v4720
        %v4753 = vsub.f32 %v4589, %v4721
        %v4754 = vsub.f32 %v4592, %v4722
        %v4755 = vmul.f32 %v4723, %v4723
        %v4756 = vmul.f32 %v4724, %v4724
        %v4757 = vmul.f32 %v4725, %v4725
        %v4758 = vmul.f32 %v4726, %v4726
        %v4759 = vmul.f32 %v4727, %v4727
        %v4760 = vmul.f32 %v4728, %v4728
        %v4761 = vmul.f32 %v4729, %v4729
        %v4762 = vmul.f32 %v4730, %v4730
        %v4763 = vmul.f32 %v4731, %v4731
        %v4764 = vmul.f32 %v4732, %v4732
        %v4765 = vmul.f32 %v4733, %v4733
        %v4766 = vmul.f32 %v4734, %v4734
        %v4767 = vmul.f32 %v4735, %v4735
        %v4768 = vmul.f32 %v4736, %v4736
        %v4769 = vmul.f32 %v4737, %v4737
        %v4770 = vmul.f32 %v4738, %v4738
        %v4771 = vmul.f32 %v4739, %v4739
        %v4772 = vmul.f32 %v4740, %v4740
        %v4773 = vmul.f32 %v4741, %v4741
        %v4774 = vmul.f32 %v4742, %v4742
        %v4775 = vmul.f32 %v4743, %v4743
        %v4776 = vmul.f32 %v4744, %v4744
        %v4777 = vmul.f32 %v4745, %v4745
        %v4778 = vmul.f32 %v4746, %v4746
        %v4779 = vmul.f32 %v4747, %v4747
        %v4780 = vmul.f32 %v4748, %v4748
        %v4781 = vmul.f32 %v4749, %v4749
        %v4782 = vmul.f32 %v4750, %v4750
        %v4783 = vmul.f32 %v4751, %v4751
        %v4784 = vmul.f32 %v4752, %v4752
        %v4785 = vmul.f32 %v4753, %v4753
        %v4786 = vmul.f32 %v4754, %v4754
        %v4787 = vsel %vm406, %v4755, 0.0
        %4788 = vadd.xlane.f32.xlu0 %v4787
        %v4789 = vpop.xlane.xlu0 %4788
        %v4790 = vsel %vm406, %v4756, 0.0
        %4791 = vadd.xlane.f32.xlu0 %v4790
        %v4792 = vpop.xlane.xlu0 %4791
        %v4793 = vsel %vm406, %v4757, 0.0
        %4794 = vadd.xlane.f32.xlu0 %v4793
        %v4795 = vpop.xlane.xlu0 %4794
        %v4796 = vsel %vm406, %v4758, 0.0
        %4797 = vadd.xlane.f32.xlu0 %v4796
        %v4798 = vpop.xlane.xlu0 %4797
        %v4799 = vsel %vm406, %v4759, 0.0
        %4800 = vadd.xlane.f32.xlu0 %v4799
        %v4801 = vpop.xlane.xlu0 %4800
        %v4802 = vsel %vm406, %v4760, 0.0
        %4803 = vadd.xlane.f32.xlu0 %v4802
        %v4804 = vpop.xlane.xlu0 %4803
        %v4805 = vsel %vm406, %v4761, 0.0
        %4806 = vadd.xlane.f32.xlu0 %v4805
        %v4807 = vpop.xlane.xlu0 %4806
        %v4808 = vsel %vm406, %v4762, 0.0
        %4809 = vadd.xlane.f32.xlu0 %v4808
        %v4810 = vpop.xlane.xlu0 %4809
        %v4811 = vsel %vm406, %v4763, 0.0
        %4812 = vadd.xlane.f32.xlu0 %v4811
        %v4813 = vpop.xlane.xlu0 %4812
        %v4814 = vsel %vm406, %v4764, 0.0
        %4815 = vadd.xlane.f32.xlu0 %v4814
        %v4816 = vpop.xlane.xlu0 %4815
        %v4817 = vsel %vm406, %v4765, 0.0
        %4818 = vadd.xlane.f32.xlu0 %v4817
        %v4819 = vpop.xlane.xlu0 %4818
        %v4820 = vsel %vm406, %v4766, 0.0
        %4821 = vadd.xlane.f32.xlu0 %v4820
        %v4822 = vpop.xlane.xlu0 %4821
        %v4823 = vsel %vm406, %v4767, 0.0
        %4824 = vadd.xlane.f32.xlu0 %v4823
        %v4825 = vpop.xlane.xlu0 %4824
        %v4826 = vsel %vm406, %v4768, 0.0
        %4827 = vadd.xlane.f32.xlu0 %v4826
        %v4828 = vpop.xlane.xlu0 %4827
        %v4829 = vsel %vm406, %v4769, 0.0
        %4830 = vadd.xlane.f32.xlu0 %v4829
        %v4831 = vpop.xlane.xlu0 %4830
        %v4832 = vsel %vm406, %v4770, 0.0
        %4833 = vadd.xlane.f32.xlu0 %v4832
        %v4834 = vpop.xlane.xlu0 %4833
        %v4835 = vsel %vm406, %v4771, 0.0
        %4836 = vadd.xlane.f32.xlu0 %v4835
        %v4837 = vpop.xlane.xlu0 %4836
        %v4838 = vsel %vm406, %v4772, 0.0
        %4839 = vadd.xlane.f32.xlu0 %v4838
        %v4840 = vpop.xlane.xlu0 %4839
        %v4841 = vsel %vm406, %v4773, 0.0
        %4842 = vadd.xlane.f32.xlu0 %v4841
        %v4843 = vpop.xlane.xlu0 %4842
        %v4844 = vsel %vm406, %v4774, 0.0
        %4845 = vadd.xlane.f32.xlu0 %v4844
        %v4846 = vpop.xlane.xlu0 %4845
        %v4847 = vsel %vm406, %v4775, 0.0
        %4848 = vadd.xlane.f32.xlu0 %v4847
        %v4849 = vpop.xlane.xlu0 %4848
        %v4850 = vsel %vm406, %v4776, 0.0
        %4851 = vadd.xlane.f32.xlu0 %v4850
        %v4852 = vpop.xlane.xlu0 %4851
        %v4853 = vsel %vm406, %v4777, 0.0
        %4854 = vadd.xlane.f32.xlu0 %v4853
        %v4855 = vpop.xlane.xlu0 %4854
        %v4856 = vsel %vm406, %v4778, 0.0
        %4857 = vadd.xlane.f32.xlu0 %v4856
        %v4858 = vpop.xlane.xlu0 %4857
        %v4859 = vsel %vm406, %v4779, 0.0
        %4860 = vadd.xlane.f32.xlu0 %v4859
        %v4861 = vpop.xlane.xlu0 %4860
        %v4862 = vsel %vm406, %v4780, 0.0
        %4863 = vadd.xlane.f32.xlu0 %v4862
        %v4864 = vpop.xlane.xlu0 %4863
        %v4865 = vsel %vm406, %v4781, 0.0
        %4866 = vadd.xlane.f32.xlu0 %v4865
        %v4867 = vpop.xlane.xlu0 %4866
        %v4868 = vsel %vm406, %v4782, 0.0
        %4869 = vadd.xlane.f32.xlu0 %v4868
        %v4870 = vpop.xlane.xlu0 %4869
        %v4871 = vsel %vm406, %v4783, 0.0
        %4872 = vadd.xlane.f32.xlu0 %v4871
        %v4873 = vpop.xlane.xlu0 %4872
        %v4874 = vsel %vm406, %v4784, 0.0
        %4875 = vadd.xlane.f32.xlu0 %v4874
        %v4876 = vpop.xlane.xlu0 %4875
        %v4877 = vsel %vm406, %v4785, 0.0
        %4878 = vadd.xlane.f32.xlu0 %v4877
        %v4879 = vpop.xlane.xlu0 %4878
        %v4880 = vsel %vm406, %v4786, 0.0
        %4881 = vadd.xlane.f32.xlu0 %v4880
        %v4882 = vpop.xlane.xlu0 %4881
        %v4883 = vmul.f32 %v4789, %v2482
        %v4884 = vmul.f32 %v4792, %v2482
        %v4885 = vmul.f32 %v4795, %v2482
        %v4886 = vmul.f32 %v4798, %v2482
        %v4887 = vmul.f32 %v4801, %v2482
        %v4888 = vmul.f32 %v4804, %v2482
        %v4889 = vmul.f32 %v4807, %v2482
        %v4890 = vmul.f32 %v4810, %v2482
        %v4891 = vmul.f32 %v4813, %v2482
        %v4892 = vmul.f32 %v4816, %v2482
        %v4893 = vmul.f32 %v4819, %v2482
        %v4894 = vmul.f32 %v4822, %v2482
        %v4895 = vmul.f32 %v4825, %v2482
        %v4896 = vmul.f32 %v4828, %v2482
        %v4897 = vmul.f32 %v4831, %v2482
        %v4898 = vmul.f32 %v4834, %v2482
        %v4899 = vmul.f32 %v4837, %v2482
        %v4900 = vmul.f32 %v4840, %v2482
        %v4901 = vmul.f32 %v4843, %v2482
        %v4902 = vmul.f32 %v4846, %v2482
        %v4903 = vmul.f32 %v4849, %v2482
        %v4904 = vmul.f32 %v4852, %v2482
        %v4905 = vmul.f32 %v4855, %v2482
        %v4906 = vmul.f32 %v4858, %v2482
        %v4907 = vmul.f32 %v4861, %v2482
        %v4908 = vmul.f32 %v4864, %v2482
        %v4909 = vmul.f32 %v4867, %v2482
        %v4910 = vmul.f32 %v4870, %v2482
        %v4911 = vmul.f32 %v4873, %v2482
        %v4912 = vmul.f32 %v4876, %v2482
        %v4913 = vmul.f32 %v4879, %v2482
        %v4914 = vmul.f32 %v4882, %v2482
        %v4915 = vadd.f32 %v4883, 1e-05
        %v4916 = vadd.f32 %v4884, 1e-05
        %v4917 = vadd.f32 %v4885, 1e-05
        %v4918 = vadd.f32 %v4886, 1e-05
        %v4919 = vadd.f32 %v4887, 1e-05
        %v4920 = vadd.f32 %v4888, 1e-05
        %v4921 = vadd.f32 %v4889, 1e-05
        %v4922 = vadd.f32 %v4890, 1e-05
        %v4923 = vadd.f32 %v4891, 1e-05
        %v4924 = vadd.f32 %v4892, 1e-05
        %v4925 = vadd.f32 %v4893, 1e-05
        %v4926 = vadd.f32 %v4894, 1e-05
        %v4927 = vadd.f32 %v4895, 1e-05
        %v4928 = vadd.f32 %v4896, 1e-05
        %v4929 = vadd.f32 %v4897, 1e-05
        %v4930 = vadd.f32 %v4898, 1e-05
        %v4931 = vadd.f32 %v4899, 1e-05
        %v4932 = vadd.f32 %v4900, 1e-05
        %v4933 = vadd.f32 %v4901, 1e-05
        %v4934 = vadd.f32 %v4902, 1e-05
        %v4935 = vadd.f32 %v4903, 1e-05
        %v4936 = vadd.f32 %v4904, 1e-05
        %v4937 = vadd.f32 %v4905, 1e-05
        %v4938 = vadd.f32 %v4906, 1e-05
        %v4939 = vadd.f32 %v4907, 1e-05
        %v4940 = vadd.f32 %v4908, 1e-05
        %v4941 = vadd.f32 %v4909, 1e-05
        %v4942 = vadd.f32 %v4910, 1e-05
        %v4943 = vadd.f32 %v4911, 1e-05
        %v4944 = vadd.f32 %v4912, 1e-05
        %v4945 = vadd.f32 %v4913, 1e-05
        %v4946 = vadd.f32 %v4914, 1e-05
        %v4947 = vrsqrt.pop %v4915
        %v4948 = vrsqrt.pop %v4916
        %v4949 = vrsqrt.pop %v4917
        %v4950 = vrsqrt.pop %v4918
        %v4951 = vrsqrt.pop %v4919
        %v4952 = vrsqrt.pop %v4920
        %v4953 = vrsqrt.pop %v4921
        %v4954 = vrsqrt.pop %v4922
        %v4955 = vrsqrt.pop %v4923
        %v4956 = vrsqrt.pop %v4924
        %v4957 = vrsqrt.pop %v4925
        %v4958 = vrsqrt.pop %v4926
        %v4959 = vrsqrt.pop %v4927
        %v4960 = vrsqrt.pop %v4928
        %v4961 = vrsqrt.pop %v4929
        %v4962 = vrsqrt.pop %v4930
        %v4963 = vrsqrt.pop %v4931
        %v4964 = vrsqrt.pop %v4932
        %v4965 = vrsqrt.pop %v4933
        %v4966 = vrsqrt.pop %v4934
        %v4967 = vrsqrt.pop %v4935
        %v4968 = vrsqrt.pop %v4936
        %v4969 = vrsqrt.pop %v4937
        %v4970 = vrsqrt.pop %v4938
        %v4971 = vrsqrt.pop %v4939
        %v4972 = vrsqrt.pop %v4940
        %v4973 = vrsqrt.pop %v4941
        %v4974 = vrsqrt.pop %v4942
        %v4975 = vrsqrt.pop %v4943
        %v4976 = vrsqrt.pop %v4944
        %v4977 = vrsqrt.pop %v4945
        %v4978 = vrsqrt.pop %v4946
        %v4979 = vmul.f32 %v4723, %v4947
        %v4980 = vmul.f32 %v4724, %v4948
        %v4981 = vmul.f32 %v4725, %v4949
        %v4982 = vmul.f32 %v4726, %v4950
        %v4983 = vmul.f32 %v4727, %v4951
        %v4984 = vmul.f32 %v4728, %v4952
        %v4985 = vmul.f32 %v4729, %v4953
        %v4986 = vmul.f32 %v4730, %v4954
        %v4987 = vmul.f32 %v4731, %v4955
        %v4988 = vmul.f32 %v4732, %v4956
        %v4989 = vmul.f32 %v4733, %v4957
        %v4990 = vmul.f32 %v4734, %v4958
        %v4991 = vmul.f32 %v4735, %v4959
        %v4992 = vmul.f32 %v4736, %v4960
        %v4993 = vmul.f32 %v4737, %v4961
        %v4994 = vmul.f32 %v4738, %v4962
        %v4995 = vmul.f32 %v4739, %v4963
        %v4996 = vmul.f32 %v4740, %v4964
        %v4997 = vmul.f32 %v4741, %v4965
        %v4998 = vmul.f32 %v4742, %v4966
        %v4999 = vmul.f32 %v4743, %v4967
        %v5000 = vmul.f32 %v4744, %v4968
        %v5001 = vmul.f32 %v4745, %v4969
        %v5002 = vmul.f32 %v4746, %v4970
        %v5003 = vmul.f32 %v4747, %v4971
        %v5004 = vmul.f32 %v4748, %v4972
        %v5005 = vmul.f32 %v4749, %v4973
        %v5006 = vmul.f32 %v4750, %v4974
        %v5007 = vmul.f32 %v4751, %v4975
        %v5008 = vmul.f32 %v4752, %v4976
        %v5009 = vmul.f32 %v4753, %v4977
        %v5010 = vmul.f32 %v4754, %v4978
        %v5011 = vld [vmem:[%s5] sm:$0x1]
        %v5013 = vlaneseq
        %v5014 = vshrl.u32 %v5013, 7
        %v5015 = vsub.s32 0, %v5014
        %v5016 = vrot.slane %v5011, %v5015
        %v5018 = vmul.f32 %v4979, %v5016
        %v5019 = vmul.f32 %v4980, %v5016
        %v5020 = vmul.f32 %v4981, %v5016
        %v5021 = vmul.f32 %v4982, %v5016
        %v5022 = vmul.f32 %v4983, %v5016
        %v5023 = vmul.f32 %v4984, %v5016
        %v5024 = vmul.f32 %v4985, %v5016
        %v5025 = vmul.f32 %v4986, %v5016
        %v5026 = vmul.f32 %v4987, %v5016
        %v5027 = vmul.f32 %v4988, %v5016
        %v5028 = vmul.f32 %v4989, %v5016
        %v5029 = vmul.f32 %v4990, %v5016
        %v5030 = vmul.f32 %v4991, %v5016
        %v5031 = vmul.f32 %v4992, %v5016
        %v5032 = vmul.f32 %v4993, %v5016
        %v5033 = vmul.f32 %v4994, %v5016
        %v5034 = vmul.f32 %v4995, %v5016
        %v5035 = vmul.f32 %v4996, %v5016
        %v5036 = vmul.f32 %v4997, %v5016
        %v5037 = vmul.f32 %v4998, %v5016
        %v5038 = vmul.f32 %v4999, %v5016
        %v5039 = vmul.f32 %v5000, %v5016
        %v5040 = vmul.f32 %v5001, %v5016
        %v5041 = vmul.f32 %v5002, %v5016
        %v5042 = vmul.f32 %v5003, %v5016
        %v5043 = vmul.f32 %v5004, %v5016
        %v5044 = vmul.f32 %v5005, %v5016
        %v5045 = vmul.f32 %v5006, %v5016
        %v5046 = vmul.f32 %v5007, %v5016
        %v5047 = vmul.f32 %v5008, %v5016
        %v5048 = vmul.f32 %v5009, %v5016
        %v5049 = vmul.f32 %v5010, %v5016
        %v5050 = vld [vmem:[%s6] sm:$0x1]
        %v5052 = vlaneseq
        %v5053 = vshrl.u32 %v5052, 7
        %v5054 = vsub.s32 0, %v5053
        %v5055 = vrot.slane %v5050, %v5054
        %v5057 = vadd.f32 %v5018, %v5055
        %v5058 = vadd.f32 %v5019, %v5055
        %v5059 = vadd.f32 %v5020, %v5055
        %v5060 = vadd.f32 %v5021, %v5055
        %v5061 = vadd.f32 %v5022, %v5055
        %v5062 = vadd.f32 %v5023, %v5055
        %v5063 = vadd.f32 %v5024, %v5055
        %v5064 = vadd.f32 %v5025, %v5055
        %v5065 = vadd.f32 %v5026, %v5055
        %v5066 = vadd.f32 %v5027, %v5055
        %v5067 = vadd.f32 %v5028, %v5055
        %v5068 = vadd.f32 %v5029, %v5055
        %v5069 = vadd.f32 %v5030, %v5055
        %v5070 = vadd.f32 %v5031, %v5055
        %v5071 = vadd.f32 %v5032, %v5055
        %v5072 = vadd.f32 %v5033, %v5055
        %v5073 = vadd.f32 %v5034, %v5055
        %v5074 = vadd.f32 %v5035, %v5055
        %v5075 = vadd.f32 %v5036, %v5055
        %v5076 = vadd.f32 %v5037, %v5055
        %v5077 = vadd.f32 %v5038, %v5055
        %v5078 = vadd.f32 %v5039, %v5055
        %v5079 = vadd.f32 %v5040, %v5055
        %v5080 = vadd.f32 %v5041, %v5055
        %v5081 = vadd.f32 %v5042, %v5055
        %v5082 = vadd.f32 %v5043, %v5055
        %v5083 = vadd.f32 %v5044, %v5055
        %v5084 = vadd.f32 %v5045, %v5055
        %v5085 = vadd.f32 %v5046, %v5055
        %v5086 = vadd.f32 %v5047, %v5055
        %v5087 = vadd.f32 %v5048, %v5055
        %v5088 = vadd.f32 %v5049, %v5055
        %v5089 = vmax.f32 %v5057, 0.0
        %v5090 = vmax.f32 %v5058, 0.0
        %v5091 = vmax.f32 %v5059, 0.0
        %v5092 = vmax.f32 %v5060, 0.0
        %v5093 = vmax.f32 %v5061, 0.0
        %v5094 = vmax.f32 %v5062, 0.0
        %v5095 = vmax.f32 %v5063, 0.0
        %v5096 = vmax.f32 %v5064, 0.0
        %v5097 = vmax.f32 %v5065, 0.0
        %v5098 = vmax.f32 %v5066, 0.0
        %v5099 = vmax.f32 %v5067, 0.0
        %v5100 = vmax.f32 %v5068, 0.0
        %v5101 = vmax.f32 %v5069, 0.0
        %v5102 = vmax.f32 %v5070, 0.0
        %v5103 = vmax.f32 %v5071, 0.0
        %v5104 = vmax.f32 %v5072, 0.0
        %v5105 = vmax.f32 %v5073, 0.0
        %v5106 = vmax.f32 %v5074, 0.0
        %v5107 = vmax.f32 %v5075, 0.0
        %v5108 = vmax.f32 %v5076, 0.0
        %v5109 = vmax.f32 %v5077, 0.0
        %v5110 = vmax.f32 %v5078, 0.0
        %v5111 = vmax.f32 %v5079, 0.0
        %v5112 = vmax.f32 %v5080, 0.0
        %v5113 = vmax.f32 %v5081, 0.0
        %v5114 = vmax.f32 %v5082, 0.0
        %v5115 = vmax.f32 %v5083, 0.0
        %v5116 = vmax.f32 %v5084, 0.0
        %v5117 = vmax.f32 %v5085, 0.0
        %v5118 = vmax.f32 %v5086, 0.0
        %v5119 = vmax.f32 %v5087, 0.0
        %v5120 = vmax.f32 %v5088, 0.0
        %s5121 = scalar_lea.vmem [#allocation4], 24
        %5122 = vst.msk [vmem:[%s5121 + $0x1] sm:$0xff] %vm406, %v5089
        %5123 = vst.msk [vmem:[%s5121 + $0x9] sm:$0xff] %vm406, %v5090
        %5124 = vst.msk [vmem:[%s5121 + $0x19] sm:$0xff] %vm406, %v5091
        %5125 = vst.msk [vmem:[%s5121 + $0x21] sm:$0xff] %vm406, %v5092
        %5126 = vst.msk [vmem:[%s5121 + $0x31] sm:$0xff] %vm406, %v5093
        %5127 = vst.msk [vmem:[%s5121 + $0x39] sm:$0xff] %vm406, %v5094
        %5128 = vst.msk [vmem:[%s5121 + $0x49] sm:$0xff] %vm406, %v5095
        %5129 = vst.msk [vmem:[%s5121 + $0x51] sm:$0xff] %vm406, %v5096
        %5130 = vst.msk [vmem:[%s5121 + $0x61] sm:$0xff] %vm406, %v5097
        %5131 = vst.msk [vmem:[%s5121 + $0x69] sm:$0xff] %vm406, %v5098
        %5132 = vst.msk [vmem:[%s5121 + $0x79] sm:$0xff] %vm406, %v5099
        %5133 = vst.msk [vmem:[%s5121 + $0x81] sm:$0xff] %vm406, %v5100
        %5134 = vst.msk [vmem:[%s5121 + $0x91] sm:$0xff] %vm406, %v5101
        %5135 = vst.msk [vmem:[%s5121 + $0x99] sm:$0xff] %vm406, %v5102
        %5136 = vst.msk [vmem:[%s5121 + $0xa9] sm:$0xff] %vm406, %v5103
        %5137 = vst.msk [vmem:[%s5121 + $0xb1] sm:$0xff] %vm406, %v5104
        %5138 = vst.msk [vmem:[%s5121 + $0xc1] sm:$0xff] %vm406, %v5105
        %5139 = vst.msk [vmem:[%s5121 + $0xc9] sm:$0xff] %vm406, %v5106
        %5140 = vst.msk [vmem:[%s5121 + $0xd9] sm:$0xff] %vm406, %v5107
        %5141 = vst.msk [vmem:[%s5121 + $0xe1] sm:$0xff] %vm406, %v5108
        %5142 = vst.msk [vmem:[%s5121 + $0xf1] sm:$0xff] %vm406, %v5109
        %5143 = vst.msk [vmem:[%s5121 + $0xf9] sm:$0xff] %vm406, %v5110
        %5144 = vst.msk [vmem:[%s5121 + $0x109] sm:$0xff] %vm406, %v5111
        %5145 = vst.msk [vmem:[%s5121 + $0x111] sm:$0xff] %vm406, %v5112
        %5146 = vst.msk [vmem:[%s5121 + $0x121] sm:$0xff] %vm406, %v5113
        %5147 = vst.msk [vmem:[%s5121 + $0x129] sm:$0xff] %vm406, %v5114
        %5148 = vst.msk [vmem:[%s5121 + $0x139] sm:$0xff] %vm406, %v5115
        %5149 = vst.msk [vmem:[%s5121 + $0x141] sm:$0xff] %vm406, %v5116
        %5150 = vst.msk [vmem:[%s5121 + $0x151] sm:$0xff] %vm406, %v5117
        %5151 = vst.msk [vmem:[%s5121 + $0x159] sm:$0xff] %vm406, %v5118
        %5152 = vst.msk [vmem:[%s5121 + $0x169] sm:$0xff] %vm406, %v5119
        %5153 = vst.msk [vmem:[%s5121 + $0x171] sm:$0xff] %vm406, %v5120
        %v5154 = vld [vmem:[#allocation4] sm:$0xff]
        %v5155 = vld [vmem:[#allocation4 + $0x8] sm:$0xff]
        %v5156 = vld [vmem:[#allocation4 + $0x10] sm:$0x3]
        %v5157 = vld [vmem:[#allocation4 + $0x18] sm:$0xff]
        %v5158 = vld [vmem:[#allocation4 + $0x20] sm:$0xff]
        %v5159 = vld [vmem:[#allocation4 + $0x28] sm:$0x3]
        %v5160 = vld [vmem:[#allocation4 + $0x30] sm:$0xff]
        %v5161 = vld [vmem:[#allocation4 + $0x38] sm:$0xff]
        %v5162 = vld [vmem:[#allocation4 + $0x40] sm:$0x3]
        %v5163 = vld [vmem:[#allocation4 + $0x48] sm:$0xff]
        %v5164 = vld [vmem:[#allocation4 + $0x50] sm:$0xff]
        %v5165 = vld [vmem:[#allocation4 + $0x58] sm:$0x3]
        %v5166 = vld [vmem:[#allocation4 + $0x60] sm:$0xff]
        %v5167 = vld [vmem:[#allocation4 + $0x68] sm:$0xff]
        %v5168 = vld [vmem:[#allocation4 + $0x70] sm:$0x3]
        %v5169 = vld [vmem:[#allocation4 + $0x78] sm:$0xff]
        %v5170 = vld [vmem:[#allocation4 + $0x80] sm:$0xff]
        %v5171 = vld [vmem:[#allocation4 + $0x88] sm:$0x3]
        %v5172 = vld [vmem:[#allocation4 + $0x90] sm:$0xff]
        %v5173 = vld [vmem:[#allocation4 + $0x98] sm:$0xff]
        %v5174 = vld [vmem:[#allocation4 + $0xa0] sm:$0x3]
        %v5175 = vld [vmem:[#allocation4 + $0xa8] sm:$0xff]
        %v5176 = vld [vmem:[#allocation4 + $0xb0] sm:$0xff]
        %v5177 = vld [vmem:[#allocation4 + $0xb8] sm:$0x3]
        %v5178 = vld [vmem:[#allocation4 + $0xc0] sm:$0xff]
        %v5179 = vld [vmem:[#allocation4 + $0xc8] sm:$0xff]
        %v5180 = vld [vmem:[#allocation4 + $0xd0] sm:$0x3]
        %v5181 = vld [vmem:[#allocation4 + $0xd8] sm:$0xff]
        %v5182 = vld [vmem:[#allocation4 + $0xe0] sm:$0xff]
        %v5183 = vld [vmem:[#allocation4 + $0xe8] sm:$0x3]
        %v5184 = vld [vmem:[#allocation4 + $0xf0] sm:$0xff]
        %v5185 = vld [vmem:[#allocation4 + $0xf8] sm:$0xff]
        %v5186 = vld [vmem:[#allocation4 + $0x100] sm:$0x3]
        %v5187 = vld [vmem:[#allocation4 + $0x108] sm:$0xff]
        %v5188 = vld [vmem:[#allocation4 + $0x110] sm:$0xff]
        %v5189 = vld [vmem:[#allocation4 + $0x118] sm:$0x3]
        %v5190 = vld [vmem:[#allocation4 + $0x120] sm:$0xff]
        %v5191 = vld [vmem:[#allocation4 + $0x128] sm:$0xff]
        %v5192 = vld [vmem:[#allocation4 + $0x130] sm:$0x3]
        %v5193 = vld [vmem:[#allocation4 + $0x138] sm:$0xff]
        %v5194 = vld [vmem:[#allocation4 + $0x140] sm:$0xff]
        %v5195 = vld [vmem:[#allocation4 + $0x148] sm:$0x3]
        %v5196 = vld [vmem:[#allocation4 + $0x150] sm:$0xff]
        %v5197 = vld [vmem:[#allocation4 + $0x158] sm:$0xff]
        %v5198 = vld [vmem:[#allocation4 + $0x160] sm:$0x3]
        %v5199 = vld [vmem:[#allocation4 + $0x168] sm:$0xff]
        %v5200 = vld [vmem:[#allocation4 + $0x170] sm:$0xff]
        %v5201 = vld [vmem:[#allocation4 + $0x178] sm:$0x3]
        %v5202 = vld [vmem:[#allocation4 + $0x180] sm:$0xff]
        %v5203 = vld [vmem:[#allocation4 + $0x188] sm:$0xff]
        %v5204 = vld [vmem:[#allocation4 + $0x190] sm:$0x3]
        %v5205 = vld [vmem:[#allocation4 + $0x198] sm:$0xff]
        %v5206 = vld [vmem:[#allocation4 + $0x1a0] sm:$0xff]
        %v5207 = vld [vmem:[#allocation4 + $0x1a8] sm:$0x3]
        %v5256 = vrot.slane %v5154, 1
        %v5257 = vrot.slane %v5155, 1
        %v5258 = vsel %vm802, %v5256, %v5257
        %v5259 = vrot.slane %v5156, 1
        %v5260 = vsel %vm802, %v5257, %v5259
        %v5261 = vrot.slane %v5157, 1
        %v5262 = vrot.slane %v5158, 1
        %v5263 = vsel %vm802, %v5261, %v5262
        %v5264 = vrot.slane %v5159, 1
        %v5265 = vsel %vm802, %v5262, %v5264
        %v5266 = vrot.slane %v5160, 1
        %v5267 = vrot.slane %v5161, 1
        %v5268 = vsel %vm802, %v5266, %v5267
        %v5269 = vrot.slane %v5162, 1
        %v5270 = vsel %vm802, %v5267, %v5269
        %v5271 = vrot.slane %v5163, 1
        %v5272 = vrot.slane %v5164, 1
        %v5273 = vsel %vm802, %v5271, %v5272
        %v5274 = vrot.slane %v5165, 1
        %v5275 = vsel %vm802, %v5272, %v5274
        %v5276 = vrot.slane %v5166, 1
        %v5277 = vrot.slane %v5167, 1
        %v5278 = vsel %vm802, %v5276, %v5277
        %v5279 = vrot.slane %v5168, 1
        %v5280 = vsel %vm802, %v5277, %v5279
        %v5281 = vrot.slane %v5169, 1
        %v5282 = vrot.slane %v5170, 1
        %v5283 = vsel %vm802, %v5281, %v5282
        %v5284 = vrot.slane %v5171, 1
        %v5285 = vsel %vm802, %v5282, %v5284
        %v5286 = vrot.slane %v5172, 1
        %v5287 = vrot.slane %v5173, 1
        %v5288 = vsel %vm802, %v5286, %v5287
        %v5289 = vrot.slane %v5174, 1
        %v5290 = vsel %vm802, %v5287, %v5289
        %v5291 = vrot.slane %v5175, 1
        %v5292 = vrot.slane %v5176, 1
        %v5293 = vsel %vm802, %v5291, %v5292
        %v5294 = vrot.slane %v5177, 1
        %v5295 = vsel %vm802, %v5292, %v5294
        %v5296 = vrot.slane %v5178, 1
        %v5297 = vrot.slane %v5179, 1
        %v5298 = vsel %vm802, %v5296, %v5297
        %v5299 = vrot.slane %v5180, 1
        %v5300 = vsel %vm802, %v5297, %v5299
        %v5301 = vrot.slane %v5181, 1
        %v5302 = vrot.slane %v5182, 1
        %v5303 = vsel %vm802, %v5301, %v5302
        %v5304 = vrot.slane %v5183, 1
        %v5305 = vsel %vm802, %v5302, %v5304
        %v5306 = vrot.slane %v5184, 1
        %v5307 = vrot.slane %v5185, 1
        %v5308 = vsel %vm802, %v5306, %v5307
        %v5309 = vrot.slane %v5186, 1
        %v5310 = vsel %vm802, %v5307, %v5309
        %v5311 = vrot.slane %v5187, 1
        %v5312 = vrot.slane %v5188, 1
        %v5313 = vsel %vm802, %v5311, %v5312
        %v5314 = vrot.slane %v5189, 1
        %v5315 = vsel %vm802, %v5312, %v5314
        %v5316 = vrot.slane %v5190, 1
        %v5317 = vrot.slane %v5191, 1
        %v5318 = vsel %vm802, %v5316, %v5317
        %v5319 = vrot.slane %v5192, 1
        %v5320 = vsel %vm802, %v5317, %v5319
        %v5321 = vrot.slane %v5193, 1
        %v5322 = vrot.slane %v5194, 1
        %v5323 = vsel %vm802, %v5321, %v5322
        %v5324 = vrot.slane %v5195, 1
        %v5325 = vsel %vm802, %v5322, %v5324
        %v5326 = vrot.slane %v5196, 1
        %v5327 = vrot.slane %v5197, 1
        %v5328 = vsel %vm802, %v5326, %v5327
        %v5329 = vrot.slane %v5198, 1
        %v5330 = vsel %vm802, %v5327, %v5329
        %v5331 = vrot.slane %v5199, 1
        %v5332 = vrot.slane %v5200, 1
        %v5333 = vsel %vm802, %v5331, %v5332
        %v5334 = vrot.slane %v5201, 1
        %v5335 = vsel %vm802, %v5332, %v5334
        %5336 = vrot.lane.b32.xlu0 %v5258, 32
        %v5337 = vpop.permute.xlu0 %5336
        %5338 = vrot.lane.b32.xlu0 %v5260, 32
        %v5339 = vpop.permute.xlu0 %5338
        %5340 = vrot.lane.b32.xlu0 %v5263, 32
        %v5341 = vpop.permute.xlu0 %5340
        %5342 = vrot.lane.b32.xlu0 %v5265, 32
        %v5343 = vpop.permute.xlu0 %5342
        %5344 = vrot.lane.b32.xlu0 %v5268, 32
        %v5345 = vpop.permute.xlu0 %5344
        %5346 = vrot.lane.b32.xlu0 %v5270, 32
        %v5347 = vpop.permute.xlu0 %5346
        %5348 = vrot.lane.b32.xlu0 %v5273, 32
        %v5349 = vpop.permute.xlu0 %5348
        %5350 = vrot.lane.b32.xlu0 %v5275, 32
        %v5351 = vpop.permute.xlu0 %5350
        %5352 = vrot.lane.b32.xlu0 %v5278, 32
        %v5353 = vpop.permute.xlu0 %5352
        %5354 = vrot.lane.b32.xlu0 %v5280, 32
        %v5355 = vpop.permute.xlu0 %5354
        %5356 = vrot.lane.b32.xlu0 %v5283, 32
        %v5357 = vpop.permute.xlu0 %5356
        %5358 = vrot.lane.b32.xlu0 %v5285, 32
        %v5359 = vpop.permute.xlu0 %5358
        %5360 = vrot.lane.b32.xlu0 %v5288, 32
        %v5361 = vpop.permute.xlu0 %5360
        %5362 = vrot.lane.b32.xlu0 %v5290, 32
        %v5363 = vpop.permute.xlu0 %5362
        %5364 = vrot.lane.b32.xlu0 %v5293, 32
        %v5365 = vpop.permute.xlu0 %5364
        %5366 = vrot.lane.b32.xlu0 %v5295, 32
        %v5367 = vpop.permute.xlu0 %5366
        %5368 = vrot.lane.b32.xlu0 %v5298, 32
        %v5369 = vpop.permute.xlu0 %5368
        %5370 = vrot.lane.b32.xlu0 %v5300, 32
        %v5371 = vpop.permute.xlu0 %5370
        %5372 = vrot.lane.b32.xlu0 %v5303, 32
        %v5373 = vpop.permute.xlu0 %5372
        %5374 = vrot.lane.b32.xlu0 %v5305, 32
        %v5375 = vpop.permute.xlu0 %5374
        %5376 = vrot.lane.b32.xlu0 %v5308, 32
        %v5377 = vpop.permute.xlu0 %5376
        %5378 = vrot.lane.b32.xlu0 %v5310, 32
        %v5379 = vpop.permute.xlu0 %5378
        %5380 = vrot.lane.b32.xlu0 %v5313, 32
        %v5381 = vpop.permute.xlu0 %5380
        %5382 = vrot.lane.b32.xlu0 %v5315, 32
        %v5383 = vpop.permute.xlu0 %5382
        %5384 = vrot.lane.b32.xlu0 %v5318, 32
        %v5385 = vpop.permute.xlu0 %5384
        %5386 = vrot.lane.b32.xlu0 %v5320, 32
        %v5387 = vpop.permute.xlu0 %5386
        %5388 = vrot.lane.b32.xlu0 %v5323, 32
        %v5389 = vpop.permute.xlu0 %5388
        %5390 = vrot.lane.b32.xlu0 %v5325, 32
        %v5391 = vpop.permute.xlu0 %5390
        %5392 = vrot.lane.b32.xlu0 %v5328, 32
        %v5393 = vpop.permute.xlu0 %5392
        %5394 = vrot.lane.b32.xlu0 %v5330, 32
        %v5395 = vpop.permute.xlu0 %5394
        %5396 = vrot.lane.b32.xlu0 %v5333, 32
        %v5397 = vpop.permute.xlu0 %5396
        %5398 = vrot.lane.b32.xlu0 %v5335, 32
        %v5399 = vpop.permute.xlu0 %5398
        %v5432 = vrot.slane %v5154, 2
        %v5433 = vrot.slane %v5155, 2
        %v5434 = vsel %vm979, %v5432, %v5433
        %v5435 = vrot.slane %v5156, 2
        %v5436 = vsel %vm979, %v5433, %v5435
        %v5437 = vrot.slane %v5157, 2
        %v5438 = vrot.slane %v5158, 2
        %v5439 = vsel %vm979, %v5437, %v5438
        %v5440 = vrot.slane %v5159, 2
        %v5441 = vsel %vm979, %v5438, %v5440
        %v5442 = vrot.slane %v5160, 2
        %v5443 = vrot.slane %v5161, 2
        %v5444 = vsel %vm979, %v5442, %v5443
        %v5445 = vrot.slane %v5162, 2
        %v5446 = vsel %vm979, %v5443, %v5445
        %v5447 = vrot.slane %v5163, 2
        %v5448 = vrot.slane %v5164, 2
        %v5449 = vsel %vm979, %v5447, %v5448
        %v5450 = vrot.slane %v5165, 2
        %v5451 = vsel %vm979, %v5448, %v5450
        %v5452 = vrot.slane %v5166, 2
        %v5453 = vrot.slane %v5167, 2
        %v5454 = vsel %vm979, %v5452, %v5453
        %v5455 = vrot.slane %v5168, 2
        %v5456 = vsel %vm979, %v5453, %v5455
        %v5457 = vrot.slane %v5169, 2
        %v5458 = vrot.slane %v5170, 2
        %v5459 = vsel %vm979, %v5457, %v5458
        %v5460 = vrot.slane %v5171, 2
        %v5461 = vsel %vm979, %v5458, %v5460
        %v5462 = vrot.slane %v5172, 2
        %v5463 = vrot.slane %v5173, 2
        %v5464 = vsel %vm979, %v5462, %v5463
        %v5465 = vrot.slane %v5174, 2
        %v5466 = vsel %vm979, %v5463, %v5465
        %v5467 = vrot.slane %v5175, 2
        %v5468 = vrot.slane %v5176, 2
        %v5469 = vsel %vm979, %v5467, %v5468
        %v5470 = vrot.slane %v5177, 2
        %v5471 = vsel %vm979, %v5468, %v5470
        %v5472 = vrot.slane %v5178, 2
        %v5473 = vrot.slane %v5179, 2
        %v5474 = vsel %vm979, %v5472, %v5473
        %v5475 = vrot.slane %v5180, 2
        %v5476 = vsel %vm979, %v5473, %v5475
        %v5477 = vrot.slane %v5181, 2
        %v5478 = vrot.slane %v5182, 2
        %v5479 = vsel %vm979, %v5477, %v5478
        %v5480 = vrot.slane %v5183, 2
        %v5481 = vsel %vm979, %v5478, %v5480
        %v5482 = vrot.slane %v5184, 2
        %v5483 = vrot.slane %v5185, 2
        %v5484 = vsel %vm979, %v5482, %v5483
        %v5485 = vrot.slane %v5186, 2
        %v5486 = vsel %vm979, %v5483, %v5485
        %v5487 = vrot.slane %v5187, 2
        %v5488 = vrot.slane %v5188, 2
        %v5489 = vsel %vm979, %v5487, %v5488
        %v5490 = vrot.slane %v5189, 2
        %v5491 = vsel %vm979, %v5488, %v5490
        %v5492 = vrot.slane %v5190, 2
        %v5493 = vrot.slane %v5191, 2
        %v5494 = vsel %vm979, %v5492, %v5493
        %v5495 = vrot.slane %v5192, 2
        %v5496 = vsel %vm979, %v5493, %v5495
        %v5497 = vrot.slane %v5193, 2
        %v5498 = vrot.slane %v5194, 2
        %v5499 = vsel %vm979, %v5497, %v5498
        %v5500 = vrot.slane %v5195, 2
        %v5501 = vsel %vm979, %v5498, %v5500
        %v5502 = vrot.slane %v5196, 2
        %v5503 = vrot.slane %v5197, 2
        %v5504 = vsel %vm979, %v5502, %v5503
        %v5505 = vrot.slane %v5198, 2
        %v5506 = vsel %vm979, %v5503, %v5505
        %v5507 = vrot.slane %v5199, 2
        %v5508 = vrot.slane %v5200, 2
        %v5509 = vsel %vm979, %v5507, %v5508
        %v5510 = vrot.slane %v5201, 2
        %v5511 = vsel %vm979, %v5508, %v5510
        %5512 = vrot.lane.b32.xlu0 %v5434, 64
        %v5513 = vpop.permute.xlu0 %5512
        %5514 = vrot.lane.b32.xlu0 %v5436, 64
        %v5515 = vpop.permute.xlu0 %5514
        %5516 = vrot.lane.b32.xlu0 %v5439, 64
        %v5517 = vpop.permute.xlu0 %5516
        %5518 = vrot.lane.b32.xlu0 %v5441, 64
        %v5519 = vpop.permute.xlu0 %5518
        %5520 = vrot.lane.b32.xlu0 %v5444, 64
        %v5521 = vpop.permute.xlu0 %5520
        %5522 = vrot.lane.b32.xlu0 %v5446, 64
        %v5523 = vpop.permute.xlu0 %5522
        %5524 = vrot.lane.b32.xlu0 %v5449, 64
        %v5525 = vpop.permute.xlu0 %5524
        %5526 = vrot.lane.b32.xlu0 %v5451, 64
        %v5527 = vpop.permute.xlu0 %5526
        %5528 = vrot.lane.b32.xlu0 %v5454, 64
        %v5529 = vpop.permute.xlu0 %5528
        %5530 = vrot.lane.b32.xlu0 %v5456, 64
        %v5531 = vpop.permute.xlu0 %5530
        %5532 = vrot.lane.b32.xlu0 %v5459, 64
        %v5533 = vpop.permute.xlu0 %5532
        %5534 = vrot.lane.b32.xlu0 %v5461, 64
        %v5535 = vpop.permute.xlu0 %5534
        %5536 = vrot.lane.b32.xlu0 %v5464, 64
        %v5537 = vpop.permute.xlu0 %5536
        %5538 = vrot.lane.b32.xlu0 %v5466, 64
        %v5539 = vpop.permute.xlu0 %5538
        %5540 = vrot.lane.b32.xlu0 %v5469, 64
        %v5541 = vpop.permute.xlu0 %5540
        %5542 = vrot.lane.b32.xlu0 %v5471, 64
        %v5543 = vpop.permute.xlu0 %5542
        %5544 = vrot.lane.b32.xlu0 %v5474, 64
        %v5545 = vpop.permute.xlu0 %5544
        %5546 = vrot.lane.b32.xlu0 %v5476, 64
        %v5547 = vpop.permute.xlu0 %5546
        %5548 = vrot.lane.b32.xlu0 %v5479, 64
        %v5549 = vpop.permute.xlu0 %5548
        %5550 = vrot.lane.b32.xlu0 %v5481, 64
        %v5551 = vpop.permute.xlu0 %5550
        %5552 = vrot.lane.b32.xlu0 %v5484, 64
        %v5553 = vpop.permute.xlu0 %5552
        %5554 = vrot.lane.b32.xlu0 %v5486, 64
        %v5555 = vpop.permute.xlu0 %5554
        %5556 = vrot.lane.b32.xlu0 %v5489, 64
        %v5557 = vpop.permute.xlu0 %5556
        %5558 = vrot.lane.b32.xlu0 %v5491, 64
        %v5559 = vpop.permute.xlu0 %5558
        %5560 = vrot.lane.b32.xlu0 %v5494, 64
        %v5561 = vpop.permute.xlu0 %5560
        %5562 = vrot.lane.b32.xlu0 %v5496, 64
        %v5563 = vpop.permute.xlu0 %5562
        %5564 = vrot.lane.b32.xlu0 %v5499, 64
        %v5565 = vpop.permute.xlu0 %5564
        %5566 = vrot.lane.b32.xlu0 %v5501, 64
        %v5567 = vpop.permute.xlu0 %5566
        %5568 = vrot.lane.b32.xlu0 %v5504, 64
        %v5569 = vpop.permute.xlu0 %5568
        %5570 = vrot.lane.b32.xlu0 %v5506, 64
        %v5571 = vpop.permute.xlu0 %5570
        %5572 = vrot.lane.b32.xlu0 %v5509, 64
        %v5573 = vpop.permute.xlu0 %5572
        %5574 = vrot.lane.b32.xlu0 %v5511, 64
        %v5575 = vpop.permute.xlu0 %5574
        %5610 = vrot.lane.b32.xlu0 %v5157, 96
        %v5611 = vpop.permute.xlu0 %5610
        %5612 = vrot.lane.b32.xlu0 %v5158, 96
        %v5613 = vpop.permute.xlu0 %5612
        %5614 = vrot.lane.b32.xlu0 %v5160, 96
        %v5615 = vpop.permute.xlu0 %5614
        %5616 = vrot.lane.b32.xlu0 %v5161, 96
        %v5617 = vpop.permute.xlu0 %5616
        %5618 = vrot.lane.b32.xlu0 %v5163, 96
        %v5619 = vpop.permute.xlu0 %5618
        %5620 = vrot.lane.b32.xlu0 %v5164, 96
        %v5621 = vpop.permute.xlu0 %5620
        %5622 = vrot.lane.b32.xlu0 %v5166, 96
        %v5623 = vpop.permute.xlu0 %5622
        %5624 = vrot.lane.b32.xlu0 %v5167, 96
        %v5625 = vpop.permute.xlu0 %5624
        %5626 = vrot.lane.b32.xlu0 %v5169, 96
        %v5627 = vpop.permute.xlu0 %5626
        %5628 = vrot.lane.b32.xlu0 %v5170, 96
        %v5629 = vpop.permute.xlu0 %5628
        %5630 = vrot.lane.b32.xlu0 %v5172, 96
        %v5631 = vpop.permute.xlu0 %5630
        %5632 = vrot.lane.b32.xlu0 %v5173, 96
        %v5633 = vpop.permute.xlu0 %5632
        %5634 = vrot.lane.b32.xlu0 %v5175, 96
        %v5635 = vpop.permute.xlu0 %5634
        %5636 = vrot.lane.b32.xlu0 %v5176, 96
        %v5637 = vpop.permute.xlu0 %5636
        %5638 = vrot.lane.b32.xlu0 %v5178, 96
        %v5639 = vpop.permute.xlu0 %5638
        %5640 = vrot.lane.b32.xlu0 %v5179, 96
        %v5641 = vpop.permute.xlu0 %5640
        %5642 = vrot.lane.b32.xlu0 %v5181, 96
        %v5643 = vpop.permute.xlu0 %5642
        %5644 = vrot.lane.b32.xlu0 %v5182, 96
        %v5645 = vpop.permute.xlu0 %5644
        %5646 = vrot.lane.b32.xlu0 %v5184, 96
        %v5647 = vpop.permute.xlu0 %5646
        %5648 = vrot.lane.b32.xlu0 %v5185, 96
        %v5649 = vpop.permute.xlu0 %5648
        %5650 = vrot.lane.b32.xlu0 %v5187, 96
        %v5651 = vpop.permute.xlu0 %5650
        %5652 = vrot.lane.b32.xlu0 %v5188, 96
        %v5653 = vpop.permute.xlu0 %5652
        %5654 = vrot.lane.b32.xlu0 %v5190, 96
        %v5655 = vpop.permute.xlu0 %5654
        %5656 = vrot.lane.b32.xlu0 %v5191, 96
        %v5657 = vpop.permute.xlu0 %5656
        %5658 = vrot.lane.b32.xlu0 %v5193, 96
        %v5659 = vpop.permute.xlu0 %5658
        %5660 = vrot.lane.b32.xlu0 %v5194, 96
        %v5661 = vpop.permute.xlu0 %5660
        %5662 = vrot.lane.b32.xlu0 %v5196, 96
        %v5663 = vpop.permute.xlu0 %5662
        %5664 = vrot.lane.b32.xlu0 %v5197, 96
        %v5665 = vpop.permute.xlu0 %5664
        %5666 = vrot.lane.b32.xlu0 %v5199, 96
        %v5667 = vpop.permute.xlu0 %5666
        %5668 = vrot.lane.b32.xlu0 %v5200, 96
        %v5669 = vpop.permute.xlu0 %5668
        %5670 = vrot.lane.b32.xlu0 %v5202, 96
        %v5671 = vpop.permute.xlu0 %5670
        %5672 = vrot.lane.b32.xlu0 %v5203, 96
        %v5673 = vpop.permute.xlu0 %5672
        %v5707 = vrot.slane %v5202, 1
        %v5708 = vrot.slane %v5203, 1
        %v5709 = vsel %vm802, %v5707, %v5708
        %v5710 = vrot.slane %v5204, 1
        %v5711 = vsel %vm802, %v5708, %v5710
        %v5744 = vrot.slane %v5202, 2
        %v5745 = vrot.slane %v5203, 2
        %v5746 = vsel %vm979, %v5744, %v5745
        %v5747 = vrot.slane %v5204, 2
        %v5748 = vsel %vm979, %v5745, %v5747
        %5749 = vrot.lane.b32.xlu0 %v5439, 32
        %v5750 = vpop.permute.xlu0 %5749
        %5751 = vrot.lane.b32.xlu0 %v5441, 32
        %v5752 = vpop.permute.xlu0 %5751
        %5753 = vrot.lane.b32.xlu0 %v5444, 32
        %v5754 = vpop.permute.xlu0 %5753
        %5755 = vrot.lane.b32.xlu0 %v5446, 32
        %v5756 = vpop.permute.xlu0 %5755
        %5757 = vrot.lane.b32.xlu0 %v5449, 32
        %v5758 = vpop.permute.xlu0 %5757
        %5759 = vrot.lane.b32.xlu0 %v5451, 32
        %v5760 = vpop.permute.xlu0 %5759
        %5761 = vrot.lane.b32.xlu0 %v5454, 32
        %v5762 = vpop.permute.xlu0 %5761
        %5763 = vrot.lane.b32.xlu0 %v5456, 32
        %v5764 = vpop.permute.xlu0 %5763
        %5765 = vrot.lane.b32.xlu0 %v5459, 32
        %v5766 = vpop.permute.xlu0 %5765
        %5767 = vrot.lane.b32.xlu0 %v5461, 32
        %v5768 = vpop.permute.xlu0 %5767
        %5769 = vrot.lane.b32.xlu0 %v5464, 32
        %v5770 = vpop.permute.xlu0 %5769
        %5771 = vrot.lane.b32.xlu0 %v5466, 32
        %v5772 = vpop.permute.xlu0 %5771
        %5773 = vrot.lane.b32.xlu0 %v5469, 32
        %v5774 = vpop.permute.xlu0 %5773
        %5775 = vrot.lane.b32.xlu0 %v5471, 32
        %v5776 = vpop.permute.xlu0 %5775
        %5777 = vrot.lane.b32.xlu0 %v5474, 32
        %v5778 = vpop.permute.xlu0 %5777
        %5779 = vrot.lane.b32.xlu0 %v5476, 32
        %v5780 = vpop.permute.xlu0 %5779
        %5781 = vrot.lane.b32.xlu0 %v5479, 32
        %v5782 = vpop.permute.xlu0 %5781
        %5783 = vrot.lane.b32.xlu0 %v5481, 32
        %v5784 = vpop.permute.xlu0 %5783
        %5785 = vrot.lane.b32.xlu0 %v5484, 32
        %v5786 = vpop.permute.xlu0 %5785
        %5787 = vrot.lane.b32.xlu0 %v5486, 32
        %v5788 = vpop.permute.xlu0 %5787
        %5789 = vrot.lane.b32.xlu0 %v5489, 32
        %v5790 = vpop.permute.xlu0 %5789
        %5791 = vrot.lane.b32.xlu0 %v5491, 32
        %v5792 = vpop.permute.xlu0 %5791
        %5793 = vrot.lane.b32.xlu0 %v5494, 32
        %v5794 = vpop.permute.xlu0 %5793
        %5795 = vrot.lane.b32.xlu0 %v5496, 32
        %v5796 = vpop.permute.xlu0 %5795
        %5797 = vrot.lane.b32.xlu0 %v5499, 32
        %v5798 = vpop.permute.xlu0 %5797
        %5799 = vrot.lane.b32.xlu0 %v5501, 32
        %v5800 = vpop.permute.xlu0 %5799
        %5801 = vrot.lane.b32.xlu0 %v5504, 32
        %v5802 = vpop.permute.xlu0 %5801
        %5803 = vrot.lane.b32.xlu0 %v5506, 32
        %v5804 = vpop.permute.xlu0 %5803
        %5805 = vrot.lane.b32.xlu0 %v5509, 32
        %v5806 = vpop.permute.xlu0 %5805
        %5807 = vrot.lane.b32.xlu0 %v5511, 32
        %v5808 = vpop.permute.xlu0 %5807
        %5809 = vrot.lane.b32.xlu0 %v5746, 32
        %v5810 = vpop.permute.xlu0 %5809
        %5811 = vrot.lane.b32.xlu0 %v5748, 32
        %v5812 = vpop.permute.xlu0 %5811
        %5847 = vrot.lane.b32.xlu0 %v5160, 64
        %v5848 = vpop.permute.xlu0 %5847
        %5849 = vrot.lane.b32.xlu0 %v5161, 64
        %v5850 = vpop.permute.xlu0 %5849
        %5851 = vrot.lane.b32.xlu0 %v5163, 64
        %v5852 = vpop.permute.xlu0 %5851
        %5853 = vrot.lane.b32.xlu0 %v5164, 64
        %v5854 = vpop.permute.xlu0 %5853
        %5855 = vrot.lane.b32.xlu0 %v5166, 64
        %v5856 = vpop.permute.xlu0 %5855
        %5857 = vrot.lane.b32.xlu0 %v5167, 64
        %v5858 = vpop.permute.xlu0 %5857
        %5859 = vrot.lane.b32.xlu0 %v5169, 64
        %v5860 = vpop.permute.xlu0 %5859
        %5861 = vrot.lane.b32.xlu0 %v5170, 64
        %v5862 = vpop.permute.xlu0 %5861
        %5863 = vrot.lane.b32.xlu0 %v5172, 64
        %v5864 = vpop.permute.xlu0 %5863
        %5865 = vrot.lane.b32.xlu0 %v5173, 64
        %v5866 = vpop.permute.xlu0 %5865
        %5867 = vrot.lane.b32.xlu0 %v5175, 64
        %v5868 = vpop.permute.xlu0 %5867
        %5869 = vrot.lane.b32.xlu0 %v5176, 64
        %v5870 = vpop.permute.xlu0 %5869
        %5871 = vrot.lane.b32.xlu0 %v5178, 64
        %v5872 = vpop.permute.xlu0 %5871
        %5873 = vrot.lane.b32.xlu0 %v5179, 64
        %v5874 = vpop.permute.xlu0 %5873
        %5875 = vrot.lane.b32.xlu0 %v5181, 64
        %v5876 = vpop.permute.xlu0 %5875
        %5877 = vrot.lane.b32.xlu0 %v5182, 64
        %v5878 = vpop.permute.xlu0 %5877
        %5879 = vrot.lane.b32.xlu0 %v5184, 64
        %v5880 = vpop.permute.xlu0 %5879
        %5881 = vrot.lane.b32.xlu0 %v5185, 64
        %v5882 = vpop.permute.xlu0 %5881
        %5883 = vrot.lane.b32.xlu0 %v5187, 64
        %v5884 = vpop.permute.xlu0 %5883
        %5885 = vrot.lane.b32.xlu0 %v5188, 64
        %v5886 = vpop.permute.xlu0 %5885
        %5887 = vrot.lane.b32.xlu0 %v5190, 64
        %v5888 = vpop.permute.xlu0 %5887
        %5889 = vrot.lane.b32.xlu0 %v5191, 64
        %v5890 = vpop.permute.xlu0 %5889
        %5891 = vrot.lane.b32.xlu0 %v5193, 64
        %v5892 = vpop.permute.xlu0 %5891
        %5893 = vrot.lane.b32.xlu0 %v5194, 64
        %v5894 = vpop.permute.xlu0 %5893
        %5895 = vrot.lane.b32.xlu0 %v5196, 64
        %v5896 = vpop.permute.xlu0 %5895
        %5897 = vrot.lane.b32.xlu0 %v5197, 64
        %v5898 = vpop.permute.xlu0 %5897
        %5899 = vrot.lane.b32.xlu0 %v5199, 64
        %v5900 = vpop.permute.xlu0 %5899
        %5901 = vrot.lane.b32.xlu0 %v5200, 64
        %v5902 = vpop.permute.xlu0 %5901
        %5903 = vrot.lane.b32.xlu0 %v5202, 64
        %v5904 = vpop.permute.xlu0 %5903
        %5905 = vrot.lane.b32.xlu0 %v5203, 64
        %v5906 = vpop.permute.xlu0 %5905
        %5907 = vrot.lane.b32.xlu0 %v5205, 64
        %v5908 = vpop.permute.xlu0 %5907
        %5909 = vrot.lane.b32.xlu0 %v5206, 64
        %v5910 = vpop.permute.xlu0 %5909
        %v5944 = vrot.slane %v5205, 1
        %v5945 = vrot.slane %v5206, 1
        %v5946 = vsel %vm802, %v5944, %v5945
        %v5947 = vrot.slane %v5207, 1
        %v5948 = vsel %vm802, %v5945, %v5947
        %5949 = vrot.lane.b32.xlu0 %v5268, 96
        %v5950 = vpop.permute.xlu0 %5949
        %5951 = vrot.lane.b32.xlu0 %v5270, 96
        %v5952 = vpop.permute.xlu0 %5951
        %5953 = vrot.lane.b32.xlu0 %v5273, 96
        %v5954 = vpop.permute.xlu0 %5953
        %5955 = vrot.lane.b32.xlu0 %v5275, 96
        %v5956 = vpop.permute.xlu0 %5955
        %5957 = vrot.lane.b32.xlu0 %v5278, 96
        %v5958 = vpop.permute.xlu0 %5957
        %5959 = vrot.lane.b32.xlu0 %v5280, 96
        %v5960 = vpop.permute.xlu0 %5959
        %5961 = vrot.lane.b32.xlu0 %v5283, 96
        %v5962 = vpop.permute.xlu0 %5961
        %5963 = vrot.lane.b32.xlu0 %v5285, 96
        %v5964 = vpop.permute.xlu0 %5963
        %5965 = vrot.lane.b32.xlu0 %v5288, 96
        %v5966 = vpop.permute.xlu0 %5965
        %5967 = vrot.lane.b32.xlu0 %v5290, 96
        %v5968 = vpop.permute.xlu0 %5967
        %5969 = vrot.lane.b32.xlu0 %v5293, 96
        %v5970 = vpop.permute.xlu0 %5969
        %5971 = vrot.lane.b32.xlu0 %v5295, 96
        %v5972 = vpop.permute.xlu0 %5971
        %5973 = vrot.lane.b32.xlu0 %v5298, 96
        %v5974 = vpop.permute.xlu0 %5973
        %5975 = vrot.lane.b32.xlu0 %v5300, 96
        %v5976 = vpop.permute.xlu0 %5975
        %5977 = vrot.lane.b32.xlu0 %v5303, 96
        %v5978 = vpop.permute.xlu0 %5977
        %5979 = vrot.lane.b32.xlu0 %v5305, 96
        %v5980 = vpop.permute.xlu0 %5979
        %5981 = vrot.lane.b32.xlu0 %v5308, 96
        %v5982 = vpop.permute.xlu0 %5981
        %5983 = vrot.lane.b32.xlu0 %v5310, 96
        %v5984 = vpop.permute.xlu0 %5983
        %5985 = vrot.lane.b32.xlu0 %v5313, 96
        %v5986 = vpop.permute.xlu0 %5985
        %5987 = vrot.lane.b32.xlu0 %v5315, 96
        %v5988 = vpop.permute.xlu0 %5987
        %5989 = vrot.lane.b32.xlu0 %v5318, 96
        %v5990 = vpop.permute.xlu0 %5989
        %5991 = vrot.lane.b32.xlu0 %v5320, 96
        %v5992 = vpop.permute.xlu0 %5991
        %5993 = vrot.lane.b32.xlu0 %v5323, 96
        %v5994 = vpop.permute.xlu0 %5993
        %5995 = vrot.lane.b32.xlu0 %v5325, 96
        %v5996 = vpop.permute.xlu0 %5995
        %5997 = vrot.lane.b32.xlu0 %v5328, 96
        %v5998 = vpop.permute.xlu0 %5997
        %5999 = vrot.lane.b32.xlu0 %v5330, 96
        %v6000 = vpop.permute.xlu0 %5999
        %6001 = vrot.lane.b32.xlu0 %v5333, 96
        %v6002 = vpop.permute.xlu0 %6001
        %6003 = vrot.lane.b32.xlu0 %v5335, 96
        %v6004 = vpop.permute.xlu0 %6003
        %6005 = vrot.lane.b32.xlu0 %v5709, 96
        %v6006 = vpop.permute.xlu0 %6005
        %6007 = vrot.lane.b32.xlu0 %v5711, 96
        %v6008 = vpop.permute.xlu0 %6007
        %6009 = vrot.lane.b32.xlu0 %v5946, 96
        %v6010 = vpop.permute.xlu0 %6009
        %6011 = vrot.lane.b32.xlu0 %v5948, 96
        %v6012 = vpop.permute.xlu0 %6011
        %v6045 = vrot.slane %v5205, 2
        %v6046 = vrot.slane %v5206, 2
        %v6047 = vsel %vm979, %v6045, %v6046
        %v6048 = vrot.slane %v5207, 2
        %v6049 = vsel %vm979, %v6046, %v6048
        %v6082 = vsel %vm406, %v5154, %v5337
        %v6083 = vsel %vm406, %v5155, %v5339
        %v6084 = vsel %vm406, %v5157, %v5341
        %v6085 = vsel %vm406, %v5158, %v5343
        %v6086 = vsel %vm406, %v5160, %v5345
        %v6087 = vsel %vm406, %v5161, %v5347
        %v6088 = vsel %vm406, %v5163, %v5349
        %v6089 = vsel %vm406, %v5164, %v5351
        %v6090 = vsel %vm406, %v5166, %v5353
        %v6091 = vsel %vm406, %v5167, %v5355
        %v6092 = vsel %vm406, %v5169, %v5357
        %v6093 = vsel %vm406, %v5170, %v5359
        %v6094 = vsel %vm406, %v5172, %v5361
        %v6095 = vsel %vm406, %v5173, %v5363
        %v6096 = vsel %vm406, %v5175, %v5365
        %v6097 = vsel %vm406, %v5176, %v5367
        %v6098 = vsel %vm406, %v5178, %v5369
        %v6099 = vsel %vm406, %v5179, %v5371
        %v6100 = vsel %vm406, %v5181, %v5373
        %v6101 = vsel %vm406, %v5182, %v5375
        %v6102 = vsel %vm406, %v5184, %v5377
        %v6103 = vsel %vm406, %v5185, %v5379
        %v6104 = vsel %vm406, %v5187, %v5381
        %v6105 = vsel %vm406, %v5188, %v5383
        %v6106 = vsel %vm406, %v5190, %v5385
        %v6107 = vsel %vm406, %v5191, %v5387
        %v6108 = vsel %vm406, %v5193, %v5389
        %v6109 = vsel %vm406, %v5194, %v5391
        %v6110 = vsel %vm406, %v5196, %v5393
        %v6111 = vsel %vm406, %v5197, %v5395
        %v6112 = vsel %vm406, %v5199, %v5397
        %v6113 = vsel %vm406, %v5200, %v5399
        %v6114 = vsel %vm1662, %v6082, %v5513
        %v6115 = vsel %vm1662, %v6083, %v5515
        %v6116 = vsel %vm1662, %v6084, %v5517
        %v6117 = vsel %vm1662, %v6085, %v5519
        %v6118 = vsel %vm1662, %v6086, %v5521
        %v6119 = vsel %vm1662, %v6087, %v5523
        %v6120 = vsel %vm1662, %v6088, %v5525
        %v6121 = vsel %vm1662, %v6089, %v5527
        %v6122 = vsel %vm1662, %v6090, %v5529
        %v6123 = vsel %vm1662, %v6091, %v5531
        %v6124 = vsel %vm1662, %v6092, %v5533
        %v6125 = vsel %vm1662, %v6093, %v5535
        %v6126 = vsel %vm1662, %v6094, %v5537
        %v6127 = vsel %vm1662, %v6095, %v5539
        %v6128 = vsel %vm1662, %v6096, %v5541
        %v6129 = vsel %vm1662, %v6097, %v5543
        %v6130 = vsel %vm1662, %v6098, %v5545
        %v6131 = vsel %vm1662, %v6099, %v5547
        %v6132 = vsel %vm1662, %v6100, %v5549
        %v6133 = vsel %vm1662, %v6101, %v5551
        %v6134 = vsel %vm1662, %v6102, %v5553
        %v6135 = vsel %vm1662, %v6103, %v5555
        %v6136 = vsel %vm1662, %v6104, %v5557
        %v6137 = vsel %vm1662, %v6105, %v5559
        %v6138 = vsel %vm1662, %v6106, %v5561
        %v6139 = vsel %vm1662, %v6107, %v5563
        %v6140 = vsel %vm1662, %v6108, %v5565
        %v6141 = vsel %vm1662, %v6109, %v5567
        %v6142 = vsel %vm1662, %v6110, %v5569
        %v6143 = vsel %vm1662, %v6111, %v5571
        %v6144 = vsel %vm1662, %v6112, %v5573
        %v6145 = vsel %vm1662, %v6113, %v5575
        %v6146 = vsel %vm1695, %v6114, %v5611
        %v6147 = vsel %vm1695, %v6115, %v5613
        %v6148 = vsel %vm1695, %v6116, %v5615
        %v6149 = vsel %vm1695, %v6117, %v5617
        %v6150 = vsel %vm1695, %v6118, %v5619
        %v6151 = vsel %vm1695, %v6119, %v5621
        %v6152 = vsel %vm1695, %v6120, %v5623
        %v6153 = vsel %vm1695, %v6121, %v5625
        %v6154 = vsel %vm1695, %v6122, %v5627
        %v6155 = vsel %vm1695, %v6123, %v5629
        %v6156 = vsel %vm1695, %v6124, %v5631
        %v6157 = vsel %vm1695, %v6125, %v5633
        %v6158 = vsel %vm1695, %v6126, %v5635
        %v6159 = vsel %vm1695, %v6127, %v5637
        %v6160 = vsel %vm1695, %v6128, %v5639
        %v6161 = vsel %vm1695, %v6129, %v5641
        %v6162 = vsel %vm1695, %v6130, %v5643
        %v6163 = vsel %vm1695, %v6131, %v5645
        %v6164 = vsel %vm1695, %v6132, %v5647
        %v6165 = vsel %vm1695, %v6133, %v5649
        %v6166 = vsel %vm1695, %v6134, %v5651
        %v6167 = vsel %vm1695, %v6135, %v5653
        %v6168 = vsel %vm1695, %v6136, %v5655
        %v6169 = vsel %vm1695, %v6137, %v5657
        %v6170 = vsel %vm1695, %v6138, %v5659
        %v6171 = vsel %vm1695, %v6139, %v5661
        %v6172 = vsel %vm1695, %v6140, %v5663
        %v6173 = vsel %vm1695, %v6141, %v5665
        %v6174 = vsel %vm1695, %v6142, %v5667
        %v6175 = vsel %vm1695, %v6143, %v5669
        %v6176 = vsel %vm1695, %v6144, %v5671
        %v6177 = vsel %vm1695, %v6145, %v5673
        %v6178 = vsel %vm406, %v5263, %v5750
        %v6179 = vsel %vm406, %v5265, %v5752
        %v6180 = vsel %vm406, %v5268, %v5754
        %v6181 = vsel %vm406, %v5270, %v5756
        %v6182 = vsel %vm406, %v5273, %v5758
        %v6183 = vsel %vm406, %v5275, %v5760
        %v6184 = vsel %vm406, %v5278, %v5762
        %v6185 = vsel %vm406, %v5280, %v5764
        %v6186 = vsel %vm406, %v5283, %v5766
        %v6187 = vsel %vm406, %v5285, %v5768
        %v6188 = vsel %vm406, %v5288, %v5770
        %v6189 = vsel %vm406, %v5290, %v5772
        %v6190 = vsel %vm406, %v5293, %v5774
        %v6191 = vsel %vm406, %v5295, %v5776
        %v6192 = vsel %vm406, %v5298, %v5778
        %v6193 = vsel %vm406, %v5300, %v5780
        %v6194 = vsel %vm406, %v5303, %v5782
        %v6195 = vsel %vm406, %v5305, %v5784
        %v6196 = vsel %vm406, %v5308, %v5786
        %v6197 = vsel %vm406, %v5310, %v5788
        %v6198 = vsel %vm406, %v5313, %v5790
        %v6199 = vsel %vm406, %v5315, %v5792
        %v6200 = vsel %vm406, %v5318, %v5794
        %v6201 = vsel %vm406, %v5320, %v5796
        %v6202 = vsel %vm406, %v5323, %v5798
        %v6203 = vsel %vm406, %v5325, %v5800
        %v6204 = vsel %vm406, %v5328, %v5802
        %v6205 = vsel %vm406, %v5330, %v5804
        %v6206 = vsel %vm406, %v5333, %v5806
        %v6207 = vsel %vm406, %v5335, %v5808
        %v6208 = vsel %vm406, %v5709, %v5810
        %v6209 = vsel %vm406, %v5711, %v5812
        %v6210 = vsel %vm1662, %v6178, %v5848
        %v6211 = vsel %vm1662, %v6179, %v5850
        %v6212 = vsel %vm1662, %v6180, %v5852
        %v6213 = vsel %vm1662, %v6181, %v5854
        %v6214 = vsel %vm1662, %v6182, %v5856
        %v6215 = vsel %vm1662, %v6183, %v5858
        %v6216 = vsel %vm1662, %v6184, %v5860
        %v6217 = vsel %vm1662, %v6185, %v5862
        %v6218 = vsel %vm1662, %v6186, %v5864
        %v6219 = vsel %vm1662, %v6187, %v5866
        %v6220 = vsel %vm1662, %v6188, %v5868
        %v6221 = vsel %vm1662, %v6189, %v5870
        %v6222 = vsel %vm1662, %v6190, %v5872
        %v6223 = vsel %vm1662, %v6191, %v5874
        %v6224 = vsel %vm1662, %v6192, %v5876
        %v6225 = vsel %vm1662, %v6193, %v5878
        %v6226 = vsel %vm1662, %v6194, %v5880
        %v6227 = vsel %vm1662, %v6195, %v5882
        %v6228 = vsel %vm1662, %v6196, %v5884
        %v6229 = vsel %vm1662, %v6197, %v5886
        %v6230 = vsel %vm1662, %v6198, %v5888
        %v6231 = vsel %vm1662, %v6199, %v5890
        %v6232 = vsel %vm1662, %v6200, %v5892
        %v6233 = vsel %vm1662, %v6201, %v5894
        %v6234 = vsel %vm1662, %v6202, %v5896
        %v6235 = vsel %vm1662, %v6203, %v5898
        %v6236 = vsel %vm1662, %v6204, %v5900
        %v6237 = vsel %vm1662, %v6205, %v5902
        %v6238 = vsel %vm1662, %v6206, %v5904
        %v6239 = vsel %vm1662, %v6207, %v5906
        %v6240 = vsel %vm1662, %v6208, %v5908
        %v6241 = vsel %vm1662, %v6209, %v5910
        %v6242 = vsel %vm1695, %v6210, %v5950
        %v6243 = vsel %vm1695, %v6211, %v5952
        %v6244 = vsel %vm1695, %v6212, %v5954
        %v6245 = vsel %vm1695, %v6213, %v5956
        %v6246 = vsel %vm1695, %v6214, %v5958
        %v6247 = vsel %vm1695, %v6215, %v5960
        %v6248 = vsel %vm1695, %v6216, %v5962
        %v6249 = vsel %vm1695, %v6217, %v5964
        %v6250 = vsel %vm1695, %v6218, %v5966
        %v6251 = vsel %vm1695, %v6219, %v5968
        %v6252 = vsel %vm1695, %v6220, %v5970
        %v6253 = vsel %vm1695, %v6221, %v5972
        %v6254 = vsel %vm1695, %v6222, %v5974
        %v6255 = vsel %vm1695, %v6223, %v5976
        %v6256 = vsel %vm1695, %v6224, %v5978
        %v6257 = vsel %vm1695, %v6225, %v5980
        %v6258 = vsel %vm1695, %v6226, %v5982
        %v6259 = vsel %vm1695, %v6227, %v5984
        %v6260 = vsel %vm1695, %v6228, %v5986
        %v6261 = vsel %vm1695, %v6229, %v5988
        %v6262 = vsel %vm1695, %v6230, %v5990
        %v6263 = vsel %vm1695, %v6231, %v5992
        %v6264 = vsel %vm1695, %v6232, %v5994
        %v6265 = vsel %vm1695, %v6233, %v5996
        %v6266 = vsel %vm1695, %v6234, %v5998
        %v6267 = vsel %vm1695, %v6235, %v6000
        %v6268 = vsel %vm1695, %v6236, %v6002
        %v6269 = vsel %vm1695, %v6237, %v6004
        %v6270 = vsel %vm1695, %v6238, %v6006
        %v6271 = vsel %vm1695, %v6239, %v6008
        %v6272 = vsel %vm1695, %v6240, %v6010
        %v6273 = vsel %vm1695, %v6241, %v6012
        %v6274 = vpack.c.bf16 %v6147, %v6146
        %v6275 = vpack.c.bf16 %v6243, %v6242
        %v6276 = vpack.c.bf16 %v5446, %v5444
        %v6277 = vpack.c.bf16 %v6149, %v6148
        %v6278 = vpack.c.bf16 %v6245, %v6244
        %v6279 = vpack.c.bf16 %v5451, %v5449
        %v6280 = vpack.c.bf16 %v6151, %v6150
        %v6281 = vpack.c.bf16 %v6247, %v6246
        %v6282 = vpack.c.bf16 %v5456, %v5454
        %v6283 = vpack.c.bf16 %v6153, %v6152
        %v6284 = vpack.c.bf16 %v6249, %v6248
        %v6285 = vpack.c.bf16 %v5461, %v5459
        %v6286 = vpack.c.bf16 %v6155, %v6154
        %v6287 = vpack.c.bf16 %v6251, %v6250
        %v6288 = vpack.c.bf16 %v5466, %v5464
        %v6289 = vpack.c.bf16 %v6157, %v6156
        %v6290 = vpack.c.bf16 %v6253, %v6252
        %v6291 = vpack.c.bf16 %v5471, %v5469
        %v6292 = vpack.c.bf16 %v6159, %v6158
        %v6293 = vpack.c.bf16 %v6255, %v6254
        %v6294 = vpack.c.bf16 %v5476, %v5474
        %v6295 = vpack.c.bf16 %v6161, %v6160
        %v6296 = vpack.c.bf16 %v6257, %v6256
        %v6297 = vpack.c.bf16 %v5481, %v5479
        %v6298 = vpack.c.bf16 %v6163, %v6162
        %v6299 = vpack.c.bf16 %v6259, %v6258
        %v6300 = vpack.c.bf16 %v5486, %v5484
        %v6301 = vpack.c.bf16 %v6165, %v6164
        %v6302 = vpack.c.bf16 %v6261, %v6260
        %v6303 = vpack.c.bf16 %v5491, %v5489
        %v6304 = vpack.c.bf16 %v6167, %v6166
        %v6305 = vpack.c.bf16 %v6263, %v6262
        %v6306 = vpack.c.bf16 %v5496, %v5494
        %v6307 = vpack.c.bf16 %v6169, %v6168
        %v6308 = vpack.c.bf16 %v6265, %v6264
        %v6309 = vpack.c.bf16 %v5501, %v5499
        %v6310 = vpack.c.bf16 %v6171, %v6170
        %v6311 = vpack.c.bf16 %v6267, %v6266
        %v6312 = vpack.c.bf16 %v5506, %v5504
        %v6313 = vpack.c.bf16 %v6173, %v6172
        %v6314 = vpack.c.bf16 %v6269, %v6268
        %v6315 = vpack.c.bf16 %v5511, %v5509
        %v6316 = vpack.c.bf16 %v6175, %v6174
        %v6317 = vpack.c.bf16 %v6271, %v6270
        %v6318 = vpack.c.bf16 %v5748, %v5746
        %v6319 = vpack.c.bf16 %v6177, %v6176
        %v6320 = vpack.c.bf16 %v6273, %v6272
        %v6321 = vpack.c.bf16 %v6049, %v6047
        %v6322 = vld [vmem:[%s4] sm:$0xf]
        %v6323 = vld [vmem:[%s4 + $0x4] sm:$0xf]
        %v6324 = vld [vmem:[%s4 + $0x8] sm:$0xf]
        %v6325 = vld [vmem:[%s4 + $0xc] sm:$0xf]
        %v6326 = vld [vmem:[%s4 + $0x10] sm:$0xf]
        %v6327 = vld [vmem:[%s4 + $0x14] sm:$0xf]
        %v6328 = vld [vmem:[%s4 + $0x18] sm:$0xf]
        %v6329 = vld [vmem:[%s4 + $0x1c] sm:$0xf]
        %v6330 = vld [vmem:[%s4 + $0x20] sm:$0xf]
        %v6331 = vld [vmem:[%s4 + $0x24] sm:$0xf]
        %v6332 = vld [vmem:[%s4 + $0x28] sm:$0xf]
        %v6333 = vld [vmem:[%s4 + $0x2c] sm:$0xf]
        %v6334 = vld [vmem:[%s4 + $0x30] sm:$0xf]
        %v6335 = vld [vmem:[%s4 + $0x34] sm:$0xf]
        %v6336 = vld [vmem:[%s4 + $0x38] sm:$0xf]
        %v6337 = vld [vmem:[%s4 + $0x3c] sm:$0xf]
        %v6338 = vld [vmem:[%s4 + $0x40] sm:$0xf]
        %v6339 = vld [vmem:[%s4 + $0x44] sm:$0xf]
        %v6340 = vld [vmem:[%s4 + $0x48] sm:$0xf]
        %v6341 = vld [vmem:[%s4 + $0x4c] sm:$0xf]
        %v6342 = vld [vmem:[%s4 + $0x50] sm:$0xf]
        %v6343 = vld [vmem:[%s4 + $0x54] sm:$0xf]
        %v6344 = vld [vmem:[%s4 + $0x58] sm:$0xf]
        %v6345 = vld [vmem:[%s4 + $0x5c] sm:$0xf]
        %v6346 = vld [vmem:[%s4 + $0x60] sm:$0xf]
        %v6347 = vld [vmem:[%s4 + $0x64] sm:$0xf]
        %v6348 = vld [vmem:[%s4 + $0x68] sm:$0xf]
        %v6349 = vld [vmem:[%s4 + $0x6c] sm:$0xf]
        %v6350 = vld [vmem:[%s4 + $0x70] sm:$0xf]
        %v6351 = vld [vmem:[%s4 + $0x74] sm:$0xf]
        %v6352 = vld [vmem:[%s4 + $0x78] sm:$0xf]
        %v6353 = vld [vmem:[%s4 + $0x7c] sm:$0xf]
        %v6354 = vld [vmem:[%s4 + $0x80] sm:$0xf]
        %v6355 = vld [vmem:[%s4 + $0x84] sm:$0xf]
        %v6356 = vld [vmem:[%s4 + $0x88] sm:$0xf]
        %v6357 = vld [vmem:[%s4 + $0x8c] sm:$0xf]
        %v6394 = vunpack.c.l.b16 %v6322
        %v6395 = vunpack.c.l.b16 %v6323
        %v6396 = vunpack.c.l.b16 %v6324
        %v6397 = vunpack.c.l.b16 %v6325
        %v6398 = vunpack.c.l.b16 %v6326
        %v6399 = vunpack.c.l.b16 %v6327
        %v6400 = vunpack.c.l.b16 %v6328
        %v6401 = vunpack.c.l.b16 %v6329
        %v6402 = vunpack.c.l.b16 %v6330
        %v6403 = vunpack.c.l.b16 %v6331
        %v6404 = vunpack.c.l.b16 %v6332
        %v6405 = vunpack.c.l.b16 %v6333
        %v6406 = vunpack.c.l.b16 %v6334
        %v6407 = vunpack.c.l.b16 %v6335
        %v6408 = vunpack.c.l.b16 %v6336
        %v6409 = vunpack.c.l.b16 %v6337
        %v6410 = vunpack.c.l.b16 %v6338
        %v6411 = vunpack.c.l.b16 %v6339
        %v6412 = vunpack.c.l.b16 %v6340
        %v6413 = vunpack.c.l.b16 %v6341
        %v6414 = vunpack.c.l.b16 %v6342
        %v6415 = vunpack.c.l.b16 %v6343
        %v6416 = vunpack.c.l.b16 %v6344
        %v6417 = vunpack.c.l.b16 %v6345
        %v6418 = vunpack.c.l.b16 %v6346
        %v6419 = vunpack.c.l.b16 %v6347
        %v6420 = vunpack.c.l.b16 %v6348
        %v6421 = vunpack.c.l.b16 %v6349
        %v6422 = vunpack.c.l.b16 %v6350
        %v6423 = vunpack.c.l.b16 %v6351
        %v6424 = vunpack.c.l.b16 %v6352
        %v6425 = vunpack.c.l.b16 %v6353
        %v6426 = vunpack.c.l.b16 %v6354
        %v6427 = vunpack.c.l.b16 %v6355
        %v6428 = vunpack.c.l.b16 %v6356
        %v6429 = vunpack.c.l.b16 %v6357
        %v6430 = vpack.c.b16 %v6395, %v6394
        %v6431 = vpack.c.b16 %v6397, %v6396
        %v6432 = vpack.c.b16 %v6399, %v6398
        %v6433 = vpack.c.b16 %v6401, %v6400
        %v6434 = vpack.c.b16 %v6403, %v6402
        %v6435 = vpack.c.b16 %v6405, %v6404
        %v6436 = vpack.c.b16 %v6407, %v6406
        %v6437 = vpack.c.b16 %v6409, %v6408
        %v6438 = vpack.c.b16 %v6411, %v6410
        %v6439 = vpack.c.b16 %v6413, %v6412
        %v6440 = vpack.c.b16 %v6415, %v6414
        %v6441 = vpack.c.b16 %v6417, %v6416
        %v6442 = vpack.c.b16 %v6419, %v6418
        %v6443 = vpack.c.b16 %v6421, %v6420
        %v6444 = vpack.c.b16 %v6423, %v6422
        %v6445 = vpack.c.b16 %v6425, %v6424
        %v6446 = vpack.c.b16 %v6427, %v6426
        %v6447 = vpack.c.b16 %v6429, %v6428
        %v6467 = vsel %vm406, %v6276, 0
        %v6470 = vsel %vm406, %v6279, 0
        %v6473 = vsel %vm406, %v6282, 0
        %v6476 = vsel %vm406, %v6285, 0
        %v6479 = vsel %vm406, %v6288, 0
        %v6482 = vsel %vm406, %v6291, 0
        %v6485 = vsel %vm406, %v6294, 0
        %v6488 = vsel %vm406, %v6297, 0
        %v6491 = vsel %vm406, %v6300, 0
        %v6494 = vsel %vm406, %v6303, 0
        %v6497 = vsel %vm406, %v6306, 0
        %v6500 = vsel %vm406, %v6309, 0
        %v6503 = vsel %vm406, %v6312, 0
        %v6506 = vsel %vm406, %v6315, 0
        %v6509 = vsel %vm406, %v6318, 0
        %v6512 = vsel %vm406, %v6321, 0
        %6514 = vmatprep.subr.bf16.mxu0 0
        %6515 = vmatpush1.bf16.msra.mxu0 %v6430
        %6516 = vmatprep.subr.bf16.mxu0 0
        %6517 = vmatpush1.bf16.msra.mxu0 %v6431
        %6518 = vmatprep.subr.bf16.mxu0 0
        %6519 = vmatpush1.bf16.msra.mxu0 %v6432
        %6520 = vmatprep.subr.bf16.mxu0 0
        %6521 = vmatpush1.bf16.msra.mxu0 %v6433
        %6522 = vmatprep.subr.bf16.mxu0 0
        %6523 = vmatpush1.bf16.msra.mxu0 %v6434
        %6524 = vmatprep.subr.bf16.mxu0 0
        %6525 = vmatpush1.bf16.msra.mxu0 %v6435
        %6526 = vmatprep.subr.bf16.mxu0 0
        %6527 = vmatpush1.bf16.msra.mxu0 %v6436
        %6528 = vmatprep.subr.bf16.mxu0 0
        %6529 = vmatpush1.bf16.msra.mxu0 %v6437
        %6530 = vmatprep.subr.bf16.mxu0 0
        %6531 = vmatpush1.bf16.msra.mxu0 %v6438
        %6532 = vmatprep.subr.bf16.mxu0 0
        %6533 = vmatpush1.bf16.msra.mxu0 %v6439
        %6534 = vmatprep.subr.bf16.mxu0 0
        %6535 = vmatpush1.bf16.msra.mxu0 %v6440
        %6536 = vmatprep.subr.bf16.mxu0 0
        %6537 = vmatpush1.bf16.msra.mxu0 %v6441
        %6538 = vmatprep.subr.bf16.mxu0 0
        %6539 = vmatpush1.bf16.msra.mxu0 %v6442
        %6540 = vmatprep.subr.bf16.mxu0 0
        %6541 = vmatpush1.bf16.msra.mxu0 %v6443
        %6542 = vmatprep.subr.bf16.mxu0 0
        %6543 = vmatpush1.bf16.msra.mxu0 %v6444
        %6544 = vmatprep.subr.bf16.mxu0 0
        %6545 = vmatpush1.bf16.msra.mxu0 %v6445
        %6546 = vmatprep.mubr.bf16.mxu0 %v6275
        %6547 = vmatmul.mubr.bf16.gmra.mrb[0].mxu0 %v6274
        %v6548 = vpop.f32.mrb[0].mxu0
        %v6549 = vadd.f32 0.0, %v6548
        %v6550 = vpop.f32.mrb[0].mxu0
        %v6551 = vpop.f32.mrb[0].mxu0
        %v6552 = vadd.f32 0.0, %v6551
        %v6553 = vpop.f32.mrb[0].mxu0
        %6554 = vmatprep.mubr.bf16.mxu0 %v6278
        %6555 = vmatmul.mubr.bf16.gmra.mrb[0].mxu0 %v6277
        %v6556 = vpop.f32.mrb[0].mxu0
        %v6557 = vadd.f32 0.0, %v6556
        %v6558 = vpop.f32.mrb[0].mxu0
        %v6559 = vpop.f32.mrb[0].mxu0
        %v6560 = vadd.f32 0.0, %v6559
        %v6561 = vpop.f32.mrb[0].mxu0
        %6562 = vmatprep.mubr.bf16.mxu0 %v6281
        %6563 = vmatmul.mubr.bf16.gmra.mrb[0].mxu0 %v6280
        %v6564 = vpop.f32.mrb[0].mxu0
        %v6565 = vadd.f32 0.0, %v6564
        %v6566 = vpop.f32.mrb[0].mxu0
        %v6567 = vpop.f32.mrb[0].mxu0
        %v6568 = vadd.f32 0.0, %v6567
        %v6569 = vpop.f32.mrb[0].mxu0
        %6570 = vmatprep.mubr.bf16.mxu0 %v6284
        %6571 = vmatmul.mubr.bf16.gmra.mrb[0].mxu0 %v6283
        %v6572 = vpop.f32.mrb[0].mxu0
        %v6573 = vadd.f32 0.0, %v6572
        %v6574 = vpop.f32.mrb[0].mxu0
        %v6575 = vpop.f32.mrb[0].mxu0
        %v6576 = vadd.f32 0.0, %v6575
        %v6577 = vpop.f32.mrb[0].mxu0
        %6578 = vmatprep.mubr.bf16.mxu0 %v6287
        %6579 = vmatmul.mubr.bf16.gmra.mrb[0].mxu0 %v6286
        %v6580 = vpop.f32.mrb[0].mxu0
        %v6581 = vadd.f32 0.0, %v6580
        %v6582 = vpop.f32.mrb[0].mxu0
        %v6583 = vpop.f32.mrb[0].mxu0
        %v6584 = vadd.f32 0.0, %v6583
        %v6585 = vpop.f32.mrb[0].mxu0
        %6586 = vmatprep.mubr.bf16.mxu0 %v6290
        %6587 = vmatmul.mubr.bf16.gmra.mrb[0].mxu0 %v6289
        %v6588 = vpop.f32.mrb[0].mxu0
        %v6589 = vadd.f32 0.0, %v6588
        %v6590 = vpop.f32.mrb[0].mxu0
        %v6591 = vpop.f32.mrb[0].mxu0
        %v6592 = vadd.f32 0.0, %v6591
        %v6593 = vpop.f32.mrb[0].mxu0
        %6594 = vmatprep.mubr.bf16.mxu0 %v6293
        %6595 = vmatmul.mubr.bf16.gmra.mrb[0].mxu0 %v6292
        %v6596 = vpop.f32.mrb[0].mxu0
        %v6597 = vadd.f32 0.0, %v6596
        %v6598 = vpop.f32.mrb[0].mxu0
        %v6599 = vpop.f32.mrb[0].mxu0
        %v6600 = vadd.f32 0.0, %v6599
        %v6601 = vpop.f32.mrb[0].mxu0
        %6602 = vmatprep.mubr.bf16.mxu0 %v6296
        %6603 = vmatmul.mubr.bf16.gmra.mrb[0].mxu0 %v6295
        %v6604 = vpop.f32.mrb[0].mxu0
        %v6605 = vadd.f32 0.0, %v6604
        %v6606 = vpop.f32.mrb[0].mxu0
        %v6607 = vpop.f32.mrb[0].mxu0
        %v6608 = vadd.f32 0.0, %v6607
        %v6609 = vpop.f32.mrb[0].mxu0
        %6610 = vmatprep.mubr.bf16.mxu0 %v6299
        %6611 = vmatmul.mubr.bf16.gmra.mrb[0].mxu0 %v6298
        %v6612 = vpop.f32.mrb[0].mxu0
        %v6613 = vadd.f32 0.0, %v6612
        %v6614 = vpop.f32.mrb[0].mxu0
        %v6615 = vpop.f32.mrb[0].mxu0
        %v6616 = vadd.f32 0.0, %v6615
        %v6617 = vpop.f32.mrb[0].mxu0
        %6618 = vmatprep.mubr.bf16.mxu0 %v6302
        %6619 = vmatmul.mubr.bf16.gmra.mrb[0].mxu0 %v6301
        %v6620 = vpop.f32.mrb[0].mxu0
        %v6621 = vadd.f32 0.0, %v6620
        %v6622 = vpop.f32.mrb[0].mxu0
        %v6623 = vpop.f32.mrb[0].mxu0
        %v6624 = vadd.f32 0.0, %v6623
        %v6625 = vpop.f32.mrb[0].mxu0
        %6626 = vmatprep.mubr.bf16.mxu0 %v6305
        %6627 = vmatmul.mubr.bf16.gmra.mrb[0].mxu0 %v6304
        %v6628 = vpop.f32.mrb[0].mxu0
        %v6629 = vadd.f32 0.0, %v6628
        %v6630 = vpop.f32.mrb[0].mxu0
        %v6631 = vpop.f32.mrb[0].mxu0
        %v6632 = vadd.f32 0.0, %v6631
        %v6633 = vpop.f32.mrb[0].mxu0
        %6634 = vmatprep.mubr.bf16.mxu0 %v6308
        %6635 = vmatmul.mubr.bf16.gmra.mrb[0].mxu0 %v6307
        %v6636 = vpop.f32.mrb[0].mxu0
        %v6637 = vadd.f32 0.0, %v6636
        %v6638 = vpop.f32.mrb[0].mxu0
        %v6639 = vpop.f32.mrb[0].mxu0
        %v6640 = vadd.f32 0.0, %v6639
        %v6641 = vpop.f32.mrb[0].mxu0
        %6642 = vmatprep.mubr.bf16.mxu0 %v6311
        %6643 = vmatmul.mubr.bf16.gmra.mrb[0].mxu0 %v6310
        %v6644 = vpop.f32.mrb[0].mxu0
        %v6645 = vadd.f32 0.0, %v6644
        %v6646 = vpop.f32.mrb[0].mxu0
        %v6647 = vpop.f32.mrb[0].mxu0
        %v6648 = vadd.f32 0.0, %v6647
        %v6649 = vpop.f32.mrb[0].mxu0
        %6650 = vmatprep.mubr.bf16.mxu0 %v6314
        %6651 = vmatmul.mubr.bf16.gmra.mrb[0].mxu0 %v6313
        %v6652 = vpop.f32.mrb[0].mxu0
        %v6653 = vadd.f32 0.0, %v6652
        %v6654 = vpop.f32.mrb[0].mxu0
        %v6655 = vpop.f32.mrb[0].mxu0
        %v6656 = vadd.f32 0.0, %v6655
        %v6657 = vpop.f32.mrb[0].mxu0
        %6658 = vmatprep.mubr.bf16.mxu0 %v6317
        %6659 = vmatmul.mubr.bf16.gmra.mrb[0].mxu0 %v6316
        %v6660 = vpop.f32.mrb[0].mxu0
        %v6661 = vadd.f32 0.0, %v6660
        %v6662 = vpop.f32.mrb[0].mxu0
        %v6663 = vpop.f32.mrb[0].mxu0
        %v6664 = vadd.f32 0.0, %v6663
        %v6665 = vpop.f32.mrb[0].mxu0
        %6666 = vmatprep.mubr.bf16.mxu0 %v6320
        %6667 = vmatmul.mubr.bf16.gmra.mrb[0].mxu0 %v6319
        %v6668 = vpop.f32.mrb[0].mxu0
        %v6669 = vadd.f32 0.0, %v6668
        %v6670 = vpop.f32.mrb[0].mxu0
        %v6671 = vpop.f32.mrb[0].mxu0
        %v6672 = vadd.f32 0.0, %v6671
        %v6673 = vpop.f32.mrb[0].mxu0
        %6674 = vdwg.mxu0
        %6675 = vmatprep.subr.bf16.mxu0 0
        %6676 = vmatpush1.bf16.msra.mxu0 %v6446
        %6677 = vmatprep.subr.bf16.mxu0 0
        %6678 = vmatpush1.bf16.msra.mxu0 %v6447
        %6679 = vmatprep.subr.bf16.mxu0 0
        %6680 = vmatpush1.bf16.msra.mxu0 0
        %6681 = vmatprep.subr.bf16.mxu0 0
        %6682 = vmatpush1.bf16.msra.mxu0 0
        %6683 = vmatprep.subr.bf16.mxu0 0
        %6684 = vmatpush1.bf16.msra.mxu0 0
        %6685 = vmatprep.subr.bf16.mxu0 0
        %6686 = vmatpush1.bf16.msra.mxu0 0
        %6687 = vmatprep.subr.bf16.mxu0 0
        %6688 = vmatpush1.bf16.msra.mxu0 0
        %6689 = vmatprep.subr.bf16.mxu0 0
        %6690 = vmatpush1.bf16.msra.mxu0 0
        %6691 = vmatprep.subr.bf16.mxu0 0
        %6692 = vmatpush1.bf16.msra.mxu0 0
        %6693 = vmatprep.subr.bf16.mxu0 0
        %6694 = vmatpush1.bf16.msra.mxu0 0
        %6695 = vmatprep.subr.bf16.mxu0 0
        %6696 = vmatpush1.bf16.msra.mxu0 0
        %6697 = vmatprep.subr.bf16.mxu0 0
        %6698 = vmatpush1.bf16.msra.mxu0 0
        %6699 = vmatprep.subr.bf16.mxu0 0
        %6700 = vmatpush1.bf16.msra.mxu0 0
        %6701 = vmatprep.subr.bf16.mxu0 0
        %6702 = vmatpush1.bf16.msra.mxu0 0
        %6703 = vmatprep.subr.bf16.mxu0 0
        %6704 = vmatpush1.bf16.msra.mxu0 0
        %6705 = vmatprep.subr.bf16.mxu0 0
        %6706 = vmatpush1.bf16.msra.mxu0 0
        %6707 = vmatprep.mubr.bf16.mxu0 0
        %6708 = vmatmul.mubr.bf16.gmra.mrb[0].mxu0 %v6467
        %v6709 = vpop.f32.mrb[0].mxu0
        %v6710 = vadd.f32 %v6549, %v6709
        %v6711 = vpop.f32.mrb[0].mxu0
        %v6712 = vpop.f32.mrb[0].mxu0
        %v6713 = vadd.f32 %v6552, %v6712
        %v6714 = vpop.f32.mrb[0].mxu0
        %6715 = vmatprep.mubr.bf16.mxu0 0
        %6716 = vmatmul.mubr.bf16.gmra.mrb[0].mxu0 %v6470
        %v6717 = vpop.f32.mrb[0].mxu0
        %v6718 = vadd.f32 %v6557, %v6717
        %v6719 = vpop.f32.mrb[0].mxu0
        %v6720 = vpop.f32.mrb[0].mxu0
        %v6721 = vadd.f32 %v6560, %v6720
        %v6722 = vpop.f32.mrb[0].mxu0
        %6723 = vmatprep.mubr.bf16.mxu0 0
        %6724 = vmatmul.mubr.bf16.gmra.mrb[0].mxu0 %v6473
        %v6725 = vpop.f32.mrb[0].mxu0
        %v6726 = vadd.f32 %v6565, %v6725
        %v6727 = vpop.f32.mrb[0].mxu0
        %v6728 = vpop.f32.mrb[0].mxu0
        %v6729 = vadd.f32 %v6568, %v6728
        %v6730 = vpop.f32.mrb[0].mxu0
        %6731 = vmatprep.mubr.bf16.mxu0 0
        %6732 = vmatmul.mubr.bf16.gmra.mrb[0].mxu0 %v6476
        %v6733 = vpop.f32.mrb[0].mxu0
        %v6734 = vadd.f32 %v6573, %v6733
        %v6735 = vpop.f32.mrb[0].mxu0
        %v6736 = vpop.f32.mrb[0].mxu0
        %v6737 = vadd.f32 %v6576, %v6736
        %v6738 = vpop.f32.mrb[0].mxu0
        %6739 = vmatprep.mubr.bf16.mxu0 0
        %6740 = vmatmul.mubr.bf16.gmra.mrb[0].mxu0 %v6479
        %v6741 = vpop.f32.mrb[0].mxu0
        %v6742 = vadd.f32 %v6581, %v6741
        %v6743 = vpop.f32.mrb[0].mxu0
        %v6744 = vpop.f32.mrb[0].mxu0
        %v6745 = vadd.f32 %v6584, %v6744
        %v6746 = vpop.f32.mrb[0].mxu0
        %6747 = vmatprep.mubr.bf16.mxu0 0
        %6748 = vmatmul.mubr.bf16.gmra.mrb[0].mxu0 %v6482
        %v6749 = vpop.f32.mrb[0].mxu0
        %v6750 = vadd.f32 %v6589, %v6749
        %v6751 = vpop.f32.mrb[0].mxu0
        %v6752 = vpop.f32.mrb[0].mxu0
        %v6753 = vadd.f32 %v6592, %v6752
        %v6754 = vpop.f32.mrb[0].mxu0
        %6755 = vmatprep.mubr.bf16.mxu0 0
        %6756 = vmatmul.mubr.bf16.gmra.mrb[0].mxu0 %v6485
        %v6757 = vpop.f32.mrb[0].mxu0
        %v6758 = vadd.f32 %v6597, %v6757
        %v6759 = vpop.f32.mrb[0].mxu0
        %v6760 = vpop.f32.mrb[0].mxu0
        %v6761 = vadd.f32 %v6600, %v6760
        %v6762 = vpop.f32.mrb[0].mxu0
        %6763 = vmatprep.mubr.bf16.mxu0 0
        %6764 = vmatmul.mubr.bf16.gmra.mrb[0].mxu0 %v6488
        %v6765 = vpop.f32.mrb[0].mxu0
        %v6766 = vadd.f32 %v6605, %v6765
        %v6767 = vpop.f32.mrb[0].mxu0
        %v6768 = vpop.f32.mrb[0].mxu0
        %v6769 = vadd.f32 %v6608, %v6768
        %v6770 = vpop.f32.mrb[0].mxu0
        %6771 = vmatprep.mubr.bf16.mxu0 0
        %6772 = vmatmul.mubr.bf16.gmra.mrb[0].mxu0 %v6491
        %v6773 = vpop.f32.mrb[0].mxu0
        %v6774 = vadd.f32 %v6613, %v6773
        %v6775 = vpop.f32.mrb[0].mxu0
        %v6776 = vpop.f32.mrb[0].mxu0
        %v6777 = vadd.f32 %v6616, %v6776
        %v6778 = vpop.f32.mrb[0].mxu0
        %6779 = vmatprep.mubr.bf16.mxu0 0
        %6780 = vmatmul.mubr.bf16.gmra.mrb[0].mxu0 %v6494
        %v6781 = vpop.f32.mrb[0].mxu0
        %v6782 = vadd.f32 %v6621, %v6781
        %v6783 = vpop.f32.mrb[0].mxu0
        %v6784 = vpop.f32.mrb[0].mxu0
        %v6785 = vadd.f32 %v6624, %v6784
        %v6786 = vpop.f32.mrb[0].mxu0
        %6787 = vmatprep.mubr.bf16.mxu0 0
        %6788 = vmatmul.mubr.bf16.gmra.mrb[0].mxu0 %v6497
        %v6789 = vpop.f32.mrb[0].mxu0
        %v6790 = vadd.f32 %v6629, %v6789
        %v6791 = vpop.f32.mrb[0].mxu0
        %v6792 = vpop.f32.mrb[0].mxu0
        %v6793 = vadd.f32 %v6632, %v6792
        %v6794 = vpop.f32.mrb[0].mxu0
        %6795 = vmatprep.mubr.bf16.mxu0 0
        %6796 = vmatmul.mubr.bf16.gmra.mrb[0].mxu0 %v6500
        %v6797 = vpop.f32.mrb[0].mxu0
        %v6798 = vadd.f32 %v6637, %v6797
        %v6799 = vpop.f32.mrb[0].mxu0
        %v6800 = vpop.f32.mrb[0].mxu0
        %v6801 = vadd.f32 %v6640, %v6800
        %v6802 = vpop.f32.mrb[0].mxu0
        %6803 = vmatprep.mubr.bf16.mxu0 0
        %6804 = vmatmul.mubr.bf16.gmra.mrb[0].mxu0 %v6503
        %v6805 = vpop.f32.mrb[0].mxu0
        %v6806 = vadd.f32 %v6645, %v6805
        %v6807 = vpop.f32.mrb[0].mxu0
        %v6808 = vpop.f32.mrb[0].mxu0
        %v6809 = vadd.f32 %v6648, %v6808
        %v6810 = vpop.f32.mrb[0].mxu0
        %6811 = vmatprep.mubr.bf16.mxu0 0
        %6812 = vmatmul.mubr.bf16.gmra.mrb[0].mxu0 %v6506
        %v6813 = vpop.f32.mrb[0].mxu0
        %v6814 = vadd.f32 %v6653, %v6813
        %v6815 = vpop.f32.mrb[0].mxu0
        %v6816 = vpop.f32.mrb[0].mxu0
        %v6817 = vadd.f32 %v6656, %v6816
        %v6818 = vpop.f32.mrb[0].mxu0
        %6819 = vmatprep.mubr.bf16.mxu0 0
        %6820 = vmatmul.mubr.bf16.gmra.mrb[0].mxu0 %v6509
        %v6821 = vpop.f32.mrb[0].mxu0
        %v6822 = vadd.f32 %v6661, %v6821
        %v6823 = vpop.f32.mrb[0].mxu0
        %v6824 = vpop.f32.mrb[0].mxu0
        %v6825 = vadd.f32 %v6664, %v6824
        %v6826 = vpop.f32.mrb[0].mxu0
        %6827 = vmatprep.mubr.bf16.mxu0 0
        %6828 = vmatmul.mubr.bf16.gmra.mrb[0].mxu0 %v6512
        %v6829 = vpop.f32.mrb[0].mxu0
        %v6830 = vadd.f32 %v6669, %v6829
        %v6831 = vpop.f32.mrb[0].mxu0
        %v6832 = vpop.f32.mrb[0].mxu0
        %v6833 = vadd.f32 %v6672, %v6832
        %v6834 = vpop.f32.mrb[0].mxu0
        %6835 = vdwg.mxu0
        %v6836 = vsel %vm406, %v6710, 0.0
        %6837 = vadd.xlane.f32.xlu0 %v6836
        %v6838 = vpop.xlane.xlu0 %6837
        %v6839 = vsel %vm406, %v6713, 0.0
        %6840 = vadd.xlane.f32.xlu0 %v6839
        %v6841 = vpop.xlane.xlu0 %6840
        %v6842 = vsel %vm406, %v6718, 0.0
        %6843 = vadd.xlane.f32.xlu0 %v6842
        %v6844 = vpop.xlane.xlu0 %6843
        %v6845 = vsel %vm406, %v6721, 0.0
        %6846 = vadd.xlane.f32.xlu0 %v6845
        %v6847 = vpop.xlane.xlu0 %6846
        %v6848 = vsel %vm406, %v6726, 0.0
        %6849 = vadd.xlane.f32.xlu0 %v6848
        %v6850 = vpop.xlane.xlu0 %6849
        %v6851 = vsel %vm406, %v6729, 0.0
        %6852 = vadd.xlane.f32.xlu0 %v6851
        %v6853 = vpop.xlane.xlu0 %6852
        %v6854 = vsel %vm406, %v6734, 0.0
        %6855 = vadd.xlane.f32.xlu0 %v6854
        %v6856 = vpop.xlane.xlu0 %6855
        %v6857 = vsel %vm406, %v6737, 0.0
        %6858 = vadd.xlane.f32.xlu0 %v6857
        %v6859 = vpop.xlane.xlu0 %6858
        %v6860 = vsel %vm406, %v6742, 0.0
        %6861 = vadd.xlane.f32.xlu0 %v6860
        %v6862 = vpop.xlane.xlu0 %6861
        %v6863 = vsel %vm406, %v6745, 0.0
        %6864 = vadd.xlane.f32.xlu0 %v6863
        %v6865 = vpop.xlane.xlu0 %6864
        %v6866 = vsel %vm406, %v6750, 0.0
        %6867 = vadd.xlane.f32.xlu0 %v6866
        %v6868 = vpop.xlane.xlu0 %6867
        %v6869 = vsel %vm406, %v6753, 0.0
        %6870 = vadd.xlane.f32.xlu0 %v6869
        %v6871 = vpop.xlane.xlu0 %6870
        %v6872 = vsel %vm406, %v6758, 0.0
        %6873 = vadd.xlane.f32.xlu0 %v6872
        %v6874 = vpop.xlane.xlu0 %6873
        %v6875 = vsel %vm406, %v6761, 0.0
        %6876 = vadd.xlane.f32.xlu0 %v6875
        %v6877 = vpop.xlane.xlu0 %6876
        %v6878 = vsel %vm406, %v6766, 0.0
        %6879 = vadd.xlane.f32.xlu0 %v6878
        %v6880 = vpop.xlane.xlu0 %6879
        %v6881 = vsel %vm406, %v6769, 0.0
        %6882 = vadd.xlane.f32.xlu0 %v6881
        %v6883 = vpop.xlane.xlu0 %6882
        %v6884 = vsel %vm406, %v6774, 0.0
        %6885 = vadd.xlane.f32.xlu0 %v6884
        %v6886 = vpop.xlane.xlu0 %6885
        %v6887 = vsel %vm406, %v6777, 0.0
        %6888 = vadd.xlane.f32.xlu0 %v6887
        %v6889 = vpop.xlane.xlu0 %6888
        %v6890 = vsel %vm406, %v6782, 0.0
        %6891 = vadd.xlane.f32.xlu0 %v6890
        %v6892 = vpop.xlane.xlu0 %6891
        %v6893 = vsel %vm406, %v6785, 0.0
        %6894 = vadd.xlane.f32.xlu0 %v6893
        %v6895 = vpop.xlane.xlu0 %6894
        %v6896 = vsel %vm406, %v6790, 0.0
        %6897 = vadd.xlane.f32.xlu0 %v6896
        %v6898 = vpop.xlane.xlu0 %6897
        %v6899 = vsel %vm406, %v6793, 0.0
        %6900 = vadd.xlane.f32.xlu0 %v6899
        %v6901 = vpop.xlane.xlu0 %6900
        %v6902 = vsel %vm406, %v6798, 0.0
        %6903 = vadd.xlane.f32.xlu0 %v6902
        %v6904 = vpop.xlane.xlu0 %6903
        %v6905 = vsel %vm406, %v6801, 0.0
        %6906 = vadd.xlane.f32.xlu0 %v6905
        %v6907 = vpop.xlane.xlu0 %6906
        %v6908 = vsel %vm406, %v6806, 0.0
        %6909 = vadd.xlane.f32.xlu0 %v6908
        %v6910 = vpop.xlane.xlu0 %6909
        %v6911 = vsel %vm406, %v6809, 0.0
        %6912 = vadd.xlane.f32.xlu0 %v6911
        %v6913 = vpop.xlane.xlu0 %6912
        %v6914 = vsel %vm406, %v6814, 0.0
        %6915 = vadd.xlane.f32.xlu0 %v6914
        %v6916 = vpop.xlane.xlu0 %6915
        %v6917 = vsel %vm406, %v6817, 0.0
        %6918 = vadd.xlane.f32.xlu0 %v6917
        %v6919 = vpop.xlane.xlu0 %6918
        %v6920 = vsel %vm406, %v6822, 0.0
        %6921 = vadd.xlane.f32.xlu0 %v6920
        %v6922 = vpop.xlane.xlu0 %6921
        %v6923 = vsel %vm406, %v6825, 0.0
        %6924 = vadd.xlane.f32.xlu0 %v6923
        %v6925 = vpop.xlane.xlu0 %6924
        %v6926 = vsel %vm406, %v6830, 0.0
        %6927 = vadd.xlane.f32.xlu0 %v6926
        %v6928 = vpop.xlane.xlu0 %6927
        %v6929 = vsel %vm406, %v6833, 0.0
        %6930 = vadd.xlane.f32.xlu0 %v6929
        %v6931 = vpop.xlane.xlu0 %6930
        %v6932 = vmul.f32 %v6838, %v2482
        %v6933 = vmul.f32 %v6841, %v2482
        %v6934 = vmul.f32 %v6844, %v2482
        %v6935 = vmul.f32 %v6847, %v2482
        %v6936 = vmul.f32 %v6850, %v2482
        %v6937 = vmul.f32 %v6853, %v2482
        %v6938 = vmul.f32 %v6856, %v2482
        %v6939 = vmul.f32 %v6859, %v2482
        %v6940 = vmul.f32 %v6862, %v2482
        %v6941 = vmul.f32 %v6865, %v2482
        %v6942 = vmul.f32 %v6868, %v2482
        %v6943 = vmul.f32 %v6871, %v2482
        %v6944 = vmul.f32 %v6874, %v2482
        %v6945 = vmul.f32 %v6877, %v2482
        %v6946 = vmul.f32 %v6880, %v2482
        %v6947 = vmul.f32 %v6883, %v2482
        %v6948 = vmul.f32 %v6886, %v2482
        %v6949 = vmul.f32 %v6889, %v2482
        %v6950 = vmul.f32 %v6892, %v2482
        %v6951 = vmul.f32 %v6895, %v2482
        %v6952 = vmul.f32 %v6898, %v2482
        %v6953 = vmul.f32 %v6901, %v2482
        %v6954 = vmul.f32 %v6904, %v2482
        %v6955 = vmul.f32 %v6907, %v2482
        %v6956 = vmul.f32 %v6910, %v2482
        %v6957 = vmul.f32 %v6913, %v2482
        %v6958 = vmul.f32 %v6916, %v2482
        %v6959 = vmul.f32 %v6919, %v2482
        %v6960 = vmul.f32 %v6922, %v2482
        %v6961 = vmul.f32 %v6925, %v2482
        %v6962 = vmul.f32 %v6928, %v2482
        %v6963 = vmul.f32 %v6931, %v2482
        %v6964 = vsub.f32 %v6710, %v6932
        %v6965 = vsub.f32 %v6713, %v6933
        %v6966 = vsub.f32 %v6718, %v6934
        %v6967 = vsub.f32 %v6721, %v6935
        %v6968 = vsub.f32 %v6726, %v6936
        %v6969 = vsub.f32 %v6729, %v6937
        %v6970 = vsub.f32 %v6734, %v6938
        %v6971 = vsub.f32 %v6737, %v6939
        %v6972 = vsub.f32 %v6742, %v6940
        %v6973 = vsub.f32 %v6745, %v6941
        %v6974 = vsub.f32 %v6750, %v6942
        %v6975 = vsub.f32 %v6753, %v6943
        %v6976 = vsub.f32 %v6758, %v6944
        %v6977 = vsub.f32 %v6761, %v6945
        %v6978 = vsub.f32 %v6766, %v6946
        %v6979 = vsub.f32 %v6769, %v6947
        %v6980 = vsub.f32 %v6774, %v6948
        %v6981 = vsub.f32 %v6777, %v6949
        %v6982 = vsub.f32 %v6782, %v6950
        %v6983 = vsub.f32 %v6785, %v6951
        %v6984 = vsub.f32 %v6790, %v6952
        %v6985 = vsub.f32 %v6793, %v6953
        %v6986 = vsub.f32 %v6798, %v6954
        %v6987 = vsub.f32 %v6801, %v6955
        %v6988 = vsub.f32 %v6806, %v6956
        %v6989 = vsub.f32 %v6809, %v6957
        %v6990 = vsub.f32 %v6814, %v6958
        %v6991 = vsub.f32 %v6817, %v6959
        %v6992 = vsub.f32 %v6822, %v6960
        %v6993 = vsub.f32 %v6825, %v6961
        %v6994 = vsub.f32 %v6830, %v6962
        %v6995 = vsub.f32 %v6833, %v6963
        %v6996 = vmul.f32 %v6964, %v6964
        %v6997 = vmul.f32 %v6965, %v6965
        %v6998 = vmul.f32 %v6966, %v6966
        %v6999 = vmul.f32 %v6967, %v6967
        %v7000 = vmul.f32 %v6968, %v6968
        %v7001 = vmul.f32 %v6969, %v6969
        %v7002 = vmul.f32 %v6970, %v6970
        %v7003 = vmul.f32 %v6971, %v6971
        %v7004 = vmul.f32 %v6972, %v6972
        %v7005 = vmul.f32 %v6973, %v6973
        %v7006 = vmul.f32 %v6974, %v6974
        %v7007 = vmul.f32 %v6975, %v6975
        %v7008 = vmul.f32 %v6976, %v6976
        %v7009 = vmul.f32 %v6977, %v6977
        %v7010 = vmul.f32 %v6978, %v6978
        %v7011 = vmul.f32 %v6979, %v6979
        %v7012 = vmul.f32 %v6980, %v6980
        %v7013 = vmul.f32 %v6981, %v6981
        %v7014 = vmul.f32 %v6982, %v6982
        %v7015 = vmul.f32 %v6983, %v6983
        %v7016 = vmul.f32 %v6984, %v6984
        %v7017 = vmul.f32 %v6985, %v6985
        %v7018 = vmul.f32 %v6986, %v6986
        %v7019 = vmul.f32 %v6987, %v6987
        %v7020 = vmul.f32 %v6988, %v6988
        %v7021 = vmul.f32 %v6989, %v6989
        %v7022 = vmul.f32 %v6990, %v6990
        %v7023 = vmul.f32 %v6991, %v6991
        %v7024 = vmul.f32 %v6992, %v6992
        %v7025 = vmul.f32 %v6993, %v6993
        %v7026 = vmul.f32 %v6994, %v6994
        %v7027 = vmul.f32 %v6995, %v6995
        %v7028 = vsel %vm406, %v6996, 0.0
        %7029 = vadd.xlane.f32.xlu0 %v7028
        %v7030 = vpop.xlane.xlu0 %7029
        %v7031 = vsel %vm406, %v6997, 0.0
        %7032 = vadd.xlane.f32.xlu0 %v7031
        %v7033 = vpop.xlane.xlu0 %7032
        %v7034 = vsel %vm406, %v6998, 0.0
        %7035 = vadd.xlane.f32.xlu0 %v7034
        %v7036 = vpop.xlane.xlu0 %7035
        %v7037 = vsel %vm406, %v6999, 0.0
        %7038 = vadd.xlane.f32.xlu0 %v7037
        %v7039 = vpop.xlane.xlu0 %7038
        %v7040 = vsel %vm406, %v7000, 0.0
        %7041 = vadd.xlane.f32.xlu0 %v7040
        %v7042 = vpop.xlane.xlu0 %7041
        %v7043 = vsel %vm406, %v7001, 0.0
        %7044 = vadd.xlane.f32.xlu0 %v7043
        %v7045 = vpop.xlane.xlu0 %7044
        %v7046 = vsel %vm406, %v7002, 0.0
        %7047 = vadd.xlane.f32.xlu0 %v7046
        %v7048 = vpop.xlane.xlu0 %7047
        %v7049 = vsel %vm406, %v7003, 0.0
        %7050 = vadd.xlane.f32.xlu0 %v7049
        %v7051 = vpop.xlane.xlu0 %7050
        %v7052 = vsel %vm406, %v7004, 0.0
        %7053 = vadd.xlane.f32.xlu0 %v7052
        %v7054 = vpop.xlane.xlu0 %7053
        %v7055 = vsel %vm406, %v7005, 0.0
        %7056 = vadd.xlane.f32.xlu0 %v7055
        %v7057 = vpop.xlane.xlu0 %7056
        %v7058 = vsel %vm406, %v7006, 0.0
        %7059 = vadd.xlane.f32.xlu0 %v7058
        %v7060 = vpop.xlane.xlu0 %7059
        %v7061 = vsel %vm406, %v7007, 0.0
        %7062 = vadd.xlane.f32.xlu0 %v7061
        %v7063 = vpop.xlane.xlu0 %7062
        %v7064 = vsel %vm406, %v7008, 0.0
        %7065 = vadd.xlane.f32.xlu0 %v7064
        %v7066 = vpop.xlane.xlu0 %7065
        %v7067 = vsel %vm406, %v7009, 0.0
        %7068 = vadd.xlane.f32.xlu0 %v7067
        %v7069 = vpop.xlane.xlu0 %7068
        %v7070 = vsel %vm406, %v7010, 0.0
        %7071 = vadd.xlane.f32.xlu0 %v7070
        %v7072 = vpop.xlane.xlu0 %7071
        %v7073 = vsel %vm406, %v7011, 0.0
        %7074 = vadd.xlane.f32.xlu0 %v7073
        %v7075 = vpop.xlane.xlu0 %7074
        %v7076 = vsel %vm406, %v7012, 0.0
        %7077 = vadd.xlane.f32.xlu0 %v7076
        %v7078 = vpop.xlane.xlu0 %7077
        %v7079 = vsel %vm406, %v7013, 0.0
        %7080 = vadd.xlane.f32.xlu0 %v7079
        %v7081 = vpop.xlane.xlu0 %7080
        %v7082 = vsel %vm406, %v7014, 0.0
        %7083 = vadd.xlane.f32.xlu0 %v7082
        %v7084 = vpop.xlane.xlu0 %7083
        %v7085 = vsel %vm406, %v7015, 0.0
        %7086 = vadd.xlane.f32.xlu0 %v7085
        %v7087 = vpop.xlane.xlu0 %7086
        %v7088 = vsel %vm406, %v7016, 0.0
        %7089 = vadd.xlane.f32.xlu0 %v7088
        %v7090 = vpop.xlane.xlu0 %7089
        %v7091 = vsel %vm406, %v7017, 0.0
        %7092 = vadd.xlane.f32.xlu0 %v7091
        %v7093 = vpop.xlane.xlu0 %7092
        %v7094 = vsel %vm406, %v7018, 0.0
        %7095 = vadd.xlane.f32.xlu0 %v7094
        %v7096 = vpop.xlane.xlu0 %7095
        %v7097 = vsel %vm406, %v7019, 0.0
        %7098 = vadd.xlane.f32.xlu0 %v7097
        %v7099 = vpop.xlane.xlu0 %7098
        %v7100 = vsel %vm406, %v7020, 0.0
        %7101 = vadd.xlane.f32.xlu0 %v7100
        %v7102 = vpop.xlane.xlu0 %7101
        %v7103 = vsel %vm406, %v7021, 0.0
        %7104 = vadd.xlane.f32.xlu0 %v7103
        %v7105 = vpop.xlane.xlu0 %7104
        %v7106 = vsel %vm406, %v7022, 0.0
        %7107 = vadd.xlane.f32.xlu0 %v7106
        %v7108 = vpop.xlane.xlu0 %7107
        %v7109 = vsel %vm406, %v7023, 0.0
        %7110 = vadd.xlane.f32.xlu0 %v7109
        %v7111 = vpop.xlane.xlu0 %7110
        %v7112 = vsel %vm406, %v7024, 0.0
        %7113 = vadd.xlane.f32.xlu0 %v7112
        %v7114 = vpop.xlane.xlu0 %7113
        %v7115 = vsel %vm406, %v7025, 0.0
        %7116 = vadd.xlane.f32.xlu0 %v7115
        %v7117 = vpop.xlane.xlu0 %7116
        %v7118 = vsel %vm406, %v7026, 0.0
        %7119 = vadd.xlane.f32.xlu0 %v7118
        %v7120 = vpop.xlane.xlu0 %7119
        %v7121 = vsel %vm406, %v7027, 0.0
        %7122 = vadd.xlane.f32.xlu0 %v7121
        %v7123 = vpop.xlane.xlu0 %7122
        %v7124 = vmul.f32 %v7030, %v2482
        %v7125 = vmul.f32 %v7033, %v2482
        %v7126 = vmul.f32 %v7036, %v2482
        %v7127 = vmul.f32 %v7039, %v2482
        %v7128 = vmul.f32 %v7042, %v2482
        %v7129 = vmul.f32 %v7045, %v2482
        %v7130 = vmul.f32 %v7048, %v2482
        %v7131 = vmul.f32 %v7051, %v2482
        %v7132 = vmul.f32 %v7054, %v2482
        %v7133 = vmul.f32 %v7057, %v2482
        %v7134 = vmul.f32 %v7060, %v2482
        %v7135 = vmul.f32 %v7063, %v2482
        %v7136 = vmul.f32 %v7066, %v2482
        %v7137 = vmul.f32 %v7069, %v2482
        %v7138 = vmul.f32 %v7072, %v2482
        %v7139 = vmul.f32 %v7075, %v2482
        %v7140 = vmul.f32 %v7078, %v2482
        %v7141 = vmul.f32 %v7081, %v2482
        %v7142 = vmul.f32 %v7084, %v2482
        %v7143 = vmul.f32 %v7087, %v2482
        %v7144 = vmul.f32 %v7090, %v2482
        %v7145 = vmul.f32 %v7093, %v2482
        %v7146 = vmul.f32 %v7096, %v2482
        %v7147 = vmul.f32 %v7099, %v2482
        %v7148 = vmul.f32 %v7102, %v2482
        %v7149 = vmul.f32 %v7105, %v2482
        %v7150 = vmul.f32 %v7108, %v2482
        %v7151 = vmul.f32 %v7111, %v2482
        %v7152 = vmul.f32 %v7114, %v2482
        %v7153 = vmul.f32 %v7117, %v2482
        %v7154 = vmul.f32 %v7120, %v2482
        %v7155 = vmul.f32 %v7123, %v2482
        %v7156 = vadd.f32 %v7124, 1e-05
        %v7157 = vadd.f32 %v7125, 1e-05
        %v7158 = vadd.f32 %v7126, 1e-05
        %v7159 = vadd.f32 %v7127, 1e-05
        %v7160 = vadd.f32 %v7128, 1e-05
        %v7161 = vadd.f32 %v7129, 1e-05
        %v7162 = vadd.f32 %v7130, 1e-05
        %v7163 = vadd.f32 %v7131, 1e-05
        %v7164 = vadd.f32 %v7132, 1e-05
        %v7165 = vadd.f32 %v7133, 1e-05
        %v7166 = vadd.f32 %v7134, 1e-05
        %v7167 = vadd.f32 %v7135, 1e-05
        %v7168 = vadd.f32 %v7136, 1e-05
        %v7169 = vadd.f32 %v7137, 1e-05
        %v7170 = vadd.f32 %v7138, 1e-05
        %v7171 = vadd.f32 %v7139, 1e-05
        %v7172 = vadd.f32 %v7140, 1e-05
        %v7173 = vadd.f32 %v7141, 1e-05
        %v7174 = vadd.f32 %v7142, 1e-05
        %v7175 = vadd.f32 %v7143, 1e-05
        %v7176 = vadd.f32 %v7144, 1e-05
        %v7177 = vadd.f32 %v7145, 1e-05
        %v7178 = vadd.f32 %v7146, 1e-05
        %v7179 = vadd.f32 %v7147, 1e-05
        %v7180 = vadd.f32 %v7148, 1e-05
        %v7181 = vadd.f32 %v7149, 1e-05
        %v7182 = vadd.f32 %v7150, 1e-05
        %v7183 = vadd.f32 %v7151, 1e-05
        %v7184 = vadd.f32 %v7152, 1e-05
        %v7185 = vadd.f32 %v7153, 1e-05
        %v7186 = vadd.f32 %v7154, 1e-05
        %v7187 = vadd.f32 %v7155, 1e-05
        %v7188 = vrsqrt.pop %v7156
        %v7189 = vrsqrt.pop %v7157
        %v7190 = vrsqrt.pop %v7158
        %v7191 = vrsqrt.pop %v7159
        %v7192 = vrsqrt.pop %v7160
        %v7193 = vrsqrt.pop %v7161
        %v7194 = vrsqrt.pop %v7162
        %v7195 = vrsqrt.pop %v7163
        %v7196 = vrsqrt.pop %v7164
        %v7197 = vrsqrt.pop %v7165
        %v7198 = vrsqrt.pop %v7166
        %v7199 = vrsqrt.pop %v7167
        %v7200 = vrsqrt.pop %v7168
        %v7201 = vrsqrt.pop %v7169
        %v7202 = vrsqrt.pop %v7170
        %v7203 = vrsqrt.pop %v7171
        %v7204 = vrsqrt.pop %v7172
        %v7205 = vrsqrt.pop %v7173
        %v7206 = vrsqrt.pop %v7174
        %v7207 = vrsqrt.pop %v7175
        %v7208 = vrsqrt.pop %v7176
        %v7209 = vrsqrt.pop %v7177
        %v7210 = vrsqrt.pop %v7178
        %v7211 = vrsqrt.pop %v7179
        %v7212 = vrsqrt.pop %v7180
        %v7213 = vrsqrt.pop %v7181
        %v7214 = vrsqrt.pop %v7182
        %v7215 = vrsqrt.pop %v7183
        %v7216 = vrsqrt.pop %v7184
        %v7217 = vrsqrt.pop %v7185
        %v7218 = vrsqrt.pop %v7186
        %v7219 = vrsqrt.pop %v7187
        %v7220 = vmul.f32 %v6964, %v7188
        %v7221 = vmul.f32 %v6965, %v7189
        %v7222 = vmul.f32 %v6966, %v7190
        %v7223 = vmul.f32 %v6967, %v7191
        %v7224 = vmul.f32 %v6968, %v7192
        %v7225 = vmul.f32 %v6969, %v7193
        %v7226 = vmul.f32 %v6970, %v7194
        %v7227 = vmul.f32 %v6971, %v7195
        %v7228 = vmul.f32 %v6972, %v7196
        %v7229 = vmul.f32 %v6973, %v7197
        %v7230 = vmul.f32 %v6974, %v7198
        %v7231 = vmul.f32 %v6975, %v7199
        %v7232 = vmul.f32 %v6976, %v7200
        %v7233 = vmul.f32 %v6977, %v7201
        %v7234 = vmul.f32 %v6978, %v7202
        %v7235 = vmul.f32 %v6979, %v7203
        %v7236 = vmul.f32 %v6980, %v7204
        %v7237 = vmul.f32 %v6981, %v7205
        %v7238 = vmul.f32 %v6982, %v7206
        %v7239 = vmul.f32 %v6983, %v7207
        %v7240 = vmul.f32 %v6984, %v7208
        %v7241 = vmul.f32 %v6985, %v7209
        %v7242 = vmul.f32 %v6986, %v7210
        %v7243 = vmul.f32 %v6987, %v7211
        %v7244 = vmul.f32 %v6988, %v7212
        %v7245 = vmul.f32 %v6989, %v7213
        %v7246 = vmul.f32 %v6990, %v7214
        %v7247 = vmul.f32 %v6991, %v7215
        %v7248 = vmul.f32 %v6992, %v7216
        %v7249 = vmul.f32 %v6993, %v7217
        %v7250 = vmul.f32 %v6994, %v7218
        %v7251 = vmul.f32 %v6995, %v7219
        %v7252 = vld [vmem:[%s9] sm:$0x1]
        %v7254 = vlaneseq
        %v7255 = vshrl.u32 %v7254, 7
        %v7256 = vsub.s32 0, %v7255
        %v7257 = vrot.slane %v7252, %v7256
        %v7259 = vmul.f32 %v7220, %v7257
        %v7260 = vmul.f32 %v7221, %v7257
        %v7261 = vmul.f32 %v7222, %v7257
        %v7262 = vmul.f32 %v7223, %v7257
        %v7263 = vmul.f32 %v7224, %v7257
        %v7264 = vmul.f32 %v7225, %v7257
        %v7265 = vmul.f32 %v7226, %v7257
        %v7266 = vmul.f32 %v7227, %v7257
        %v7267 = vmul.f32 %v7228, %v7257
        %v7268 = vmul.f32 %v7229, %v7257
        %v7269 = vmul.f32 %v7230, %v7257
        %v7270 = vmul.f32 %v7231, %v7257
        %v7271 = vmul.f32 %v7232, %v7257
        %v7272 = vmul.f32 %v7233, %v7257
        %v7273 = vmul.f32 %v7234, %v7257
        %v7274 = vmul.f32 %v7235, %v7257
        %v7275 = vmul.f32 %v7236, %v7257
        %v7276 = vmul.f32 %v7237, %v7257
        %v7277 = vmul.f32 %v7238, %v7257
        %v7278 = vmul.f32 %v7239, %v7257
        %v7279 = vmul.f32 %v7240, %v7257
        %v7280 = vmul.f32 %v7241, %v7257
        %v7281 = vmul.f32 %v7242, %v7257
        %v7282 = vmul.f32 %v7243, %v7257
        %v7283 = vmul.f32 %v7244, %v7257
        %v7284 = vmul.f32 %v7245, %v7257
        %v7285 = vmul.f32 %v7246, %v7257
        %v7286 = vmul.f32 %v7247, %v7257
        %v7287 = vmul.f32 %v7248, %v7257
        %v7288 = vmul.f32 %v7249, %v7257
        %v7289 = vmul.f32 %v7250, %v7257
        %v7290 = vmul.f32 %v7251, %v7257
        %v7291 = vld [vmem:[%s10] sm:$0x1]
        %v7293 = vlaneseq
        %v7294 = vshrl.u32 %v7293, 7
        %v7295 = vsub.s32 0, %v7294
        %v7296 = vrot.slane %v7291, %v7295
        %v7298 = vadd.f32 %v7259, %v7296
        %v7299 = vadd.f32 %v7260, %v7296
        %v7300 = vadd.f32 %v7261, %v7296
        %v7301 = vadd.f32 %v7262, %v7296
        %v7302 = vadd.f32 %v7263, %v7296
        %v7303 = vadd.f32 %v7264, %v7296
        %v7304 = vadd.f32 %v7265, %v7296
        %v7305 = vadd.f32 %v7266, %v7296
        %v7306 = vadd.f32 %v7267, %v7296
        %v7307 = vadd.f32 %v7268, %v7296
        %v7308 = vadd.f32 %v7269, %v7296
        %v7309 = vadd.f32 %v7270, %v7296
        %v7310 = vadd.f32 %v7271, %v7296
        %v7311 = vadd.f32 %v7272, %v7296
        %v7312 = vadd.f32 %v7273, %v7296
        %v7313 = vadd.f32 %v7274, %v7296
        %v7314 = vadd.f32 %v7275, %v7296
        %v7315 = vadd.f32 %v7276, %v7296
        %v7316 = vadd.f32 %v7277, %v7296
        %v7317 = vadd.f32 %v7278, %v7296
        %v7318 = vadd.f32 %v7279, %v7296
        %v7319 = vadd.f32 %v7280, %v7296
        %v7320 = vadd.f32 %v7281, %v7296
        %v7321 = vadd.f32 %v7282, %v7296
        %v7322 = vadd.f32 %v7283, %v7296
        %v7323 = vadd.f32 %v7284, %v7296
        %v7324 = vadd.f32 %v7285, %v7296
        %v7325 = vadd.f32 %v7286, %v7296
        %v7326 = vadd.f32 %v7287, %v7296
        %v7327 = vadd.f32 %v7288, %v7296
        %v7328 = vadd.f32 %v7289, %v7296
        %v7329 = vadd.f32 %v7290, %v7296
        %v7330 = vmax.f32 %v7298, 0.0
        %v7331 = vmax.f32 %v7299, 0.0
        %v7332 = vmax.f32 %v7300, 0.0
        %v7333 = vmax.f32 %v7301, 0.0
        %v7334 = vmax.f32 %v7302, 0.0
        %v7335 = vmax.f32 %v7303, 0.0
        %v7336 = vmax.f32 %v7304, 0.0
        %v7337 = vmax.f32 %v7305, 0.0
        %v7338 = vmax.f32 %v7306, 0.0
        %v7339 = vmax.f32 %v7307, 0.0
        %v7340 = vmax.f32 %v7308, 0.0
        %v7341 = vmax.f32 %v7309, 0.0
        %v7342 = vmax.f32 %v7310, 0.0
        %v7343 = vmax.f32 %v7311, 0.0
        %v7344 = vmax.f32 %v7312, 0.0
        %v7345 = vmax.f32 %v7313, 0.0
        %v7346 = vmax.f32 %v7314, 0.0
        %v7347 = vmax.f32 %v7315, 0.0
        %v7348 = vmax.f32 %v7316, 0.0
        %v7349 = vmax.f32 %v7317, 0.0
        %v7350 = vmax.f32 %v7318, 0.0
        %v7351 = vmax.f32 %v7319, 0.0
        %v7352 = vmax.f32 %v7320, 0.0
        %v7353 = vmax.f32 %v7321, 0.0
        %v7354 = vmax.f32 %v7322, 0.0
        %v7355 = vmax.f32 %v7323, 0.0
        %v7356 = vmax.f32 %v7324, 0.0
        %v7357 = vmax.f32 %v7325, 0.0
        %v7358 = vmax.f32 %v7326, 0.0
        %v7359 = vmax.f32 %v7327, 0.0
        %v7360 = vmax.f32 %v7328, 0.0
        %v7361 = vmax.f32 %v7329, 0.0
        %v7362 = vadd.f32 %v7330, %v2881
        %v7363 = vadd.f32 %v7331, %v2882
        %v7364 = vadd.f32 %v7332, %v2883
        %v7365 = vadd.f32 %v7333, %v2884
        %v7366 = vadd.f32 %v7334, %v2885
        %v7367 = vadd.f32 %v7335, %v2886
        %v7368 = vadd.f32 %v7336, %v2887
        %v7369 = vadd.f32 %v7337, %v2888
        %v7370 = vadd.f32 %v7338, %v2889
        %v7371 = vadd.f32 %v7339, %v2890
        %v7372 = vadd.f32 %v7340, %v2891
        %v7373 = vadd.f32 %v7341, %v2892
        %v7374 = vadd.f32 %v7342, %v2893
        %v7375 = vadd.f32 %v7343, %v2894
        %v7376 = vadd.f32 %v7344, %v2895
        %v7377 = vadd.f32 %v7345, %v2896
        %v7378 = vadd.f32 %v7346, %v2897
        %v7379 = vadd.f32 %v7347, %v2898
        %v7380 = vadd.f32 %v7348, %v2899
        %v7381 = vadd.f32 %v7349, %v2900
        %v7382 = vadd.f32 %v7350, %v2901
        %v7383 = vadd.f32 %v7351, %v2902
        %v7384 = vadd.f32 %v7352, %v2903
        %v7385 = vadd.f32 %v7353, %v2904
        %v7386 = vadd.f32 %v7354, %v2905
        %v7387 = vadd.f32 %v7355, %v2906
        %v7388 = vadd.f32 %v7356, %v2907
        %v7389 = vadd.f32 %v7357, %v2908
        %v7390 = vadd.f32 %v7358, %v2909
        %v7391 = vadd.f32 %v7359, %v2910
        %v7392 = vadd.f32 %v7360, %v2911
        %v7393 = vadd.f32 %v7361, %v2912
        %7394 = vst.msk [vmem:[%s394] sm:$0xff] %vm406, %v7362
        %7395 = vst.msk [vmem:[%s394 + $0x8] sm:$0xff] %vm406, %v7363
        %7396 = vst.msk [vmem:[%s394 + $0x10] sm:$0xff] %vm406, %v7364
        %7397 = vst.msk [vmem:[%s394 + $0x18] sm:$0xff] %vm406, %v7365
        %7398 = vst.msk [vmem:[%s394 + $0x20] sm:$0xff] %vm406, %v7366
        %7399 = vst.msk [vmem:[%s394 + $0x28] sm:$0xff] %vm406, %v7367
        %7400 = vst.msk [vmem:[%s394 + $0x30] sm:$0xff] %vm406, %v7368
        %7401 = vst.msk [vmem:[%s394 + $0x38] sm:$0xff] %vm406, %v7369
        %7402 = vst.msk [vmem:[%s394 + $0x40] sm:$0xff] %vm406, %v7370
        %7403 = vst.msk [vmem:[%s394 + $0x48] sm:$0xff] %vm406, %v7371
        %7404 = vst.msk [vmem:[%s394 + $0x50] sm:$0xff] %vm406, %v7372
        %7405 = vst.msk [vmem:[%s394 + $0x58] sm:$0xff] %vm406, %v7373
        %7406 = vst.msk [vmem:[%s394 + $0x60] sm:$0xff] %vm406, %v7374
        %7407 = vst.msk [vmem:[%s394 + $0x68] sm:$0xff] %vm406, %v7375
        %7408 = vst.msk [vmem:[%s394 + $0x70] sm:$0xff] %vm406, %v7376
        %7409 = vst.msk [vmem:[%s394 + $0x78] sm:$0xff] %vm406, %v7377
        %7410 = vst.msk [vmem:[%s394 + $0x80] sm:$0xff] %vm406, %v7378
        %7411 = vst.msk [vmem:[%s394 + $0x88] sm:$0xff] %vm406, %v7379
        %7412 = vst.msk [vmem:[%s394 + $0x90] sm:$0xff] %vm406, %v7380
        %7413 = vst.msk [vmem:[%s394 + $0x98] sm:$0xff] %vm406, %v7381
        %7414 = vst.msk [vmem:[%s394 + $0xa0] sm:$0xff] %vm406, %v7382
        %7415 = vst.msk [vmem:[%s394 + $0xa8] sm:$0xff] %vm406, %v7383
        %7416 = vst.msk [vmem:[%s394 + $0xb0] sm:$0xff] %vm406, %v7384
        %7417 = vst.msk [vmem:[%s394 + $0xb8] sm:$0xff] %vm406, %v7385
        %7418 = vst.msk [vmem:[%s394 + $0xc0] sm:$0xff] %vm406, %v7386
        %7419 = vst.msk [vmem:[%s394 + $0xc8] sm:$0xff] %vm406, %v7387
        %7420 = vst.msk [vmem:[%s394 + $0xd0] sm:$0xff] %vm406, %v7388
        %7421 = vst.msk [vmem:[%s394 + $0xd8] sm:$0xff] %vm406, %v7389
        %7422 = vst.msk [vmem:[%s394 + $0xe0] sm:$0xff] %vm406, %v7390
        %7423 = vst.msk [vmem:[%s394 + $0xe8] sm:$0xff] %vm406, %v7391
        %7424 = vst.msk [vmem:[%s394 + $0xf0] sm:$0xff] %vm406, %v7392
        %7425 = vst.msk [vmem:[%s394 + $0xf8] sm:$0xff] %vm406, %v7393
        %s7426 = sand.u32 %s274, 1
        %s7427 = scalar_lea.sflag [#allocation6], %s7426
        %s7428 = sand.u32 %s274, 1
        %s7429 = smul.addr %s7428, 256
        %s7430 = scalar_lea.vmem [#allocation5], %s7429
        // Predicated region
        $region65: #{conv_block_forward.1} parent=63 // pred_check
          %p7431 = pneg %p284
        $region66: #{conv_block_forward.1} parent=63 // pred_check_branch
          %7433 = sbr.rel (%p7431) target = $region68
        $region67: #{conv_block_forward.1} parent=63 // pred_region
          %s7435 = ssub.s32 4096, 4096
          %7436 = vsyncadd %s7427, %s7435
          %s7437 = smul.addr %s25, 32
          %s7438 = smul.addr %s7437, 128
          %s7439 = scalar_lea.hbm %s11, %s7438
          %s7440 = sshll.u32 %s7430, 4
          %s7441 = int_to_ptr.vmem [resolvable:$true] %s7440
          %7446 = dma.vmem_to_hbm [thread:$0]  %s7441, 4096, %s7439, %s7427, 128, 128, 8
        $region68: #{conv_block_forward.1} parent=63 // pred_fallthru
          _
      $region64: #{conv_block_forward.1} parent=5 // pred_fallthru
        _
      %p7447 = scmp.le.s32.totalorder 2, %s20
      // Predicated region
      $region69: #{conv_block_forward.1} parent=5 // pred_check
        %p7448 = pneg %p7447
      $region70: #{conv_block_forward.1} parent=5 // pred_check_branch
        %7450 = sbr.rel (%p7448) target = $region72
      $region71: #{conv_block_forward.1} parent=5 // pred_region
        %s7451 = ssub.s32 %s20, 2
        // Predicated region
        $region73: #{conv_block_forward.1} parent=71 // pred_check
          %p7452 = pneg %p290
        $region74: #{conv_block_forward.1} parent=71 // pred_check_branch
          %7454 = sbr.rel (%p7452) target = $region76
        $region75: #{conv_block_forward.1} parent=71 // pred_region
          %s7455 = sand.u32 %s275, 1
          %s7456 = scalar_lea.sflag [#allocation6], %s7455
          %s7457 = sand.u32 %s275, 1
          %s7458 = smul.addr %s7457, 256
          %s7459 = scalar_lea.vmem [#allocation5], %s7458
          %7460 = dma.done %s7456, 4096
        $region76: #{conv_block_forward.1} parent=71 // pred_fallthru
          _
      $region72: #{conv_block_forward.1} parent=5 // pred_fallthru
        _
    $region6: #{conv_block_forward.1} parent=1 // loop_footer
      %s24 = sadd.s32 1, %s20
    $region7: #{conv_block_forward.1} parent=1 // loop_footer_branch
      %19 = sbr.rel target = $region3
    $region8: #{conv_block_forward.1} parent=1 // loop_exit
      _
    %7461 = vsyncpa [#allocation6], 1
    %s7462 = scalar_lea.sflag [#allocation6], 1
    %7463 = vsyncpa %s7462, 1

</llo_original>
